<compile_context>
chip_gen: v6e
topology: v6e:2x2x1
jax: 0.10.0
libtpu: 0.0.40
codegen_flags: <defaults>
</compile_context>

<pallas_src>
import numpy as np

import jax
import jax.numpy as jnp
from jax.experimental import pallas as pl
from jax.experimental.pallas import tpu as pltpu

_BATCH_TILE = 8  # images per grid step (sized well under v7x's 64 MiB VMEM)


# ----------------------------------------------------------------------------
# Parameters (PyTorch layout) + one-time packing (host-side numpy).
# ----------------------------------------------------------------------------
def init_params(key):
    shapes = {
        "c1w": (30, 1, 5, 5), "c1b": (30,),
        "c2w": (15, 30, 5, 5), "c2b": (15,),
        "f1w": (128, 4 * 4 * 15), "f1b": (128,),
        "f2w": (10, 128), "f2b": (10,),
    }
    params = {}
    for name, shape in shapes.items():
        for part in ("r", "i"):
            key, sub = jax.random.split(key)
            params[name + part] = 0.05 * jax.random.normal(sub, shape, jnp.float32)
    return params


def _build_conv1(wr, wi, br, bi):
    """Toeplitz-over-width conv1 weights.

    Patch rows (K=140): (kh, iw) with iw in [0,28).
    Output lanes (N=1440): (part, dow, jow, c) with ow = 2*jow + dow, c in [0,30),
    part 0 = real, part 1 = imag.
    """
    C = wr.shape[0]
    Wt = np.zeros((5, 28, 2, 2, 12, C), np.float32)
    Wb = np.zeros((5, 28, 2, 2, 12, C), np.float32)
    for kh in range(5):
        for kw in range(5):
            for dow in range(2):
                for jow in range(12):
                    iw = 2 * jow + dow + kw
                    Wt[kh, iw, 0, dow, jow, :] = wr[:, 0, kh, kw]
                    Wt[kh, iw, 1, dow, jow, :] = wi[:, 0, kh, kw]
                    Wb[kh, iw, 0, dow, jow, :] = -wi[:, 0, kh, kw]
                    Wb[kh, iw, 1, dow, jow, :] = wr[:, 0, kh, kw]
    Wt = Wt.reshape(140, 1440)
    Wb = Wb.reshape(140, 1440)
    bias = np.zeros((2, 2, 12, C), np.float32)
    bias[0] = (br - bi)[None, None, :]
    bias[1] = (br + bi)[None, None, :]
    return (jnp.asarray(Wt, jnp.bfloat16), jnp.asarray(Wb, jnp.bfloat16),
            jnp.asarray(bias.reshape(1, 1440), jnp.float32))


def _build_conv2(wr, wi, br, bi):
    """Toeplitz-over-width conv2 weights.

    Patch rows (K=1800): (kh2, j1, cin) with j1 in [0,12), cin in [0,30).
    Output lanes (N=240): (part, dow2, jow2, cout) with ow2 = 2*jow2 + dow2.
    """
    Cout, Cin = wr.shape[0], wr.shape[1]
    Wt = np.zeros((5, 12, Cin, 2, 2, 4, Cout), np.float32)
    Wb = np.zeros((5, 12, Cin, 2, 2, 4, Cout), np.float32)
    for kh in range(5):
        for kw in range(5):
            for dow in range(2):
                for jow in range(4):
                    j1 = 2 * jow + dow + kw
                    wr_t = wr[:, :, kh, kw].T      # (Cin, Cout)
                    wi_t = wi[:, :, kh, kw].T
                    Wt[kh, j1, :, 0, dow, jow, :] = wr_t
                    Wt[kh, j1, :, 1, dow, jow, :] = wi_t
                    Wb[kh, j1, :, 0, dow, jow, :] = -wi_t
                    Wb[kh, j1, :, 1, dow, jow, :] = wr_t
    Wt = Wt.reshape(1800, 240)
    Wb = Wb.reshape(1800, 240)
    bias = np.zeros((2, 2, 4, Cout), np.float32)
    bias[0] = (br - bi)
    bias[1] = (br + bi)
    return (jnp.asarray(Wt, jnp.bfloat16), jnp.asarray(Wb, jnp.bfloat16),
            jnp.asarray(bias.reshape(1, 240), jnp.float32))


def _build_fc1(wr, wi, br, bi):
    """fc1, with torch's NCHW flatten order folded into a row permutation.

    Kernel feature order: row = i2*60 + j2*15 + c ; torch column = c*16 + i2*4 + j2.
    Output lanes (256): [real 128 | imag 128].
    """
    perm = np.zeros(240, np.int32)
    for i2 in range(4):
        for j2 in range(4):
            for c in range(15):
                perm[i2 * 60 + j2 * 15 + c] = c * 16 + i2 * 4 + j2
    wr_p = wr[:, perm].T           # (240, 128)
    wi_p = wi[:, perm].T
    Wt = np.concatenate([wr_p, wi_p], axis=1)
    Wb = np.concatenate([-wi_p, wr_p], axis=1)
    bias = np.concatenate([br - bi, br + bi]).reshape(1, -1)
    return (jnp.asarray(Wt, jnp.bfloat16), jnp.asarray(Wb, jnp.bfloat16),
            jnp.asarray(bias, jnp.float32))


def _build_fc2(wr, wi, br, bi):
    Wt = np.concatenate([wr.T, wi.T], axis=1)     # (128, 20)
    Wb = np.concatenate([-wi.T, wr.T], axis=1)
    bias = np.concatenate([br - bi, br + bi]).reshape(1, -1)
    return (jnp.asarray(Wt, jnp.bfloat16), jnp.asarray(Wb, jnp.bfloat16),
            jnp.asarray(bias, jnp.float32))


def prepare_params(params):
    """One-time weight packing (hoisted completely out of the forward pass)."""
    p = {k: np.asarray(v) for k, v in params.items()}
    c1wt, c1wb, c1b = _build_conv1(p["c1wr"], p["c1wi"], p["c1br"], p["c1bi"])
    c2wt, c2wb, c2b = _build_conv2(p["c2wr"], p["c2wi"], p["c2br"], p["c2bi"])
    f1wt, f1wb, f1b = _build_fc1(p["f1wr"], p["f1wi"], p["f1br"], p["f1bi"])
    f2wt, f2wb, f2b = _build_fc2(p["f2wr"], p["f2wi"], p["f2br"], p["f2bi"])
    return dict(c1wt=c1wt, c1wb=c1wb, c1b=c1b,
                c2wt=c2wt, c2wb=c2wb, c2b=c2b,
                f1wt=f1wt, f1wb=f1wb, f1b=f1b,
                f2wt=f2wt, f2wb=f2wb, f2b=f2b)


# ----------------------------------------------------------------------------
# The fused Pallas kernel.
# ----------------------------------------------------------------------------
def _max_abs_select(corner):
    """Per-element max-|z| selection over the 4 pooling corners.

    Window scanned in row-major order; strict '>' keeps the first maximal
    element (matches complexPyTorch's max_pool2d-with-indices gather)."""
    best_r, best_i = corner(0, 0)
    best_m = best_r * best_r + best_i * best_i
    for dh, dw in ((0, 1), (1, 0), (1, 1)):
        r, im = corner(dh, dw)
        mm = r * r + im * im
        take = mm > best_m
        best_r = jnp.where(take, r, best_r)
        best_i = jnp.where(take, im, best_i)
        best_m = jnp.where(take, mm, best_m)
    return best_r, best_i


def _cvcnn_kernel(xr_ref, xi_ref,
                  c1wt_ref, c1wb_ref, c1b_ref,
                  c2wt_ref, c2wb_ref, c2b_ref,
                  f1wt_ref, f1wb_ref, f1b_ref,
                  f2wt_ref, f2wb_ref, f2b_ref,
                  out_ref,
                  pr1_ref, pi1_ref, pr2_ref, pi2_ref, p2r_ref, p2i_ref):
    f32 = jnp.float32
    bf16 = jnp.bfloat16
    tb = xr_ref.shape[0]

    xr = xr_ref[...]                 # (tb, 4, 7, 28): phase-mod-4 rows of the 28x28 image
    xi = xi_ref[...]

    # ---- conv1 patch assembly (im2col, all in VMEM, static slices only) -----
    # Patch row (per image) = g*6 + u, g = 2*doh + a  -> conv1 row oh1 = 4u + 2a + doh.
    # Lanes = (kh, iw) = 140 (Toeplitz over the full input width).
    for doh in range(2):
        for a in range(2):
            g = 2 * doh + a
            for kh in range(5):
                m = 2 * a + doh + kh
                p4, uoff = m % 4, m // 4
                pr1_ref[:, g * 6:(g + 1) * 6, kh * 28:(kh + 1) * 28] = \
                    xr[:, p4, uoff:uoff + 6, :]
                pi1_ref[:, g * 6:(g + 1) * 6, kh * 28:(kh + 1) * 28] = \
                    xi[:, p4, uoff:uoff + 6, :]

    pr1 = pr1_ref[...].reshape(tb * 24, 140).astype(bf16)
    pi1 = pi1_ref[...].reshape(tb * 24, 140).astype(bf16)

    # conv1 (packed complex matmul) + bias + complex ReLU.
    # Output lanes: (part, dow, jow, c) = 2*2*12*30 = 1440.
    y1 = (jnp.dot(pr1, c1wt_ref[...], preferred_element_type=f32)
          + jnp.dot(pi1, c1wb_ref[...], preferred_element_type=f32)
          + c1b_ref[...])
    y1 = jnp.maximum(y1, 0.0).reshape(tb, 24, 1440)

    # ---- pool1: 2x2 max-|z|, corners are contiguous row/lane blocks ---------
    def _corner1(dh, dw):
        r = y1[:, dh * 12:(dh + 1) * 12, dw * 360:dw * 360 + 360]
        im = y1[:, dh * 12:(dh + 1) * 12, 720 + dw * 360:720 + dw * 360 + 360]
        return r, im

    # pool1 rows are parity-ordered: row a*6 + u holds output row i1 = 2u + a.
    pool1_r, pool1_i = _max_abs_select(_corner1)         # (tb, 12, 360)

    # ---- conv2 patch assembly ------------------------------------------------
    # Patch row (per image) = doh2*4 + ioh2 (oh2 = 2*ioh2 + doh2).
    # Lanes = (kh2, j1, cin) = 5*12*30 = 1800.
    for doh2 in range(2):
        for kh2 in range(5):
            a = (doh2 + kh2) % 2
            off = (doh2 + kh2) // 2
            rs = a * 6 + off
            pr2_ref[:, doh2 * 4:(doh2 + 1) * 4, kh2 * 360:(kh2 + 1) * 360] = \
                pool1_r[:, rs:rs + 4, :]
            pi2_ref[:, doh2 * 4:(doh2 + 1) * 4, kh2 * 360:(kh2 + 1) * 360] = \
                pool1_i[:, rs:rs + 4, :]

    pr2 = pr2_ref[...].reshape(tb * 8, 1800).astype(bf16)
    pi2 = pi2_ref[...].reshape(tb * 8, 1800).astype(bf16)

    # conv2 (packed complex matmul) + bias + complex ReLU.
    # Output lanes: (part, dow2, jow2, cout) = 2*2*4*15 = 240.
    y2 = (jnp.dot(pr2, c2wt_ref[...], preferred_element_type=f32)
          + jnp.dot(pi2, c2wb_ref[...], preferred_element_type=f32)
          + c2b_ref[...])
    y2 = jnp.maximum(y2, 0.0).reshape(tb, 8, 240)

    # ---- pool2 ----------------------------------------------------------------
    def _corner2(dh, dw):
        r = y2[:, dh * 4:(dh + 1) * 4, dw * 60:dw * 60 + 60]
        im = y2[:, dh * 4:(dh + 1) * 4, 120 + dw * 60:120 + dw * 60 + 60]
        return r, im

    pool2_r, pool2_i = _max_abs_select(_corner2)          # (tb, 4, 60)
    p2r_ref[...] = pool2_r
    p2i_ref[...] = pool2_i

    # ---- fc1 + complex ReLU: sum the 4 spatial-row blocks of the flatten ------
    # (the NCHW flatten permutation is already folded into the fc1 weight rows)
    acc = None
    for k in range(4):
        fr = p2r_ref[:, k, :].astype(bf16)                # (tb, 60)
        fi = p2i_ref[:, k, :].astype(bf16)
        part = (jnp.dot(fr, f1wt_ref[k * 60:(k + 1) * 60, :],
                        preferred_element_type=f32)
                + jnp.dot(fi, f1wb_ref[k * 60:(k + 1) * 60, :],
                          preferred_element_type=f32))
        acc = part if acc is None else acc + part
    h = jnp.maximum(acc + f1b_ref[...], 0.0)              # (tb, 256) = [re 128 | im 128]

    # ---- fc2 + |z| + log_softmax ----------------------------------------------
    hr = h[:, :128].astype(bf16)
    hi = h[:, 128:].astype(bf16)
    o = (jnp.dot(hr, f2wt_ref[...], preferred_element_type=f32)
         + jnp.dot(hi, f2wb_ref[...], preferred_element_type=f32)
         + f2b_ref[...])                                  # (tb, 20)
    yr = o[:, :10]
    yi = o[:, 10:]
    mag = jnp.sqrt(yr * yr + yi * yi)
    mx = jnp.max(mag, axis=-1, keepdims=True)
    s = mag - mx
    lse = jnp.log(jnp.sum(jnp.exp(s), axis=-1, keepdims=True))
    out_ref[...] = s - lse


# ----------------------------------------------------------------------------
# Forward wrapper (one pallas_call; only XLA work is the tiny input reshuffle).
# ----------------------------------------------------------------------------
@jax.jit
def cvcnn_forward(prep, xr, xi):
    """xr/xi: (B, 1, 28, 28) float32 (NCHW, like the PyTorch module) -> (B, 10)."""
    B = xr.shape[0]
    xr = xr.reshape(B, 28, 28)
    xi = xi.reshape(B, 28, 28)
    tb = _BATCH_TILE if B >= _BATCH_TILE else B
    bp = ((B + tb - 1) // tb) * tb
    if bp != B:
        pad = bp - B
        xr = jnp.concatenate([xr, jnp.zeros((pad, 28, 28), xr.dtype)], axis=0)
        xi = jnp.concatenate([xi, jnp.zeros((pad, 28, 28), xi.dtype)], axis=0)

    # Phase-decompose image rows mod 4 (xp[b, p, u, :] = x[b, 4u + p, :]) so all
    # in-kernel patch gathers are contiguous static slices.
    xr4 = xr.reshape(bp, 7, 4, 28).transpose(0, 2, 1, 3)
    xi4 = xi.reshape(bp, 7, 4, 28).transpose(0, 2, 1, 3)

    def wspec(shape):
        return pl.BlockSpec(shape, lambda i: (0, 0))

    out = pl.pallas_call(
        _cvcnn_kernel,
        out_shape=jax.ShapeDtypeStruct((bp, 10), jnp.float32),
        grid=(bp // tb,),
        in_specs=[
            pl.BlockSpec((tb, 4, 7, 28), lambda i: (i, 0, 0, 0)),
            pl.BlockSpec((tb, 4, 7, 28), lambda i: (i, 0, 0, 0)),
            wspec((140, 1440)), wspec((140, 1440)), wspec((1, 1440)),
            wspec((1800, 240)), wspec((1800, 240)), wspec((1, 240)),
            wspec((240, 256)), wspec((240, 256)), wspec((1, 256)),
            wspec((128, 20)), wspec((128, 20)), wspec((1, 20)),
        ],
        out_specs=pl.BlockSpec((tb, 10), lambda i: (i, 0)),
        scratch_shapes=[
            pltpu.VMEM((tb, 24, 140), jnp.float32),   # conv1 patches (real)
            pltpu.VMEM((tb, 24, 140), jnp.float32),   # conv1 patches (imag)
            pltpu.VMEM((tb, 8, 1800), jnp.float32),   # conv2 patches (real)
            pltpu.VMEM((tb, 8, 1800), jnp.float32),   # conv2 patches (imag)
            pltpu.VMEM((tb, 4, 60), jnp.float32),     # pool2 output (real)
            pltpu.VMEM((tb, 4, 60), jnp.float32),     # pool2 output (imag)
        ],
        compiler_params=pltpu.CompilerParams(
            dimension_semantics=("parallel",),
            vmem_limit_bytes=48 * 1024 * 1024,
        ),
    )(xr4, xi4,
      prep["c1wt"], prep["c1wb"], prep["c1b"],
      prep["c2wt"], prep["c2wb"], prep["c2b"],
      prep["f1wt"], prep["f1wb"], prep["f1b"],
      prep["f2wt"], prep["f2wb"], prep["f2b"])
    return out[:B]


if __name__ == "__main__":
    key = jax.random.PRNGKey(0)
    kp, kxr, kxi = jax.random.split(key, 3)
    params = init_params(kp)
    prep = prepare_params(params)    # one-time packing, hoisted out of forward

    # MNIST-like complex input: fc1 in-features (4*4*15) imply 28x28 spatial.
    B = 2
    x_real = jax.random.normal(kxr, (B, 1, 28, 28), jnp.float32)
    x_imag = jax.random.normal(kxi, (B, 1, 28, 28), jnp.float32)

    out = cvcnn_forward(prep, x_real, x_imag)
    out = jax.block_until_ready(out)
    assert out.shape == (B, 10)
    assert bool(jnp.all(jnp.isfinite(out)))
    print("KERNEL_OK")
</pallas_src>

<mosaic_0001>
module attributes {stable_mosaic.version = 11 : i64} {
  func.func @_cvcnn_kernel(%arg0: i32, %arg1: memref<2x4x7x28xf32, #tpu.memory_space<vmem>>, %arg2: memref<2x4x7x28xf32, #tpu.memory_space<vmem>>, %arg3: memref<140x1440xbf16, #tpu.memory_space<vmem>>, %arg4: memref<140x1440xbf16, #tpu.memory_space<vmem>>, %arg5: memref<1x1440xf32, #tpu.memory_space<vmem>>, %arg6: memref<1800x240xbf16, #tpu.memory_space<vmem>>, %arg7: memref<1800x240xbf16, #tpu.memory_space<vmem>>, %arg8: memref<1x240xf32, #tpu.memory_space<vmem>>, %arg9: memref<240x256xbf16, #tpu.memory_space<vmem>>, %arg10: memref<240x256xbf16, #tpu.memory_space<vmem>>, %arg11: memref<1x256xf32, #tpu.memory_space<vmem>>, %arg12: memref<128x20xbf16, #tpu.memory_space<vmem>>, %arg13: memref<128x20xbf16, #tpu.memory_space<vmem>>, %arg14: memref<1x20xf32, #tpu.memory_space<vmem>>, %arg15: memref<2x10xf32, #tpu.memory_space<vmem>>, %arg16: memref<2x24x140xf32, #tpu.memory_space<vmem>>, %arg17: memref<2x24x140xf32, #tpu.memory_space<vmem>>, %arg18: memref<2x8x1800xf32, #tpu.memory_space<vmem>>, %arg19: memref<2x8x1800xf32, #tpu.memory_space<vmem>>, %arg20: memref<2x4x60xf32, #tpu.memory_space<vmem>>, %arg21: memref<2x4x60xf32, #tpu.memory_space<vmem>>) attributes {dimension_semantics = [#tpu.dimension_semantics<parallel>], iteration_bounds = array<i64: 1>, scalar_prefetch = 0 : i64, scratch_operands = 6 : i64, tpu.core_type = #tpu.core_type<tc>, window_params = [{transform_indices = @transform_0, window_bounds = array<i64: 2, 4, 7, 28>}, {transform_indices = @transform_1, window_bounds = array<i64: 2, 4, 7, 28>}, {pipeline_mode = #tpu.pipeline_mode<synchronous>, transform_indices = @transform_2, window_bounds = array<i64: 140, 1440>}, {pipeline_mode = #tpu.pipeline_mode<synchronous>, transform_indices = @transform_3, window_bounds = array<i64: 140, 1440>}, {pipeline_mode = #tpu.pipeline_mode<synchronous>, transform_indices = @transform_4, window_bounds = array<i64: 1, 1440>}, {pipeline_mode = #tpu.pipeline_mode<synchronous>, transform_indices = @transform_5, window_bounds = array<i64: 1800, 240>}, {pipeline_mode = #tpu.pipeline_mode<synchronous>, transform_indices = @transform_6, window_bounds = array<i64: 1800, 240>}, {pipeline_mode = #tpu.pipeline_mode<synchronous>, transform_indices = @transform_7, window_bounds = array<i64: 1, 240>}, {pipeline_mode = #tpu.pipeline_mode<synchronous>, transform_indices = @transform_8, window_bounds = array<i64: 240, 256>}, {pipeline_mode = #tpu.pipeline_mode<synchronous>, transform_indices = @transform_9, window_bounds = array<i64: 240, 256>}, {pipeline_mode = #tpu.pipeline_mode<synchronous>, transform_indices = @transform_10, window_bounds = array<i64: 1, 256>}, {pipeline_mode = #tpu.pipeline_mode<synchronous>, transform_indices = @transform_11, window_bounds = array<i64: 128, 20>}, {pipeline_mode = #tpu.pipeline_mode<synchronous>, transform_indices = @transform_12, window_bounds = array<i64: 128, 20>}, {pipeline_mode = #tpu.pipeline_mode<synchronous>, transform_indices = @transform_13, window_bounds = array<i64: 1, 20>}, {transform_indices = @transform_14, window_bounds = array<i64: 2, 10>}]} {
    %c0 = arith.constant 0 : index
    %c0_0 = arith.constant 0 : index
    %c0_1 = arith.constant 0 : index
    %c0_2 = arith.constant 0 : index
    %0 = vector.load %arg1[%c0, %c0_0, %c0_1, %c0_2] : memref<2x4x7x28xf32, #tpu.memory_space<vmem>>, vector<2x4x7x28xf32>
    %c0_3 = arith.constant 0 : index
    %c0_4 = arith.constant 0 : index
    %c0_5 = arith.constant 0 : index
    %c0_6 = arith.constant 0 : index
    %1 = vector.load %arg2[%c0_3, %c0_4, %c0_5, %c0_6] : memref<2x4x7x28xf32, #tpu.memory_space<vmem>>, vector<2x4x7x28xf32>
    %2 = vector.extract_strided_slice %0 {offsets = [0, 0, 0, 0], sizes = [2, 1, 6, 28], strides = [1, 1, 1, 1]} : vector<2x4x7x28xf32> to vector<2x1x6x28xf32>
    %3 = vector.shape_cast %2 : vector<2x1x6x28xf32> to vector<2x6x28xf32>
    %c0_7 = arith.constant 0 : index
    %c0_8 = arith.constant 0 : index
    %c0_9 = arith.constant 0 : index
    %4 = vector.load %arg16[%c0_7, %c0_8, %c0_9] : memref<2x24x140xf32, #tpu.memory_space<vmem>>, vector<2x6x28xf32>
    tpu.vector_store %arg16[%c0_7, %c0_8, %c0_9], %3 {strides = array<i32>} : memref<2x24x140xf32, #tpu.memory_space<vmem>>, vector<2x6x28xf32>,
    %5 = vector.extract_strided_slice %1 {offsets = [0, 0, 0, 0], sizes = [2, 1, 6, 28], strides = [1, 1, 1, 1]} : vector<2x4x7x28xf32> to vector<2x1x6x28xf32>
    %6 = vector.shape_cast %5 : vector<2x1x6x28xf32> to vector<2x6x28xf32>
    %c0_10 = arith.constant 0 : index
    %c0_11 = arith.constant 0 : index
    %c0_12 = arith.constant 0 : index
    %7 = vector.load %arg17[%c0_10, %c0_11, %c0_12] : memref<2x24x140xf32, #tpu.memory_space<vmem>>, vector<2x6x28xf32>
    tpu.vector_store %arg17[%c0_10, %c0_11, %c0_12], %6 {strides = array<i32>} : memref<2x24x140xf32, #tpu.memory_space<vmem>>, vector<2x6x28xf32>,
    %8 = vector.extract_strided_slice %0 {offsets = [0, 1, 0, 0], sizes = [2, 1, 6, 28], strides = [1, 1, 1, 1]} : vector<2x4x7x28xf32> to vector<2x1x6x28xf32>
    %9 = vector.shape_cast %8 : vector<2x1x6x28xf32> to vector<2x6x28xf32>
    %c0_13 = arith.constant 0 : index
    %c0_14 = arith.constant 0 : index
    %c28 = arith.constant 28 : index
    %10 = vector.load %arg16[%c0_13, %c0_14, %c28] : memref<2x24x140xf32, #tpu.memory_space<vmem>>, vector<2x6x28xf32>
    tpu.vector_store %arg16[%c0_13, %c0_14, %c28], %9 {strides = array<i32>} : memref<2x24x140xf32, #tpu.memory_space<vmem>>, vector<2x6x28xf32>,
    %11 = vector.extract_strided_slice %1 {offsets = [0, 1, 0, 0], sizes = [2, 1, 6, 28], strides = [1, 1, 1, 1]} : vector<2x4x7x28xf32> to vector<2x1x6x28xf32>
    %12 = vector.shape_cast %11 : vector<2x1x6x28xf32> to vector<2x6x28xf32>
    %c0_15 = arith.constant 0 : index
    %c0_16 = arith.constant 0 : index
    %c28_17 = arith.constant 28 : index
    %13 = vector.load %arg17[%c0_15, %c0_16, %c28_17] : memref<2x24x140xf32, #tpu.memory_space<vmem>>, vector<2x6x28xf32>
    tpu.vector_store %arg17[%c0_15, %c0_16, %c28_17], %12 {strides = array<i32>} : memref<2x24x140xf32, #tpu.memory_space<vmem>>, vector<2x6x28xf32>,
    %14 = vector.extract_strided_slice %0 {offsets = [0, 2, 0, 0], sizes = [2, 1, 6, 28], strides = [1, 1, 1, 1]} : vector<2x4x7x28xf32> to vector<2x1x6x28xf32>
    %15 = vector.shape_cast %14 : vector<2x1x6x28xf32> to vector<2x6x28xf32>
    %c0_18 = arith.constant 0 : index
    %c0_19 = arith.constant 0 : index
    %c56 = arith.constant 56 : index
    %16 = vector.load %arg16[%c0_18, %c0_19, %c56] : memref<2x24x140xf32, #tpu.memory_space<vmem>>, vector<2x6x28xf32>
    tpu.vector_store %arg16[%c0_18, %c0_19, %c56], %15 {strides = array<i32>} : memref<2x24x140xf32, #tpu.memory_space<vmem>>, vector<2x6x28xf32>,
    %17 = vector.extract_strided_slice %1 {offsets = [0, 2, 0, 0], sizes = [2, 1, 6, 28], strides = [1, 1, 1, 1]} : vector<2x4x7x28xf32> to vector<2x1x6x28xf32>
    %18 = vector.shape_cast %17 : vector<2x1x6x28xf32> to vector<2x6x28xf32>
    %c0_20 = arith.constant 0 : index
    %c0_21 = arith.constant 0 : index
    %c56_22 = arith.constant 56 : index
    %19 = vector.load %arg17[%c0_20, %c0_21, %c56_22] : memref<2x24x140xf32, #tpu.memory_space<vmem>>, vector<2x6x28xf32>
    tpu.vector_store %arg17[%c0_20, %c0_21, %c56_22], %18 {strides = array<i32>} : memref<2x24x140xf32, #tpu.memory_space<vmem>>, vector<2x6x28xf32>,
    %20 = vector.extract_strided_slice %0 {offsets = [0, 3, 0, 0], sizes = [2, 1, 6, 28], strides = [1, 1, 1, 1]} : vector<2x4x7x28xf32> to vector<2x1x6x28xf32>
    %21 = vector.shape_cast %20 : vector<2x1x6x28xf32> to vector<2x6x28xf32>
    %c0_23 = arith.constant 0 : index
    %c0_24 = arith.constant 0 : index
    %c84 = arith.constant 84 : index
    %22 = vector.load %arg16[%c0_23, %c0_24, %c84] : memref<2x24x140xf32, #tpu.memory_space<vmem>>, vector<2x6x28xf32>
    tpu.vector_store %arg16[%c0_23, %c0_24, %c84], %21 {strides = array<i32>} : memref<2x24x140xf32, #tpu.memory_space<vmem>>, vector<2x6x28xf32>,
    %23 = vector.extract_strided_slice %1 {offsets = [0, 3, 0, 0], sizes = [2, 1, 6, 28], strides = [1, 1, 1, 1]} : vector<2x4x7x28xf32> to vector<2x1x6x28xf32>
    %24 = vector.shape_cast %23 : vector<2x1x6x28xf32> to vector<2x6x28xf32>
    %c0_25 = arith.constant 0 : index
    %c0_26 = arith.constant 0 : index
    %c84_27 = arith.constant 84 : index
    %25 = vector.load %arg17[%c0_25, %c0_26, %c84_27] : memref<2x24x140xf32, #tpu.memory_space<vmem>>, vector<2x6x28xf32>
    tpu.vector_store %arg17[%c0_25, %c0_26, %c84_27], %24 {strides = array<i32>} : memref<2x24x140xf32, #tpu.memory_space<vmem>>, vector<2x6x28xf32>,
    %26 = vector.extract_strided_slice %0 {offsets = [0, 0, 1, 0], sizes = [2, 1, 6, 28], strides = [1, 1, 1, 1]} : vector<2x4x7x28xf32> to vector<2x1x6x28xf32>
    %27 = vector.shape_cast %26 : vector<2x1x6x28xf32> to vector<2x6x28xf32>
    %c0_28 = arith.constant 0 : index
    %c0_29 = arith.constant 0 : index
    %c112 = arith.constant 112 : index
    %28 = vector.load %arg16[%c0_28, %c0_29, %c112] : memref<2x24x140xf32, #tpu.memory_space<vmem>>, vector<2x6x28xf32>
    tpu.vector_store %arg16[%c0_28, %c0_29, %c112], %27 {strides = array<i32>} : memref<2x24x140xf32, #tpu.memory_space<vmem>>, vector<2x6x28xf32>,
    %29 = vector.extract_strided_slice %1 {offsets = [0, 0, 1, 0], sizes = [2, 1, 6, 28], strides = [1, 1, 1, 1]} : vector<2x4x7x28xf32> to vector<2x1x6x28xf32>
    %30 = vector.shape_cast %29 : vector<2x1x6x28xf32> to vector<2x6x28xf32>
    %c0_30 = arith.constant 0 : index
    %c0_31 = arith.constant 0 : index
    %c112_32 = arith.constant 112 : index
    %31 = vector.load %arg17[%c0_30, %c0_31, %c112_32] : memref<2x24x140xf32, #tpu.memory_space<vmem>>, vector<2x6x28xf32>
    tpu.vector_store %arg17[%c0_30, %c0_31, %c112_32], %30 {strides = array<i32>} : memref<2x24x140xf32, #tpu.memory_space<vmem>>, vector<2x6x28xf32>,
    %32 = vector.extract_strided_slice %0 {offsets = [0, 2, 0, 0], sizes = [2, 1, 6, 28], strides = [1, 1, 1, 1]} : vector<2x4x7x28xf32> to vector<2x1x6x28xf32>
    %33 = vector.shape_cast %32 : vector<2x1x6x28xf32> to vector<2x6x28xf32>
    %c0_33 = arith.constant 0 : index
    %c6 = arith.constant 6 : index
    %c0_34 = arith.constant 0 : index
    %34 = vector.load %arg16[%c0_33, %c6, %c0_34] : memref<2x24x140xf32, #tpu.memory_space<vmem>>, vector<2x6x28xf32>
    tpu.vector_store %arg16[%c0_33, %c6, %c0_34], %33 {strides = array<i32>} : memref<2x24x140xf32, #tpu.memory_space<vmem>>, vector<2x6x28xf32>,
    %35 = vector.extract_strided_slice %1 {offsets = [0, 2, 0, 0], sizes = [2, 1, 6, 28], strides = [1, 1, 1, 1]} : vector<2x4x7x28xf32> to vector<2x1x6x28xf32>
    %36 = vector.shape_cast %35 : vector<2x1x6x28xf32> to vector<2x6x28xf32>
    %c0_35 = arith.constant 0 : index
    %c6_36 = arith.constant 6 : index
    %c0_37 = arith.constant 0 : index
    %37 = vector.load %arg17[%c0_35, %c6_36, %c0_37] : memref<2x24x140xf32, #tpu.memory_space<vmem>>, vector<2x6x28xf32>
    tpu.vector_store %arg17[%c0_35, %c6_36, %c0_37], %36 {strides = array<i32>} : memref<2x24x140xf32, #tpu.memory_space<vmem>>, vector<2x6x28xf32>,
    %38 = vector.extract_strided_slice %0 {offsets = [0, 3, 0, 0], sizes = [2, 1, 6, 28], strides = [1, 1, 1, 1]} : vector<2x4x7x28xf32> to vector<2x1x6x28xf32>
    %39 = vector.shape_cast %38 : vector<2x1x6x28xf32> to vector<2x6x28xf32>
    %c0_38 = arith.constant 0 : index
    %c6_39 = arith.constant 6 : index
    %c28_40 = arith.constant 28 : index
    %40 = vector.load %arg16[%c0_38, %c6_39, %c28_40] : memref<2x24x140xf32, #tpu.memory_space<vmem>>, vector<2x6x28xf32>
    tpu.vector_store %arg16[%c0_38, %c6_39, %c28_40], %39 {strides = array<i32>} : memref<2x24x140xf32, #tpu.memory_space<vmem>>, vector<2x6x28xf32>,
    %41 = vector.extract_strided_slice %1 {offsets = [0, 3, 0, 0], sizes = [2, 1, 6, 28], strides = [1, 1, 1, 1]} : vector<2x4x7x28xf32> to vector<2x1x6x28xf32>
    %42 = vector.shape_cast %41 : vector<2x1x6x28xf32> to vector<2x6x28xf32>
    %c0_41 = arith.constant 0 : index
    %c6_42 = arith.constant 6 : index
    %c28_43 = arith.constant 28 : index
    %43 = vector.load %arg17[%c0_41, %c6_42, %c28_43] : memref<2x24x140xf32, #tpu.memory_space<vmem>>, vector<2x6x28xf32>
    tpu.vector_store %arg17[%c0_41, %c6_42, %c28_43], %42 {strides = array<i32>} : memref<2x24x140xf32, #tpu.memory_space<vmem>>, vector<2x6x28xf32>,
    %44 = vector.extract_strided_slice %0 {offsets = [0, 0, 1, 0], sizes = [2, 1, 6, 28], strides = [1, 1, 1, 1]} : vector<2x4x7x28xf32> to vector<2x1x6x28xf32>
    %45 = vector.shape_cast %44 : vector<2x1x6x28xf32> to vector<2x6x28xf32>
    %c0_44 = arith.constant 0 : index
    %c6_45 = arith.constant 6 : index
    %c56_46 = arith.constant 56 : index
    %46 = vector.load %arg16[%c0_44, %c6_45, %c56_46] : memref<2x24x140xf32, #tpu.memory_space<vmem>>, vector<2x6x28xf32>
    tpu.vector_store %arg16[%c0_44, %c6_45, %c56_46], %45 {strides = array<i32>} : memref<2x24x140xf32, #tpu.memory_space<vmem>>, vector<2x6x28xf32>,
    %47 = vector.extract_strided_slice %1 {offsets = [0, 0, 1, 0], sizes = [2, 1, 6, 28], strides = [1, 1, 1, 1]} : vector<2x4x7x28xf32> to vector<2x1x6x28xf32>
    %48 = vector.shape_cast %47 : vector<2x1x6x28xf32> to vector<2x6x28xf32>
    %c0_47 = arith.constant 0 : index
    %c6_48 = arith.constant 6 : index
    %c56_49 = arith.constant 56 : index
    %49 = vector.load %arg17[%c0_47, %c6_48, %c56_49] : memref<2x24x140xf32, #tpu.memory_space<vmem>>, vector<2x6x28xf32>
    tpu.vector_store %arg17[%c0_47, %c6_48, %c56_49], %48 {strides = array<i32>} : memref<2x24x140xf32, #tpu.memory_space<vmem>>, vector<2x6x28xf32>,
    %50 = vector.extract_strided_slice %0 {offsets = [0, 1, 1, 0], sizes = [2, 1, 6, 28], strides = [1, 1, 1, 1]} : vector<2x4x7x28xf32> to vector<2x1x6x28xf32>
    %51 = vector.shape_cast %50 : vector<2x1x6x28xf32> to vector<2x6x28xf32>
    %c0_50 = arith.constant 0 : index
    %c6_51 = arith.constant 6 : index
    %c84_52 = arith.constant 84 : index
    %52 = vector.load %arg16[%c0_50, %c6_51, %c84_52] : memref<2x24x140xf32, #tpu.memory_space<vmem>>, vector<2x6x28xf32>
    tpu.vector_store %arg16[%c0_50, %c6_51, %c84_52], %51 {strides = array<i32>} : memref<2x24x140xf32, #tpu.memory_space<vmem>>, vector<2x6x28xf32>,
    %53 = vector.extract_strided_slice %1 {offsets = [0, 1, 1, 0], sizes = [2, 1, 6, 28], strides = [1, 1, 1, 1]} : vector<2x4x7x28xf32> to vector<2x1x6x28xf32>
    %54 = vector.shape_cast %53 : vector<2x1x6x28xf32> to vector<2x6x28xf32>
    %c0_53 = arith.constant 0 : index
    %c6_54 = arith.constant 6 : index
    %c84_55 = arith.constant 84 : index
    %55 = vector.load %arg17[%c0_53, %c6_54, %c84_55] : memref<2x24x140xf32, #tpu.memory_space<vmem>>, vector<2x6x28xf32>
    tpu.vector_store %arg17[%c0_53, %c6_54, %c84_55], %54 {strides = array<i32>} : memref<2x24x140xf32, #tpu.memory_space<vmem>>, vector<2x6x28xf32>,
    %56 = vector.extract_strided_slice %0 {offsets = [0, 2, 1, 0], sizes = [2, 1, 6, 28], strides = [1, 1, 1, 1]} : vector<2x4x7x28xf32> to vector<2x1x6x28xf32>
    %57 = vector.shape_cast %56 : vector<2x1x6x28xf32> to vector<2x6x28xf32>
    %c0_56 = arith.constant 0 : index
    %c6_57 = arith.constant 6 : index
    %c112_58 = arith.constant 112 : index
    %58 = vector.load %arg16[%c0_56, %c6_57, %c112_58] : memref<2x24x140xf32, #tpu.memory_space<vmem>>, vector<2x6x28xf32>
    tpu.vector_store %arg16[%c0_56, %c6_57, %c112_58], %57 {strides = array<i32>} : memref<2x24x140xf32, #tpu.memory_space<vmem>>, vector<2x6x28xf32>,
    %59 = vector.extract_strided_slice %1 {offsets = [0, 2, 1, 0], sizes = [2, 1, 6, 28], strides = [1, 1, 1, 1]} : vector<2x4x7x28xf32> to vector<2x1x6x28xf32>
    %60 = vector.shape_cast %59 : vector<2x1x6x28xf32> to vector<2x6x28xf32>
    %c0_59 = arith.constant 0 : index
    %c6_60 = arith.constant 6 : index
    %c112_61 = arith.constant 112 : index
    %61 = vector.load %arg17[%c0_59, %c6_60, %c112_61] : memref<2x24x140xf32, #tpu.memory_space<vmem>>, vector<2x6x28xf32>
    tpu.vector_store %arg17[%c0_59, %c6_60, %c112_61], %60 {strides = array<i32>} : memref<2x24x140xf32, #tpu.memory_space<vmem>>, vector<2x6x28xf32>,
    %62 = vector.extract_strided_slice %0 {offsets = [0, 1, 0, 0], sizes = [2, 1, 6, 28], strides = [1, 1, 1, 1]} : vector<2x4x7x28xf32> to vector<2x1x6x28xf32>
    %63 = vector.shape_cast %62 : vector<2x1x6x28xf32> to vector<2x6x28xf32>
    %c0_62 = arith.constant 0 : index
    %c12 = arith.constant 12 : index
    %c0_63 = arith.constant 0 : index
    %64 = vector.load %arg16[%c0_62, %c12, %c0_63] : memref<2x24x140xf32, #tpu.memory_space<vmem>>, vector<2x6x28xf32>
    tpu.vector_store %arg16[%c0_62, %c12, %c0_63], %63 {strides = array<i32>} : memref<2x24x140xf32, #tpu.memory_space<vmem>>, vector<2x6x28xf32>,
    %65 = vector.extract_strided_slice %1 {offsets = [0, 1, 0, 0], sizes = [2, 1, 6, 28], strides = [1, 1, 1, 1]} : vector<2x4x7x28xf32> to vector<2x1x6x28xf32>
    %66 = vector.shape_cast %65 : vector<2x1x6x28xf32> to vector<2x6x28xf32>
    %c0_64 = arith.constant 0 : index
    %c12_65 = arith.constant 12 : index
    %c0_66 = arith.constant 0 : index
    %67 = vector.load %arg17[%c0_64, %c12_65, %c0_66] : memref<2x24x140xf32, #tpu.memory_space<vmem>>, vector<2x6x28xf32>
    tpu.vector_store %arg17[%c0_64, %c12_65, %c0_66], %66 {strides = array<i32>} : memref<2x24x140xf32, #tpu.memory_space<vmem>>, vector<2x6x28xf32>,
    %68 = vector.extract_strided_slice %0 {offsets = [0, 2, 0, 0], sizes = [2, 1, 6, 28], strides = [1, 1, 1, 1]} : vector<2x4x7x28xf32> to vector<2x1x6x28xf32>
    %69 = vector.shape_cast %68 : vector<2x1x6x28xf32> to vector<2x6x28xf32>
    %c0_67 = arith.constant 0 : index
    %c12_68 = arith.constant 12 : index
    %c28_69 = arith.constant 28 : index
    %70 = vector.load %arg16[%c0_67, %c12_68, %c28_69] : memref<2x24x140xf32, #tpu.memory_space<vmem>>, vector<2x6x28xf32>
    tpu.vector_store %arg16[%c0_67, %c12_68, %c28_69], %69 {strides = array<i32>} : memref<2x24x140xf32, #tpu.memory_space<vmem>>, vector<2x6x28xf32>,
    %71 = vector.extract_strided_slice %1 {offsets = [0, 2, 0, 0], sizes = [2, 1, 6, 28], strides = [1, 1, 1, 1]} : vector<2x4x7x28xf32> to vector<2x1x6x28xf32>
    %72 = vector.shape_cast %71 : vector<2x1x6x28xf32> to vector<2x6x28xf32>
    %c0_70 = arith.constant 0 : index
    %c12_71 = arith.constant 12 : index
    %c28_72 = arith.constant 28 : index
    %73 = vector.load %arg17[%c0_70, %c12_71, %c28_72] : memref<2x24x140xf32, #tpu.memory_space<vmem>>, vector<2x6x28xf32>
    tpu.vector_store %arg17[%c0_70, %c12_71, %c28_72], %72 {strides = array<i32>} : memref<2x24x140xf32, #tpu.memory_space<vmem>>, vector<2x6x28xf32>,
    %74 = vector.extract_strided_slice %0 {offsets = [0, 3, 0, 0], sizes = [2, 1, 6, 28], strides = [1, 1, 1, 1]} : vector<2x4x7x28xf32> to vector<2x1x6x28xf32>
    %75 = vector.shape_cast %74 : vector<2x1x6x28xf32> to vector<2x6x28xf32>
    %c0_73 = arith.constant 0 : index
    %c12_74 = arith.constant 12 : index
    %c56_75 = arith.constant 56 : index
    %76 = vector.load %arg16[%c0_73, %c12_74, %c56_75] : memref<2x24x140xf32, #tpu.memory_space<vmem>>, vector<2x6x28xf32>
    tpu.vector_store %arg16[%c0_73, %c12_74, %c56_75], %75 {strides = array<i32>} : memref<2x24x140xf32, #tpu.memory_space<vmem>>, vector<2x6x28xf32>,
    %77 = vector.extract_strided_slice %1 {offsets = [0, 3, 0, 0], sizes = [2, 1, 6, 28], strides = [1, 1, 1, 1]} : vector<2x4x7x28xf32> to vector<2x1x6x28xf32>
    %78 = vector.shape_cast %77 : vector<2x1x6x28xf32> to vector<2x6x28xf32>
    %c0_76 = arith.constant 0 : index
    %c12_77 = arith.constant 12 : index
    %c56_78 = arith.constant 56 : index
    %79 = vector.load %arg17[%c0_76, %c12_77, %c56_78] : memref<2x24x140xf32, #tpu.memory_space<vmem>>, vector<2x6x28xf32>
    tpu.vector_store %arg17[%c0_76, %c12_77, %c56_78], %78 {strides = array<i32>} : memref<2x24x140xf32, #tpu.memory_space<vmem>>, vector<2x6x28xf32>,
    %80 = vector.extract_strided_slice %0 {offsets = [0, 0, 1, 0], sizes = [2, 1, 6, 28], strides = [1, 1, 1, 1]} : vector<2x4x7x28xf32> to vector<2x1x6x28xf32>
    %81 = vector.shape_cast %80 : vector<2x1x6x28xf32> to vector<2x6x28xf32>
    %c0_79 = arith.constant 0 : index
    %c12_80 = arith.constant 12 : index
    %c84_81 = arith.constant 84 : index
    %82 = vector.load %arg16[%c0_79, %c12_80, %c84_81] : memref<2x24x140xf32, #tpu.memory_space<vmem>>, vector<2x6x28xf32>
    tpu.vector_store %arg16[%c0_79, %c12_80, %c84_81], %81 {strides = array<i32>} : memref<2x24x140xf32, #tpu.memory_space<vmem>>, vector<2x6x28xf32>,
    %83 = vector.extract_strided_slice %1 {offsets = [0, 0, 1, 0], sizes = [2, 1, 6, 28], strides = [1, 1, 1, 1]} : vector<2x4x7x28xf32> to vector<2x1x6x28xf32>
    %84 = vector.shape_cast %83 : vector<2x1x6x28xf32> to vector<2x6x28xf32>
    %c0_82 = arith.constant 0 : index
    %c12_83 = arith.constant 12 : index
    %c84_84 = arith.constant 84 : index
    %85 = vector.load %arg17[%c0_82, %c12_83, %c84_84] : memref<2x24x140xf32, #tpu.memory_space<vmem>>, vector<2x6x28xf32>
    tpu.vector_store %arg17[%c0_82, %c12_83, %c84_84], %84 {strides = array<i32>} : memref<2x24x140xf32, #tpu.memory_space<vmem>>, vector<2x6x28xf32>,
    %86 = vector.extract_strided_slice %0 {offsets = [0, 1, 1, 0], sizes = [2, 1, 6, 28], strides = [1, 1, 1, 1]} : vector<2x4x7x28xf32> to vector<2x1x6x28xf32>
    %87 = vector.shape_cast %86 : vector<2x1x6x28xf32> to vector<2x6x28xf32>
    %c0_85 = arith.constant 0 : index
    %c12_86 = arith.constant 12 : index
    %c112_87 = arith.constant 112 : index
    %88 = vector.load %arg16[%c0_85, %c12_86, %c112_87] : memref<2x24x140xf32, #tpu.memory_space<vmem>>, vector<2x6x28xf32>
    tpu.vector_store %arg16[%c0_85, %c12_86, %c112_87], %87 {strides = array<i32>} : memref<2x24x140xf32, #tpu.memory_space<vmem>>, vector<2x6x28xf32>,
    %89 = vector.extract_strided_slice %1 {offsets = [0, 1, 1, 0], sizes = [2, 1, 6, 28], strides = [1, 1, 1, 1]} : vector<2x4x7x28xf32> to vector<2x1x6x28xf32>
    %90 = vector.shape_cast %89 : vector<2x1x6x28xf32> to vector<2x6x28xf32>
    %c0_88 = arith.constant 0 : index
    %c12_89 = arith.constant 12 : index
    %c112_90 = arith.constant 112 : index
    %91 = vector.load %arg17[%c0_88, %c12_89, %c112_90] : memref<2x24x140xf32, #tpu.memory_space<vmem>>, vector<2x6x28xf32>
    tpu.vector_store %arg17[%c0_88, %c12_89, %c112_90], %90 {strides = array<i32>} : memref<2x24x140xf32, #tpu.memory_space<vmem>>, vector<2x6x28xf32>,
    %92 = vector.extract_strided_slice %0 {offsets = [0, 3, 0, 0], sizes = [2, 1, 6, 28], strides = [1, 1, 1, 1]} : vector<2x4x7x28xf32> to vector<2x1x6x28xf32>
    %93 = vector.shape_cast %92 : vector<2x1x6x28xf32> to vector<2x6x28xf32>
    %c0_91 = arith.constant 0 : index
    %c18 = arith.constant 18 : index
    %c0_92 = arith.constant 0 : index
    %94 = vector.load %arg16[%c0_91, %c18, %c0_92] : memref<2x24x140xf32, #tpu.memory_space<vmem>>, vector<2x6x28xf32>
    tpu.vector_store %arg16[%c0_91, %c18, %c0_92], %93 {strides = array<i32>} : memref<2x24x140xf32, #tpu.memory_space<vmem>>, vector<2x6x28xf32>,
    %95 = vector.extract_strided_slice %1 {offsets = [0, 3, 0, 0], sizes = [2, 1, 6, 28], strides = [1, 1, 1, 1]} : vector<2x4x7x28xf32> to vector<2x1x6x28xf32>
    %96 = vector.shape_cast %95 : vector<2x1x6x28xf32> to vector<2x6x28xf32>
    %c0_93 = arith.constant 0 : index
    %c18_94 = arith.constant 18 : index
    %c0_95 = arith.constant 0 : index
    %97 = vector.load %arg17[%c0_93, %c18_94, %c0_95] : memref<2x24x140xf32, #tpu.memory_space<vmem>>, vector<2x6x28xf32>
    tpu.vector_store %arg17[%c0_93, %c18_94, %c0_95], %96 {strides = array<i32>} : memref<2x24x140xf32, #tpu.memory_space<vmem>>, vector<2x6x28xf32>,
    %98 = vector.extract_strided_slice %0 {offsets = [0, 0, 1, 0], sizes = [2, 1, 6, 28], strides = [1, 1, 1, 1]} : vector<2x4x7x28xf32> to vector<2x1x6x28xf32>
    %99 = vector.shape_cast %98 : vector<2x1x6x28xf32> to vector<2x6x28xf32>
    %c0_96 = arith.constant 0 : index
    %c18_97 = arith.constant 18 : index
    %c28_98 = arith.constant 28 : index
    %100 = vector.load %arg16[%c0_96, %c18_97, %c28_98] : memref<2x24x140xf32, #tpu.memory_space<vmem>>, vector<2x6x28xf32>
    tpu.vector_store %arg16[%c0_96, %c18_97, %c28_98], %99 {strides = array<i32>} : memref<2x24x140xf32, #tpu.memory_space<vmem>>, vector<2x6x28xf32>,
    %101 = vector.extract_strided_slice %1 {offsets = [0, 0, 1, 0], sizes = [2, 1, 6, 28], strides = [1, 1, 1, 1]} : vector<2x4x7x28xf32> to vector<2x1x6x28xf32>
    %102 = vector.shape_cast %101 : vector<2x1x6x28xf32> to vector<2x6x28xf32>
    %c0_99 = arith.constant 0 : index
    %c18_100 = arith.constant 18 : index
    %c28_101 = arith.constant 28 : index
    %103 = vector.load %arg17[%c0_99, %c18_100, %c28_101] : memref<2x24x140xf32, #tpu.memory_space<vmem>>, vector<2x6x28xf32>
    tpu.vector_store %arg17[%c0_99, %c18_100, %c28_101], %102 {strides = array<i32>} : memref<2x24x140xf32, #tpu.memory_space<vmem>>, vector<2x6x28xf32>,
    %104 = vector.extract_strided_slice %0 {offsets = [0, 1, 1, 0], sizes = [2, 1, 6, 28], strides = [1, 1, 1, 1]} : vector<2x4x7x28xf32> to vector<2x1x6x28xf32>
    %105 = vector.shape_cast %104 : vector<2x1x6x28xf32> to vector<2x6x28xf32>
    %c0_102 = arith.constant 0 : index
    %c18_103 = arith.constant 18 : index
    %c56_104 = arith.constant 56 : index
    %106 = vector.load %arg16[%c0_102, %c18_103, %c56_104] : memref<2x24x140xf32, #tpu.memory_space<vmem>>, vector<2x6x28xf32>
    tpu.vector_store %arg16[%c0_102, %c18_103, %c56_104], %105 {strides = array<i32>} : memref<2x24x140xf32, #tpu.memory_space<vmem>>, vector<2x6x28xf32>,
    %107 = vector.extract_strided_slice %1 {offsets = [0, 1, 1, 0], sizes = [2, 1, 6, 28], strides = [1, 1, 1, 1]} : vector<2x4x7x28xf32> to vector<2x1x6x28xf32>
    %108 = vector.shape_cast %107 : vector<2x1x6x28xf32> to vector<2x6x28xf32>
    %c0_105 = arith.constant 0 : index
    %c18_106 = arith.constant 18 : index
    %c56_107 = arith.constant 56 : index
    %109 = vector.load %arg17[%c0_105, %c18_106, %c56_107] : memref<2x24x140xf32, #tpu.memory_space<vmem>>, vector<2x6x28xf32>
    tpu.vector_store %arg17[%c0_105, %c18_106, %c56_107], %108 {strides = array<i32>} : memref<2x24x140xf32, #tpu.memory_space<vmem>>, vector<2x6x28xf32>,
    %110 = vector.extract_strided_slice %0 {offsets = [0, 2, 1, 0], sizes = [2, 1, 6, 28], strides = [1, 1, 1, 1]} : vector<2x4x7x28xf32> to vector<2x1x6x28xf32>
    %111 = vector.shape_cast %110 : vector<2x1x6x28xf32> to vector<2x6x28xf32>
    %c0_108 = arith.constant 0 : index
    %c18_109 = arith.constant 18 : index
    %c84_110 = arith.constant 84 : index
    %112 = vector.load %arg16[%c0_108, %c18_109, %c84_110] : memref<2x24x140xf32, #tpu.memory_space<vmem>>, vector<2x6x28xf32>
    tpu.vector_store %arg16[%c0_108, %c18_109, %c84_110], %111 {strides = array<i32>} : memref<2x24x140xf32, #tpu.memory_space<vmem>>, vector<2x6x28xf32>,
    %113 = vector.extract_strided_slice %1 {offsets = [0, 2, 1, 0], sizes = [2, 1, 6, 28], strides = [1, 1, 1, 1]} : vector<2x4x7x28xf32> to vector<2x1x6x28xf32>
    %114 = vector.shape_cast %113 : vector<2x1x6x28xf32> to vector<2x6x28xf32>
    %c0_111 = arith.constant 0 : index
    %c18_112 = arith.constant 18 : index
    %c84_113 = arith.constant 84 : index
    %115 = vector.load %arg17[%c0_111, %c18_112, %c84_113] : memref<2x24x140xf32, #tpu.memory_space<vmem>>, vector<2x6x28xf32>
    tpu.vector_store %arg17[%c0_111, %c18_112, %c84_113], %114 {strides = array<i32>} : memref<2x24x140xf32, #tpu.memory_space<vmem>>, vector<2x6x28xf32>,
    %116 = vector.extract_strided_slice %0 {offsets = [0, 3, 1, 0], sizes = [2, 1, 6, 28], strides = [1, 1, 1, 1]} : vector<2x4x7x28xf32> to vector<2x1x6x28xf32>
    %117 = vector.shape_cast %116 : vector<2x1x6x28xf32> to vector<2x6x28xf32>
    %c0_114 = arith.constant 0 : index
    %c18_115 = arith.constant 18 : index
    %c112_116 = arith.constant 112 : index
    %118 = vector.load %arg16[%c0_114, %c18_115, %c112_116] : memref<2x24x140xf32, #tpu.memory_space<vmem>>, vector<2x6x28xf32>
    tpu.vector_store %arg16[%c0_114, %c18_115, %c112_116], %117 {strides = array<i32>} : memref<2x24x140xf32, #tpu.memory_space<vmem>>, vector<2x6x28xf32>,
    %119 = vector.extract_strided_slice %1 {offsets = [0, 3, 1, 0], sizes = [2, 1, 6, 28], strides = [1, 1, 1, 1]} : vector<2x4x7x28xf32> to vector<2x1x6x28xf32>
    %120 = vector.shape_cast %119 : vector<2x1x6x28xf32> to vector<2x6x28xf32>
    %c0_117 = arith.constant 0 : index
    %c18_118 = arith.constant 18 : index
    %c112_119 = arith.constant 112 : index
    %121 = vector.load %arg17[%c0_117, %c18_118, %c112_119] : memref<2x24x140xf32, #tpu.memory_space<vmem>>, vector<2x6x28xf32>
    tpu.vector_store %arg17[%c0_117, %c18_118, %c112_119], %120 {strides = array<i32>} : memref<2x24x140xf32, #tpu.memory_space<vmem>>, vector<2x6x28xf32>,
    %c0_120 = arith.constant 0 : index
    %c0_121 = arith.constant 0 : index
    %c0_122 = arith.constant 0 : index
    %122 = vector.load %arg16[%c0_120, %c0_121, %c0_122] : memref<2x24x140xf32, #tpu.memory_space<vmem>>, vector<2x24x140xf32>
    %123 = vector.shape_cast %122 : vector<2x24x140xf32> to vector<48x140xf32>
    %124 = arith.truncf %123 : vector<48x140xf32> to vector<48x140xbf16>
    %c0_123 = arith.constant 0 : index
    %c0_124 = arith.constant 0 : index
    %c0_125 = arith.constant 0 : index
    %125 = vector.load %arg17[%c0_123, %c0_124, %c0_125] : memref<2x24x140xf32, #tpu.memory_space<vmem>>, vector<2x24x140xf32>
    %126 = vector.shape_cast %125 : vector<2x24x140xf32> to vector<48x140xf32>
    %127 = arith.truncf %126 : vector<48x140xf32> to vector<48x140xbf16>
    %c0_126 = arith.constant 0 : index
    %c0_127 = arith.constant 0 : index
    %128 = vector.load %arg3[%c0_126, %c0_127] : memref<140x1440xbf16, #tpu.memory_space<vmem>>, vector<140x1440xbf16>
    %cst = arith.constant dense<0.000000e+00> : vector<48x1440xf32>
    %129 = tpu.matmul %124, %128, %cst {dimension_numbers = #tpu.dot_dimension_numbers<[1], [0], [0], [1], [0, 0, 1, 1], [], []>} : vector<48x140xbf16>, vector<140x1440xbf16>, vector<48x1440xf32> -> vector<48x1440xf32>
    %c0_128 = arith.constant 0 : index
    %c0_129 = arith.constant 0 : index
    %130 = vector.load %arg4[%c0_128, %c0_129] : memref<140x1440xbf16, #tpu.memory_space<vmem>>, vector<140x1440xbf16>
    %cst_130 = arith.constant dense<0.000000e+00> : vector<48x1440xf32>
    %131 = tpu.matmul %127, %130, %cst_130 {dimension_numbers = #tpu.dot_dimension_numbers<[1], [0], [0], [1], [0, 0, 1, 1], [], []>} : vector<48x140xbf16>, vector<140x1440xbf16>, vector<48x1440xf32> -> vector<48x1440xf32>
    %132 = arith.addf %129, %131 : vector<48x1440xf32>
    %c0_131 = arith.constant 0 : index
    %c0_132 = arith.constant 0 : index
    %133 = vector.load %arg5[%c0_131, %c0_132] : memref<1x1440xf32, #tpu.memory_space<vmem>>, vector<1x1440xf32>
    %134 = vector.broadcast %133 : vector<1x1440xf32> to vector<48x1440xf32>
    %135 = arith.addf %132, %134 : vector<48x1440xf32>
    %cst_133 = arith.constant 0.000000e+00 : f32
    %136 = vector.broadcast %cst_133 : f32 to vector<48x1440xf32>
    %137 = arith.maximumf %135, %136 : vector<48x1440xf32>
    %138 = vector.shape_cast %137 : vector<48x1440xf32> to vector<2x24x1440xf32>
    %139 = vector.extract_strided_slice %138 {offsets = [0, 0, 0], sizes = [2, 12, 360], strides = [1, 1, 1]} : vector<2x24x1440xf32> to vector<2x12x360xf32>
    %140 = vector.extract_strided_slice %138 {offsets = [0, 0, 720], sizes = [2, 12, 360], strides = [1, 1, 1]} : vector<2x24x1440xf32> to vector<2x12x360xf32>
    %141 = arith.mulf %139, %139 : vector<2x12x360xf32>
    %142 = arith.mulf %140, %140 : vector<2x12x360xf32>
    %143 = arith.addf %141, %142 : vector<2x12x360xf32>
    %144 = vector.extract_strided_slice %138 {offsets = [0, 0, 360], sizes = [2, 12, 360], strides = [1, 1, 1]} : vector<2x24x1440xf32> to vector<2x12x360xf32>
    %145 = vector.extract_strided_slice %138 {offsets = [0, 0, 1080], sizes = [2, 12, 360], strides = [1, 1, 1]} : vector<2x24x1440xf32> to vector<2x12x360xf32>
    %146 = arith.mulf %144, %144 : vector<2x12x360xf32>
    %147 = arith.mulf %145, %145 : vector<2x12x360xf32>
    %148 = arith.addf %146, %147 : vector<2x12x360xf32>
    %149 = arith.cmpf ogt, %148, %143 : vector<2x12x360xf32>
    %150 = arith.select %149, %144, %139 : vector<2x12x360xi1>, vector<2x12x360xf32>
    %151 = arith.select %149, %145, %140 : vector<2x12x360xi1>, vector<2x12x360xf32>
    %152 = arith.select %149, %148, %143 : vector<2x12x360xi1>, vector<2x12x360xf32>
    %153 = vector.extract_strided_slice %138 {offsets = [0, 12, 0], sizes = [2, 12, 360], strides = [1, 1, 1]} : vector<2x24x1440xf32> to vector<2x12x360xf32>
    %154 = vector.extract_strided_slice %138 {offsets = [0, 12, 720], sizes = [2, 12, 360], strides = [1, 1, 1]} : vector<2x24x1440xf32> to vector<2x12x360xf32>
    %155 = arith.mulf %153, %153 : vector<2x12x360xf32>
    %156 = arith.mulf %154, %154 : vector<2x12x360xf32>
    %157 = arith.addf %155, %156 : vector<2x12x360xf32>
    %158 = arith.cmpf ogt, %157, %152 : vector<2x12x360xf32>
    %159 = arith.select %158, %153, %150 : vector<2x12x360xi1>, vector<2x12x360xf32>
    %160 = arith.select %158, %154, %151 : vector<2x12x360xi1>, vector<2x12x360xf32>
    %161 = arith.select %158, %157, %152 : vector<2x12x360xi1>, vector<2x12x360xf32>
    %162 = vector.extract_strided_slice %138 {offsets = [0, 12, 360], sizes = [2, 12, 360], strides = [1, 1, 1]} : vector<2x24x1440xf32> to vector<2x12x360xf32>
    %163 = vector.extract_strided_slice %138 {offsets = [0, 12, 1080], sizes = [2, 12, 360], strides = [1, 1, 1]} : vector<2x24x1440xf32> to vector<2x12x360xf32>
    %164 = arith.mulf %162, %162 : vector<2x12x360xf32>
    %165 = arith.mulf %163, %163 : vector<2x12x360xf32>
    %166 = arith.addf %164, %165 : vector<2x12x360xf32>
    %167 = arith.cmpf ogt, %166, %161 : vector<2x12x360xf32>
    %168 = arith.select %167, %162, %159 : vector<2x12x360xi1>, vector<2x12x360xf32>
    %169 = arith.select %167, %163, %160 : vector<2x12x360xi1>, vector<2x12x360xf32>
    %170 = vector.extract_strided_slice %168 {offsets = [0, 0, 0], sizes = [2, 4, 360], strides = [1, 1, 1]} : vector<2x12x360xf32> to vector<2x4x360xf32>
    %c0_134 = arith.constant 0 : index
    %c0_135 = arith.constant 0 : index
    %c0_136 = arith.constant 0 : index
    %171 = vector.load %arg18[%c0_134, %c0_135, %c0_136] : memref<2x8x1800xf32, #tpu.memory_space<vmem>>, vector<2x4x360xf32>
    tpu.vector_store %arg18[%c0_134, %c0_135, %c0_136], %170 {strides = array<i32>} : memref<2x8x1800xf32, #tpu.memory_space<vmem>>, vector<2x4x360xf32>,
    %172 = vector.extract_strided_slice %169 {offsets = [0, 0, 0], sizes = [2, 4, 360], strides = [1, 1, 1]} : vector<2x12x360xf32> to vector<2x4x360xf32>
    %c0_137 = arith.constant 0 : index
    %c0_138 = arith.constant 0 : index
    %c0_139 = arith.constant 0 : index
    %173 = vector.load %arg19[%c0_137, %c0_138, %c0_139] : memref<2x8x1800xf32, #tpu.memory_space<vmem>>, vector<2x4x360xf32>
    tpu.vector_store %arg19[%c0_137, %c0_138, %c0_139], %172 {strides = array<i32>} : memref<2x8x1800xf32, #tpu.memory_space<vmem>>, vector<2x4x360xf32>,
    %174 = vector.extract_strided_slice %168 {offsets = [0, 6, 0], sizes = [2, 4, 360], strides = [1, 1, 1]} : vector<2x12x360xf32> to vector<2x4x360xf32>
    %c0_140 = arith.constant 0 : index
    %c0_141 = arith.constant 0 : index
    %c360 = arith.constant 360 : index
    %175 = vector.load %arg18[%c0_140, %c0_141, %c360] : memref<2x8x1800xf32, #tpu.memory_space<vmem>>, vector<2x4x360xf32>
    tpu.vector_store %arg18[%c0_140, %c0_141, %c360], %174 {strides = array<i32>} : memref<2x8x1800xf32, #tpu.memory_space<vmem>>, vector<2x4x360xf32>,
    %176 = vector.extract_strided_slice %169 {offsets = [0, 6, 0], sizes = [2, 4, 360], strides = [1, 1, 1]} : vector<2x12x360xf32> to vector<2x4x360xf32>
    %c0_142 = arith.constant 0 : index
    %c0_143 = arith.constant 0 : index
    %c360_144 = arith.constant 360 : index
    %177 = vector.load %arg19[%c0_142, %c0_143, %c360_144] : memref<2x8x1800xf32, #tpu.memory_space<vmem>>, vector<2x4x360xf32>
    tpu.vector_store %arg19[%c0_142, %c0_143, %c360_144], %176 {strides = array<i32>} : memref<2x8x1800xf32, #tpu.memory_space<vmem>>, vector<2x4x360xf32>,
    %178 = vector.extract_strided_slice %168 {offsets = [0, 1, 0], sizes = [2, 4, 360], strides = [1, 1, 1]} : vector<2x12x360xf32> to vector<2x4x360xf32>
    %c0_145 = arith.constant 0 : index
    %c0_146 = arith.constant 0 : index
    %c720 = arith.constant 720 : index
    %179 = vector.load %arg18[%c0_145, %c0_146, %c720] : memref<2x8x1800xf32, #tpu.memory_space<vmem>>, vector<2x4x360xf32>
    tpu.vector_store %arg18[%c0_145, %c0_146, %c720], %178 {strides = array<i32>} : memref<2x8x1800xf32, #tpu.memory_space<vmem>>, vector<2x4x360xf32>,
    %180 = vector.extract_strided_slice %169 {offsets = [0, 1, 0], sizes = [2, 4, 360], strides = [1, 1, 1]} : vector<2x12x360xf32> to vector<2x4x360xf32>
    %c0_147 = arith.constant 0 : index
    %c0_148 = arith.constant 0 : index
    %c720_149 = arith.constant 720 : index
    %181 = vector.load %arg19[%c0_147, %c0_148, %c720_149] : memref<2x8x1800xf32, #tpu.memory_space<vmem>>, vector<2x4x360xf32>
    tpu.vector_store %arg19[%c0_147, %c0_148, %c720_149], %180 {strides = array<i32>} : memref<2x8x1800xf32, #tpu.memory_space<vmem>>, vector<2x4x360xf32>,
    %182 = vector.extract_strided_slice %168 {offsets = [0, 7, 0], sizes = [2, 4, 360], strides = [1, 1, 1]} : vector<2x12x360xf32> to vector<2x4x360xf32>
    %c0_150 = arith.constant 0 : index
    %c0_151 = arith.constant 0 : index
    %c1080 = arith.constant 1080 : index
    %183 = vector.load %arg18[%c0_150, %c0_151, %c1080] : memref<2x8x1800xf32, #tpu.memory_space<vmem>>, vector<2x4x360xf32>
    tpu.vector_store %arg18[%c0_150, %c0_151, %c1080], %182 {strides = array<i32>} : memref<2x8x1800xf32, #tpu.memory_space<vmem>>, vector<2x4x360xf32>,
    %184 = vector.extract_strided_slice %169 {offsets = [0, 7, 0], sizes = [2, 4, 360], strides = [1, 1, 1]} : vector<2x12x360xf32> to vector<2x4x360xf32>
    %c0_152 = arith.constant 0 : index
    %c0_153 = arith.constant 0 : index
    %c1080_154 = arith.constant 1080 : index
    %185 = vector.load %arg19[%c0_152, %c0_153, %c1080_154] : memref<2x8x1800xf32, #tpu.memory_space<vmem>>, vector<2x4x360xf32>
    tpu.vector_store %arg19[%c0_152, %c0_153, %c1080_154], %184 {strides = array<i32>} : memref<2x8x1800xf32, #tpu.memory_space<vmem>>, vector<2x4x360xf32>,
    %186 = vector.extract_strided_slice %168 {offsets = [0, 2, 0], sizes = [2, 4, 360], strides = [1, 1, 1]} : vector<2x12x360xf32> to vector<2x4x360xf32>
    %c0_155 = arith.constant 0 : index
    %c0_156 = arith.constant 0 : index
    %c1440 = arith.constant 1440 : index
    %187 = vector.load %arg18[%c0_155, %c0_156, %c1440] : memref<2x8x1800xf32, #tpu.memory_space<vmem>>, vector<2x4x360xf32>
    tpu.vector_store %arg18[%c0_155, %c0_156, %c1440], %186 {strides = array<i32>} : memref<2x8x1800xf32, #tpu.memory_space<vmem>>, vector<2x4x360xf32>,
    %188 = vector.extract_strided_slice %169 {offsets = [0, 2, 0], sizes = [2, 4, 360], strides = [1, 1, 1]} : vector<2x12x360xf32> to vector<2x4x360xf32>
    %c0_157 = arith.constant 0 : index
    %c0_158 = arith.constant 0 : index
    %c1440_159 = arith.constant 1440 : index
    %189 = vector.load %arg19[%c0_157, %c0_158, %c1440_159] : memref<2x8x1800xf32, #tpu.memory_space<vmem>>, vector<2x4x360xf32>
    tpu.vector_store %arg19[%c0_157, %c0_158, %c1440_159], %188 {strides = array<i32>} : memref<2x8x1800xf32, #tpu.memory_space<vmem>>, vector<2x4x360xf32>,
    %190 = vector.extract_strided_slice %168 {offsets = [0, 6, 0], sizes = [2, 4, 360], strides = [1, 1, 1]} : vector<2x12x360xf32> to vector<2x4x360xf32>
    %c0_160 = arith.constant 0 : index
    %c4 = arith.constant 4 : index
    %c0_161 = arith.constant 0 : index
    %191 = vector.load %arg18[%c0_160, %c4, %c0_161] : memref<2x8x1800xf32, #tpu.memory_space<vmem>>, vector<2x4x360xf32>
    tpu.vector_store %arg18[%c0_160, %c4, %c0_161], %190 {strides = array<i32>} : memref<2x8x1800xf32, #tpu.memory_space<vmem>>, vector<2x4x360xf32>,
    %192 = vector.extract_strided_slice %169 {offsets = [0, 6, 0], sizes = [2, 4, 360], strides = [1, 1, 1]} : vector<2x12x360xf32> to vector<2x4x360xf32>
    %c0_162 = arith.constant 0 : index
    %c4_163 = arith.constant 4 : index
    %c0_164 = arith.constant 0 : index
    %193 = vector.load %arg19[%c0_162, %c4_163, %c0_164] : memref<2x8x1800xf32, #tpu.memory_space<vmem>>, vector<2x4x360xf32>
    tpu.vector_store %arg19[%c0_162, %c4_163, %c0_164], %192 {strides = array<i32>} : memref<2x8x1800xf32, #tpu.memory_space<vmem>>, vector<2x4x360xf32>,
    %194 = vector.extract_strided_slice %168 {offsets = [0, 1, 0], sizes = [2, 4, 360], strides = [1, 1, 1]} : vector<2x12x360xf32> to vector<2x4x360xf32>
    %c0_165 = arith.constant 0 : index
    %c4_166 = arith.constant 4 : index
    %c360_167 = arith.constant 360 : index
    %195 = vector.load %arg18[%c0_165, %c4_166, %c360_167] : memref<2x8x1800xf32, #tpu.memory_space<vmem>>, vector<2x4x360xf32>
    tpu.vector_store %arg18[%c0_165, %c4_166, %c360_167], %194 {strides = array<i32>} : memref<2x8x1800xf32, #tpu.memory_space<vmem>>, vector<2x4x360xf32>,
    %196 = vector.extract_strided_slice %169 {offsets = [0, 1, 0], sizes = [2, 4, 360], strides = [1, 1, 1]} : vector<2x12x360xf32> to vector<2x4x360xf32>
    %c0_168 = arith.constant 0 : index
    %c4_169 = arith.constant 4 : index
    %c360_170 = arith.constant 360 : index
    %197 = vector.load %arg19[%c0_168, %c4_169, %c360_170] : memref<2x8x1800xf32, #tpu.memory_space<vmem>>, vector<2x4x360xf32>
    tpu.vector_store %arg19[%c0_168, %c4_169, %c360_170], %196 {strides = array<i32>} : memref<2x8x1800xf32, #tpu.memory_space<vmem>>, vector<2x4x360xf32>,
    %198 = vector.extract_strided_slice %168 {offsets = [0, 7, 0], sizes = [2, 4, 360], strides = [1, 1, 1]} : vector<2x12x360xf32> to vector<2x4x360xf32>
    %c0_171 = arith.constant 0 : index
    %c4_172 = arith.constant 4 : index
    %c720_173 = arith.constant 720 : index
    %199 = vector.load %arg18[%c0_171, %c4_172, %c720_173] : memref<2x8x1800xf32, #tpu.memory_space<vmem>>, vector<2x4x360xf32>
    tpu.vector_store %arg18[%c0_171, %c4_172, %c720_173], %198 {strides = array<i32>} : memref<2x8x1800xf32, #tpu.memory_space<vmem>>, vector<2x4x360xf32>,
    %200 = vector.extract_strided_slice %169 {offsets = [0, 7, 0], sizes = [2, 4, 360], strides = [1, 1, 1]} : vector<2x12x360xf32> to vector<2x4x360xf32>
    %c0_174 = arith.constant 0 : index
    %c4_175 = arith.constant 4 : index
    %c720_176 = arith.constant 720 : index
    %201 = vector.load %arg19[%c0_174, %c4_175, %c720_176] : memref<2x8x1800xf32, #tpu.memory_space<vmem>>, vector<2x4x360xf32>
    tpu.vector_store %arg19[%c0_174, %c4_175, %c720_176], %200 {strides = array<i32>} : memref<2x8x1800xf32, #tpu.memory_space<vmem>>, vector<2x4x360xf32>,
    %202 = vector.extract_strided_slice %168 {offsets = [0, 2, 0], sizes = [2, 4, 360], strides = [1, 1, 1]} : vector<2x12x360xf32> to vector<2x4x360xf32>
    %c0_177 = arith.constant 0 : index
    %c4_178 = arith.constant 4 : index
    %c1080_179 = arith.constant 1080 : index
    %203 = vector.load %arg18[%c0_177, %c4_178, %c1080_179] : memref<2x8x1800xf32, #tpu.memory_space<vmem>>, vector<2x4x360xf32>
    tpu.vector_store %arg18[%c0_177, %c4_178, %c1080_179], %202 {strides = array<i32>} : memref<2x8x1800xf32, #tpu.memory_space<vmem>>, vector<2x4x360xf32>,
    %204 = vector.extract_strided_slice %169 {offsets = [0, 2, 0], sizes = [2, 4, 360], strides = [1, 1, 1]} : vector<2x12x360xf32> to vector<2x4x360xf32>
    %c0_180 = arith.constant 0 : index
    %c4_181 = arith.constant 4 : index
    %c1080_182 = arith.constant 1080 : index
    %205 = vector.load %arg19[%c0_180, %c4_181, %c1080_182] : memref<2x8x1800xf32, #tpu.memory_space<vmem>>, vector<2x4x360xf32>
    tpu.vector_store %arg19[%c0_180, %c4_181, %c1080_182], %204 {strides = array<i32>} : memref<2x8x1800xf32, #tpu.memory_space<vmem>>, vector<2x4x360xf32>,
    %206 = vector.extract_strided_slice %168 {offsets = [0, 8, 0], sizes = [2, 4, 360], strides = [1, 1, 1]} : vector<2x12x360xf32> to vector<2x4x360xf32>
    %c0_183 = arith.constant 0 : index
    %c4_184 = arith.constant 4 : index
    %c1440_185 = arith.constant 1440 : index
    %207 = vector.load %arg18[%c0_183, %c4_184, %c1440_185] : memref<2x8x1800xf32, #tpu.memory_space<vmem>>, vector<2x4x360xf32>
    tpu.vector_store %arg18[%c0_183, %c4_184, %c1440_185], %206 {strides = array<i32>} : memref<2x8x1800xf32, #tpu.memory_space<vmem>>, vector<2x4x360xf32>,
    %208 = vector.extract_strided_slice %169 {offsets = [0, 8, 0], sizes = [2, 4, 360], strides = [1, 1, 1]} : vector<2x12x360xf32> to vector<2x4x360xf32>
    %c0_186 = arith.constant 0 : index
    %c4_187 = arith.constant 4 : index
    %c1440_188 = arith.constant 1440 : index
    %209 = vector.load %arg19[%c0_186, %c4_187, %c1440_188] : memref<2x8x1800xf32, #tpu.memory_space<vmem>>, vector<2x4x360xf32>
    tpu.vector_store %arg19[%c0_186, %c4_187, %c1440_188], %208 {strides = array<i32>} : memref<2x8x1800xf32, #tpu.memory_space<vmem>>, vector<2x4x360xf32>,
    %c0_189 = arith.constant 0 : index
    %c0_190 = arith.constant 0 : index
    %c0_191 = arith.constant 0 : index
    %210 = vector.load %arg18[%c0_189, %c0_190, %c0_191] : memref<2x8x1800xf32, #tpu.memory_space<vmem>>, vector<2x8x1800xf32>
    %211 = vector.shape_cast %210 : vector<2x8x1800xf32> to vector<16x1800xf32>
    %212 = arith.truncf %211 : vector<16x1800xf32> to vector<16x1800xbf16>
    %c0_192 = arith.constant 0 : index
    %c0_193 = arith.constant 0 : index
    %c0_194 = arith.constant 0 : index
    %213 = vector.load %arg19[%c0_192, %c0_193, %c0_194] : memref<2x8x1800xf32, #tpu.memory_space<vmem>>, vector<2x8x1800xf32>
    %214 = vector.shape_cast %213 : vector<2x8x1800xf32> to vector<16x1800xf32>
    %215 = arith.truncf %214 : vector<16x1800xf32> to vector<16x1800xbf16>
    %c0_195 = arith.constant 0 : index
    %c0_196 = arith.constant 0 : index
    %216 = vector.load %arg6[%c0_195, %c0_196] : memref<1800x240xbf16, #tpu.memory_space<vmem>>, vector<1800x240xbf16>
    %cst_197 = arith.constant dense<0.000000e+00> : vector<16x240xf32>
    %217 = tpu.matmul %212, %216, %cst_197 {dimension_numbers = #tpu.dot_dimension_numbers<[1], [0], [0], [1], [0, 0, 1, 1], [], []>} : vector<16x1800xbf16>, vector<1800x240xbf16>, vector<16x240xf32> -> vector<16x240xf32>
    %c0_198 = arith.constant 0 : index
    %c0_199 = arith.constant 0 : index
    %218 = vector.load %arg7[%c0_198, %c0_199] : memref<1800x240xbf16, #tpu.memory_space<vmem>>, vector<1800x240xbf16>
    %cst_200 = arith.constant dense<0.000000e+00> : vector<16x240xf32>
    %219 = tpu.matmul %215, %218, %cst_200 {dimension_numbers = #tpu.dot_dimension_numbers<[1], [0], [0], [1], [0, 0, 1, 1], [], []>} : vector<16x1800xbf16>, vector<1800x240xbf16>, vector<16x240xf32> -> vector<16x240xf32>
    %220 = arith.addf %217, %219 : vector<16x240xf32>
    %c0_201 = arith.constant 0 : index
    %c0_202 = arith.constant 0 : index
    %221 = vector.load %arg8[%c0_201, %c0_202] : memref<1x240xf32, #tpu.memory_space<vmem>>, vector<1x240xf32>
    %222 = vector.broadcast %221 : vector<1x240xf32> to vector<16x240xf32>
    %223 = arith.addf %220, %222 : vector<16x240xf32>
    %cst_203 = arith.constant 0.000000e+00 : f32
    %224 = vector.broadcast %cst_203 : f32 to vector<16x240xf32>
    %225 = arith.maximumf %223, %224 : vector<16x240xf32>
    %226 = vector.shape_cast %225 : vector<16x240xf32> to vector<2x8x240xf32>
    %227 = vector.extract_strided_slice %226 {offsets = [0, 0, 0], sizes = [2, 4, 60], strides = [1, 1, 1]} : vector<2x8x240xf32> to vector<2x4x60xf32>
    %228 = vector.extract_strided_slice %226 {offsets = [0, 0, 120], sizes = [2, 4, 60], strides = [1, 1, 1]} : vector<2x8x240xf32> to vector<2x4x60xf32>
    %229 = arith.mulf %227, %227 : vector<2x4x60xf32>
    %230 = arith.mulf %228, %228 : vector<2x4x60xf32>
    %231 = arith.addf %229, %230 : vector<2x4x60xf32>
    %232 = vector.extract_strided_slice %226 {offsets = [0, 0, 60], sizes = [2, 4, 60], strides = [1, 1, 1]} : vector<2x8x240xf32> to vector<2x4x60xf32>
    %233 = vector.extract_strided_slice %226 {offsets = [0, 0, 180], sizes = [2, 4, 60], strides = [1, 1, 1]} : vector<2x8x240xf32> to vector<2x4x60xf32>
    %234 = arith.mulf %232, %232 : vector<2x4x60xf32>
    %235 = arith.mulf %233, %233 : vector<2x4x60xf32>
    %236 = arith.addf %234, %235 : vector<2x4x60xf32>
    %237 = arith.cmpf ogt, %236, %231 : vector<2x4x60xf32>
    %238 = arith.select %237, %232, %227 : vector<2x4x60xi1>, vector<2x4x60xf32>
    %239 = arith.select %237, %233, %228 : vector<2x4x60xi1>, vector<2x4x60xf32>
    %240 = arith.select %237, %236, %231 : vector<2x4x60xi1>, vector<2x4x60xf32>
    %241 = vector.extract_strided_slice %226 {offsets = [0, 4, 0], sizes = [2, 4, 60], strides = [1, 1, 1]} : vector<2x8x240xf32> to vector<2x4x60xf32>
    %242 = vector.extract_strided_slice %226 {offsets = [0, 4, 120], sizes = [2, 4, 60], strides = [1, 1, 1]} : vector<2x8x240xf32> to vector<2x4x60xf32>
    %243 = arith.mulf %241, %241 : vector<2x4x60xf32>
    %244 = arith.mulf %242, %242 : vector<2x4x60xf32>
    %245 = arith.addf %243, %244 : vector<2x4x60xf32>
    %246 = arith.cmpf ogt, %245, %240 : vector<2x4x60xf32>
    %247 = arith.select %246, %241, %238 : vector<2x4x60xi1>, vector<2x4x60xf32>
    %248 = arith.select %246, %242, %239 : vector<2x4x60xi1>, vector<2x4x60xf32>
    %249 = arith.select %246, %245, %240 : vector<2x4x60xi1>, vector<2x4x60xf32>
    %250 = vector.extract_strided_slice %226 {offsets = [0, 4, 60], sizes = [2, 4, 60], strides = [1, 1, 1]} : vector<2x8x240xf32> to vector<2x4x60xf32>
    %251 = vector.extract_strided_slice %226 {offsets = [0, 4, 180], sizes = [2, 4, 60], strides = [1, 1, 1]} : vector<2x8x240xf32> to vector<2x4x60xf32>
    %252 = arith.mulf %250, %250 : vector<2x4x60xf32>
    %253 = arith.mulf %251, %251 : vector<2x4x60xf32>
    %254 = arith.addf %252, %253 : vector<2x4x60xf32>
    %255 = arith.cmpf ogt, %254, %249 : vector<2x4x60xf32>
    %256 = arith.select %255, %250, %247 : vector<2x4x60xi1>, vector<2x4x60xf32>
    %257 = arith.select %255, %251, %248 : vector<2x4x60xi1>, vector<2x4x60xf32>
    %c0_204 = arith.constant 0 : index
    %c0_205 = arith.constant 0 : index
    %c0_206 = arith.constant 0 : index
    %258 = vector.load %arg20[%c0_204, %c0_205, %c0_206] : memref<2x4x60xf32, #tpu.memory_space<vmem>>, vector<2x4x60xf32>
    tpu.vector_store %arg20[%c0_204, %c0_205, %c0_206], %256 {strides = array<i32>} : memref<2x4x60xf32, #tpu.memory_space<vmem>>, vector<2x4x60xf32>,
    %c0_207 = arith.constant 0 : index
    %c0_208 = arith.constant 0 : index
    %c0_209 = arith.constant 0 : index
    %259 = vector.load %arg21[%c0_207, %c0_208, %c0_209] : memref<2x4x60xf32, #tpu.memory_space<vmem>>, vector<2x4x60xf32>
    tpu.vector_store %arg21[%c0_207, %c0_208, %c0_209], %257 {strides = array<i32>} : memref<2x4x60xf32, #tpu.memory_space<vmem>>, vector<2x4x60xf32>,
    %c0_210 = arith.constant 0 : index
    %c0_211 = arith.constant 0 : index
    %c0_212 = arith.constant 0 : index
    %260 = vector.load %arg20[%c0_210, %c0_211, %c0_212] : memref<2x4x60xf32, #tpu.memory_space<vmem>>, vector<2x1x60xf32>
    %261 = vector.shape_cast %260 : vector<2x1x60xf32> to vector<2x60xf32>
    %262 = arith.truncf %261 : vector<2x60xf32> to vector<2x60xbf16>
    %c0_213 = arith.constant 0 : index
    %c0_214 = arith.constant 0 : index
    %c0_215 = arith.constant 0 : index
    %263 = vector.load %arg21[%c0_213, %c0_214, %c0_215] : memref<2x4x60xf32, #tpu.memory_space<vmem>>, vector<2x1x60xf32>
    %264 = vector.shape_cast %263 : vector<2x1x60xf32> to vector<2x60xf32>
    %265 = arith.truncf %264 : vector<2x60xf32> to vector<2x60xbf16>
    %c0_216 = arith.constant 0 : index
    %c0_217 = arith.constant 0 : index
    %266 = vector.load %arg9[%c0_216, %c0_217] : memref<240x256xbf16, #tpu.memory_space<vmem>>, vector<60x256xbf16>
    %cst_218 = arith.constant dense<0.000000e+00> : vector<2x256xf32>
    %267 = tpu.matmul %262, %266, %cst_218 {dimension_numbers = #tpu.dot_dimension_numbers<[1], [0], [0], [1], [0, 0, 1, 1], [], []>} : vector<2x60xbf16>, vector<60x256xbf16>, vector<2x256xf32> -> vector<2x256xf32>
    %c0_219 = arith.constant 0 : index
    %c0_220 = arith.constant 0 : index
    %268 = vector.load %arg10[%c0_219, %c0_220] : memref<240x256xbf16, #tpu.memory_space<vmem>>, vector<60x256xbf16>
    %cst_221 = arith.constant dense<0.000000e+00> : vector<2x256xf32>
    %269 = tpu.matmul %265, %268, %cst_221 {dimension_numbers = #tpu.dot_dimension_numbers<[1], [0], [0], [1], [0, 0, 1, 1], [], []>} : vector<2x60xbf16>, vector<60x256xbf16>, vector<2x256xf32> -> vector<2x256xf32>
    %270 = arith.addf %267, %269 : vector<2x256xf32>
    %c0_222 = arith.constant 0 : index
    %c1 = arith.constant 1 : index
    %c0_223 = arith.constant 0 : index
    %271 = vector.load %arg20[%c0_222, %c1, %c0_223] : memref<2x4x60xf32, #tpu.memory_space<vmem>>, vector<2x1x60xf32>
    %272 = vector.shape_cast %271 : vector<2x1x60xf32> to vector<2x60xf32>
    %273 = arith.truncf %272 : vector<2x60xf32> to vector<2x60xbf16>
    %c0_224 = arith.constant 0 : index
    %c1_225 = arith.constant 1 : index
    %c0_226 = arith.constant 0 : index
    %274 = vector.load %arg21[%c0_224, %c1_225, %c0_226] : memref<2x4x60xf32, #tpu.memory_space<vmem>>, vector<2x1x60xf32>
    %275 = vector.shape_cast %274 : vector<2x1x60xf32> to vector<2x60xf32>
    %276 = arith.truncf %275 : vector<2x60xf32> to vector<2x60xbf16>
    %c60 = arith.constant 60 : index
    %c0_227 = arith.constant 0 : index
    %277 = vector.load %arg9[%c60, %c0_227] : memref<240x256xbf16, #tpu.memory_space<vmem>>, vector<60x256xbf16>
    %cst_228 = arith.constant dense<0.000000e+00> : vector<2x256xf32>
    %278 = tpu.matmul %273, %277, %cst_228 {dimension_numbers = #tpu.dot_dimension_numbers<[1], [0], [0], [1], [0, 0, 1, 1], [], []>} : vector<2x60xbf16>, vector<60x256xbf16>, vector<2x256xf32> -> vector<2x256xf32>
    %c60_229 = arith.constant 60 : index
    %c0_230 = arith.constant 0 : index
    %279 = vector.load %arg10[%c60_229, %c0_230] : memref<240x256xbf16, #tpu.memory_space<vmem>>, vector<60x256xbf16>
    %cst_231 = arith.constant dense<0.000000e+00> : vector<2x256xf32>
    %280 = tpu.matmul %276, %279, %cst_231 {dimension_numbers = #tpu.dot_dimension_numbers<[1], [0], [0], [1], [0, 0, 1, 1], [], []>} : vector<2x60xbf16>, vector<60x256xbf16>, vector<2x256xf32> -> vector<2x256xf32>
    %281 = arith.addf %278, %280 : vector<2x256xf32>
    %282 = arith.addf %270, %281 : vector<2x256xf32>
    %c0_232 = arith.constant 0 : index
    %c2 = arith.constant 2 : index
    %c0_233 = arith.constant 0 : index
    %283 = vector.load %arg20[%c0_232, %c2, %c0_233] : memref<2x4x60xf32, #tpu.memory_space<vmem>>, vector<2x1x60xf32>
    %284 = vector.shape_cast %283 : vector<2x1x60xf32> to vector<2x60xf32>
    %285 = arith.truncf %284 : vector<2x60xf32> to vector<2x60xbf16>
    %c0_234 = arith.constant 0 : index
    %c2_235 = arith.constant 2 : index
    %c0_236 = arith.constant 0 : index
    %286 = vector.load %arg21[%c0_234, %c2_235, %c0_236] : memref<2x4x60xf32, #tpu.memory_space<vmem>>, vector<2x1x60xf32>
    %287 = vector.shape_cast %286 : vector<2x1x60xf32> to vector<2x60xf32>
    %288 = arith.truncf %287 : vector<2x60xf32> to vector<2x60xbf16>
    %c120 = arith.constant 120 : index
    %c0_237 = arith.constant 0 : index
    %289 = vector.load %arg9[%c120, %c0_237] : memref<240x256xbf16, #tpu.memory_space<vmem>>, vector<60x256xbf16>
    %cst_238 = arith.constant dense<0.000000e+00> : vector<2x256xf32>
    %290 = tpu.matmul %285, %289, %cst_238 {dimension_numbers = #tpu.dot_dimension_numbers<[1], [0], [0], [1], [0, 0, 1, 1], [], []>} : vector<2x60xbf16>, vector<60x256xbf16>, vector<2x256xf32> -> vector<2x256xf32>
    %c120_239 = arith.constant 120 : index
    %c0_240 = arith.constant 0 : index
    %291 = vector.load %arg10[%c120_239, %c0_240] : memref<240x256xbf16, #tpu.memory_space<vmem>>, vector<60x256xbf16>
    %cst_241 = arith.constant dense<0.000000e+00> : vector<2x256xf32>
    %292 = tpu.matmul %288, %291, %cst_241 {dimension_numbers = #tpu.dot_dimension_numbers<[1], [0], [0], [1], [0, 0, 1, 1], [], []>} : vector<2x60xbf16>, vector<60x256xbf16>, vector<2x256xf32> -> vector<2x256xf32>
    %293 = arith.addf %290, %292 : vector<2x256xf32>
    %294 = arith.addf %282, %293 : vector<2x256xf32>
    %c0_242 = arith.constant 0 : index
    %c3 = arith.constant 3 : index
    %c0_243 = arith.constant 0 : index
    %295 = vector.load %arg20[%c0_242, %c3, %c0_243] : memref<2x4x60xf32, #tpu.memory_space<vmem>>, vector<2x1x60xf32>
    %296 = vector.shape_cast %295 : vector<2x1x60xf32> to vector<2x60xf32>
    %297 = arith.truncf %296 : vector<2x60xf32> to vector<2x60xbf16>
    %c0_244 = arith.constant 0 : index
    %c3_245 = arith.constant 3 : index
    %c0_246 = arith.constant 0 : index
    %298 = vector.load %arg21[%c0_244, %c3_245, %c0_246] : memref<2x4x60xf32, #tpu.memory_space<vmem>>, vector<2x1x60xf32>
    %299 = vector.shape_cast %298 : vector<2x1x60xf32> to vector<2x60xf32>
    %300 = arith.truncf %299 : vector<2x60xf32> to vector<2x60xbf16>
    %c180 = arith.constant 180 : index
    %c0_247 = arith.constant 0 : index
    %301 = vector.load %arg9[%c180, %c0_247] : memref<240x256xbf16, #tpu.memory_space<vmem>>, vector<60x256xbf16>
    %cst_248 = arith.constant dense<0.000000e+00> : vector<2x256xf32>
    %302 = tpu.matmul %297, %301, %cst_248 {dimension_numbers = #tpu.dot_dimension_numbers<[1], [0], [0], [1], [0, 0, 1, 1], [], []>} : vector<2x60xbf16>, vector<60x256xbf16>, vector<2x256xf32> -> vector<2x256xf32>
    %c180_249 = arith.constant 180 : index
    %c0_250 = arith.constant 0 : index
    %303 = vector.load %arg10[%c180_249, %c0_250] : memref<240x256xbf16, #tpu.memory_space<vmem>>, vector<60x256xbf16>
    %cst_251 = arith.constant dense<0.000000e+00> : vector<2x256xf32>
    %304 = tpu.matmul %300, %303, %cst_251 {dimension_numbers = #tpu.dot_dimension_numbers<[1], [0], [0], [1], [0, 0, 1, 1], [], []>} : vector<2x60xbf16>, vector<60x256xbf16>, vector<2x256xf32> -> vector<2x256xf32>
    %305 = arith.addf %302, %304 : vector<2x256xf32>
    %306 = arith.addf %294, %305 : vector<2x256xf32>
    %c0_252 = arith.constant 0 : index
    %c0_253 = arith.constant 0 : index
    %307 = vector.load %arg11[%c0_252, %c0_253] : memref<1x256xf32, #tpu.memory_space<vmem>>, vector<1x256xf32>
    %308 = vector.broadcast %307 : vector<1x256xf32> to vector<2x256xf32>
    %309 = arith.addf %306, %308 : vector<2x256xf32>
    %cst_254 = arith.constant 0.000000e+00 : f32
    %310 = vector.broadcast %cst_254 : f32 to vector<2x256xf32>
    %311 = arith.maximumf %309, %310 : vector<2x256xf32>
    %312 = vector.extract_strided_slice %311 {offsets = [0, 0], sizes = [2, 128], strides = [1, 1]} : vector<2x256xf32> to vector<2x128xf32>
    %313 = arith.truncf %312 : vector<2x128xf32> to vector<2x128xbf16>
    %314 = vector.extract_strided_slice %311 {offsets = [0, 128], sizes = [2, 128], strides = [1, 1]} : vector<2x256xf32> to vector<2x128xf32>
    %315 = arith.truncf %314 : vector<2x128xf32> to vector<2x128xbf16>
    %c0_255 = arith.constant 0 : index
    %c0_256 = arith.constant 0 : index
    %316 = vector.load %arg12[%c0_255, %c0_256] : memref<128x20xbf16, #tpu.memory_space<vmem>>, vector<128x20xbf16>
    %cst_257 = arith.constant dense<0.000000e+00> : vector<2x20xf32>
    %317 = tpu.matmul %313, %316, %cst_257 {dimension_numbers = #tpu.dot_dimension_numbers<[1], [0], [0], [1], [0, 0, 1, 1], [], []>} : vector<2x128xbf16>, vector<128x20xbf16>, vector<2x20xf32> -> vector<2x20xf32>
    %c0_258 = arith.constant 0 : index
    %c0_259 = arith.constant 0 : index
    %318 = vector.load %arg13[%c0_258, %c0_259] : memref<128x20xbf16, #tpu.memory_space<vmem>>, vector<128x20xbf16>
    %cst_260 = arith.constant dense<0.000000e+00> : vector<2x20xf32>
    %319 = tpu.matmul %315, %318, %cst_260 {dimension_numbers = #tpu.dot_dimension_numbers<[1], [0], [0], [1], [0, 0, 1, 1], [], []>} : vector<2x128xbf16>, vector<128x20xbf16>, vector<2x20xf32> -> vector<2x20xf32>
    %320 = arith.addf %317, %319 : vector<2x20xf32>
    %c0_261 = arith.constant 0 : index
    %c0_262 = arith.constant 0 : index
    %321 = vector.load %arg14[%c0_261, %c0_262] : memref<1x20xf32, #tpu.memory_space<vmem>>, vector<1x20xf32>
    %322 = vector.broadcast %321 : vector<1x20xf32> to vector<2x20xf32>
    %323 = arith.addf %320, %322 : vector<2x20xf32>
    %324 = vector.extract_strided_slice %323 {offsets = [0, 0], sizes = [2, 10], strides = [1, 1]} : vector<2x20xf32> to vector<2x10xf32>
    %325 = vector.extract_strided_slice %323 {offsets = [0, 10], sizes = [2, 10], strides = [1, 1]} : vector<2x20xf32> to vector<2x10xf32>
    %326 = arith.mulf %324, %324 : vector<2x10xf32>
    %327 = arith.mulf %325, %325 : vector<2x10xf32>
    %328 = arith.addf %326, %327 : vector<2x10xf32>
    %329 = math.sqrt %328 : vector<2x10xf32>
    %cst_263 = arith.constant dense<0xFF800000> : vector<2xf32>
    %330 = vector.multi_reduction <maximumf>, %329, %cst_263 [1] : vector<2x10xf32> to vector<2xf32>
    %331 = vector.shape_cast %330 : vector<2xf32> to vector<2x1xf32>
    %332 = vector.broadcast %331 : vector<2x1xf32> to vector<2x10xf32>
    %333 = arith.subf %329, %332 : vector<2x10xf32>
    %334 = math.exp %333 : vector<2x10xf32>
    %cst_264 = arith.constant dense<0.000000e+00> : vector<2xf32>
    %335 = vector.multi_reduction <add>, %334, %cst_264 [1] : vector<2x10xf32> to vector<2xf32>
    %336 = vector.shape_cast %335 : vector<2xf32> to vector<2x1xf32>
    %337 = math.log %336 : vector<2x1xf32>
    %338 = vector.broadcast %337 : vector<2x1xf32> to vector<2x10xf32>
    %339 = arith.subf %333, %338 : vector<2x10xf32>
    %c0_265 = arith.constant 0 : index
    %c0_266 = arith.constant 0 : index
    %340 = vector.load %arg15[%c0_265, %c0_266] : memref<2x10xf32, #tpu.memory_space<vmem>>, vector<2x10xf32>
    tpu.vector_store %arg15[%c0_265, %c0_266], %339 {strides = array<i32>} : memref<2x10xf32, #tpu.memory_space<vmem>>, vector<2x10xf32>,
    return
  }
  func.func @transform_0(%arg0: i32) -> (i32, i32, i32, i32) {
    %c0_i32 = arith.constant 0 : i32
    %c0_i32_0 = arith.constant 0 : i32
    %c0_i32_1 = arith.constant 0 : i32
    %c0_i32_2 = arith.constant 0 : i32
    return %arg0, %c0_i32, %c0_i32_0, %c0_i32_1 : i32, i32, i32, i32
  }
  func.func @transform_1(%arg0: i32) -> (i32, i32, i32, i32) {
    %c0_i32 = arith.constant 0 : i32
    %c0_i32_0 = arith.constant 0 : i32
    %c0_i32_1 = arith.constant 0 : i32
    %c0_i32_2 = arith.constant 0 : i32
    return %arg0, %c0_i32, %c0_i32_0, %c0_i32_1 : i32, i32, i32, i32
  }
  func.func @transform_2(%arg0: i32) -> (i32, i32) {
    %c0_i32 = arith.constant 0 : i32
    %c0_i32_0 = arith.constant 0 : i32
    %c0_i32_1 = arith.constant 0 : i32
    return %c0_i32, %c0_i32_0 : i32, i32
  }
  func.func @transform_3(%arg0: i32) -> (i32, i32) {
    %c0_i32 = arith.constant 0 : i32
    %c0_i32_0 = arith.constant 0 : i32
    %c0_i32_1 = arith.constant 0 : i32
    return %c0_i32, %c0_i32_0 : i32, i32
  }
  func.func @transform_4(%arg0: i32) -> (i32, i32) {
    %c0_i32 = arith.constant 0 : i32
    %c0_i32_0 = arith.constant 0 : i32
    %c0_i32_1 = arith.constant 0 : i32
    return %c0_i32, %c0_i32_0 : i32, i32
  }
  func.func @transform_5(%arg0: i32) -> (i32, i32) {
    %c0_i32 = arith.constant 0 : i32
    %c0_i32_0 = arith.constant 0 : i32
    %c0_i32_1 = arith.constant 0 : i32
    return %c0_i32, %c0_i32_0 : i32, i32
  }
  func.func @transform_6(%arg0: i32) -> (i32, i32) {
    %c0_i32 = arith.constant 0 : i32
    %c0_i32_0 = arith.constant 0 : i32
    %c0_i32_1 = arith.constant 0 : i32
    return %c0_i32, %c0_i32_0 : i32, i32
  }
  func.func @transform_7(%arg0: i32) -> (i32, i32) {
    %c0_i32 = arith.constant 0 : i32
    %c0_i32_0 = arith.constant 0 : i32
    %c0_i32_1 = arith.constant 0 : i32
    return %c0_i32, %c0_i32_0 : i32, i32
  }
  func.func @transform_8(%arg0: i32) -> (i32, i32) {
    %c0_i32 = arith.constant 0 : i32
    %c0_i32_0 = arith.constant 0 : i32
    %c0_i32_1 = arith.constant 0 : i32
    return %c0_i32, %c0_i32_0 : i32, i32
  }
  func.func @transform_9(%arg0: i32) -> (i32, i32) {
    %c0_i32 = arith.constant 0 : i32
    %c0_i32_0 = arith.constant 0 : i32
    %c0_i32_1 = arith.constant 0 : i32
    return %c0_i32, %c0_i32_0 : i32, i32
  }
  func.func @transform_10(%arg0: i32) -> (i32, i32) {
    %c0_i32 = arith.constant 0 : i32
    %c0_i32_0 = arith.constant 0 : i32
    %c0_i32_1 = arith.constant 0 : i32
    return %c0_i32, %c0_i32_0 : i32, i32
  }
  func.func @transform_11(%arg0: i32) -> (i32, i32) {
    %c0_i32 = arith.constant 0 : i32
    %c0_i32_0 = arith.constant 0 : i32
    %c0_i32_1 = arith.constant 0 : i32
    return %c0_i32, %c0_i32_0 : i32, i32
  }
  func.func @transform_12(%arg0: i32) -> (i32, i32) {
    %c0_i32 = arith.constant 0 : i32
    %c0_i32_0 = arith.constant 0 : i32
    %c0_i32_1 = arith.constant 0 : i32
    return %c0_i32, %c0_i32_0 : i32, i32
  }
  func.func @transform_13(%arg0: i32) -> (i32, i32) {
    %c0_i32 = arith.constant 0 : i32
    %c0_i32_0 = arith.constant 0 : i32
    %c0_i32_1 = arith.constant 0 : i32
    return %c0_i32, %c0_i32_0 : i32, i32
  }
  func.func @transform_14(%arg0: i32) -> (i32, i32) {
    %c0_i32 = arith.constant 0 : i32
    %c0_i32_0 = arith.constant 0 : i32
    return %arg0, %c0_i32 : i32, i32
  }
}

</mosaic_0001>

<llo_original>
// kernel: cvcnn_forward.1
$region0: #{cvcnn_forward.1}
  #allocation0 [shape = 'u32[]', space=smem, size = 0x4, offset = 0x4, fixed_abs, tag = 'smem constant byte address 0x4 - core index']
  #allocation1 [shape = 'u32[144,128]{1,0:T(1,128)}', space=vmem, size = 0x12000, scoped, tag = 'internal scratch']
  #allocation2 [shape = 'f32[2,24,140]{2,1,0:T(8,128)}', space=vmem, size = 0xc000, scoped, tag = 'scratch operand']
  #allocation3 [shape = 'f32[2,24,140]{2,1,0:T(8,128)}', space=vmem, size = 0xc000, scoped, tag = 'scratch operand']
  #allocation4 [shape = 'f32[2,8,1800]{2,1,0:T(8,128)}', space=vmem, size = 0x1e000, scoped, tag = 'scratch operand']
  #allocation5 [shape = 'f32[2,8,1800]{2,1,0:T(8,128)}', space=vmem, size = 0x1e000, scoped, tag = 'scratch operand']
  #allocation6 [shape = 'f32[2,4,60]{2,1,0:T(4,128)}', space=vmem, size = 0x1000, scoped, tag = 'scratch operand']
  #allocation7 [shape = 'f32[2,4,60]{2,1,0:T(4,128)}', space=vmem, size = 0x1000, scoped, tag = 'scratch operand']
  %s0 = inlined_call_operand.vmem [shape: f32[2,4,7,28], index: 0, kind: input, shape index: {}]
  %s1 = inlined_call_operand.vmem [shape: f32[2,4,7,28], index: 1, kind: input, shape index: {}]
  %s2 = inlined_call_operand.hbm [shape: bf16[140,1440], index: 2, kind: input, shape index: {}]
  %s3 = inlined_call_operand.hbm [shape: bf16[140,1440], index: 3, kind: input, shape index: {}]
  %s4 = inlined_call_operand.vmem [shape: f32[1,1440], index: 4, kind: input, shape index: {}]
  %s5 = inlined_call_operand.hbm [shape: bf16[1800,240], index: 5, kind: input, shape index: {}]
  %s6 = inlined_call_operand.hbm [shape: bf16[1800,240], index: 6, kind: input, shape index: {}]
  %s7 = inlined_call_operand.vmem [shape: f32[1,240], index: 7, kind: input, shape index: {}]
  %s8 = inlined_call_operand.vmem [shape: bf16[240,256], index: 8, kind: input, shape index: {}]
  %s9 = inlined_call_operand.hbm [shape: bf16[240,256], index: 9, kind: input, shape index: {}]
  %s10 = inlined_call_operand.vmem [shape: f32[1,256], index: 10, kind: input, shape index: {}]
  %s11 = inlined_call_operand.vmem [shape: bf16[128,20], index: 11, kind: input, shape index: {}]
  %s12 = inlined_call_operand.vmem [shape: bf16[128,20], index: 12, kind: input, shape index: {}]
  %s13 = inlined_call_operand.vmem [shape: f32[1,20], index: 13, kind: input, shape index: {}]
  %s14 = inlined_call_operand.hbm [shape: f32[2,10], index: 14, kind: output, shape index: {}]
  %s15 = sld [smem:[#allocation0]]
  $region86: #{cvcnn_forward.1} parent=0
    _
  %s17 = ssub.s32 1, %s15
  %s18 = scalar_select 0, %s17, %s15
  $region1: #{cvcnn_forward.1} parent=0
    #allocation8 [shape = 'u8[442368]{0}', space=vmem, size = 0x6c000, scoped, tag = 'input window, operand 2, single buffered']
    #allocation9 [shape = 's32[1]{0}', space=sflag, size = 0x4, scoped, tag = 'scoped memory for cvcnn_forward.1']
    #allocation10 [shape = 's32[1]{0}', space=sflag, size = 0x4, scoped, tag = 'scoped memory for cvcnn_forward.1']
    #allocation11 [shape = 'u8[442368]{0}', space=vmem, size = 0x6c000, scoped, tag = 'input window, operand 3, single buffered']
    #allocation12 [shape = 's32[1]{0}', space=sflag, size = 0x4, scoped, tag = 'scoped memory for cvcnn_forward.1']
    #allocation13 [shape = 'u8[921600]{0}', space=vmem, size = 0xe1000, scoped, tag = 'input window, operand 5, single buffered']
    #allocation14 [shape = 'u8[921600]{0}', space=vmem, size = 0xe1000, scoped, tag = 'input window, operand 6, single buffered']
    #allocation15 [shape = 's32[1]{0}', space=sflag, size = 0x4, scoped, tag = 'scoped memory for cvcnn_forward.1']
    #allocation16 [shape = 'u8[122880]{0}', space=vmem, size = 0x1e000, scoped, tag = 'input window, operand 9, single buffered']
    #allocation17 [shape = 'u8[1024]{0}', space=vmem, size = 0x400, scoped, tag = 'output window, operand 0, single buffered']
    %19 = vsyncpa [#allocation9], 0
    %20 = vsyncpa [#allocation12], 0
    %21 = vsyncpa [#allocation15], 0
    %22 = vsyncpa [#allocation10], 0
    // Predicated region
    $region2: #{cvcnn_forward.1} parent=1 // pred_check
      _
    $region3: #{cvcnn_forward.1} parent=1 // pred_check_branch
      %24 = sbr.rel (0) target = $region5
    $region4: #{cvcnn_forward.1} parent=1 // pred_region
      _
    $region5: #{cvcnn_forward.1} parent=1 // pred_fallthru
      _
    // Predicated region
    $region6: #{cvcnn_forward.1} parent=1 // pred_check
      _
    $region7: #{cvcnn_forward.1} parent=1 // pred_check_branch
      %26 = sbr.rel (0) target = $region9
    $region8: #{cvcnn_forward.1} parent=1 // pred_region
      _
    $region9: #{cvcnn_forward.1} parent=1 // pred_fallthru
      _
    // Predicated region
    $region10: #{cvcnn_forward.1} parent=1 // pred_check
      _
    $region11: #{cvcnn_forward.1} parent=1 // pred_check_branch
      %28 = sbr.rel (0) target = $region13
    $region12: #{cvcnn_forward.1} parent=1 // pred_region
      %s30 = ssub.s32 13824, 13824
      %31 = vsyncadd [#allocation9], %s30
      %s32 = sshll.u32 [#allocation8], 4
      %s33 = int_to_ptr.vmem [resolvable:$true] %s32
      %38 = dma.hbm_to_vmem [thread:$0]  %s2, 13824, %s33, [#allocation9], 768, 768, 48
    $region13: #{cvcnn_forward.1} parent=1 // pred_fallthru
      _
    // Predicated region
    $region14: #{cvcnn_forward.1} parent=1 // pred_check
      _
    $region15: #{cvcnn_forward.1} parent=1 // pred_check_branch
      %40 = sbr.rel (0) target = $region17
    $region16: #{cvcnn_forward.1} parent=1 // pred_region
      %s42 = ssub.s32 13824, 13824
      %43 = vsyncadd [#allocation12], %s42
      %s44 = sshll.u32 [#allocation11], 4
      %s45 = int_to_ptr.vmem [resolvable:$true] %s44
      %50 = dma.hbm_to_vmem [thread:$0]  %s3, 13824, %s45, [#allocation12], 768, 768, 48
    $region17: #{cvcnn_forward.1} parent=1 // pred_fallthru
      _
    // Predicated region
    $region18: #{cvcnn_forward.1} parent=1 // pred_check
      _
    $region19: #{cvcnn_forward.1} parent=1 // pred_check_branch
      %52 = sbr.rel (0) target = $region21
    $region20: #{cvcnn_forward.1} parent=1 // pred_region
      _
    $region21: #{cvcnn_forward.1} parent=1 // pred_fallthru
      _
    // Predicated region
    $region22: #{cvcnn_forward.1} parent=1 // pred_check
      _
    $region23: #{cvcnn_forward.1} parent=1 // pred_check_branch
      %54 = sbr.rel (0) target = $region25
    $region24: #{cvcnn_forward.1} parent=1 // pred_region
      %s56 = ssub.s32 28800, 28800
      %57 = vsyncadd [#allocation12], %s56
      %s58 = sshll.u32 [#allocation13], 4
      %s59 = int_to_ptr.vmem [resolvable:$true] %s58
      %64 = dma.hbm_to_vmem [thread:$0]  %s5, 28800, %s59, [#allocation12], 128, 128, 8
    $region25: #{cvcnn_forward.1} parent=1 // pred_fallthru
      _
    // Predicated region
    $region26: #{cvcnn_forward.1} parent=1 // pred_check
      _
    $region27: #{cvcnn_forward.1} parent=1 // pred_check_branch
      %66 = sbr.rel (0) target = $region29
    $region28: #{cvcnn_forward.1} parent=1 // pred_region
      %s68 = ssub.s32 28800, 28800
      %69 = vsyncadd [#allocation15], %s68
      %s70 = sshll.u32 [#allocation14], 4
      %s71 = int_to_ptr.vmem [resolvable:$true] %s70
      %76 = dma.hbm_to_vmem [thread:$0]  %s6, 28800, %s71, [#allocation15], 128, 128, 8
    $region29: #{cvcnn_forward.1} parent=1 // pred_fallthru
      _
    // Predicated region
    $region30: #{cvcnn_forward.1} parent=1 // pred_check
      _
    $region31: #{cvcnn_forward.1} parent=1 // pred_check_branch
      %78 = sbr.rel (0) target = $region33
    $region32: #{cvcnn_forward.1} parent=1 // pred_region
      _
    $region33: #{cvcnn_forward.1} parent=1 // pred_fallthru
      _
    // Predicated region
    $region34: #{cvcnn_forward.1} parent=1 // pred_check
      _
    $region35: #{cvcnn_forward.1} parent=1 // pred_check_branch
      %80 = sbr.rel (0) target = $region37
    $region36: #{cvcnn_forward.1} parent=1 // pred_region
      _
    $region37: #{cvcnn_forward.1} parent=1 // pred_fallthru
      _
    // Predicated region
    $region38: #{cvcnn_forward.1} parent=1 // pred_check
      _
    $region39: #{cvcnn_forward.1} parent=1 // pred_check_branch
      %82 = sbr.rel (0) target = $region41
    $region40: #{cvcnn_forward.1} parent=1 // pred_region
      %s84 = ssub.s32 3840, 3840
      %85 = vsyncadd [#allocation15], %s84
      %s86 = sshll.u32 [#allocation16], 4
      %s87 = int_to_ptr.vmem [resolvable:$true] %s86
      %92 = dma.hbm_to_vmem [thread:$0]  %s9, 3840, %s87, [#allocation15], 128, 128, 8
    $region41: #{cvcnn_forward.1} parent=1 // pred_fallthru
      _
    // Predicated region
    $region42: #{cvcnn_forward.1} parent=1 // pred_check
      _
    $region43: #{cvcnn_forward.1} parent=1 // pred_check_branch
      %94 = sbr.rel (0) target = $region45
    $region44: #{cvcnn_forward.1} parent=1 // pred_region
      _
    $region45: #{cvcnn_forward.1} parent=1 // pred_fallthru
      _
    // Predicated region
    $region46: #{cvcnn_forward.1} parent=1 // pred_check
      _
    $region47: #{cvcnn_forward.1} parent=1 // pred_check_branch
      %96 = sbr.rel (0) target = $region49
    $region48: #{cvcnn_forward.1} parent=1 // pred_region
      _
    $region49: #{cvcnn_forward.1} parent=1 // pred_fallthru
      _
    // Predicated region
    $region50: #{cvcnn_forward.1} parent=1 // pred_check
      _
    $region51: #{cvcnn_forward.1} parent=1 // pred_check_branch
      %98 = sbr.rel (0) target = $region53
    $region52: #{cvcnn_forward.1} parent=1 // pred_region
      _
    $region53: #{cvcnn_forward.1} parent=1 // pred_fallthru
      _
    // Predicated region
    $region54: #{cvcnn_forward.1} parent=1 // pred_check
      _
    $region55: #{cvcnn_forward.1} parent=1 // pred_check_branch
      %100 = sbr.rel (0) target = $region57
    $region56: #{cvcnn_forward.1} parent=1 // pred_region
      _
    $region57: #{cvcnn_forward.1} parent=1 // pred_fallthru
      _
    // Predicated region
    $region58: #{cvcnn_forward.1} parent=1 // pred_check
      _
    $region59: #{cvcnn_forward.1} parent=1 // pred_check_branch
      %102 = sbr.rel (0) target = $region61
    $region60: #{cvcnn_forward.1} parent=1 // pred_region
      %103 = dma.done [#allocation9], 13824
    $region61: #{cvcnn_forward.1} parent=1 // pred_fallthru
      _
    // Predicated region
    $region62: #{cvcnn_forward.1} parent=1 // pred_check
      _
    $region63: #{cvcnn_forward.1} parent=1 // pred_check_branch
      %105 = sbr.rel (0) target = $region65
    $region64: #{cvcnn_forward.1} parent=1 // pred_region
      %106 = dma.done [#allocation12], 13824
    $region65: #{cvcnn_forward.1} parent=1 // pred_fallthru
      _
    // Predicated region
    $region66: #{cvcnn_forward.1} parent=1 // pred_check
      _
    $region67: #{cvcnn_forward.1} parent=1 // pred_check_branch
      %108 = sbr.rel (0) target = $region69
    $region68: #{cvcnn_forward.1} parent=1 // pred_region
      %109 = dma.done [#allocation12], 28800
    $region69: #{cvcnn_forward.1} parent=1 // pred_fallthru
      _
    // Predicated region
    $region70: #{cvcnn_forward.1} parent=1 // pred_check
      _
    $region71: #{cvcnn_forward.1} parent=1 // pred_check_branch
      %111 = sbr.rel (0) target = $region73
    $region72: #{cvcnn_forward.1} parent=1 // pred_region
      %112 = dma.done [#allocation15], 28800
    $region73: #{cvcnn_forward.1} parent=1 // pred_fallthru
      _
    // Predicated region
    $region74: #{cvcnn_forward.1} parent=1 // pred_check
      _
    $region75: #{cvcnn_forward.1} parent=1 // pred_check_branch
      %114 = sbr.rel (0) target = $region77
    $region76: #{cvcnn_forward.1} parent=1 // pred_region
      %115 = dma.done [#allocation15], 3840
    $region77: #{cvcnn_forward.1} parent=1 // pred_fallthru
      _
    %v117 = vld [vmem:[%s0] sm:$0x7f]
    %v118 = vld [vmem:[%s0 + $0x8] sm:$0x7f]
    %v119 = vld [vmem:[%s0 + $0x10] sm:$0x7f]
    %v120 = vld [vmem:[%s0 + $0x18] sm:$0x7f]
    %v121 = vld [vmem:[%s0 + $0x20] sm:$0x7f]
    %v122 = vld [vmem:[%s0 + $0x28] sm:$0x7f]
    %v123 = vld [vmem:[%s0 + $0x30] sm:$0x7f]
    %v124 = vld [vmem:[%s0 + $0x38] sm:$0x7f]
    %v125 = vld [vmem:[%s1] sm:$0x7f]
    %v126 = vld [vmem:[%s1 + $0x8] sm:$0x7f]
    %v127 = vld [vmem:[%s1 + $0x10] sm:$0x7f]
    %v128 = vld [vmem:[%s1 + $0x18] sm:$0x7f]
    %v129 = vld [vmem:[%s1 + $0x20] sm:$0x7f]
    %v130 = vld [vmem:[%s1 + $0x28] sm:$0x7f]
    %v131 = vld [vmem:[%s1 + $0x30] sm:$0x7f]
    %v132 = vld [vmem:[%s1 + $0x38] sm:$0x7f]
    %vm133 = vcmask 226304
    %134 = vst.msk [vmem:[#allocation2] sm:$0x3f] %vm133, %v117
    %135 = vst.msk [vmem:[#allocation2 + $0x30] sm:$0x3f] %vm133, %v121
    %136 = vst.msk [vmem:[#allocation3] sm:$0x3f] %vm133, %v125
    %137 = vst.msk [vmem:[#allocation3 + $0x30] sm:$0x3f] %vm133, %v129
    %140 = vrot.lane.b32.xlu0 %v118, 28
    %v141 = vpop.permute.xlu0 %140
    %142 = vrot.lane.b32.xlu0 %v122, 28
    %v143 = vpop.permute.xlu0 %142
    %vm146 = vcmask 455904
    %147 = vst.msk [vmem:[#allocation2] sm:$0x3f] %vm146, %v141
    %148 = vst.msk [vmem:[#allocation2 + $0x30] sm:$0x3f] %vm146, %v143
    %151 = vrot.lane.b32.xlu0 %v126, 28
    %v152 = vpop.permute.xlu0 %151
    %153 = vrot.lane.b32.xlu0 %v130, 28
    %v154 = vpop.permute.xlu0 %153
    %157 = vst.msk [vmem:[#allocation3] sm:$0x3f] %vm146, %v152
    %158 = vst.msk [vmem:[#allocation3 + $0x30] sm:$0x3f] %vm146, %v154
    %161 = vrot.lane.b32.xlu0 %v119, 56
    %v162 = vpop.permute.xlu0 %161
    %163 = vrot.lane.b32.xlu0 %v123, 56
    %v164 = vpop.permute.xlu0 %163
    %vm167 = vcmask 685504
    %168 = vst.msk [vmem:[#allocation2] sm:$0x3f] %vm167, %v162
    %169 = vst.msk [vmem:[#allocation2 + $0x30] sm:$0x3f] %vm167, %v164
    %172 = vrot.lane.b32.xlu0 %v127, 56
    %v173 = vpop.permute.xlu0 %172
    %174 = vrot.lane.b32.xlu0 %v131, 56
    %v175 = vpop.permute.xlu0 %174
    %178 = vst.msk [vmem:[#allocation3] sm:$0x3f] %vm167, %v173
    %179 = vst.msk [vmem:[#allocation3 + $0x30] sm:$0x3f] %vm167, %v175
    %182 = vrot.lane.b32.xlu0 %v120, 84
    %v183 = vpop.permute.xlu0 %182
    %184 = vrot.lane.b32.xlu0 %v124, 84
    %v185 = vpop.permute.xlu0 %184
    %vm188 = vcmask 915104
    %189 = vst.msk [vmem:[#allocation2] sm:$0x3f] %vm188, %v183
    %190 = vst.msk [vmem:[#allocation2 + $0x30] sm:$0x3f] %vm188, %v185
    %193 = vrot.lane.b32.xlu0 %v128, 84
    %v194 = vpop.permute.xlu0 %193
    %195 = vrot.lane.b32.xlu0 %v132, 84
    %v196 = vpop.permute.xlu0 %195
    %199 = vst.msk [vmem:[#allocation3] sm:$0x3f] %vm188, %v194
    %200 = vst.msk [vmem:[#allocation3 + $0x30] sm:$0x3f] %vm188, %v196
    %v203 = vrot.slane %v117, 1
    %v204 = vrot.slane %v121, 1
    %205 = vrot.lane.b32.xlu0 %v203, 112
    %v206 = vpop.permute.xlu0 %205
    %207 = vrot.lane.b32.xlu0 %v204, 112
    %v208 = vpop.permute.xlu0 %207
    %vm211 = vcmask 1046400
    %212 = vst.msk [vmem:[#allocation2] sm:$0x3f] %vm211, %v206
    %vm213 = vcmask 95232
    %214 = vst.msk [vmem:[#allocation2 + $0x8] sm:$0x3f] %vm213, %v206
    %215 = vst.msk [vmem:[#allocation2 + $0x30] sm:$0x3f] %vm211, %v208
    %216 = vst.msk [vmem:[#allocation2 + $0x38] sm:$0x3f] %vm213, %v208
    %v219 = vrot.slane %v125, 1
    %v220 = vrot.slane %v129, 1
    %221 = vrot.lane.b32.xlu0 %v219, 112
    %v222 = vpop.permute.xlu0 %221
    %223 = vrot.lane.b32.xlu0 %v220, 112
    %v224 = vpop.permute.xlu0 %223
    %227 = vst.msk [vmem:[#allocation3] sm:$0x3f] %vm211, %v222
    %228 = vst.msk [vmem:[#allocation3 + $0x8] sm:$0x3f] %vm213, %v222
    %229 = vst.msk [vmem:[#allocation3 + $0x30] sm:$0x3f] %vm211, %v224
    %230 = vst.msk [vmem:[#allocation3 + $0x38] sm:$0x3f] %vm213, %v224
    %v231 = vrot.slane %v119, 2
    %v232 = vrot.slane %v123, 2
    %vm235 = vcmask 228358
    %236 = vst.msk [vmem:[#allocation2] sm:$0xc0] %vm235, %v231
    %vm237 = vcmask 224256
    %238 = vst.msk [vmem:[#allocation2 + $0x10] sm:$0xf] %vm237, %v231
    %239 = vst.msk [vmem:[#allocation2 + $0x30] sm:$0xc0] %vm235, %v232
    %240 = vst.msk [vmem:[#allocation2 + $0x40] sm:$0xf] %vm237, %v232
    %v241 = vrot.slane %v127, 2
    %v242 = vrot.slane %v131, 2
    %245 = vst.msk [vmem:[#allocation3] sm:$0xc0] %vm235, %v241
    %246 = vst.msk [vmem:[#allocation3 + $0x10] sm:$0xf] %vm237, %v241
    %247 = vst.msk [vmem:[#allocation3 + $0x30] sm:$0xc0] %vm235, %v242
    %248 = vst.msk [vmem:[#allocation3 + $0x40] sm:$0xf] %vm237, %v242
    %v249 = vrot.slane %v120, 2
    %v250 = vrot.slane %v124, 2
    %251 = vrot.lane.b32.xlu0 %v249, 28
    %v252 = vpop.permute.xlu0 %251
    %253 = vrot.lane.b32.xlu0 %v250, 28
    %v254 = vpop.permute.xlu0 %253
    %vm257 = vcmask 457958
    %258 = vst.msk [vmem:[#allocation2] sm:$0xc0] %vm257, %v252
    %vm259 = vcmask 453856
    %260 = vst.msk [vmem:[#allocation2 + $0x10] sm:$0xf] %vm259, %v252
    %261 = vst.msk [vmem:[#allocation2 + $0x30] sm:$0xc0] %vm257, %v254
    %262 = vst.msk [vmem:[#allocation2 + $0x40] sm:$0xf] %vm259, %v254
    %v263 = vrot.slane %v128, 2
    %v264 = vrot.slane %v132, 2
    %265 = vrot.lane.b32.xlu0 %v263, 28
    %v266 = vpop.permute.xlu0 %265
    %267 = vrot.lane.b32.xlu0 %v264, 28
    %v268 = vpop.permute.xlu0 %267
    %271 = vst.msk [vmem:[#allocation3] sm:$0xc0] %vm257, %v266
    %272 = vst.msk [vmem:[#allocation3 + $0x10] sm:$0xf] %vm259, %v266
    %273 = vst.msk [vmem:[#allocation3 + $0x30] sm:$0xc0] %vm257, %v268
    %274 = vst.msk [vmem:[#allocation3 + $0x40] sm:$0xf] %vm259, %v268
    %v275 = vrot.slane %v117, 3
    %v276 = vrot.slane %v121, 3
    %277 = vrot.lane.b32.xlu0 %v275, 56
    %v278 = vpop.permute.xlu0 %277
    %279 = vrot.lane.b32.xlu0 %v276, 56
    %v280 = vpop.permute.xlu0 %279
    %vm283 = vcmask 687558
    %284 = vst.msk [vmem:[#allocation2] sm:$0xc0] %vm283, %v278
    %vm285 = vcmask 683456
    %286 = vst.msk [vmem:[#allocation2 + $0x10] sm:$0xf] %vm285, %v278
    %287 = vst.msk [vmem:[#allocation2 + $0x30] sm:$0xc0] %vm283, %v280
    %288 = vst.msk [vmem:[#allocation2 + $0x40] sm:$0xf] %vm285, %v280
    %v289 = vrot.slane %v125, 3
    %v290 = vrot.slane %v129, 3
    %291 = vrot.lane.b32.xlu0 %v289, 56
    %v292 = vpop.permute.xlu0 %291
    %293 = vrot.lane.b32.xlu0 %v290, 56
    %v294 = vpop.permute.xlu0 %293
    %297 = vst.msk [vmem:[#allocation3] sm:$0xc0] %vm283, %v292
    %298 = vst.msk [vmem:[#allocation3 + $0x10] sm:$0xf] %vm285, %v292
    %299 = vst.msk [vmem:[#allocation3 + $0x30] sm:$0xc0] %vm283, %v294
    %300 = vst.msk [vmem:[#allocation3 + $0x40] sm:$0xf] %vm285, %v294
    %v301 = vrot.slane %v118, 3
    %v302 = vrot.slane %v122, 3
    %303 = vrot.lane.b32.xlu0 %v301, 84
    %v304 = vpop.permute.xlu0 %303
    %305 = vrot.lane.b32.xlu0 %v302, 84
    %v306 = vpop.permute.xlu0 %305
    %vm309 = vcmask 917158
    %310 = vst.msk [vmem:[#allocation2] sm:$0xc0] %vm309, %v304
    %vm311 = vcmask 913056
    %312 = vst.msk [vmem:[#allocation2 + $0x10] sm:$0xf] %vm311, %v304
    %313 = vst.msk [vmem:[#allocation2 + $0x30] sm:$0xc0] %vm309, %v306
    %314 = vst.msk [vmem:[#allocation2 + $0x40] sm:$0xf] %vm311, %v306
    %v315 = vrot.slane %v126, 3
    %v316 = vrot.slane %v130, 3
    %317 = vrot.lane.b32.xlu0 %v315, 84
    %v318 = vpop.permute.xlu0 %317
    %319 = vrot.lane.b32.xlu0 %v316, 84
    %v320 = vpop.permute.xlu0 %319
    %323 = vst.msk [vmem:[#allocation3] sm:$0xc0] %vm309, %v318
    %324 = vst.msk [vmem:[#allocation3 + $0x10] sm:$0xf] %vm311, %v318
    %325 = vst.msk [vmem:[#allocation3 + $0x30] sm:$0xc0] %vm309, %v320
    %326 = vst.msk [vmem:[#allocation3 + $0x40] sm:$0xf] %vm311, %v320
    %v327 = vrot.slane %v119, 3
    %v328 = vrot.slane %v123, 3
    %329 = vrot.lane.b32.xlu0 %v327, 112
    %v330 = vpop.permute.xlu0 %329
    %331 = vrot.lane.b32.xlu0 %v328, 112
    %v332 = vpop.permute.xlu0 %331
    %vm335 = vcmask 1048454
    %336 = vst.msk [vmem:[#allocation2] sm:$0xc0] %vm335, %v330
    %vm337 = vcmask 97286
    %338 = vst.msk [vmem:[#allocation2 + $0x8] sm:$0xc0] %vm337, %v330
    %vm339 = vcmask 1044352
    %340 = vst.msk [vmem:[#allocation2 + $0x10] sm:$0xf] %vm339, %v330
    %vm341 = vcmask 93184
    %342 = vst.msk [vmem:[#allocation2 + $0x18] sm:$0xf] %vm341, %v330
    %343 = vst.msk [vmem:[#allocation2 + $0x30] sm:$0xc0] %vm335, %v332
    %344 = vst.msk [vmem:[#allocation2 + $0x38] sm:$0xc0] %vm337, %v332
    %345 = vst.msk [vmem:[#allocation2 + $0x40] sm:$0xf] %vm339, %v332
    %346 = vst.msk [vmem:[#allocation2 + $0x48] sm:$0xf] %vm341, %v332
    %v347 = vrot.slane %v127, 3
    %v348 = vrot.slane %v131, 3
    %349 = vrot.lane.b32.xlu0 %v347, 112
    %v350 = vpop.permute.xlu0 %349
    %351 = vrot.lane.b32.xlu0 %v348, 112
    %v352 = vpop.permute.xlu0 %351
    %355 = vst.msk [vmem:[#allocation3] sm:$0xc0] %vm335, %v350
    %356 = vst.msk [vmem:[#allocation3 + $0x8] sm:$0xc0] %vm337, %v350
    %357 = vst.msk [vmem:[#allocation3 + $0x10] sm:$0xf] %vm339, %v350
    %358 = vst.msk [vmem:[#allocation3 + $0x18] sm:$0xf] %vm341, %v350
    %359 = vst.msk [vmem:[#allocation3 + $0x30] sm:$0xc0] %vm335, %v352
    %360 = vst.msk [vmem:[#allocation3 + $0x38] sm:$0xc0] %vm337, %v352
    %361 = vst.msk [vmem:[#allocation3 + $0x40] sm:$0xf] %vm339, %v352
    %362 = vst.msk [vmem:[#allocation3 + $0x48] sm:$0xf] %vm341, %v352
    %v363 = vrot.slane %v118, 4
    %v364 = vrot.slane %v122, 4
    %vm367 = vcmask 228356
    %368 = vst.msk [vmem:[#allocation2 + $0x10] sm:$0xf0] %vm367, %v363
    %vm369 = vcmask 222208
    %370 = vst.msk [vmem:[#allocation2 + $0x20] sm:$0x3] %vm369, %v363
    %371 = vst.msk [vmem:[#allocation2 + $0x40] sm:$0xf0] %vm367, %v364
    %372 = vst.msk [vmem:[#allocation2 + $0x50] sm:$0x3] %vm369, %v364
    %v373 = vrot.slane %v126, 4
    %v374 = vrot.slane %v130, 4
    %377 = vst.msk [vmem:[#allocation3 + $0x10] sm:$0xf0] %vm367, %v373
    %378 = vst.msk [vmem:[#allocation3 + $0x20] sm:$0x3] %vm369, %v373
    %379 = vst.msk [vmem:[#allocation3 + $0x40] sm:$0xf0] %vm367, %v374
    %380 = vst.msk [vmem:[#allocation3 + $0x50] sm:$0x3] %vm369, %v374
    %v381 = vrot.slane %v119, 4
    %v382 = vrot.slane %v123, 4
    %383 = vrot.lane.b32.xlu0 %v381, 28
    %v384 = vpop.permute.xlu0 %383
    %385 = vrot.lane.b32.xlu0 %v382, 28
    %v386 = vpop.permute.xlu0 %385
    %vm389 = vcmask 457956
    %390 = vst.msk [vmem:[#allocation2 + $0x10] sm:$0xf0] %vm389, %v384
    %vm391 = vcmask 451808
    %392 = vst.msk [vmem:[#allocation2 + $0x20] sm:$0x3] %vm391, %v384
    %393 = vst.msk [vmem:[#allocation2 + $0x40] sm:$0xf0] %vm389, %v386
    %394 = vst.msk [vmem:[#allocation2 + $0x50] sm:$0x3] %vm391, %v386
    %v395 = vrot.slane %v127, 4
    %v396 = vrot.slane %v131, 4
    %397 = vrot.lane.b32.xlu0 %v395, 28
    %v398 = vpop.permute.xlu0 %397
    %399 = vrot.lane.b32.xlu0 %v396, 28
    %v400 = vpop.permute.xlu0 %399
    %403 = vst.msk [vmem:[#allocation3 + $0x10] sm:$0xf0] %vm389, %v398
    %404 = vst.msk [vmem:[#allocation3 + $0x20] sm:$0x3] %vm391, %v398
    %405 = vst.msk [vmem:[#allocation3 + $0x40] sm:$0xf0] %vm389, %v400
    %406 = vst.msk [vmem:[#allocation3 + $0x50] sm:$0x3] %vm391, %v400
    %v407 = vrot.slane %v120, 4
    %v408 = vrot.slane %v124, 4
    %409 = vrot.lane.b32.xlu0 %v407, 56
    %v410 = vpop.permute.xlu0 %409
    %411 = vrot.lane.b32.xlu0 %v408, 56
    %v412 = vpop.permute.xlu0 %411
    %vm415 = vcmask 687556
    %416 = vst.msk [vmem:[#allocation2 + $0x10] sm:$0xf0] %vm415, %v410
    %vm417 = vcmask 681408
    %418 = vst.msk [vmem:[#allocation2 + $0x20] sm:$0x3] %vm417, %v410
    %419 = vst.msk [vmem:[#allocation2 + $0x40] sm:$0xf0] %vm415, %v412
    %420 = vst.msk [vmem:[#allocation2 + $0x50] sm:$0x3] %vm417, %v412
    %v421 = vrot.slane %v128, 4
    %v422 = vrot.slane %v132, 4
    %423 = vrot.lane.b32.xlu0 %v421, 56
    %v424 = vpop.permute.xlu0 %423
    %425 = vrot.lane.b32.xlu0 %v422, 56
    %v426 = vpop.permute.xlu0 %425
    %429 = vst.msk [vmem:[#allocation3 + $0x10] sm:$0xf0] %vm415, %v424
    %430 = vst.msk [vmem:[#allocation3 + $0x20] sm:$0x3] %vm417, %v424
    %431 = vst.msk [vmem:[#allocation3 + $0x40] sm:$0xf0] %vm415, %v426
    %432 = vst.msk [vmem:[#allocation3 + $0x50] sm:$0x3] %vm417, %v426
    %v433 = vrot.slane %v117, 5
    %v434 = vrot.slane %v121, 5
    %435 = vrot.lane.b32.xlu0 %v433, 84
    %v436 = vpop.permute.xlu0 %435
    %437 = vrot.lane.b32.xlu0 %v434, 84
    %v438 = vpop.permute.xlu0 %437
    %vm441 = vcmask 917156
    %442 = vst.msk [vmem:[#allocation2 + $0x10] sm:$0xf0] %vm441, %v436
    %vm443 = vcmask 911008
    %444 = vst.msk [vmem:[#allocation2 + $0x20] sm:$0x3] %vm443, %v436
    %445 = vst.msk [vmem:[#allocation2 + $0x40] sm:$0xf0] %vm441, %v438
    %446 = vst.msk [vmem:[#allocation2 + $0x50] sm:$0x3] %vm443, %v438
    %v447 = vrot.slane %v125, 5
    %v448 = vrot.slane %v129, 5
    %449 = vrot.lane.b32.xlu0 %v447, 84
    %v450 = vpop.permute.xlu0 %449
    %451 = vrot.lane.b32.xlu0 %v448, 84
    %v452 = vpop.permute.xlu0 %451
    %455 = vst.msk [vmem:[#allocation3 + $0x10] sm:$0xf0] %vm441, %v450
    %456 = vst.msk [vmem:[#allocation3 + $0x20] sm:$0x3] %vm443, %v450
    %457 = vst.msk [vmem:[#allocation3 + $0x40] sm:$0xf0] %vm441, %v452
    %458 = vst.msk [vmem:[#allocation3 + $0x50] sm:$0x3] %vm443, %v452
    %v459 = vrot.slane %v118, 5
    %v460 = vrot.slane %v122, 5
    %461 = vrot.lane.b32.xlu0 %v459, 112
    %v462 = vpop.permute.xlu0 %461
    %463 = vrot.lane.b32.xlu0 %v460, 112
    %v464 = vpop.permute.xlu0 %463
    %vm467 = vcmask 1048452
    %468 = vst.msk [vmem:[#allocation2 + $0x10] sm:$0xf0] %vm467, %v462
    %vm469 = vcmask 97284
    %470 = vst.msk [vmem:[#allocation2 + $0x18] sm:$0xf0] %vm469, %v462
    %vm471 = vcmask 1042304
    %472 = vst.msk [vmem:[#allocation2 + $0x20] sm:$0x3] %vm471, %v462
    %vm473 = vcmask 91136
    %474 = vst.msk [vmem:[#allocation2 + $0x28] sm:$0x3] %vm473, %v462
    %475 = vst.msk [vmem:[#allocation2 + $0x40] sm:$0xf0] %vm467, %v464
    %476 = vst.msk [vmem:[#allocation2 + $0x48] sm:$0xf0] %vm469, %v464
    %477 = vst.msk [vmem:[#allocation2 + $0x50] sm:$0x3] %vm471, %v464
    %478 = vst.msk [vmem:[#allocation2 + $0x58] sm:$0x3] %vm473, %v464
    %v479 = vrot.slane %v126, 5
    %v480 = vrot.slane %v130, 5
    %481 = vrot.lane.b32.xlu0 %v479, 112
    %v482 = vpop.permute.xlu0 %481
    %483 = vrot.lane.b32.xlu0 %v480, 112
    %v484 = vpop.permute.xlu0 %483
    %487 = vst.msk [vmem:[#allocation3 + $0x10] sm:$0xf0] %vm467, %v482
    %488 = vst.msk [vmem:[#allocation3 + $0x18] sm:$0xf0] %vm469, %v482
    %489 = vst.msk [vmem:[#allocation3 + $0x20] sm:$0x3] %vm471, %v482
    %490 = vst.msk [vmem:[#allocation3 + $0x28] sm:$0x3] %vm473, %v482
    %491 = vst.msk [vmem:[#allocation3 + $0x40] sm:$0xf0] %vm467, %v484
    %492 = vst.msk [vmem:[#allocation3 + $0x48] sm:$0xf0] %vm469, %v484
    %493 = vst.msk [vmem:[#allocation3 + $0x50] sm:$0x3] %vm471, %v484
    %494 = vst.msk [vmem:[#allocation3 + $0x58] sm:$0x3] %vm473, %v484
    %v495 = vrot.slane %v120, 6
    %v496 = vrot.slane %v124, 6
    %vm499 = vcmask 228354
    %500 = vst.msk [vmem:[#allocation2 + $0x20] sm:$0xfc] %vm499, %v495
    %501 = vst.msk [vmem:[#allocation2 + $0x50] sm:$0xfc] %vm499, %v496
    %v502 = vrot.slane %v128, 6
    %v503 = vrot.slane %v132, 6
    %506 = vst.msk [vmem:[#allocation3 + $0x20] sm:$0xfc] %vm499, %v502
    %507 = vst.msk [vmem:[#allocation3 + $0x50] sm:$0xfc] %vm499, %v503
    %v508 = vrot.slane %v117, 7
    %v509 = vrot.slane %v121, 7
    %510 = vrot.lane.b32.xlu0 %v508, 28
    %v511 = vpop.permute.xlu0 %510
    %512 = vrot.lane.b32.xlu0 %v509, 28
    %v513 = vpop.permute.xlu0 %512
    %vm516 = vcmask 457954
    %517 = vst.msk [vmem:[#allocation2 + $0x20] sm:$0xfc] %vm516, %v511
    %518 = vst.msk [vmem:[#allocation2 + $0x50] sm:$0xfc] %vm516, %v513
    %v519 = vrot.slane %v125, 7
    %v520 = vrot.slane %v129, 7
    %521 = vrot.lane.b32.xlu0 %v519, 28
    %v522 = vpop.permute.xlu0 %521
    %523 = vrot.lane.b32.xlu0 %v520, 28
    %v524 = vpop.permute.xlu0 %523
    %527 = vst.msk [vmem:[#allocation3 + $0x20] sm:$0xfc] %vm516, %v522
    %528 = vst.msk [vmem:[#allocation3 + $0x50] sm:$0xfc] %vm516, %v524
    %v529 = vrot.slane %v118, 7
    %v530 = vrot.slane %v122, 7
    %531 = vrot.lane.b32.xlu0 %v529, 56
    %v532 = vpop.permute.xlu0 %531
    %533 = vrot.lane.b32.xlu0 %v530, 56
    %v534 = vpop.permute.xlu0 %533
    %vm537 = vcmask 687554
    %538 = vst.msk [vmem:[#allocation2 + $0x20] sm:$0xfc] %vm537, %v532
    %539 = vst.msk [vmem:[#allocation2 + $0x50] sm:$0xfc] %vm537, %v534
    %v540 = vrot.slane %v126, 7
    %v541 = vrot.slane %v130, 7
    %542 = vrot.lane.b32.xlu0 %v540, 56
    %v543 = vpop.permute.xlu0 %542
    %544 = vrot.lane.b32.xlu0 %v541, 56
    %v545 = vpop.permute.xlu0 %544
    %548 = vst.msk [vmem:[#allocation3 + $0x20] sm:$0xfc] %vm537, %v543
    %549 = vst.msk [vmem:[#allocation3 + $0x50] sm:$0xfc] %vm537, %v545
    %v550 = vrot.slane %v119, 7
    %v551 = vrot.slane %v123, 7
    %552 = vrot.lane.b32.xlu0 %v550, 84
    %v553 = vpop.permute.xlu0 %552
    %554 = vrot.lane.b32.xlu0 %v551, 84
    %v555 = vpop.permute.xlu0 %554
    %vm558 = vcmask 917154
    %559 = vst.msk [vmem:[#allocation2 + $0x20] sm:$0xfc] %vm558, %v553
    %560 = vst.msk [vmem:[#allocation2 + $0x50] sm:$0xfc] %vm558, %v555
    %v561 = vrot.slane %v127, 7
    %v562 = vrot.slane %v131, 7
    %563 = vrot.lane.b32.xlu0 %v561, 84
    %v564 = vpop.permute.xlu0 %563
    %565 = vrot.lane.b32.xlu0 %v562, 84
    %v566 = vpop.permute.xlu0 %565
    %569 = vst.msk [vmem:[#allocation3 + $0x20] sm:$0xfc] %vm558, %v564
    %570 = vst.msk [vmem:[#allocation3 + $0x50] sm:$0xfc] %vm558, %v566
    %v571 = vrot.slane %v120, 7
    %v572 = vrot.slane %v124, 7
    %573 = vrot.lane.b32.xlu0 %v571, 112
    %v574 = vpop.permute.xlu0 %573
    %575 = vrot.lane.b32.xlu0 %v572, 112
    %v576 = vpop.permute.xlu0 %575
    %vm579 = vcmask 1048450
    %580 = vst.msk [vmem:[#allocation2 + $0x20] sm:$0xfc] %vm579, %v574
    %vm581 = vcmask 97282
    %582 = vst.msk [vmem:[#allocation2 + $0x28] sm:$0xfc] %vm581, %v574
    %583 = vst.msk [vmem:[#allocation2 + $0x50] sm:$0xfc] %vm579, %v576
    %584 = vst.msk [vmem:[#allocation2 + $0x58] sm:$0xfc] %vm581, %v576
    %v585 = vrot.slane %v128, 7
    %v586 = vrot.slane %v132, 7
    %587 = vrot.lane.b32.xlu0 %v585, 112
    %v588 = vpop.permute.xlu0 %587
    %589 = vrot.lane.b32.xlu0 %v586, 112
    %v590 = vpop.permute.xlu0 %589
    %593 = vst.msk [vmem:[#allocation3 + $0x20] sm:$0xfc] %vm579, %v588
    %594 = vst.msk [vmem:[#allocation3 + $0x28] sm:$0xfc] %vm581, %v588
    %595 = vst.msk [vmem:[#allocation3 + $0x50] sm:$0xfc] %vm579, %v590
    %596 = vst.msk [vmem:[#allocation3 + $0x58] sm:$0xfc] %vm581, %v590
    %v597 = vld [vmem:[#allocation2] sm:$0xff]
    %v598 = vld [vmem:[#allocation2 + $0x8] sm:$0xff]
    %v599 = vld [vmem:[#allocation2 + $0x10] sm:$0xff]
    %v600 = vld [vmem:[#allocation2 + $0x18] sm:$0xff]
    %v601 = vld [vmem:[#allocation2 + $0x20] sm:$0xff]
    %v602 = vld [vmem:[#allocation2 + $0x28] sm:$0xff]
    %v603 = vld [vmem:[#allocation2 + $0x30] sm:$0xff]
    %v604 = vld [vmem:[#allocation2 + $0x38] sm:$0xff]
    %v605 = vld [vmem:[#allocation2 + $0x40] sm:$0xff]
    %v606 = vld [vmem:[#allocation2 + $0x48] sm:$0xff]
    %v607 = vld [vmem:[#allocation2 + $0x50] sm:$0xff]
    %v608 = vld [vmem:[#allocation2 + $0x58] sm:$0xff]
    %v609 = vpack.c.bf16 %v599, %v597
    %v610 = vpack.c.bf16 %v600, %v598
    %v611 = vpack.c.bf16 %v603, %v601
    %v612 = vpack.c.bf16 %v604, %v602
    %v613 = vpack.c.bf16 %v607, %v605
    %v614 = vpack.c.bf16 %v608, %v606
    %v615 = vld [vmem:[#allocation3] sm:$0xff]
    %v616 = vld [vmem:[#allocation3 + $0x8] sm:$0xff]
    %v617 = vld [vmem:[#allocation3 + $0x10] sm:$0xff]
    %v618 = vld [vmem:[#allocation3 + $0x18] sm:$0xff]
    %v619 = vld [vmem:[#allocation3 + $0x20] sm:$0xff]
    %v620 = vld [vmem:[#allocation3 + $0x28] sm:$0xff]
    %v621 = vld [vmem:[#allocation3 + $0x30] sm:$0xff]
    %v622 = vld [vmem:[#allocation3 + $0x38] sm:$0xff]
    %v623 = vld [vmem:[#allocation3 + $0x40] sm:$0xff]
    %v624 = vld [vmem:[#allocation3 + $0x48] sm:$0xff]
    %v625 = vld [vmem:[#allocation3 + $0x50] sm:$0xff]
    %v626 = vld [vmem:[#allocation3 + $0x58] sm:$0xff]
    %v627 = vpack.c.bf16 %v617, %v615
    %v628 = vpack.c.bf16 %v618, %v616
    %v629 = vpack.c.bf16 %v621, %v619
    %v630 = vpack.c.bf16 %v622, %v620
    %v631 = vpack.c.bf16 %v625, %v623
    %v632 = vpack.c.bf16 %v626, %v624
    %v633 = vld [vmem:[#allocation8] sm:$0xff]
    %v634 = vld [vmem:[#allocation8 + $0x8] sm:$0xff]
    %v635 = vld [vmem:[#allocation8 + $0x10] sm:$0xff]
    %v636 = vld [vmem:[#allocation8 + $0x18] sm:$0xff]
    %v637 = vld [vmem:[#allocation8 + $0x20] sm:$0xff]
    %v638 = vld [vmem:[#allocation8 + $0x28] sm:$0xff]
    %v639 = vld [vmem:[#allocation8 + $0x30] sm:$0xff]
    %v640 = vld [vmem:[#allocation8 + $0x38] sm:$0xff]
    %v641 = vld [vmem:[#allocation8 + $0x40] sm:$0xff]
    %v642 = vld [vmem:[#allocation8 + $0x48] sm:$0xff]
    %v643 = vld [vmem:[#allocation8 + $0x50] sm:$0xff]
    %v644 = vld [vmem:[#allocation8 + $0x58] sm:$0xff]
    %v645 = vld [vmem:[#allocation8 + $0x60] sm:$0xff]
    %v646 = vld [vmem:[#allocation8 + $0x68] sm:$0xff]
    %v647 = vld [vmem:[#allocation8 + $0x70] sm:$0xff]
    %v648 = vld [vmem:[#allocation8 + $0x78] sm:$0xff]
    %v649 = vld [vmem:[#allocation8 + $0x80] sm:$0xff]
    %v650 = vld [vmem:[#allocation8 + $0x88] sm:$0xff]
    %v651 = vld [vmem:[#allocation8 + $0x90] sm:$0xff]
    %v652 = vld [vmem:[#allocation8 + $0x98] sm:$0xff]
    %v653 = vld [vmem:[#allocation8 + $0xa0] sm:$0xff]
    %v654 = vld [vmem:[#allocation8 + $0xa8] sm:$0xff]
    %v655 = vld [vmem:[#allocation8 + $0xb0] sm:$0xff]
    %v656 = vld [vmem:[#allocation8 + $0xb8] sm:$0xff]
    %v657 = vld [vmem:[#allocation8 + $0xc0] sm:$0xff]
    %v658 = vld [vmem:[#allocation8 + $0xc8] sm:$0xff]
    %v659 = vld [vmem:[#allocation8 + $0xd0] sm:$0xff]
    %v660 = vld [vmem:[#allocation8 + $0xd8] sm:$0xff]
    %v661 = vld [vmem:[#allocation8 + $0xe0] sm:$0xff]
    %v662 = vld [vmem:[#allocation8 + $0xe8] sm:$0xff]
    %v663 = vld [vmem:[#allocation8 + $0xf0] sm:$0xff]
    %v664 = vld [vmem:[#allocation8 + $0xf8] sm:$0xff]
    %v665 = vld [vmem:[#allocation8 + $0x100] sm:$0xff]
    %v666 = vld [vmem:[#allocation8 + $0x108] sm:$0xff]
    %v667 = vld [vmem:[#allocation8 + $0x110] sm:$0xff]
    %v668 = vld [vmem:[#allocation8 + $0x118] sm:$0xff]
    %v669 = vld [vmem:[#allocation8 + $0x120] sm:$0xff]
    %v670 = vld [vmem:[#allocation8 + $0x128] sm:$0xff]
    %v671 = vld [vmem:[#allocation8 + $0x130] sm:$0xff]
    %v672 = vld [vmem:[#allocation8 + $0x138] sm:$0xff]
    %v673 = vld [vmem:[#allocation8 + $0x140] sm:$0xff]
    %v674 = vld [vmem:[#allocation8 + $0x148] sm:$0xff]
    %v675 = vld [vmem:[#allocation8 + $0x150] sm:$0xff]
    %v676 = vld [vmem:[#allocation8 + $0x158] sm:$0xff]
    %v677 = vld [vmem:[#allocation8 + $0x160] sm:$0xff]
    %v678 = vld [vmem:[#allocation8 + $0x168] sm:$0xff]
    %v679 = vld [vmem:[#allocation8 + $0x170] sm:$0xff]
    %v680 = vld [vmem:[#allocation8 + $0x178] sm:$0xff]
    %v681 = vld [vmem:[#allocation8 + $0x180] sm:$0xff]
    %v682 = vld [vmem:[#allocation8 + $0x188] sm:$0xff]
    %v683 = vld [vmem:[#allocation8 + $0x190] sm:$0xff]
    %v684 = vld [vmem:[#allocation8 + $0x198] sm:$0xff]
    %v685 = vld [vmem:[#allocation8 + $0x1a0] sm:$0xff]
    %v686 = vld [vmem:[#allocation8 + $0x1a8] sm:$0xff]
    %v687 = vld [vmem:[#allocation8 + $0x1b0] sm:$0xff]
    %v688 = vld [vmem:[#allocation8 + $0x1b8] sm:$0xff]
    %v689 = vld [vmem:[#allocation8 + $0x1c0] sm:$0xff]
    %v690 = vld [vmem:[#allocation8 + $0x1c8] sm:$0xff]
    %v691 = vld [vmem:[#allocation8 + $0x1d0] sm:$0xff]
    %v692 = vld [vmem:[#allocation8 + $0x1d8] sm:$0xff]
    %v693 = vld [vmem:[#allocation8 + $0x1e0] sm:$0xff]
    %v694 = vld [vmem:[#allocation8 + $0x1e8] sm:$0xff]
    %v695 = vld [vmem:[#allocation8 + $0x1f0] sm:$0xff]
    %v696 = vld [vmem:[#allocation8 + $0x1f8] sm:$0xff]
    %v697 = vld [vmem:[#allocation8 + $0x200] sm:$0xff]
    %v698 = vld [vmem:[#allocation8 + $0x208] sm:$0xff]
    %v699 = vld [vmem:[#allocation8 + $0x210] sm:$0xff]
    %v700 = vld [vmem:[#allocation8 + $0x218] sm:$0xff]
    %v701 = vld [vmem:[#allocation8 + $0x220] sm:$0xff]
    %v702 = vld [vmem:[#allocation8 + $0x228] sm:$0xff]
    %v703 = vld [vmem:[#allocation8 + $0x230] sm:$0xff]
    %v704 = vld [vmem:[#allocation8 + $0x238] sm:$0xff]
    %v705 = vld [vmem:[#allocation8 + $0x240] sm:$0xff]
    %v706 = vld [vmem:[#allocation8 + $0x248] sm:$0xff]
    %v707 = vld [vmem:[#allocation8 + $0x250] sm:$0xff]
    %v708 = vld [vmem:[#allocation8 + $0x258] sm:$0xff]
    %v709 = vld [vmem:[#allocation8 + $0x260] sm:$0xff]
    %v710 = vld [vmem:[#allocation8 + $0x268] sm:$0xff]
    %v711 = vld [vmem:[#allocation8 + $0x270] sm:$0xff]
    %v712 = vld [vmem:[#allocation8 + $0x278] sm:$0xff]
    %v713 = vld [vmem:[#allocation8 + $0x280] sm:$0xff]
    %v714 = vld [vmem:[#allocation8 + $0x288] sm:$0xff]
    %v715 = vld [vmem:[#allocation8 + $0x290] sm:$0xff]
    %v716 = vld [vmem:[#allocation8 + $0x298] sm:$0xff]
    %v717 = vld [vmem:[#allocation8 + $0x2a0] sm:$0xff]
    %v718 = vld [vmem:[#allocation8 + $0x2a8] sm:$0xff]
    %v719 = vld [vmem:[#allocation8 + $0x2b0] sm:$0xff]
    %v720 = vld [vmem:[#allocation8 + $0x2b8] sm:$0xff]
    %v721 = vld [vmem:[#allocation8 + $0x2c0] sm:$0xff]
    %v722 = vld [vmem:[#allocation8 + $0x2c8] sm:$0xff]
    %v723 = vld [vmem:[#allocation8 + $0x2d0] sm:$0xff]
    %v724 = vld [vmem:[#allocation8 + $0x2d8] sm:$0xff]
    %v725 = vld [vmem:[#allocation8 + $0x2e0] sm:$0xff]
    %v726 = vld [vmem:[#allocation8 + $0x2e8] sm:$0xff]
    %v727 = vld [vmem:[#allocation8 + $0x2f0] sm:$0xff]
    %v728 = vld [vmem:[#allocation8 + $0x2f8] sm:$0xff]
    %v729 = vld [vmem:[#allocation8 + $0x300] sm:$0xff]
    %v730 = vld [vmem:[#allocation8 + $0x308] sm:$0xff]
    %v731 = vld [vmem:[#allocation8 + $0x310] sm:$0xff]
    %v732 = vld [vmem:[#allocation8 + $0x318] sm:$0xff]
    %v733 = vld [vmem:[#allocation8 + $0x320] sm:$0xff]
    %v734 = vld [vmem:[#allocation8 + $0x328] sm:$0xff]
    %v735 = vld [vmem:[#allocation8 + $0x330] sm:$0x33]
    %v736 = vld [vmem:[#allocation8 + $0x338] sm:$0x33]
    %v737 = vld [vmem:[#allocation8 + $0x340] sm:$0x33]
    %v738 = vld [vmem:[#allocation8 + $0x348] sm:$0x33]
    %v739 = vld [vmem:[#allocation8 + $0x350] sm:$0x33]
    %v740 = vld [vmem:[#allocation8 + $0x358] sm:$0x33]
    %v741 = vld [vmem:[#allocation11] sm:$0xff]
    %v742 = vld [vmem:[#allocation11 + $0x8] sm:$0xff]
    %v743 = vld [vmem:[#allocation11 + $0x10] sm:$0xff]
    %v744 = vld [vmem:[#allocation11 + $0x18] sm:$0xff]
    %v745 = vld [vmem:[#allocation11 + $0x20] sm:$0xff]
    %v746 = vld [vmem:[#allocation11 + $0x28] sm:$0xff]
    %v747 = vld [vmem:[#allocation11 + $0x30] sm:$0xff]
    %v748 = vld [vmem:[#allocation11 + $0x38] sm:$0xff]
    %v749 = vld [vmem:[#allocation11 + $0x40] sm:$0xff]
    %v750 = vld [vmem:[#allocation11 + $0x48] sm:$0xff]
    %v751 = vld [vmem:[#allocation11 + $0x50] sm:$0xff]
    %v752 = vld [vmem:[#allocation11 + $0x58] sm:$0xff]
    %v753 = vld [vmem:[#allocation11 + $0x60] sm:$0xff]
    %v754 = vld [vmem:[#allocation11 + $0x68] sm:$0xff]
    %v755 = vld [vmem:[#allocation11 + $0x70] sm:$0xff]
    %v756 = vld [vmem:[#allocation11 + $0x78] sm:$0xff]
    %v757 = vld [vmem:[#allocation11 + $0x80] sm:$0xff]
    %v758 = vld [vmem:[#allocation11 + $0x88] sm:$0xff]
    %v759 = vld [vmem:[#allocation11 + $0x90] sm:$0xff]
    %v760 = vld [vmem:[#allocation11 + $0x98] sm:$0xff]
    %v761 = vld [vmem:[#allocation11 + $0xa0] sm:$0xff]
    %v762 = vld [vmem:[#allocation11 + $0xa8] sm:$0xff]
    %v763 = vld [vmem:[#allocation11 + $0xb0] sm:$0xff]
    %v764 = vld [vmem:[#allocation11 + $0xb8] sm:$0xff]
    %v765 = vld [vmem:[#allocation11 + $0xc0] sm:$0xff]
    %v766 = vld [vmem:[#allocation11 + $0xc8] sm:$0xff]
    %v767 = vld [vmem:[#allocation11 + $0xd0] sm:$0xff]
    %v768 = vld [vmem:[#allocation11 + $0xd8] sm:$0xff]
    %v769 = vld [vmem:[#allocation11 + $0xe0] sm:$0xff]
    %v770 = vld [vmem:[#allocation11 + $0xe8] sm:$0xff]
    %v771 = vld [vmem:[#allocation11 + $0xf0] sm:$0xff]
    %v772 = vld [vmem:[#allocation11 + $0xf8] sm:$0xff]
    %v773 = vld [vmem:[#allocation11 + $0x100] sm:$0xff]
    %v774 = vld [vmem:[#allocation11 + $0x108] sm:$0xff]
    %v775 = vld [vmem:[#allocation11 + $0x110] sm:$0xff]
    %v776 = vld [vmem:[#allocation11 + $0x118] sm:$0xff]
    %v777 = vld [vmem:[#allocation11 + $0x120] sm:$0xff]
    %v778 = vld [vmem:[#allocation11 + $0x128] sm:$0xff]
    %v779 = vld [vmem:[#allocation11 + $0x130] sm:$0xff]
    %v780 = vld [vmem:[#allocation11 + $0x138] sm:$0xff]
    %v781 = vld [vmem:[#allocation11 + $0x140] sm:$0xff]
    %v782 = vld [vmem:[#allocation11 + $0x148] sm:$0xff]
    %v783 = vld [vmem:[#allocation11 + $0x150] sm:$0xff]
    %v784 = vld [vmem:[#allocation11 + $0x158] sm:$0xff]
    %v785 = vld [vmem:[#allocation11 + $0x160] sm:$0xff]
    %v786 = vld [vmem:[#allocation11 + $0x168] sm:$0xff]
    %v787 = vld [vmem:[#allocation11 + $0x170] sm:$0xff]
    %v788 = vld [vmem:[#allocation11 + $0x178] sm:$0xff]
    %v789 = vld [vmem:[#allocation11 + $0x180] sm:$0xff]
    %v790 = vld [vmem:[#allocation11 + $0x188] sm:$0xff]
    %v791 = vld [vmem:[#allocation11 + $0x190] sm:$0xff]
    %v792 = vld [vmem:[#allocation11 + $0x198] sm:$0xff]
    %v793 = vld [vmem:[#allocation11 + $0x1a0] sm:$0xff]
    %v794 = vld [vmem:[#allocation11 + $0x1a8] sm:$0xff]
    %v795 = vld [vmem:[#allocation11 + $0x1b0] sm:$0xff]
    %v796 = vld [vmem:[#allocation11 + $0x1b8] sm:$0xff]
    %v797 = vld [vmem:[#allocation11 + $0x1c0] sm:$0xff]
    %v798 = vld [vmem:[#allocation11 + $0x1c8] sm:$0xff]
    %v799 = vld [vmem:[#allocation11 + $0x1d0] sm:$0xff]
    %v800 = vld [vmem:[#allocation11 + $0x1d8] sm:$0xff]
    %v801 = vld [vmem:[#allocation11 + $0x1e0] sm:$0xff]
    %v802 = vld [vmem:[#allocation11 + $0x1e8] sm:$0xff]
    %v803 = vld [vmem:[#allocation11 + $0x1f0] sm:$0xff]
    %v804 = vld [vmem:[#allocation11 + $0x1f8] sm:$0xff]
    %v805 = vld [vmem:[#allocation11 + $0x200] sm:$0xff]
    %v806 = vld [vmem:[#allocation11 + $0x208] sm:$0xff]
    %v807 = vld [vmem:[#allocation11 + $0x210] sm:$0xff]
    %v808 = vld [vmem:[#allocation11 + $0x218] sm:$0xff]
    %v809 = vld [vmem:[#allocation11 + $0x220] sm:$0xff]
    %v810 = vld [vmem:[#allocation11 + $0x228] sm:$0xff]
    %v811 = vld [vmem:[#allocation11 + $0x230] sm:$0xff]
    %v812 = vld [vmem:[#allocation11 + $0x238] sm:$0xff]
    %v813 = vld [vmem:[#allocation11 + $0x240] sm:$0xff]
    %v814 = vld [vmem:[#allocation11 + $0x248] sm:$0xff]
    %v815 = vld [vmem:[#allocation11 + $0x250] sm:$0xff]
    %v816 = vld [vmem:[#allocation11 + $0x258] sm:$0xff]
    %v817 = vld [vmem:[#allocation11 + $0x260] sm:$0xff]
    %v818 = vld [vmem:[#allocation11 + $0x268] sm:$0xff]
    %v819 = vld [vmem:[#allocation11 + $0x270] sm:$0xff]
    %v820 = vld [vmem:[#allocation11 + $0x278] sm:$0xff]
    %v821 = vld [vmem:[#allocation11 + $0x280] sm:$0xff]
    %v822 = vld [vmem:[#allocation11 + $0x288] sm:$0xff]
    %v823 = vld [vmem:[#allocation11 + $0x290] sm:$0xff]
    %v824 = vld [vmem:[#allocation11 + $0x298] sm:$0xff]
    %v825 = vld [vmem:[#allocation11 + $0x2a0] sm:$0xff]
    %v826 = vld [vmem:[#allocation11 + $0x2a8] sm:$0xff]
    %v827 = vld [vmem:[#allocation11 + $0x2b0] sm:$0xff]
    %v828 = vld [vmem:[#allocation11 + $0x2b8] sm:$0xff]
    %v829 = vld [vmem:[#allocation11 + $0x2c0] sm:$0xff]
    %v830 = vld [vmem:[#allocation11 + $0x2c8] sm:$0xff]
    %v831 = vld [vmem:[#allocation11 + $0x2d0] sm:$0xff]
    %v832 = vld [vmem:[#allocation11 + $0x2d8] sm:$0xff]
    %v833 = vld [vmem:[#allocation11 + $0x2e0] sm:$0xff]
    %v834 = vld [vmem:[#allocation11 + $0x2e8] sm:$0xff]
    %v835 = vld [vmem:[#allocation11 + $0x2f0] sm:$0xff]
    %v836 = vld [vmem:[#allocation11 + $0x2f8] sm:$0xff]
    %v837 = vld [vmem:[#allocation11 + $0x300] sm:$0xff]
    %v838 = vld [vmem:[#allocation11 + $0x308] sm:$0xff]
    %v839 = vld [vmem:[#allocation11 + $0x310] sm:$0xff]
    %v840 = vld [vmem:[#allocation11 + $0x318] sm:$0xff]
    %v841 = vld [vmem:[#allocation11 + $0x320] sm:$0xff]
    %v842 = vld [vmem:[#allocation11 + $0x328] sm:$0xff]
    %v843 = vld [vmem:[#allocation11 + $0x330] sm:$0x33]
    %v844 = vld [vmem:[#allocation11 + $0x338] sm:$0x33]
    %v845 = vld [vmem:[#allocation11 + $0x340] sm:$0x33]
    %v846 = vld [vmem:[#allocation11 + $0x348] sm:$0x33]
    %v847 = vld [vmem:[#allocation11 + $0x350] sm:$0x33]
    %v848 = vld [vmem:[#allocation11 + $0x358] sm:$0x33]
    %v957 = vunpack.c.l.b16 %v741
    %v958 = vunpack.c.h.b16 %v741
    %v959 = vunpack.c.l.b16 %v742
    %v960 = vunpack.c.h.b16 %v742
    %v961 = vunpack.c.l.b16 %v743
    %v962 = vunpack.c.h.b16 %v743
    %v963 = vunpack.c.l.b16 %v744
    %v964 = vunpack.c.h.b16 %v744
    %v965 = vunpack.c.l.b16 %v745
    %v966 = vunpack.c.h.b16 %v745
    %v967 = vunpack.c.l.b16 %v746
    %v968 = vunpack.c.h.b16 %v746
    %v969 = vunpack.c.l.b16 %v747
    %v970 = vunpack.c.h.b16 %v747
    %v971 = vunpack.c.l.b16 %v748
    %v972 = vunpack.c.h.b16 %v748
    %v973 = vunpack.c.l.b16 %v749
    %v974 = vunpack.c.h.b16 %v749
    %v975 = vunpack.c.l.b16 %v750
    %v976 = vunpack.c.h.b16 %v750
    %v977 = vunpack.c.l.b16 %v751
    %v978 = vunpack.c.h.b16 %v751
    %v979 = vunpack.c.l.b16 %v752
    %v980 = vunpack.c.h.b16 %v752
    %v981 = vunpack.c.l.b16 %v753
    %v982 = vunpack.c.h.b16 %v753
    %v983 = vunpack.c.l.b16 %v754
    %v984 = vunpack.c.h.b16 %v754
    %v985 = vunpack.c.l.b16 %v755
    %v986 = vunpack.c.h.b16 %v755
    %v987 = vunpack.c.l.b16 %v756
    %v988 = vunpack.c.h.b16 %v756
    %v989 = vunpack.c.l.b16 %v757
    %v990 = vunpack.c.h.b16 %v757
    %v991 = vunpack.c.l.b16 %v758
    %v992 = vunpack.c.h.b16 %v758
    %v993 = vunpack.c.l.b16 %v759
    %v994 = vunpack.c.h.b16 %v759
    %v995 = vunpack.c.l.b16 %v760
    %v996 = vunpack.c.h.b16 %v760
    %v997 = vunpack.c.l.b16 %v761
    %v998 = vunpack.c.h.b16 %v761
    %v999 = vunpack.c.l.b16 %v762
    %v1000 = vunpack.c.h.b16 %v762
    %v1001 = vunpack.c.l.b16 %v763
    %v1002 = vunpack.c.h.b16 %v763
    %v1003 = vunpack.c.l.b16 %v764
    %v1004 = vunpack.c.h.b16 %v764
    %v1005 = vunpack.c.l.b16 %v765
    %v1006 = vunpack.c.h.b16 %v765
    %v1007 = vunpack.c.l.b16 %v766
    %v1008 = vunpack.c.h.b16 %v766
    %v1009 = vunpack.c.l.b16 %v767
    %v1010 = vunpack.c.h.b16 %v767
    %v1011 = vunpack.c.l.b16 %v768
    %v1012 = vunpack.c.h.b16 %v768
    %v1013 = vunpack.c.l.b16 %v769
    %v1014 = vunpack.c.h.b16 %v769
    %v1015 = vunpack.c.l.b16 %v770
    %v1016 = vunpack.c.h.b16 %v770
    %v1017 = vunpack.c.l.b16 %v771
    %v1018 = vunpack.c.h.b16 %v771
    %v1019 = vunpack.c.l.b16 %v772
    %v1020 = vunpack.c.h.b16 %v772
    %v1021 = vunpack.c.l.b16 %v773
    %v1022 = vunpack.c.h.b16 %v773
    %v1023 = vunpack.c.l.b16 %v774
    %v1024 = vunpack.c.h.b16 %v774
    %v1025 = vunpack.c.l.b16 %v775
    %v1026 = vunpack.c.h.b16 %v775
    %v1027 = vunpack.c.l.b16 %v776
    %v1028 = vunpack.c.h.b16 %v776
    %v1029 = vunpack.c.l.b16 %v777
    %v1030 = vunpack.c.h.b16 %v777
    %v1031 = vunpack.c.l.b16 %v778
    %v1032 = vunpack.c.h.b16 %v778
    %v1033 = vunpack.c.l.b16 %v779
    %v1034 = vunpack.c.h.b16 %v779
    %v1035 = vunpack.c.l.b16 %v780
    %v1036 = vunpack.c.h.b16 %v780
    %v1037 = vunpack.c.l.b16 %v781
    %v1038 = vunpack.c.h.b16 %v781
    %v1039 = vunpack.c.l.b16 %v782
    %v1040 = vunpack.c.h.b16 %v782
    %v1041 = vunpack.c.l.b16 %v783
    %v1042 = vunpack.c.h.b16 %v783
    %v1043 = vunpack.c.l.b16 %v784
    %v1044 = vunpack.c.h.b16 %v784
    %v1045 = vunpack.c.l.b16 %v785
    %v1046 = vunpack.c.h.b16 %v785
    %v1047 = vunpack.c.l.b16 %v786
    %v1048 = vunpack.c.h.b16 %v786
    %v1049 = vunpack.c.l.b16 %v787
    %v1050 = vunpack.c.h.b16 %v787
    %v1051 = vunpack.c.l.b16 %v788
    %v1052 = vunpack.c.h.b16 %v788
    %v1053 = vunpack.c.l.b16 %v789
    %v1054 = vunpack.c.h.b16 %v789
    %v1055 = vunpack.c.l.b16 %v790
    %v1056 = vunpack.c.h.b16 %v790
    %v1057 = vunpack.c.l.b16 %v791
    %v1058 = vunpack.c.h.b16 %v791
    %v1059 = vunpack.c.l.b16 %v792
    %v1060 = vunpack.c.h.b16 %v792
    %v1061 = vunpack.c.l.b16 %v793
    %v1062 = vunpack.c.h.b16 %v793
    %v1063 = vunpack.c.l.b16 %v794
    %v1064 = vunpack.c.h.b16 %v794
    %v1065 = vunpack.c.l.b16 %v795
    %v1066 = vunpack.c.h.b16 %v795
    %v1067 = vunpack.c.l.b16 %v796
    %v1068 = vunpack.c.h.b16 %v796
    %v1069 = vunpack.c.l.b16 %v797
    %v1070 = vunpack.c.h.b16 %v797
    %v1071 = vunpack.c.l.b16 %v798
    %v1072 = vunpack.c.h.b16 %v798
    %v1073 = vunpack.c.l.b16 %v799
    %v1074 = vunpack.c.h.b16 %v799
    %v1075 = vunpack.c.l.b16 %v800
    %v1076 = vunpack.c.h.b16 %v800
    %v1077 = vunpack.c.l.b16 %v801
    %v1078 = vunpack.c.h.b16 %v801
    %v1079 = vunpack.c.l.b16 %v802
    %v1080 = vunpack.c.h.b16 %v802
    %v1081 = vunpack.c.l.b16 %v803
    %v1082 = vunpack.c.h.b16 %v803
    %v1083 = vunpack.c.l.b16 %v804
    %v1084 = vunpack.c.h.b16 %v804
    %v1085 = vunpack.c.l.b16 %v805
    %v1086 = vunpack.c.h.b16 %v805
    %v1087 = vunpack.c.l.b16 %v806
    %v1088 = vunpack.c.h.b16 %v806
    %v1089 = vunpack.c.l.b16 %v807
    %v1090 = vunpack.c.h.b16 %v807
    %v1091 = vunpack.c.l.b16 %v808
    %v1092 = vunpack.c.h.b16 %v808
    %v1093 = vunpack.c.l.b16 %v809
    %v1094 = vunpack.c.h.b16 %v809
    %v1095 = vunpack.c.l.b16 %v810
    %v1096 = vunpack.c.h.b16 %v810
    %v1097 = vunpack.c.l.b16 %v811
    %v1098 = vunpack.c.h.b16 %v811
    %v1099 = vunpack.c.l.b16 %v812
    %v1100 = vunpack.c.h.b16 %v812
    %v1101 = vunpack.c.l.b16 %v813
    %v1102 = vunpack.c.h.b16 %v813
    %v1103 = vunpack.c.l.b16 %v814
    %v1104 = vunpack.c.h.b16 %v814
    %v1105 = vunpack.c.l.b16 %v815
    %v1106 = vunpack.c.h.b16 %v815
    %v1107 = vunpack.c.l.b16 %v816
    %v1108 = vunpack.c.h.b16 %v816
    %v1109 = vunpack.c.l.b16 %v817
    %v1110 = vunpack.c.h.b16 %v817
    %v1111 = vunpack.c.l.b16 %v818
    %v1112 = vunpack.c.h.b16 %v818
    %v1113 = vunpack.c.l.b16 %v819
    %v1114 = vunpack.c.h.b16 %v819
    %v1115 = vunpack.c.l.b16 %v820
    %v1116 = vunpack.c.h.b16 %v820
    %v1117 = vunpack.c.l.b16 %v821
    %v1118 = vunpack.c.h.b16 %v821
    %v1119 = vunpack.c.l.b16 %v822
    %v1120 = vunpack.c.h.b16 %v822
    %v1121 = vunpack.c.l.b16 %v823
    %v1122 = vunpack.c.h.b16 %v823
    %v1123 = vunpack.c.l.b16 %v824
    %v1124 = vunpack.c.h.b16 %v824
    %v1125 = vunpack.c.l.b16 %v825
    %v1126 = vunpack.c.h.b16 %v825
    %v1127 = vunpack.c.l.b16 %v826
    %v1128 = vunpack.c.h.b16 %v826
    %v1129 = vunpack.c.l.b16 %v827
    %v1130 = vunpack.c.h.b16 %v827
    %v1131 = vunpack.c.l.b16 %v828
    %v1132 = vunpack.c.h.b16 %v828
    %v1133 = vunpack.c.l.b16 %v829
    %v1134 = vunpack.c.h.b16 %v829
    %v1135 = vunpack.c.l.b16 %v830
    %v1136 = vunpack.c.h.b16 %v830
    %v1137 = vunpack.c.l.b16 %v831
    %v1138 = vunpack.c.h.b16 %v831
    %v1139 = vunpack.c.l.b16 %v832
    %v1140 = vunpack.c.h.b16 %v832
    %v1141 = vunpack.c.l.b16 %v833
    %v1142 = vunpack.c.h.b16 %v833
    %v1143 = vunpack.c.l.b16 %v834
    %v1144 = vunpack.c.h.b16 %v834
    %v1145 = vunpack.c.l.b16 %v835
    %v1146 = vunpack.c.h.b16 %v835
    %v1147 = vunpack.c.l.b16 %v836
    %v1148 = vunpack.c.h.b16 %v836
    %v1149 = vunpack.c.l.b16 %v837
    %v1150 = vunpack.c.h.b16 %v837
    %v1151 = vunpack.c.l.b16 %v838
    %v1152 = vunpack.c.h.b16 %v838
    %v1153 = vunpack.c.l.b16 %v839
    %v1154 = vunpack.c.h.b16 %v839
    %v1155 = vunpack.c.l.b16 %v840
    %v1156 = vunpack.c.h.b16 %v840
    %v1157 = vunpack.c.l.b16 %v841
    %v1158 = vunpack.c.h.b16 %v841
    %v1159 = vunpack.c.l.b16 %v842
    %v1160 = vunpack.c.h.b16 %v842
    %v1161 = vunpack.c.l.b16 %v843
    %v1162 = vunpack.c.h.b16 %v843
    %v1163 = vunpack.c.l.b16 %v844
    %v1164 = vunpack.c.h.b16 %v844
    %v1165 = vunpack.c.l.b16 %v845
    %v1166 = vunpack.c.h.b16 %v845
    %v1167 = vunpack.c.l.b16 %v846
    %v1168 = vunpack.c.h.b16 %v846
    %v1169 = vunpack.c.l.b16 %v847
    %v1170 = vunpack.c.h.b16 %v847
    %v1171 = vunpack.c.l.b16 %v848
    %v1172 = vunpack.c.h.b16 %v848
    %v1173 = vpack.c.b16 %v969, %v957
    %v1174 = vpack.c.b16 %v970, %v958
    %v1175 = vpack.c.b16 %v971, %v959
    %v1176 = vpack.c.b16 %v972, %v960
    %v1177 = vpack.c.b16 %v973, %v961
    %v1178 = vpack.c.b16 %v974, %v962
    %v1179 = vpack.c.b16 %v975, %v963
    %v1180 = vpack.c.b16 %v976, %v964
    %v1181 = vpack.c.b16 %v977, %v965
    %v1182 = vpack.c.b16 %v978, %v966
    %v1183 = vpack.c.b16 %v979, %v967
    %v1184 = vpack.c.b16 %v980, %v968
    %v1185 = vpack.c.b16 %v993, %v981
    %v1186 = vpack.c.b16 %v994, %v982
    %v1187 = vpack.c.b16 %v995, %v983
    %v1188 = vpack.c.b16 %v996, %v984
    %v1189 = vpack.c.b16 %v997, %v985
    %v1190 = vpack.c.b16 %v998, %v986
    %v1191 = vpack.c.b16 %v999, %v987
    %v1192 = vpack.c.b16 %v1000, %v988
    %v1193 = vpack.c.b16 %v1001, %v989
    %v1194 = vpack.c.b16 %v1002, %v990
    %v1195 = vpack.c.b16 %v1003, %v991
    %v1196 = vpack.c.b16 %v1004, %v992
    %v1197 = vpack.c.b16 %v1017, %v1005
    %v1198 = vpack.c.b16 %v1018, %v1006
    %v1199 = vpack.c.b16 %v1019, %v1007
    %v1200 = vpack.c.b16 %v1020, %v1008
    %v1201 = vpack.c.b16 %v1021, %v1009
    %v1202 = vpack.c.b16 %v1022, %v1010
    %v1203 = vpack.c.b16 %v1023, %v1011
    %v1204 = vpack.c.b16 %v1024, %v1012
    %v1205 = vpack.c.b16 %v1025, %v1013
    %v1206 = vpack.c.b16 %v1026, %v1014
    %v1207 = vpack.c.b16 %v1027, %v1015
    %v1208 = vpack.c.b16 %v1028, %v1016
    %v1209 = vpack.c.b16 %v1041, %v1029
    %v1210 = vpack.c.b16 %v1042, %v1030
    %v1211 = vpack.c.b16 %v1043, %v1031
    %v1212 = vpack.c.b16 %v1044, %v1032
    %v1213 = vpack.c.b16 %v1045, %v1033
    %v1214 = vpack.c.b16 %v1046, %v1034
    %v1215 = vpack.c.b16 %v1047, %v1035
    %v1216 = vpack.c.b16 %v1048, %v1036
    %v1217 = vpack.c.b16 %v1049, %v1037
    %v1218 = vpack.c.b16 %v1050, %v1038
    %v1219 = vpack.c.b16 %v1051, %v1039
    %v1220 = vpack.c.b16 %v1052, %v1040
    %v1221 = vpack.c.b16 %v1065, %v1053
    %v1222 = vpack.c.b16 %v1066, %v1054
    %v1223 = vpack.c.b16 %v1067, %v1055
    %v1224 = vpack.c.b16 %v1068, %v1056
    %v1225 = vpack.c.b16 %v1069, %v1057
    %v1226 = vpack.c.b16 %v1070, %v1058
    %v1227 = vpack.c.b16 %v1071, %v1059
    %v1228 = vpack.c.b16 %v1072, %v1060
    %v1229 = vpack.c.b16 %v1073, %v1061
    %v1230 = vpack.c.b16 %v1074, %v1062
    %v1231 = vpack.c.b16 %v1075, %v1063
    %v1232 = vpack.c.b16 %v1076, %v1064
    %v1233 = vpack.c.b16 %v1089, %v1077
    %v1234 = vpack.c.b16 %v1090, %v1078
    %v1235 = vpack.c.b16 %v1091, %v1079
    %v1236 = vpack.c.b16 %v1092, %v1080
    %v1237 = vpack.c.b16 %v1093, %v1081
    %v1238 = vpack.c.b16 %v1094, %v1082
    %v1239 = vpack.c.b16 %v1095, %v1083
    %v1240 = vpack.c.b16 %v1096, %v1084
    %v1241 = vpack.c.b16 %v1097, %v1085
    %v1242 = vpack.c.b16 %v1098, %v1086
    %v1243 = vpack.c.b16 %v1099, %v1087
    %v1244 = vpack.c.b16 %v1100, %v1088
    %v1245 = vpack.c.b16 %v1113, %v1101
    %v1246 = vpack.c.b16 %v1114, %v1102
    %v1247 = vpack.c.b16 %v1115, %v1103
    %v1248 = vpack.c.b16 %v1116, %v1104
    %v1249 = vpack.c.b16 %v1117, %v1105
    %v1250 = vpack.c.b16 %v1118, %v1106
    %v1251 = vpack.c.b16 %v1119, %v1107
    %v1252 = vpack.c.b16 %v1120, %v1108
    %v1253 = vpack.c.b16 %v1121, %v1109
    %v1254 = vpack.c.b16 %v1122, %v1110
    %v1255 = vpack.c.b16 %v1123, %v1111
    %v1256 = vpack.c.b16 %v1124, %v1112
    %v1257 = vpack.c.b16 %v1137, %v1125
    %v1258 = vpack.c.b16 %v1138, %v1126
    %v1259 = vpack.c.b16 %v1139, %v1127
    %v1260 = vpack.c.b16 %v1140, %v1128
    %v1261 = vpack.c.b16 %v1141, %v1129
    %v1262 = vpack.c.b16 %v1142, %v1130
    %v1263 = vpack.c.b16 %v1143, %v1131
    %v1264 = vpack.c.b16 %v1144, %v1132
    %v1265 = vpack.c.b16 %v1145, %v1133
    %v1266 = vpack.c.b16 %v1146, %v1134
    %v1267 = vpack.c.b16 %v1147, %v1135
    %v1268 = vpack.c.b16 %v1148, %v1136
    %v1269 = vpack.c.b16 %v1161, %v1149
    %v1270 = vpack.c.b16 %v1162, %v1150
    %v1271 = vpack.c.b16 %v1163, %v1151
    %v1272 = vpack.c.b16 %v1164, %v1152
    %v1273 = vpack.c.b16 %v1165, %v1153
    %v1274 = vpack.c.b16 %v1166, %v1154
    %v1275 = vpack.c.b16 %v1167, %v1155
    %v1276 = vpack.c.b16 %v1168, %v1156
    %v1277 = vpack.c.b16 %v1169, %v1157
    %v1278 = vpack.c.b16 %v1170, %v1158
    %v1279 = vpack.c.b16 %v1171, %v1159
    %v1280 = vpack.c.b16 %v1172, %v1160
    %vm1377 = vcmask 97280
    %v1379 = vsel %vm1377, %v628, 0
    %v1382 = vsel %vm1377, %v630, 0
    %v1385 = vsel %vm1377, %v632, 0
    %vm1387 = vcmask 1045504
    %v1389 = vsel %vm1387, %v1269, 0
    %v1392 = vsel %vm1387, %v1270, 0
    %v1395 = vsel %vm1387, %v1271, 0
    %v1398 = vsel %vm1387, %v1272, 0
    %v1401 = vsel %vm1387, %v1273, 0
    %v1404 = vsel %vm1387, %v1274, 0
    %v1407 = vsel %vm1387, %v1275, 0
    %v1410 = vsel %vm1387, %v1276, 0
    %v1413 = vsel %vm1387, %v1277, 0
    %v1416 = vsel %vm1387, %v1278, 0
    %v1419 = vsel %vm1387, %v1279, 0
    %v1422 = vsel %vm1387, %v1280, 0
    %1424 = vmatprep.subr.bf16.mxu0 %v1258
    %1425 = vmatpush1.bf16.msra.mxu0 %v1257
    %1426 = vmatprep.subr.bf16.mxu0 %v1246
    %1427 = vmatpush1.bf16.msra.mxu0 %v1245
    %1428 = vmatprep.subr.bf16.mxu0 %v1234
    %1429 = vmatpush1.bf16.msra.mxu0 %v1233
    %1430 = vmatprep.subr.bf16.mxu0 %v1222
    %1431 = vmatpush1.bf16.msra.mxu0 %v1221
    %1432 = vmatprep.subr.bf16.mxu0 %v1210
    %1433 = vmatpush1.bf16.msra.mxu0 %v1209
    %1434 = vmatprep.subr.bf16.mxu0 %v1198
    %1435 = vmatpush1.bf16.msra.mxu0 %v1197
    %1436 = vmatprep.subr.bf16.mxu0 %v1186
    %1437 = vmatpush1.bf16.msra.mxu0 %v1185
    %1438 = vmatprep.subr.bf16.mxu0 %v1174
    %1439 = vmatpush1.bf16.msra.mxu0 %v1173
    %1440 = vmatprep.subr.bf16.mxu0 0
    %1441 = vmatpush2.bf16.msra.mxu0 0
    %1442 = vmatprep.subr.bf16.mxu0 0
    %1443 = vmatpush2.bf16.msra.mxu0 0
    %1444 = vmatprep.subr.bf16.mxu0 0
    %1445 = vmatpush2.bf16.msra.mxu0 0
    %1446 = vmatprep.subr.bf16.mxu0 0
    %1447 = vmatpush2.bf16.msra.mxu0 0
    %1448 = vmatprep.subr.bf16.mxu0 0
    %1449 = vmatpush2.bf16.msra.mxu0 0
    %1450 = vmatprep.subr.bf16.mxu0 0
    %1451 = vmatpush2.bf16.msra.mxu0 0
    %1452 = vmatprep.subr.bf16.mxu0 0
    %1453 = vmatpush2.bf16.msra.mxu0 0
    %1454 = vmatprep.subr.bf16.mxu0 %v1392
    %1455 = vmatpush2.bf16.msra.mxu0 %v1389
    %1456 = vmatprep.mubr.bf16.mxu0 %v1379
    %1457 = vmatmul.mubr.bf16.gmra.mxu0 %v627
    %v1458 = vpop.f32.mrf.mxu0
    %v1459 = vadd.f32 0.0, %v1458
    %v1460 = vpop.f32.mrf.mxu0
    %v1461 = vadd.f32 0.0, %v1460
    %v1462 = vpop.f32.mrf.mxu0
    %v1463 = vadd.f32 0.0, %v1462
    %v1464 = vpop.f32.mrf.mxu0
    %v1465 = vadd.f32 0.0, %v1464
    %1466 = vmatprep.mubr.bf16.mxu0 %v1382
    %1467 = vmatmul.mubr.bf16.gmra.mxu0 %v629
    %v1468 = vpop.f32.mrf.mxu0
    %v1469 = vadd.f32 0.0, %v1468
    %v1470 = vpop.f32.mrf.mxu0
    %v1471 = vadd.f32 0.0, %v1470
    %v1472 = vpop.f32.mrf.mxu0
    %v1473 = vadd.f32 0.0, %v1472
    %v1474 = vpop.f32.mrf.mxu0
    %v1475 = vadd.f32 0.0, %v1474
    %1476 = vmatprep.mubr.bf16.mxu0 %v1385
    %1477 = vmatmul.mubr.bf16.gmra.mxu0 %v631
    %v1478 = vpop.f32.mrf.mxu0
    %v1479 = vadd.f32 0.0, %v1478
    %v1480 = vpop.f32.mrf.mxu0
    %v1481 = vadd.f32 0.0, %v1480
    %v1482 = vpop.f32.mrf.mxu0
    %v1483 = vadd.f32 0.0, %v1482
    %v1484 = vpop.f32.mrf.mxu0
    %v1485 = vadd.f32 0.0, %v1484
    %1486 = vdwg.mxu0
    %1487 = vmatprep.subr.bf16.mxu0 %v1260
    %1488 = vmatpush1.bf16.msra.mxu0 %v1259
    %1489 = vmatprep.subr.bf16.mxu0 %v1248
    %1490 = vmatpush1.bf16.msra.mxu0 %v1247
    %1491 = vmatprep.subr.bf16.mxu0 %v1236
    %1492 = vmatpush1.bf16.msra.mxu0 %v1235
    %1493 = vmatprep.subr.bf16.mxu0 %v1224
    %1494 = vmatpush1.bf16.msra.mxu0 %v1223
    %1495 = vmatprep.subr.bf16.mxu0 %v1212
    %1496 = vmatpush1.bf16.msra.mxu0 %v1211
    %1497 = vmatprep.subr.bf16.mxu0 %v1200
    %1498 = vmatpush1.bf16.msra.mxu0 %v1199
    %1499 = vmatprep.subr.bf16.mxu0 %v1188
    %1500 = vmatpush1.bf16.msra.mxu0 %v1187
    %1501 = vmatprep.subr.bf16.mxu0 %v1176
    %1502 = vmatpush1.bf16.msra.mxu0 %v1175
    %1503 = vmatprep.subr.bf16.mxu0 0
    %1504 = vmatpush2.bf16.msra.mxu0 0
    %1505 = vmatprep.subr.bf16.mxu0 0
    %1506 = vmatpush2.bf16.msra.mxu0 0
    %1507 = vmatprep.subr.bf16.mxu0 0
    %1508 = vmatpush2.bf16.msra.mxu0 0
    %1509 = vmatprep.subr.bf16.mxu0 0
    %1510 = vmatpush2.bf16.msra.mxu0 0
    %1511 = vmatprep.subr.bf16.mxu0 0
    %1512 = vmatpush2.bf16.msra.mxu0 0
    %1513 = vmatprep.subr.bf16.mxu0 0
    %1514 = vmatpush2.bf16.msra.mxu0 0
    %1515 = vmatprep.subr.bf16.mxu0 0
    %1516 = vmatpush2.bf16.msra.mxu0 0
    %1517 = vmatprep.subr.bf16.mxu0 %v1398
    %1518 = vmatpush2.bf16.msra.mxu0 %v1395
    %1519 = vmatprep.mubr.bf16.mxu0 %v1379
    %1520 = vmatmul.mubr.bf16.gmra.mxu0 %v627
    %v1521 = vpop.f32.mrf.mxu0
    %v1522 = vadd.f32 0.0, %v1521
    %v1523 = vpop.f32.mrf.mxu0
    %v1524 = vadd.f32 0.0, %v1523
    %v1525 = vpop.f32.mrf.mxu0
    %v1526 = vadd.f32 0.0, %v1525
    %v1527 = vpop.f32.mrf.mxu0
    %v1528 = vadd.f32 0.0, %v1527
    %1529 = vmatprep.mubr.bf16.mxu0 %v1382
    %1530 = vmatmul.mubr.bf16.gmra.mxu0 %v629
    %v1531 = vpop.f32.mrf.mxu0
    %v1532 = vadd.f32 0.0, %v1531
    %v1533 = vpop.f32.mrf.mxu0
    %v1534 = vadd.f32 0.0, %v1533
    %v1535 = vpop.f32.mrf.mxu0
    %v1536 = vadd.f32 0.0, %v1535
    %v1537 = vpop.f32.mrf.mxu0
    %v1538 = vadd.f32 0.0, %v1537
    %1539 = vmatprep.mubr.bf16.mxu0 %v1385
    %1540 = vmatmul.mubr.bf16.gmra.mxu0 %v631
    %v1541 = vpop.f32.mrf.mxu0
    %v1542 = vadd.f32 0.0, %v1541
    %v1543 = vpop.f32.mrf.mxu0
    %v1544 = vadd.f32 0.0, %v1543
    %v1545 = vpop.f32.mrf.mxu0
    %v1546 = vadd.f32 0.0, %v1545
    %v1547 = vpop.f32.mrf.mxu0
    %v1548 = vadd.f32 0.0, %v1547
    %1549 = vdwg.mxu0
    %1550 = vmatprep.subr.bf16.mxu0 %v1262
    %1551 = vmatpush1.bf16.msra.mxu0 %v1261
    %1552 = vmatprep.subr.bf16.mxu0 %v1250
    %1553 = vmatpush1.bf16.msra.mxu0 %v1249
    %1554 = vmatprep.subr.bf16.mxu0 %v1238
    %1555 = vmatpush1.bf16.msra.mxu0 %v1237
    %1556 = vmatprep.subr.bf16.mxu0 %v1226
    %1557 = vmatpush1.bf16.msra.mxu0 %v1225
    %1558 = vmatprep.subr.bf16.mxu0 %v1214
    %1559 = vmatpush1.bf16.msra.mxu0 %v1213
    %1560 = vmatprep.subr.bf16.mxu0 %v1202
    %1561 = vmatpush1.bf16.msra.mxu0 %v1201
    %1562 = vmatprep.subr.bf16.mxu0 %v1190
    %1563 = vmatpush1.bf16.msra.mxu0 %v1189
    %1564 = vmatprep.subr.bf16.mxu0 %v1178
    %1565 = vmatpush1.bf16.msra.mxu0 %v1177
    %1566 = vmatprep.subr.bf16.mxu0 0
    %1567 = vmatpush2.bf16.msra.mxu0 0
    %1568 = vmatprep.subr.bf16.mxu0 0
    %1569 = vmatpush2.bf16.msra.mxu0 0
    %1570 = vmatprep.subr.bf16.mxu0 0
    %1571 = vmatpush2.bf16.msra.mxu0 0
    %1572 = vmatprep.subr.bf16.mxu0 0
    %1573 = vmatpush2.bf16.msra.mxu0 0
    %1574 = vmatprep.subr.bf16.mxu0 0
    %1575 = vmatpush2.bf16.msra.mxu0 0
    %1576 = vmatprep.subr.bf16.mxu0 0
    %1577 = vmatpush2.bf16.msra.mxu0 0
    %1578 = vmatprep.subr.bf16.mxu0 0
    %1579 = vmatpush2.bf16.msra.mxu0 0
    %1580 = vmatprep.subr.bf16.mxu0 %v1404
    %1581 = vmatpush2.bf16.msra.mxu0 %v1401
    %1582 = vmatprep.mubr.bf16.mxu0 %v1379
    %1583 = vmatmul.mubr.bf16.gmra.mxu0 %v627
    %v1584 = vpop.f32.mrf.mxu0
    %v1585 = vadd.f32 0.0, %v1584
    %v1586 = vpop.f32.mrf.mxu0
    %v1587 = vadd.f32 0.0, %v1586
    %v1588 = vpop.f32.mrf.mxu0
    %v1589 = vadd.f32 0.0, %v1588
    %v1590 = vpop.f32.mrf.mxu0
    %v1591 = vadd.f32 0.0, %v1590
    %1592 = vmatprep.mubr.bf16.mxu0 %v1382
    %1593 = vmatmul.mubr.bf16.gmra.mxu0 %v629
    %v1594 = vpop.f32.mrf.mxu0
    %v1595 = vadd.f32 0.0, %v1594
    %v1596 = vpop.f32.mrf.mxu0
    %v1597 = vadd.f32 0.0, %v1596
    %v1598 = vpop.f32.mrf.mxu0
    %v1599 = vadd.f32 0.0, %v1598
    %v1600 = vpop.f32.mrf.mxu0
    %v1601 = vadd.f32 0.0, %v1600
    %1602 = vmatprep.mubr.bf16.mxu0 %v1385
    %1603 = vmatmul.mubr.bf16.gmra.mxu0 %v631
    %v1604 = vpop.f32.mrf.mxu0
    %v1605 = vadd.f32 0.0, %v1604
    %v1606 = vpop.f32.mrf.mxu0
    %v1607 = vadd.f32 0.0, %v1606
    %v1608 = vpop.f32.mrf.mxu0
    %v1609 = vadd.f32 0.0, %v1608
    %v1610 = vpop.f32.mrf.mxu0
    %v1611 = vadd.f32 0.0, %v1610
    %1612 = vdwg.mxu0
    %1613 = vmatprep.subr.bf16.mxu0 %v1264
    %1614 = vmatpush1.bf16.msra.mxu0 %v1263
    %1615 = vmatprep.subr.bf16.mxu0 %v1252
    %1616 = vmatpush1.bf16.msra.mxu0 %v1251
    %1617 = vmatprep.subr.bf16.mxu0 %v1240
    %1618 = vmatpush1.bf16.msra.mxu0 %v1239
    %1619 = vmatprep.subr.bf16.mxu0 %v1228
    %1620 = vmatpush1.bf16.msra.mxu0 %v1227
    %1621 = vmatprep.subr.bf16.mxu0 %v1216
    %1622 = vmatpush1.bf16.msra.mxu0 %v1215
    %1623 = vmatprep.subr.bf16.mxu0 %v1204
    %1624 = vmatpush1.bf16.msra.mxu0 %v1203
    %1625 = vmatprep.subr.bf16.mxu0 %v1192
    %1626 = vmatpush1.bf16.msra.mxu0 %v1191
    %1627 = vmatprep.subr.bf16.mxu0 %v1180
    %1628 = vmatpush1.bf16.msra.mxu0 %v1179
    %1629 = vmatprep.subr.bf16.mxu0 0
    %1630 = vmatpush2.bf16.msra.mxu0 0
    %1631 = vmatprep.subr.bf16.mxu0 0
    %1632 = vmatpush2.bf16.msra.mxu0 0
    %1633 = vmatprep.subr.bf16.mxu0 0
    %1634 = vmatpush2.bf16.msra.mxu0 0
    %1635 = vmatprep.subr.bf16.mxu0 0
    %1636 = vmatpush2.bf16.msra.mxu0 0
    %1637 = vmatprep.subr.bf16.mxu0 0
    %1638 = vmatpush2.bf16.msra.mxu0 0
    %1639 = vmatprep.subr.bf16.mxu0 0
    %1640 = vmatpush2.bf16.msra.mxu0 0
    %1641 = vmatprep.subr.bf16.mxu0 0
    %1642 = vmatpush2.bf16.msra.mxu0 0
    %1643 = vmatprep.subr.bf16.mxu0 %v1410
    %1644 = vmatpush2.bf16.msra.mxu0 %v1407
    %1645 = vmatprep.mubr.bf16.mxu0 %v1379
    %1646 = vmatmul.mubr.bf16.gmra.mxu0 %v627
    %v1647 = vpop.f32.mrf.mxu0
    %v1648 = vadd.f32 0.0, %v1647
    %v1649 = vpop.f32.mrf.mxu0
    %v1650 = vadd.f32 0.0, %v1649
    %v1651 = vpop.f32.mrf.mxu0
    %v1652 = vadd.f32 0.0, %v1651
    %v1653 = vpop.f32.mrf.mxu0
    %v1654 = vadd.f32 0.0, %v1653
    %1655 = vmatprep.mubr.bf16.mxu0 %v1382
    %1656 = vmatmul.mubr.bf16.gmra.mxu0 %v629
    %v1657 = vpop.f32.mrf.mxu0
    %v1658 = vadd.f32 0.0, %v1657
    %v1659 = vpop.f32.mrf.mxu0
    %v1660 = vadd.f32 0.0, %v1659
    %v1661 = vpop.f32.mrf.mxu0
    %v1662 = vadd.f32 0.0, %v1661
    %v1663 = vpop.f32.mrf.mxu0
    %v1664 = vadd.f32 0.0, %v1663
    %1665 = vmatprep.mubr.bf16.mxu0 %v1385
    %1666 = vmatmul.mubr.bf16.gmra.mxu0 %v631
    %v1667 = vpop.f32.mrf.mxu0
    %v1668 = vadd.f32 0.0, %v1667
    %v1669 = vpop.f32.mrf.mxu0
    %v1670 = vadd.f32 0.0, %v1669
    %v1671 = vpop.f32.mrf.mxu0
    %v1672 = vadd.f32 0.0, %v1671
    %v1673 = vpop.f32.mrf.mxu0
    %v1674 = vadd.f32 0.0, %v1673
    %1675 = vdwg.mxu0
    %1676 = vmatprep.subr.bf16.mxu0 %v1266
    %1677 = vmatpush1.bf16.msra.mxu0 %v1265
    %1678 = vmatprep.subr.bf16.mxu0 %v1254
    %1679 = vmatpush1.bf16.msra.mxu0 %v1253
    %1680 = vmatprep.subr.bf16.mxu0 %v1242
    %1681 = vmatpush1.bf16.msra.mxu0 %v1241
    %1682 = vmatprep.subr.bf16.mxu0 %v1230
    %1683 = vmatpush1.bf16.msra.mxu0 %v1229
    %1684 = vmatprep.subr.bf16.mxu0 %v1218
    %1685 = vmatpush1.bf16.msra.mxu0 %v1217
    %1686 = vmatprep.subr.bf16.mxu0 %v1206
    %1687 = vmatpush1.bf16.msra.mxu0 %v1205
    %1688 = vmatprep.subr.bf16.mxu0 %v1194
    %1689 = vmatpush1.bf16.msra.mxu0 %v1193
    %1690 = vmatprep.subr.bf16.mxu0 %v1182
    %1691 = vmatpush1.bf16.msra.mxu0 %v1181
    %1692 = vmatprep.subr.bf16.mxu0 0
    %1693 = vmatpush2.bf16.msra.mxu0 0
    %1694 = vmatprep.subr.bf16.mxu0 0
    %1695 = vmatpush2.bf16.msra.mxu0 0
    %1696 = vmatprep.subr.bf16.mxu0 0
    %1697 = vmatpush2.bf16.msra.mxu0 0
    %1698 = vmatprep.subr.bf16.mxu0 0
    %1699 = vmatpush2.bf16.msra.mxu0 0
    %1700 = vmatprep.subr.bf16.mxu0 0
    %1701 = vmatpush2.bf16.msra.mxu0 0
    %1702 = vmatprep.subr.bf16.mxu0 0
    %1703 = vmatpush2.bf16.msra.mxu0 0
    %1704 = vmatprep.subr.bf16.mxu0 0
    %1705 = vmatpush2.bf16.msra.mxu0 0
    %1706 = vmatprep.subr.bf16.mxu0 %v1416
    %1707 = vmatpush2.bf16.msra.mxu0 %v1413
    %1708 = vmatprep.mubr.bf16.mxu0 %v1379
    %1709 = vmatmul.mubr.bf16.gmra.mxu0 %v627
    %v1710 = vpop.f32.mrf.mxu0
    %v1711 = vadd.f32 0.0, %v1710
    %v1712 = vpop.f32.mrf.mxu0
    %v1713 = vadd.f32 0.0, %v1712
    %v1714 = vpop.f32.mrf.mxu0
    %v1715 = vadd.f32 0.0, %v1714
    %v1716 = vpop.f32.mrf.mxu0
    %v1717 = vadd.f32 0.0, %v1716
    %1718 = vmatprep.mubr.bf16.mxu0 %v1382
    %1719 = vmatmul.mubr.bf16.gmra.mxu0 %v629
    %v1720 = vpop.f32.mrf.mxu0
    %v1721 = vadd.f32 0.0, %v1720
    %v1722 = vpop.f32.mrf.mxu0
    %v1723 = vadd.f32 0.0, %v1722
    %v1724 = vpop.f32.mrf.mxu0
    %v1725 = vadd.f32 0.0, %v1724
    %v1726 = vpop.f32.mrf.mxu0
    %v1727 = vadd.f32 0.0, %v1726
    %1728 = vmatprep.mubr.bf16.mxu0 %v1385
    %1729 = vmatmul.mubr.bf16.gmra.mxu0 %v631
    %v1730 = vpop.f32.mrf.mxu0
    %v1731 = vadd.f32 0.0, %v1730
    %v1732 = vpop.f32.mrf.mxu0
    %v1733 = vadd.f32 0.0, %v1732
    %v1734 = vpop.f32.mrf.mxu0
    %v1735 = vadd.f32 0.0, %v1734
    %v1736 = vpop.f32.mrf.mxu0
    %v1737 = vadd.f32 0.0, %v1736
    %1738 = vdwg.mxu0
    %1739 = vmatprep.subr.bf16.mxu0 %v1268
    %1740 = vmatpush1.bf16.msra.mxu0 %v1267
    %1741 = vmatprep.subr.bf16.mxu0 %v1256
    %1742 = vmatpush1.bf16.msra.mxu0 %v1255
    %1743 = vmatprep.subr.bf16.mxu0 %v1244
    %1744 = vmatpush1.bf16.msra.mxu0 %v1243
    %1745 = vmatprep.subr.bf16.mxu0 %v1232
    %1746 = vmatpush1.bf16.msra.mxu0 %v1231
    %1747 = vmatprep.subr.bf16.mxu0 %v1220
    %1748 = vmatpush1.bf16.msra.mxu0 %v1219
    %1749 = vmatprep.subr.bf16.mxu0 %v1208
    %1750 = vmatpush1.bf16.msra.mxu0 %v1207
    %1751 = vmatprep.subr.bf16.mxu0 %v1196
    %1752 = vmatpush1.bf16.msra.mxu0 %v1195
    %1753 = vmatprep.subr.bf16.mxu0 %v1184
    %1754 = vmatpush1.bf16.msra.mxu0 %v1183
    %1755 = vmatprep.subr.bf16.mxu0 0
    %1756 = vmatpush2.bf16.msra.mxu0 0
    %1757 = vmatprep.subr.bf16.mxu0 0
    %1758 = vmatpush2.bf16.msra.mxu0 0
    %1759 = vmatprep.subr.bf16.mxu0 0
    %1760 = vmatpush2.bf16.msra.mxu0 0
    %1761 = vmatprep.subr.bf16.mxu0 0
    %1762 = vmatpush2.bf16.msra.mxu0 0
    %1763 = vmatprep.subr.bf16.mxu0 0
    %1764 = vmatpush2.bf16.msra.mxu0 0
    %1765 = vmatprep.subr.bf16.mxu0 0
    %1766 = vmatpush2.bf16.msra.mxu0 0
    %1767 = vmatprep.subr.bf16.mxu0 0
    %1768 = vmatpush2.bf16.msra.mxu0 0
    %1769 = vmatprep.subr.bf16.mxu0 %v1422
    %1770 = vmatpush2.bf16.msra.mxu0 %v1419
    %1771 = vmatprep.mubr.bf16.mxu0 %v1379
    %1772 = vmatmul.mubr.bf16.gmra.mxu0 %v627
    %v1773 = vpop.f32.mrf.mxu0
    %v1774 = vadd.f32 0.0, %v1773
    %v1775 = vpop.f32.mrf.mxu0
    %v1776 = vadd.f32 0.0, %v1775
    %v1777 = vpop.f32.mrf.mxu0
    %v1778 = vadd.f32 0.0, %v1777
    %v1779 = vpop.f32.mrf.mxu0
    %v1780 = vadd.f32 0.0, %v1779
    %1781 = vmatprep.mubr.bf16.mxu0 %v1382
    %1782 = vmatmul.mubr.bf16.gmra.mxu0 %v629
    %v1783 = vpop.f32.mrf.mxu0
    %v1784 = vadd.f32 0.0, %v1783
    %v1785 = vpop.f32.mrf.mxu0
    %v1786 = vadd.f32 0.0, %v1785
    %v1787 = vpop.f32.mrf.mxu0
    %v1788 = vadd.f32 0.0, %v1787
    %v1789 = vpop.f32.mrf.mxu0
    %v1790 = vadd.f32 0.0, %v1789
    %1791 = vmatprep.mubr.bf16.mxu0 %v1385
    %1792 = vmatmul.mubr.bf16.gmra.mxu0 %v631
    %v1793 = vpop.f32.mrf.mxu0
    %v1794 = vadd.f32 0.0, %v1793
    %v1795 = vpop.f32.mrf.mxu0
    %v1796 = vadd.f32 0.0, %v1795
    %v1797 = vpop.f32.mrf.mxu0
    %v1798 = vadd.f32 0.0, %v1797
    %v1799 = vpop.f32.mrf.mxu0
    %v1800 = vadd.f32 0.0, %v1799
    %1801 = vdwg.mxu0
    %v1910 = vunpack.c.l.b16 %v633
    %v1911 = vunpack.c.h.b16 %v633
    %v1912 = vunpack.c.l.b16 %v634
    %v1913 = vunpack.c.h.b16 %v634
    %v1914 = vunpack.c.l.b16 %v635
    %v1915 = vunpack.c.h.b16 %v635
    %v1916 = vunpack.c.l.b16 %v636
    %v1917 = vunpack.c.h.b16 %v636
    %v1918 = vunpack.c.l.b16 %v637
    %v1919 = vunpack.c.h.b16 %v637
    %v1920 = vunpack.c.l.b16 %v638
    %v1921 = vunpack.c.h.b16 %v638
    %v1922 = vunpack.c.l.b16 %v639
    %v1923 = vunpack.c.h.b16 %v639
    %v1924 = vunpack.c.l.b16 %v640
    %v1925 = vunpack.c.h.b16 %v640
    %v1926 = vunpack.c.l.b16 %v641
    %v1927 = vunpack.c.h.b16 %v641
    %v1928 = vunpack.c.l.b16 %v642
    %v1929 = vunpack.c.h.b16 %v642
    %v1930 = vunpack.c.l.b16 %v643
    %v1931 = vunpack.c.h.b16 %v643
    %v1932 = vunpack.c.l.b16 %v644
    %v1933 = vunpack.c.h.b16 %v644
    %v1934 = vunpack.c.l.b16 %v645
    %v1935 = vunpack.c.h.b16 %v645
    %v1936 = vunpack.c.l.b16 %v646
    %v1937 = vunpack.c.h.b16 %v646
    %v1938 = vunpack.c.l.b16 %v647
    %v1939 = vunpack.c.h.b16 %v647
    %v1940 = vunpack.c.l.b16 %v648
    %v1941 = vunpack.c.h.b16 %v648
    %v1942 = vunpack.c.l.b16 %v649
    %v1943 = vunpack.c.h.b16 %v649
    %v1944 = vunpack.c.l.b16 %v650
    %v1945 = vunpack.c.h.b16 %v650
    %v1946 = vunpack.c.l.b16 %v651
    %v1947 = vunpack.c.h.b16 %v651
    %v1948 = vunpack.c.l.b16 %v652
    %v1949 = vunpack.c.h.b16 %v652
    %v1950 = vunpack.c.l.b16 %v653
    %v1951 = vunpack.c.h.b16 %v653
    %v1952 = vunpack.c.l.b16 %v654
    %v1953 = vunpack.c.h.b16 %v654
    %v1954 = vunpack.c.l.b16 %v655
    %v1955 = vunpack.c.h.b16 %v655
    %v1956 = vunpack.c.l.b16 %v656
    %v1957 = vunpack.c.h.b16 %v656
    %v1958 = vunpack.c.l.b16 %v657
    %v1959 = vunpack.c.h.b16 %v657
    %v1960 = vunpack.c.l.b16 %v658
    %v1961 = vunpack.c.h.b16 %v658
    %v1962 = vunpack.c.l.b16 %v659
    %v1963 = vunpack.c.h.b16 %v659
    %v1964 = vunpack.c.l.b16 %v660
    %v1965 = vunpack.c.h.b16 %v660
    %v1966 = vunpack.c.l.b16 %v661
    %v1967 = vunpack.c.h.b16 %v661
    %v1968 = vunpack.c.l.b16 %v662
    %v1969 = vunpack.c.h.b16 %v662
    %v1970 = vunpack.c.l.b16 %v663
    %v1971 = vunpack.c.h.b16 %v663
    %v1972 = vunpack.c.l.b16 %v664
    %v1973 = vunpack.c.h.b16 %v664
    %v1974 = vunpack.c.l.b16 %v665
    %v1975 = vunpack.c.h.b16 %v665
    %v1976 = vunpack.c.l.b16 %v666
    %v1977 = vunpack.c.h.b16 %v666
    %v1978 = vunpack.c.l.b16 %v667
    %v1979 = vunpack.c.h.b16 %v667
    %v1980 = vunpack.c.l.b16 %v668
    %v1981 = vunpack.c.h.b16 %v668
    %v1982 = vunpack.c.l.b16 %v669
    %v1983 = vunpack.c.h.b16 %v669
    %v1984 = vunpack.c.l.b16 %v670
    %v1985 = vunpack.c.h.b16 %v670
    %v1986 = vunpack.c.l.b16 %v671
    %v1987 = vunpack.c.h.b16 %v671
    %v1988 = vunpack.c.l.b16 %v672
    %v1989 = vunpack.c.h.b16 %v672
    %v1990 = vunpack.c.l.b16 %v673
    %v1991 = vunpack.c.h.b16 %v673
    %v1992 = vunpack.c.l.b16 %v674
    %v1993 = vunpack.c.h.b16 %v674
    %v1994 = vunpack.c.l.b16 %v675
    %v1995 = vunpack.c.h.b16 %v675
    %v1996 = vunpack.c.l.b16 %v676
    %v1997 = vunpack.c.h.b16 %v676
    %v1998 = vunpack.c.l.b16 %v677
    %v1999 = vunpack.c.h.b16 %v677
    %v2000 = vunpack.c.l.b16 %v678
    %v2001 = vunpack.c.h.b16 %v678
    %v2002 = vunpack.c.l.b16 %v679
    %v2003 = vunpack.c.h.b16 %v679
    %v2004 = vunpack.c.l.b16 %v680
    %v2005 = vunpack.c.h.b16 %v680
    %v2006 = vunpack.c.l.b16 %v681
    %v2007 = vunpack.c.h.b16 %v681
    %v2008 = vunpack.c.l.b16 %v682
    %v2009 = vunpack.c.h.b16 %v682
    %v2010 = vunpack.c.l.b16 %v683
    %v2011 = vunpack.c.h.b16 %v683
    %v2012 = vunpack.c.l.b16 %v684
    %v2013 = vunpack.c.h.b16 %v684
    %v2014 = vunpack.c.l.b16 %v685
    %v2015 = vunpack.c.h.b16 %v685
    %v2016 = vunpack.c.l.b16 %v686
    %v2017 = vunpack.c.h.b16 %v686
    %v2018 = vunpack.c.l.b16 %v687
    %v2019 = vunpack.c.h.b16 %v687
    %v2020 = vunpack.c.l.b16 %v688
    %v2021 = vunpack.c.h.b16 %v688
    %v2022 = vunpack.c.l.b16 %v689
    %v2023 = vunpack.c.h.b16 %v689
    %v2024 = vunpack.c.l.b16 %v690
    %v2025 = vunpack.c.h.b16 %v690
    %v2026 = vunpack.c.l.b16 %v691
    %v2027 = vunpack.c.h.b16 %v691
    %v2028 = vunpack.c.l.b16 %v692
    %v2029 = vunpack.c.h.b16 %v692
    %v2030 = vunpack.c.l.b16 %v693
    %v2031 = vunpack.c.h.b16 %v693
    %v2032 = vunpack.c.l.b16 %v694
    %v2033 = vunpack.c.h.b16 %v694
    %v2034 = vunpack.c.l.b16 %v695
    %v2035 = vunpack.c.h.b16 %v695
    %v2036 = vunpack.c.l.b16 %v696
    %v2037 = vunpack.c.h.b16 %v696
    %v2038 = vunpack.c.l.b16 %v697
    %v2039 = vunpack.c.h.b16 %v697
    %v2040 = vunpack.c.l.b16 %v698
    %v2041 = vunpack.c.h.b16 %v698
    %v2042 = vunpack.c.l.b16 %v699
    %v2043 = vunpack.c.h.b16 %v699
    %v2044 = vunpack.c.l.b16 %v700
    %v2045 = vunpack.c.h.b16 %v700
    %v2046 = vunpack.c.l.b16 %v701
    %v2047 = vunpack.c.h.b16 %v701
    %v2048 = vunpack.c.l.b16 %v702
    %v2049 = vunpack.c.h.b16 %v702
    %v2050 = vunpack.c.l.b16 %v703
    %v2051 = vunpack.c.h.b16 %v703
    %v2052 = vunpack.c.l.b16 %v704
    %v2053 = vunpack.c.h.b16 %v704
    %v2054 = vunpack.c.l.b16 %v705
    %v2055 = vunpack.c.h.b16 %v705
    %v2056 = vunpack.c.l.b16 %v706
    %v2057 = vunpack.c.h.b16 %v706
    %v2058 = vunpack.c.l.b16 %v707
    %v2059 = vunpack.c.h.b16 %v707
    %v2060 = vunpack.c.l.b16 %v708
    %v2061 = vunpack.c.h.b16 %v708
    %v2062 = vunpack.c.l.b16 %v709
    %v2063 = vunpack.c.h.b16 %v709
    %v2064 = vunpack.c.l.b16 %v710
    %v2065 = vunpack.c.h.b16 %v710
    %v2066 = vunpack.c.l.b16 %v711
    %v2067 = vunpack.c.h.b16 %v711
    %v2068 = vunpack.c.l.b16 %v712
    %v2069 = vunpack.c.h.b16 %v712
    %v2070 = vunpack.c.l.b16 %v713
    %v2071 = vunpack.c.h.b16 %v713
    %v2072 = vunpack.c.l.b16 %v714
    %v2073 = vunpack.c.h.b16 %v714
    %v2074 = vunpack.c.l.b16 %v715
    %v2075 = vunpack.c.h.b16 %v715
    %v2076 = vunpack.c.l.b16 %v716
    %v2077 = vunpack.c.h.b16 %v716
    %v2078 = vunpack.c.l.b16 %v717
    %v2079 = vunpack.c.h.b16 %v717
    %v2080 = vunpack.c.l.b16 %v718
    %v2081 = vunpack.c.h.b16 %v718
    %v2082 = vunpack.c.l.b16 %v719
    %v2083 = vunpack.c.h.b16 %v719
    %v2084 = vunpack.c.l.b16 %v720
    %v2085 = vunpack.c.h.b16 %v720
    %v2086 = vunpack.c.l.b16 %v721
    %v2087 = vunpack.c.h.b16 %v721
    %v2088 = vunpack.c.l.b16 %v722
    %v2089 = vunpack.c.h.b16 %v722
    %v2090 = vunpack.c.l.b16 %v723
    %v2091 = vunpack.c.h.b16 %v723
    %v2092 = vunpack.c.l.b16 %v724
    %v2093 = vunpack.c.h.b16 %v724
    %v2094 = vunpack.c.l.b16 %v725
    %v2095 = vunpack.c.h.b16 %v725
    %v2096 = vunpack.c.l.b16 %v726
    %v2097 = vunpack.c.h.b16 %v726
    %v2098 = vunpack.c.l.b16 %v727
    %v2099 = vunpack.c.h.b16 %v727
    %v2100 = vunpack.c.l.b16 %v728
    %v2101 = vunpack.c.h.b16 %v728
    %v2102 = vunpack.c.l.b16 %v729
    %v2103 = vunpack.c.h.b16 %v729
    %v2104 = vunpack.c.l.b16 %v730
    %v2105 = vunpack.c.h.b16 %v730
    %v2106 = vunpack.c.l.b16 %v731
    %v2107 = vunpack.c.h.b16 %v731
    %v2108 = vunpack.c.l.b16 %v732
    %v2109 = vunpack.c.h.b16 %v732
    %v2110 = vunpack.c.l.b16 %v733
    %v2111 = vunpack.c.h.b16 %v733
    %v2112 = vunpack.c.l.b16 %v734
    %v2113 = vunpack.c.h.b16 %v734
    %v2114 = vunpack.c.l.b16 %v735
    %v2115 = vunpack.c.h.b16 %v735
    %v2116 = vunpack.c.l.b16 %v736
    %v2117 = vunpack.c.h.b16 %v736
    %v2118 = vunpack.c.l.b16 %v737
    %v2119 = vunpack.c.h.b16 %v737
    %v2120 = vunpack.c.l.b16 %v738
    %v2121 = vunpack.c.h.b16 %v738
    %v2122 = vunpack.c.l.b16 %v739
    %v2123 = vunpack.c.h.b16 %v739
    %v2124 = vunpack.c.l.b16 %v740
    %v2125 = vunpack.c.h.b16 %v740
    %v2126 = vpack.c.b16 %v1922, %v1910
    %v2127 = vpack.c.b16 %v1923, %v1911
    %v2128 = vpack.c.b16 %v1924, %v1912
    %v2129 = vpack.c.b16 %v1925, %v1913
    %v2130 = vpack.c.b16 %v1926, %v1914
    %v2131 = vpack.c.b16 %v1927, %v1915
    %v2132 = vpack.c.b16 %v1928, %v1916
    %v2133 = vpack.c.b16 %v1929, %v1917
    %v2134 = vpack.c.b16 %v1930, %v1918
    %v2135 = vpack.c.b16 %v1931, %v1919
    %v2136 = vpack.c.b16 %v1932, %v1920
    %v2137 = vpack.c.b16 %v1933, %v1921
    %v2138 = vpack.c.b16 %v1946, %v1934
    %v2139 = vpack.c.b16 %v1947, %v1935
    %v2140 = vpack.c.b16 %v1948, %v1936
    %v2141 = vpack.c.b16 %v1949, %v1937
    %v2142 = vpack.c.b16 %v1950, %v1938
    %v2143 = vpack.c.b16 %v1951, %v1939
    %v2144 = vpack.c.b16 %v1952, %v1940
    %v2145 = vpack.c.b16 %v1953, %v1941
    %v2146 = vpack.c.b16 %v1954, %v1942
    %v2147 = vpack.c.b16 %v1955, %v1943
    %v2148 = vpack.c.b16 %v1956, %v1944
    %v2149 = vpack.c.b16 %v1957, %v1945
    %v2150 = vpack.c.b16 %v1970, %v1958
    %v2151 = vpack.c.b16 %v1971, %v1959
    %v2152 = vpack.c.b16 %v1972, %v1960
    %v2153 = vpack.c.b16 %v1973, %v1961
    %v2154 = vpack.c.b16 %v1974, %v1962
    %v2155 = vpack.c.b16 %v1975, %v1963
    %v2156 = vpack.c.b16 %v1976, %v1964
    %v2157 = vpack.c.b16 %v1977, %v1965
    %v2158 = vpack.c.b16 %v1978, %v1966
    %v2159 = vpack.c.b16 %v1979, %v1967
    %v2160 = vpack.c.b16 %v1980, %v1968
    %v2161 = vpack.c.b16 %v1981, %v1969
    %v2162 = vpack.c.b16 %v1994, %v1982
    %v2163 = vpack.c.b16 %v1995, %v1983
    %v2164 = vpack.c.b16 %v1996, %v1984
    %v2165 = vpack.c.b16 %v1997, %v1985
    %v2166 = vpack.c.b16 %v1998, %v1986
    %v2167 = vpack.c.b16 %v1999, %v1987
    %v2168 = vpack.c.b16 %v2000, %v1988
    %v2169 = vpack.c.b16 %v2001, %v1989
    %v2170 = vpack.c.b16 %v2002, %v1990
    %v2171 = vpack.c.b16 %v2003, %v1991
    %v2172 = vpack.c.b16 %v2004, %v1992
    %v2173 = vpack.c.b16 %v2005, %v1993
    %v2174 = vpack.c.b16 %v2018, %v2006
    %v2175 = vpack.c.b16 %v2019, %v2007
    %v2176 = vpack.c.b16 %v2020, %v2008
    %v2177 = vpack.c.b16 %v2021, %v2009
    %v2178 = vpack.c.b16 %v2022, %v2010
    %v2179 = vpack.c.b16 %v2023, %v2011
    %v2180 = vpack.c.b16 %v2024, %v2012
    %v2181 = vpack.c.b16 %v2025, %v2013
    %v2182 = vpack.c.b16 %v2026, %v2014
    %v2183 = vpack.c.b16 %v2027, %v2015
    %v2184 = vpack.c.b16 %v2028, %v2016
    %v2185 = vpack.c.b16 %v2029, %v2017
    %v2186 = vpack.c.b16 %v2042, %v2030
    %v2187 = vpack.c.b16 %v2043, %v2031
    %v2188 = vpack.c.b16 %v2044, %v2032
    %v2189 = vpack.c.b16 %v2045, %v2033
    %v2190 = vpack.c.b16 %v2046, %v2034
    %v2191 = vpack.c.b16 %v2047, %v2035
    %v2192 = vpack.c.b16 %v2048, %v2036
    %v2193 = vpack.c.b16 %v2049, %v2037
    %v2194 = vpack.c.b16 %v2050, %v2038
    %v2195 = vpack.c.b16 %v2051, %v2039
    %v2196 = vpack.c.b16 %v2052, %v2040
    %v2197 = vpack.c.b16 %v2053, %v2041
    %v2198 = vpack.c.b16 %v2066, %v2054
    %v2199 = vpack.c.b16 %v2067, %v2055
    %v2200 = vpack.c.b16 %v2068, %v2056
    %v2201 = vpack.c.b16 %v2069, %v2057
    %v2202 = vpack.c.b16 %v2070, %v2058
    %v2203 = vpack.c.b16 %v2071, %v2059
    %v2204 = vpack.c.b16 %v2072, %v2060
    %v2205 = vpack.c.b16 %v2073, %v2061
    %v2206 = vpack.c.b16 %v2074, %v2062
    %v2207 = vpack.c.b16 %v2075, %v2063
    %v2208 = vpack.c.b16 %v2076, %v2064
    %v2209 = vpack.c.b16 %v2077, %v2065
    %v2210 = vpack.c.b16 %v2090, %v2078
    %v2211 = vpack.c.b16 %v2091, %v2079
    %v2212 = vpack.c.b16 %v2092, %v2080
    %v2213 = vpack.c.b16 %v2093, %v2081
    %v2214 = vpack.c.b16 %v2094, %v2082
    %v2215 = vpack.c.b16 %v2095, %v2083
    %v2216 = vpack.c.b16 %v2096, %v2084
    %v2217 = vpack.c.b16 %v2097, %v2085
    %v2218 = vpack.c.b16 %v2098, %v2086
    %v2219 = vpack.c.b16 %v2099, %v2087
    %v2220 = vpack.c.b16 %v2100, %v2088
    %v2221 = vpack.c.b16 %v2101, %v2089
    %v2222 = vpack.c.b16 %v2114, %v2102
    %v2223 = vpack.c.b16 %v2115, %v2103
    %v2224 = vpack.c.b16 %v2116, %v2104
    %v2225 = vpack.c.b16 %v2117, %v2105
    %v2226 = vpack.c.b16 %v2118, %v2106
    %v2227 = vpack.c.b16 %v2119, %v2107
    %v2228 = vpack.c.b16 %v2120, %v2108
    %v2229 = vpack.c.b16 %v2121, %v2109
    %v2230 = vpack.c.b16 %v2122, %v2110
    %v2231 = vpack.c.b16 %v2123, %v2111
    %v2232 = vpack.c.b16 %v2124, %v2112
    %v2233 = vpack.c.b16 %v2125, %v2113
    %v2331 = vsel %vm1377, %v610, 0
    %v2334 = vsel %vm1377, %v612, 0
    %v2337 = vsel %vm1377, %v614, 0
    %v2340 = vsel %vm1387, %v2222, 0
    %v2343 = vsel %vm1387, %v2223, 0
    %v2346 = vsel %vm1387, %v2224, 0
    %v2349 = vsel %vm1387, %v2225, 0
    %v2352 = vsel %vm1387, %v2226, 0
    %v2355 = vsel %vm1387, %v2227, 0
    %v2358 = vsel %vm1387, %v2228, 0
    %v2361 = vsel %vm1387, %v2229, 0
    %v2364 = vsel %vm1387, %v2230, 0
    %v2367 = vsel %vm1387, %v2231, 0
    %v2370 = vsel %vm1387, %v2232, 0
    %v2373 = vsel %vm1387, %v2233, 0
    %2375 = vmatprep.subr.bf16.mxu0 %v2211
    %2376 = vmatpush1.bf16.msra.mxu0 %v2210
    %2377 = vmatprep.subr.bf16.mxu0 %v2199
    %2378 = vmatpush1.bf16.msra.mxu0 %v2198
    %2379 = vmatprep.subr.bf16.mxu0 %v2187
    %2380 = vmatpush1.bf16.msra.mxu0 %v2186
    %2381 = vmatprep.subr.bf16.mxu0 %v2175
    %2382 = vmatpush1.bf16.msra.mxu0 %v2174
    %2383 = vmatprep.subr.bf16.mxu0 %v2163
    %2384 = vmatpush1.bf16.msra.mxu0 %v2162
    %2385 = vmatprep.subr.bf16.mxu0 %v2151
    %2386 = vmatpush1.bf16.msra.mxu0 %v2150
    %2387 = vmatprep.subr.bf16.mxu0 %v2139
    %2388 = vmatpush1.bf16.msra.mxu0 %v2138
    %2389 = vmatprep.subr.bf16.mxu0 %v2127
    %2390 = vmatpush1.bf16.msra.mxu0 %v2126
    %2391 = vmatprep.subr.bf16.mxu0 0
    %2392 = vmatpush2.bf16.msra.mxu0 0
    %2393 = vmatprep.subr.bf16.mxu0 0
    %2394 = vmatpush2.bf16.msra.mxu0 0
    %2395 = vmatprep.subr.bf16.mxu0 0
    %2396 = vmatpush2.bf16.msra.mxu0 0
    %2397 = vmatprep.subr.bf16.mxu0 0
    %2398 = vmatpush2.bf16.msra.mxu0 0
    %2399 = vmatprep.subr.bf16.mxu0 0
    %2400 = vmatpush2.bf16.msra.mxu0 0
    %2401 = vmatprep.subr.bf16.mxu0 0
    %2402 = vmatpush2.bf16.msra.mxu0 0
    %2403 = vmatprep.subr.bf16.mxu0 0
    %2404 = vmatpush2.bf16.msra.mxu0 0
    %2405 = vmatprep.subr.bf16.mxu0 %v2343
    %2406 = vmatpush2.bf16.msra.mxu0 %v2340
    %2407 = vmatprep.mubr.bf16.mxu0 %v2331
    %2408 = vmatmul.mubr.bf16.gmra.mxu0 %v609
    %v2409 = vpop.f32.mrf.mxu0
    %v2410 = vadd.f32 %v1459, %v2409
    %v2411 = vpop.f32.mrf.mxu0
    %v2412 = vadd.f32 %v1461, %v2411
    %v2413 = vpop.f32.mrf.mxu0
    %v2414 = vadd.f32 %v1463, %v2413
    %v2415 = vpop.f32.mrf.mxu0
    %v2416 = vadd.f32 %v1465, %v2415
    %2417 = vmatprep.mubr.bf16.mxu0 %v2334
    %2418 = vmatmul.mubr.bf16.gmra.mxu0 %v611
    %v2419 = vpop.f32.mrf.mxu0
    %v2420 = vadd.f32 %v1469, %v2419
    %v2421 = vpop.f32.mrf.mxu0
    %v2422 = vadd.f32 %v1471, %v2421
    %v2423 = vpop.f32.mrf.mxu0
    %v2424 = vadd.f32 %v1473, %v2423
    %v2425 = vpop.f32.mrf.mxu0
    %v2426 = vadd.f32 %v1475, %v2425
    %2427 = vmatprep.mubr.bf16.mxu0 %v2337
    %2428 = vmatmul.mubr.bf16.gmra.mxu0 %v613
    %v2429 = vpop.f32.mrf.mxu0
    %v2430 = vadd.f32 %v1479, %v2429
    %v2431 = vpop.f32.mrf.mxu0
    %v2432 = vadd.f32 %v1481, %v2431
    %v2433 = vpop.f32.mrf.mxu0
    %v2434 = vadd.f32 %v1483, %v2433
    %v2435 = vpop.f32.mrf.mxu0
    %v2436 = vadd.f32 %v1485, %v2435
    %2437 = vdwg.mxu0
    %2438 = vmatprep.subr.bf16.mxu0 %v2213
    %2439 = vmatpush1.bf16.msra.mxu0 %v2212
    %2440 = vmatprep.subr.bf16.mxu0 %v2201
    %2441 = vmatpush1.bf16.msra.mxu0 %v2200
    %2442 = vmatprep.subr.bf16.mxu0 %v2189
    %2443 = vmatpush1.bf16.msra.mxu0 %v2188
    %2444 = vmatprep.subr.bf16.mxu0 %v2177
    %2445 = vmatpush1.bf16.msra.mxu0 %v2176
    %2446 = vmatprep.subr.bf16.mxu0 %v2165
    %2447 = vmatpush1.bf16.msra.mxu0 %v2164
    %2448 = vmatprep.subr.bf16.mxu0 %v2153
    %2449 = vmatpush1.bf16.msra.mxu0 %v2152
    %2450 = vmatprep.subr.bf16.mxu0 %v2141
    %2451 = vmatpush1.bf16.msra.mxu0 %v2140
    %2452 = vmatprep.subr.bf16.mxu0 %v2129
    %2453 = vmatpush1.bf16.msra.mxu0 %v2128
    %2454 = vmatprep.subr.bf16.mxu0 0
    %2455 = vmatpush2.bf16.msra.mxu0 0
    %2456 = vmatprep.subr.bf16.mxu0 0
    %2457 = vmatpush2.bf16.msra.mxu0 0
    %2458 = vmatprep.subr.bf16.mxu0 0
    %2459 = vmatpush2.bf16.msra.mxu0 0
    %2460 = vmatprep.subr.bf16.mxu0 0
    %2461 = vmatpush2.bf16.msra.mxu0 0
    %2462 = vmatprep.subr.bf16.mxu0 0
    %2463 = vmatpush2.bf16.msra.mxu0 0
    %2464 = vmatprep.subr.bf16.mxu0 0
    %2465 = vmatpush2.bf16.msra.mxu0 0
    %2466 = vmatprep.subr.bf16.mxu0 0
    %2467 = vmatpush2.bf16.msra.mxu0 0
    %2468 = vmatprep.subr.bf16.mxu0 %v2349
    %2469 = vmatpush2.bf16.msra.mxu0 %v2346
    %2470 = vmatprep.mubr.bf16.mxu0 %v2331
    %2471 = vmatmul.mubr.bf16.gmra.mxu0 %v609
    %v2472 = vpop.f32.mrf.mxu0
    %v2473 = vadd.f32 %v1522, %v2472
    %v2474 = vpop.f32.mrf.mxu0
    %v2475 = vadd.f32 %v1524, %v2474
    %v2476 = vpop.f32.mrf.mxu0
    %v2477 = vadd.f32 %v1526, %v2476
    %v2478 = vpop.f32.mrf.mxu0
    %v2479 = vadd.f32 %v1528, %v2478
    %2480 = vmatprep.mubr.bf16.mxu0 %v2334
    %2481 = vmatmul.mubr.bf16.gmra.mxu0 %v611
    %v2482 = vpop.f32.mrf.mxu0
    %v2483 = vadd.f32 %v1532, %v2482
    %v2484 = vpop.f32.mrf.mxu0
    %v2485 = vadd.f32 %v1534, %v2484
    %v2486 = vpop.f32.mrf.mxu0
    %v2487 = vadd.f32 %v1536, %v2486
    %v2488 = vpop.f32.mrf.mxu0
    %v2489 = vadd.f32 %v1538, %v2488
    %2490 = vmatprep.mubr.bf16.mxu0 %v2337
    %2491 = vmatmul.mubr.bf16.gmra.mxu0 %v613
    %v2492 = vpop.f32.mrf.mxu0
    %v2493 = vadd.f32 %v1542, %v2492
    %v2494 = vpop.f32.mrf.mxu0
    %v2495 = vadd.f32 %v1544, %v2494
    %v2496 = vpop.f32.mrf.mxu0
    %v2497 = vadd.f32 %v1546, %v2496
    %v2498 = vpop.f32.mrf.mxu0
    %v2499 = vadd.f32 %v1548, %v2498
    %2500 = vdwg.mxu0
    %2501 = vmatprep.subr.bf16.mxu0 %v2215
    %2502 = vmatpush1.bf16.msra.mxu0 %v2214
    %2503 = vmatprep.subr.bf16.mxu0 %v2203
    %2504 = vmatpush1.bf16.msra.mxu0 %v2202
    %2505 = vmatprep.subr.bf16.mxu0 %v2191
    %2506 = vmatpush1.bf16.msra.mxu0 %v2190
    %2507 = vmatprep.subr.bf16.mxu0 %v2179
    %2508 = vmatpush1.bf16.msra.mxu0 %v2178
    %2509 = vmatprep.subr.bf16.mxu0 %v2167
    %2510 = vmatpush1.bf16.msra.mxu0 %v2166
    %2511 = vmatprep.subr.bf16.mxu0 %v2155
    %2512 = vmatpush1.bf16.msra.mxu0 %v2154
    %2513 = vmatprep.subr.bf16.mxu0 %v2143
    %2514 = vmatpush1.bf16.msra.mxu0 %v2142
    %2515 = vmatprep.subr.bf16.mxu0 %v2131
    %2516 = vmatpush1.bf16.msra.mxu0 %v2130
    %2517 = vmatprep.subr.bf16.mxu0 0
    %2518 = vmatpush2.bf16.msra.mxu0 0
    %2519 = vmatprep.subr.bf16.mxu0 0
    %2520 = vmatpush2.bf16.msra.mxu0 0
    %2521 = vmatprep.subr.bf16.mxu0 0
    %2522 = vmatpush2.bf16.msra.mxu0 0
    %2523 = vmatprep.subr.bf16.mxu0 0
    %2524 = vmatpush2.bf16.msra.mxu0 0
    %2525 = vmatprep.subr.bf16.mxu0 0
    %2526 = vmatpush2.bf16.msra.mxu0 0
    %2527 = vmatprep.subr.bf16.mxu0 0
    %2528 = vmatpush2.bf16.msra.mxu0 0
    %2529 = vmatprep.subr.bf16.mxu0 0
    %2530 = vmatpush2.bf16.msra.mxu0 0
    %2531 = vmatprep.subr.bf16.mxu0 %v2355
    %2532 = vmatpush2.bf16.msra.mxu0 %v2352
    %2533 = vmatprep.mubr.bf16.mxu0 %v2331
    %2534 = vmatmul.mubr.bf16.gmra.mxu0 %v609
    %v2535 = vpop.f32.mrf.mxu0
    %v2536 = vadd.f32 %v1585, %v2535
    %v2537 = vpop.f32.mrf.mxu0
    %v2538 = vadd.f32 %v1587, %v2537
    %v2539 = vpop.f32.mrf.mxu0
    %v2540 = vadd.f32 %v1589, %v2539
    %v2541 = vpop.f32.mrf.mxu0
    %v2542 = vadd.f32 %v1591, %v2541
    %2543 = vmatprep.mubr.bf16.mxu0 %v2334
    %2544 = vmatmul.mubr.bf16.gmra.mxu0 %v611
    %v2545 = vpop.f32.mrf.mxu0
    %v2546 = vadd.f32 %v1595, %v2545
    %v2547 = vpop.f32.mrf.mxu0
    %v2548 = vadd.f32 %v1597, %v2547
    %v2549 = vpop.f32.mrf.mxu0
    %v2550 = vadd.f32 %v1599, %v2549
    %v2551 = vpop.f32.mrf.mxu0
    %v2552 = vadd.f32 %v1601, %v2551
    %2553 = vmatprep.mubr.bf16.mxu0 %v2337
    %2554 = vmatmul.mubr.bf16.gmra.mxu0 %v613
    %v2555 = vpop.f32.mrf.mxu0
    %v2556 = vadd.f32 %v1605, %v2555
    %v2557 = vpop.f32.mrf.mxu0
    %v2558 = vadd.f32 %v1607, %v2557
    %v2559 = vpop.f32.mrf.mxu0
    %v2560 = vadd.f32 %v1609, %v2559
    %v2561 = vpop.f32.mrf.mxu0
    %v2562 = vadd.f32 %v1611, %v2561
    %2563 = vdwg.mxu0
    %2564 = vmatprep.subr.bf16.mxu0 %v2217
    %2565 = vmatpush1.bf16.msra.mxu0 %v2216
    %2566 = vmatprep.subr.bf16.mxu0 %v2205
    %2567 = vmatpush1.bf16.msra.mxu0 %v2204
    %2568 = vmatprep.subr.bf16.mxu0 %v2193
    %2569 = vmatpush1.bf16.msra.mxu0 %v2192
    %2570 = vmatprep.subr.bf16.mxu0 %v2181
    %2571 = vmatpush1.bf16.msra.mxu0 %v2180
    %2572 = vmatprep.subr.bf16.mxu0 %v2169
    %2573 = vmatpush1.bf16.msra.mxu0 %v2168
    %2574 = vmatprep.subr.bf16.mxu0 %v2157
    %2575 = vmatpush1.bf16.msra.mxu0 %v2156
    %2576 = vmatprep.subr.bf16.mxu0 %v2145
    %2577 = vmatpush1.bf16.msra.mxu0 %v2144
    %2578 = vmatprep.subr.bf16.mxu0 %v2133
    %2579 = vmatpush1.bf16.msra.mxu0 %v2132
    %2580 = vmatprep.subr.bf16.mxu0 0
    %2581 = vmatpush2.bf16.msra.mxu0 0
    %2582 = vmatprep.subr.bf16.mxu0 0
    %2583 = vmatpush2.bf16.msra.mxu0 0
    %2584 = vmatprep.subr.bf16.mxu0 0
    %2585 = vmatpush2.bf16.msra.mxu0 0
    %2586 = vmatprep.subr.bf16.mxu0 0
    %2587 = vmatpush2.bf16.msra.mxu0 0
    %2588 = vmatprep.subr.bf16.mxu0 0
    %2589 = vmatpush2.bf16.msra.mxu0 0
    %2590 = vmatprep.subr.bf16.mxu0 0
    %2591 = vmatpush2.bf16.msra.mxu0 0
    %2592 = vmatprep.subr.bf16.mxu0 0
    %2593 = vmatpush2.bf16.msra.mxu0 0
    %2594 = vmatprep.subr.bf16.mxu0 %v2361
    %2595 = vmatpush2.bf16.msra.mxu0 %v2358
    %2596 = vmatprep.mubr.bf16.mxu0 %v2331
    %2597 = vmatmul.mubr.bf16.gmra.mxu0 %v609
    %v2598 = vpop.f32.mrf.mxu0
    %v2599 = vadd.f32 %v1648, %v2598
    %v2600 = vpop.f32.mrf.mxu0
    %v2601 = vadd.f32 %v1650, %v2600
    %v2602 = vpop.f32.mrf.mxu0
    %v2603 = vadd.f32 %v1652, %v2602
    %v2604 = vpop.f32.mrf.mxu0
    %v2605 = vadd.f32 %v1654, %v2604
    %2606 = vmatprep.mubr.bf16.mxu0 %v2334
    %2607 = vmatmul.mubr.bf16.gmra.mxu0 %v611
    %v2608 = vpop.f32.mrf.mxu0
    %v2609 = vadd.f32 %v1658, %v2608
    %v2610 = vpop.f32.mrf.mxu0
    %v2611 = vadd.f32 %v1660, %v2610
    %v2612 = vpop.f32.mrf.mxu0
    %v2613 = vadd.f32 %v1662, %v2612
    %v2614 = vpop.f32.mrf.mxu0
    %v2615 = vadd.f32 %v1664, %v2614
    %2616 = vmatprep.mubr.bf16.mxu0 %v2337
    %2617 = vmatmul.mubr.bf16.gmra.mxu0 %v613
    %v2618 = vpop.f32.mrf.mxu0
    %v2619 = vadd.f32 %v1668, %v2618
    %v2620 = vpop.f32.mrf.mxu0
    %v2621 = vadd.f32 %v1670, %v2620
    %v2622 = vpop.f32.mrf.mxu0
    %v2623 = vadd.f32 %v1672, %v2622
    %v2624 = vpop.f32.mrf.mxu0
    %v2625 = vadd.f32 %v1674, %v2624
    %2626 = vdwg.mxu0
    %2627 = vmatprep.subr.bf16.mxu0 %v2219
    %2628 = vmatpush1.bf16.msra.mxu0 %v2218
    %2629 = vmatprep.subr.bf16.mxu0 %v2207
    %2630 = vmatpush1.bf16.msra.mxu0 %v2206
    %2631 = vmatprep.subr.bf16.mxu0 %v2195
    %2632 = vmatpush1.bf16.msra.mxu0 %v2194
    %2633 = vmatprep.subr.bf16.mxu0 %v2183
    %2634 = vmatpush1.bf16.msra.mxu0 %v2182
    %2635 = vmatprep.subr.bf16.mxu0 %v2171
    %2636 = vmatpush1.bf16.msra.mxu0 %v2170
    %2637 = vmatprep.subr.bf16.mxu0 %v2159
    %2638 = vmatpush1.bf16.msra.mxu0 %v2158
    %2639 = vmatprep.subr.bf16.mxu0 %v2147
    %2640 = vmatpush1.bf16.msra.mxu0 %v2146
    %2641 = vmatprep.subr.bf16.mxu0 %v2135
    %2642 = vmatpush1.bf16.msra.mxu0 %v2134
    %2643 = vmatprep.subr.bf16.mxu0 0
    %2644 = vmatpush2.bf16.msra.mxu0 0
    %2645 = vmatprep.subr.bf16.mxu0 0
    %2646 = vmatpush2.bf16.msra.mxu0 0
    %2647 = vmatprep.subr.bf16.mxu0 0
    %2648 = vmatpush2.bf16.msra.mxu0 0
    %2649 = vmatprep.subr.bf16.mxu0 0
    %2650 = vmatpush2.bf16.msra.mxu0 0
    %2651 = vmatprep.subr.bf16.mxu0 0
    %2652 = vmatpush2.bf16.msra.mxu0 0
    %2653 = vmatprep.subr.bf16.mxu0 0
    %2654 = vmatpush2.bf16.msra.mxu0 0
    %2655 = vmatprep.subr.bf16.mxu0 0
    %2656 = vmatpush2.bf16.msra.mxu0 0
    %2657 = vmatprep.subr.bf16.mxu0 %v2367
    %2658 = vmatpush2.bf16.msra.mxu0 %v2364
    %2659 = vmatprep.mubr.bf16.mxu0 %v2331
    %2660 = vmatmul.mubr.bf16.gmra.mxu0 %v609
    %v2661 = vpop.f32.mrf.mxu0
    %v2662 = vadd.f32 %v1711, %v2661
    %v2663 = vpop.f32.mrf.mxu0
    %v2664 = vadd.f32 %v1713, %v2663
    %v2665 = vpop.f32.mrf.mxu0
    %v2666 = vadd.f32 %v1715, %v2665
    %v2667 = vpop.f32.mrf.mxu0
    %v2668 = vadd.f32 %v1717, %v2667
    %2669 = vmatprep.mubr.bf16.mxu0 %v2334
    %2670 = vmatmul.mubr.bf16.gmra.mxu0 %v611
    %v2671 = vpop.f32.mrf.mxu0
    %v2672 = vadd.f32 %v1721, %v2671
    %v2673 = vpop.f32.mrf.mxu0
    %v2674 = vadd.f32 %v1723, %v2673
    %v2675 = vpop.f32.mrf.mxu0
    %v2676 = vadd.f32 %v1725, %v2675
    %v2677 = vpop.f32.mrf.mxu0
    %v2678 = vadd.f32 %v1727, %v2677
    %2679 = vmatprep.mubr.bf16.mxu0 %v2337
    %2680 = vmatmul.mubr.bf16.gmra.mxu0 %v613
    %v2681 = vpop.f32.mrf.mxu0
    %v2682 = vadd.f32 %v1731, %v2681
    %v2683 = vpop.f32.mrf.mxu0
    %v2684 = vadd.f32 %v1733, %v2683
    %v2685 = vpop.f32.mrf.mxu0
    %v2686 = vadd.f32 %v1735, %v2685
    %v2687 = vpop.f32.mrf.mxu0
    %v2688 = vadd.f32 %v1737, %v2687
    %2689 = vdwg.mxu0
    %2690 = vmatprep.subr.bf16.mxu0 %v2221
    %2691 = vmatpush1.bf16.msra.mxu0 %v2220
    %2692 = vmatprep.subr.bf16.mxu0 %v2209
    %2693 = vmatpush1.bf16.msra.mxu0 %v2208
    %2694 = vmatprep.subr.bf16.mxu0 %v2197
    %2695 = vmatpush1.bf16.msra.mxu0 %v2196
    %2696 = vmatprep.subr.bf16.mxu0 %v2185
    %2697 = vmatpush1.bf16.msra.mxu0 %v2184
    %2698 = vmatprep.subr.bf16.mxu0 %v2173
    %2699 = vmatpush1.bf16.msra.mxu0 %v2172
    %2700 = vmatprep.subr.bf16.mxu0 %v2161
    %2701 = vmatpush1.bf16.msra.mxu0 %v2160
    %2702 = vmatprep.subr.bf16.mxu0 %v2149
    %2703 = vmatpush1.bf16.msra.mxu0 %v2148
    %2704 = vmatprep.subr.bf16.mxu0 %v2137
    %2705 = vmatpush1.bf16.msra.mxu0 %v2136
    %2706 = vmatprep.subr.bf16.mxu0 0
    %2707 = vmatpush2.bf16.msra.mxu0 0
    %2708 = vmatprep.subr.bf16.mxu0 0
    %2709 = vmatpush2.bf16.msra.mxu0 0
    %2710 = vmatprep.subr.bf16.mxu0 0
    %2711 = vmatpush2.bf16.msra.mxu0 0
    %2712 = vmatprep.subr.bf16.mxu0 0
    %2713 = vmatpush2.bf16.msra.mxu0 0
    %2714 = vmatprep.subr.bf16.mxu0 0
    %2715 = vmatpush2.bf16.msra.mxu0 0
    %2716 = vmatprep.subr.bf16.mxu0 0
    %2717 = vmatpush2.bf16.msra.mxu0 0
    %2718 = vmatprep.subr.bf16.mxu0 0
    %2719 = vmatpush2.bf16.msra.mxu0 0
    %2720 = vmatprep.subr.bf16.mxu0 %v2373
    %2721 = vmatpush2.bf16.msra.mxu0 %v2370
    %2722 = vmatprep.mubr.bf16.mxu0 %v2331
    %2723 = vmatmul.mubr.bf16.gmra.mxu0 %v609
    %v2724 = vpop.f32.mrf.mxu0
    %v2725 = vadd.f32 %v1774, %v2724
    %v2726 = vpop.f32.mrf.mxu0
    %v2727 = vadd.f32 %v1776, %v2726
    %v2728 = vpop.f32.mrf.mxu0
    %v2729 = vadd.f32 %v1778, %v2728
    %v2730 = vpop.f32.mrf.mxu0
    %v2731 = vadd.f32 %v1780, %v2730
    %2732 = vmatprep.mubr.bf16.mxu0 %v2334
    %2733 = vmatmul.mubr.bf16.gmra.mxu0 %v611
    %v2734 = vpop.f32.mrf.mxu0
    %v2735 = vadd.f32 %v1784, %v2734
    %v2736 = vpop.f32.mrf.mxu0
    %v2737 = vadd.f32 %v1786, %v2736
    %v2738 = vpop.f32.mrf.mxu0
    %v2739 = vadd.f32 %v1788, %v2738
    %v2740 = vpop.f32.mrf.mxu0
    %v2741 = vadd.f32 %v1790, %v2740
    %2742 = vmatprep.mubr.bf16.mxu0 %v2337
    %2743 = vmatmul.mubr.bf16.gmra.mxu0 %v613
    %v2744 = vpop.f32.mrf.mxu0
    %v2745 = vadd.f32 %v1794, %v2744
    %v2746 = vpop.f32.mrf.mxu0
    %v2747 = vadd.f32 %v1796, %v2746
    %v2748 = vpop.f32.mrf.mxu0
    %v2749 = vadd.f32 %v1798, %v2748
    %v2750 = vpop.f32.mrf.mxu0
    %v2751 = vadd.f32 %v1800, %v2750
    %2752 = vdwg.mxu0
    %v2753 = vld [vmem:[%s4] sm:$0xff]
    %v2754 = vld [vmem:[%s4 + $0x8] sm:$0xf]
    %v2757 = vlaneseq
    %v2758 = vshrl.u32 %v2757, 7
    %v2759 = vsub.s32 0, %v2758
    %v2760 = vrot.slane %v2753, %v2759
    %v2761 = vlaneseq
    %v2762 = vshrl.u32 %v2761, 7
    %v2763 = vsub.s32 1, %v2762
    %v2764 = vrot.slane %v2753, %v2763
    %v2765 = vlaneseq
    %v2766 = vshrl.u32 %v2765, 7
    %v2767 = vsub.s32 2, %v2766
    %v2768 = vrot.slane %v2753, %v2767
    %v2769 = vlaneseq
    %v2770 = vshrl.u32 %v2769, 7
    %v2771 = vsub.s32 3, %v2770
    %v2772 = vrot.slane %v2753, %v2771
    %v2773 = vlaneseq
    %v2774 = vshrl.u32 %v2773, 7
    %v2775 = vsub.s32 4, %v2774
    %v2776 = vrot.slane %v2753, %v2775
    %v2777 = vlaneseq
    %v2778 = vshrl.u32 %v2777, 7
    %v2779 = vsub.s32 5, %v2778
    %v2780 = vrot.slane %v2753, %v2779
    %v2781 = vlaneseq
    %v2782 = vshrl.u32 %v2781, 7
    %v2783 = vsub.s32 6, %v2782
    %v2784 = vrot.slane %v2753, %v2783
    %v2785 = vlaneseq
    %v2786 = vshrl.u32 %v2785, 7
    %v2787 = vsub.s32 7, %v2786
    %v2788 = vrot.slane %v2753, %v2787
    %v2789 = vlaneseq
    %v2790 = vshrl.u32 %v2789, 7
    %v2791 = vsub.s32 0, %v2790
    %v2792 = vrot.slane %v2754, %v2791
    %v2793 = vlaneseq
    %v2794 = vshrl.u32 %v2793, 7
    %v2795 = vsub.s32 1, %v2794
    %v2796 = vrot.slane %v2754, %v2795
    %v2797 = vlaneseq
    %v2798 = vshrl.u32 %v2797, 7
    %v2799 = vsub.s32 2, %v2798
    %v2800 = vrot.slane %v2754, %v2799
    %v2801 = vlaneseq
    %v2802 = vshrl.u32 %v2801, 7
    %v2803 = vsub.s32 3, %v2802
    %v2804 = vrot.slane %v2754, %v2803
    %v2817 = vadd.f32 %v2410, %v2760
    %v2818 = vadd.f32 %v2412, %v2764
    %v2819 = vadd.f32 %v2473, %v2768
    %v2820 = vadd.f32 %v2475, %v2772
    %v2821 = vadd.f32 %v2536, %v2776
    %v2822 = vadd.f32 %v2538, %v2780
    %v2823 = vadd.f32 %v2599, %v2784
    %v2824 = vadd.f32 %v2601, %v2788
    %v2825 = vadd.f32 %v2662, %v2792
    %v2826 = vadd.f32 %v2664, %v2796
    %v2827 = vadd.f32 %v2725, %v2800
    %v2828 = vadd.f32 %v2727, %v2804
    %v2829 = vadd.f32 %v2414, %v2760
    %v2830 = vadd.f32 %v2416, %v2764
    %v2831 = vadd.f32 %v2477, %v2768
    %v2832 = vadd.f32 %v2479, %v2772
    %v2833 = vadd.f32 %v2540, %v2776
    %v2834 = vadd.f32 %v2542, %v2780
    %v2835 = vadd.f32 %v2603, %v2784
    %v2836 = vadd.f32 %v2605, %v2788
    %v2837 = vadd.f32 %v2666, %v2792
    %v2838 = vadd.f32 %v2668, %v2796
    %v2839 = vadd.f32 %v2729, %v2800
    %v2840 = vadd.f32 %v2731, %v2804
    %v2841 = vadd.f32 %v2420, %v2760
    %v2842 = vadd.f32 %v2422, %v2764
    %v2843 = vadd.f32 %v2483, %v2768
    %v2844 = vadd.f32 %v2485, %v2772
    %v2845 = vadd.f32 %v2546, %v2776
    %v2846 = vadd.f32 %v2548, %v2780
    %v2847 = vadd.f32 %v2609, %v2784
    %v2848 = vadd.f32 %v2611, %v2788
    %v2849 = vadd.f32 %v2672, %v2792
    %v2850 = vadd.f32 %v2674, %v2796
    %v2851 = vadd.f32 %v2735, %v2800
    %v2852 = vadd.f32 %v2737, %v2804
    %v2853 = vadd.f32 %v2424, %v2760
    %v2854 = vadd.f32 %v2426, %v2764
    %v2855 = vadd.f32 %v2487, %v2768
    %v2856 = vadd.f32 %v2489, %v2772
    %v2857 = vadd.f32 %v2550, %v2776
    %v2858 = vadd.f32 %v2552, %v2780
    %v2859 = vadd.f32 %v2613, %v2784
    %v2860 = vadd.f32 %v2615, %v2788
    %v2861 = vadd.f32 %v2676, %v2792
    %v2862 = vadd.f32 %v2678, %v2796
    %v2863 = vadd.f32 %v2739, %v2800
    %v2864 = vadd.f32 %v2741, %v2804
    %v2865 = vadd.f32 %v2430, %v2760
    %v2866 = vadd.f32 %v2432, %v2764
    %v2867 = vadd.f32 %v2493, %v2768
    %v2868 = vadd.f32 %v2495, %v2772
    %v2869 = vadd.f32 %v2556, %v2776
    %v2870 = vadd.f32 %v2558, %v2780
    %v2871 = vadd.f32 %v2619, %v2784
    %v2872 = vadd.f32 %v2621, %v2788
    %v2873 = vadd.f32 %v2682, %v2792
    %v2874 = vadd.f32 %v2684, %v2796
    %v2875 = vadd.f32 %v2745, %v2800
    %v2876 = vadd.f32 %v2747, %v2804
    %v2877 = vadd.f32 %v2434, %v2760
    %v2878 = vadd.f32 %v2436, %v2764
    %v2879 = vadd.f32 %v2497, %v2768
    %v2880 = vadd.f32 %v2499, %v2772
    %v2881 = vadd.f32 %v2560, %v2776
    %v2882 = vadd.f32 %v2562, %v2780
    %v2883 = vadd.f32 %v2623, %v2784
    %v2884 = vadd.f32 %v2625, %v2788
    %v2885 = vadd.f32 %v2686, %v2792
    %v2886 = vadd.f32 %v2688, %v2796
    %v2887 = vadd.f32 %v2749, %v2800
    %v2888 = vadd.f32 %v2751, %v2804
    %v2889 = vmax.f32 %v2817, 0.0
    %v2890 = vmax.f32 %v2818, 0.0
    %v2891 = vmax.f32 %v2819, 0.0
    %v2892 = vmax.f32 %v2820, 0.0
    %v2893 = vmax.f32 %v2821, 0.0
    %v2894 = vmax.f32 %v2822, 0.0
    %v2895 = vmax.f32 %v2823, 0.0
    %v2896 = vmax.f32 %v2824, 0.0
    %v2897 = vmax.f32 %v2825, 0.0
    %v2898 = vmax.f32 %v2826, 0.0
    %v2899 = vmax.f32 %v2827, 0.0
    %v2900 = vmax.f32 %v2828, 0.0
    %v2901 = vmax.f32 %v2829, 0.0
    %v2902 = vmax.f32 %v2830, 0.0
    %v2903 = vmax.f32 %v2831, 0.0
    %v2904 = vmax.f32 %v2832, 0.0
    %v2905 = vmax.f32 %v2833, 0.0
    %v2906 = vmax.f32 %v2834, 0.0
    %v2907 = vmax.f32 %v2835, 0.0
    %v2908 = vmax.f32 %v2836, 0.0
    %v2909 = vmax.f32 %v2837, 0.0
    %v2910 = vmax.f32 %v2838, 0.0
    %v2911 = vmax.f32 %v2839, 0.0
    %v2912 = vmax.f32 %v2840, 0.0
    %v2913 = vmax.f32 %v2841, 0.0
    %v2914 = vmax.f32 %v2842, 0.0
    %v2915 = vmax.f32 %v2843, 0.0
    %v2916 = vmax.f32 %v2844, 0.0
    %v2917 = vmax.f32 %v2845, 0.0
    %v2918 = vmax.f32 %v2846, 0.0
    %v2919 = vmax.f32 %v2847, 0.0
    %v2920 = vmax.f32 %v2848, 0.0
    %v2921 = vmax.f32 %v2849, 0.0
    %v2922 = vmax.f32 %v2850, 0.0
    %v2923 = vmax.f32 %v2851, 0.0
    %v2924 = vmax.f32 %v2852, 0.0
    %v2925 = vmax.f32 %v2853, 0.0
    %v2926 = vmax.f32 %v2854, 0.0
    %v2927 = vmax.f32 %v2855, 0.0
    %v2928 = vmax.f32 %v2856, 0.0
    %v2929 = vmax.f32 %v2857, 0.0
    %v2930 = vmax.f32 %v2858, 0.0
    %v2931 = vmax.f32 %v2859, 0.0
    %v2932 = vmax.f32 %v2860, 0.0
    %v2933 = vmax.f32 %v2861, 0.0
    %v2934 = vmax.f32 %v2862, 0.0
    %v2935 = vmax.f32 %v2863, 0.0
    %v2936 = vmax.f32 %v2864, 0.0
    %v2937 = vmax.f32 %v2865, 0.0
    %v2938 = vmax.f32 %v2866, 0.0
    %v2939 = vmax.f32 %v2867, 0.0
    %v2940 = vmax.f32 %v2868, 0.0
    %v2941 = vmax.f32 %v2869, 0.0
    %v2942 = vmax.f32 %v2870, 0.0
    %v2943 = vmax.f32 %v2871, 0.0
    %v2944 = vmax.f32 %v2872, 0.0
    %v2945 = vmax.f32 %v2873, 0.0
    %v2946 = vmax.f32 %v2874, 0.0
    %v2947 = vmax.f32 %v2875, 0.0
    %v2948 = vmax.f32 %v2876, 0.0
    %v2949 = vmax.f32 %v2877, 0.0
    %v2950 = vmax.f32 %v2878, 0.0
    %v2951 = vmax.f32 %v2879, 0.0
    %v2952 = vmax.f32 %v2880, 0.0
    %v2953 = vmax.f32 %v2881, 0.0
    %v2954 = vmax.f32 %v2882, 0.0
    %v2955 = vmax.f32 %v2883, 0.0
    %v2956 = vmax.f32 %v2884, 0.0
    %v2957 = vmax.f32 %v2885, 0.0
    %v2958 = vmax.f32 %v2886, 0.0
    %v2959 = vmax.f32 %v2887, 0.0
    %v2960 = vmax.f32 %v2888, 0.0
    %v2961 = vmul.f32 %v2889, %v2889
    %v2962 = vmul.f32 %v2890, %v2890
    %v2963 = vmul.f32 %v2891, %v2891
    %v2964 = vmul.f32 %v2901, %v2901
    %v2965 = vmul.f32 %v2902, %v2902
    %v2966 = vmul.f32 %v2903, %v2903
    %v2967 = vmul.f32 %v2925, %v2925
    %v2968 = vmul.f32 %v2926, %v2926
    %v2969 = vmul.f32 %v2927, %v2927
    %v2970 = vmul.f32 %v2937, %v2937
    %v2971 = vmul.f32 %v2938, %v2938
    %v2972 = vmul.f32 %v2939, %v2939
    %v2973 = vmul.f32 %v2894, %v2894
    %v2974 = vmul.f32 %v2895, %v2895
    %v2975 = vmul.f32 %v2896, %v2896
    %v2976 = vmul.f32 %v2897, %v2897
    %v2977 = vmul.f32 %v2906, %v2906
    %v2978 = vmul.f32 %v2907, %v2907
    %v2979 = vmul.f32 %v2908, %v2908
    %v2980 = vmul.f32 %v2909, %v2909
    %v2981 = vmul.f32 %v2930, %v2930
    %v2982 = vmul.f32 %v2931, %v2931
    %v2983 = vmul.f32 %v2932, %v2932
    %v2984 = vmul.f32 %v2933, %v2933
    %v2985 = vmul.f32 %v2942, %v2942
    %v2986 = vmul.f32 %v2943, %v2943
    %v2987 = vmul.f32 %v2944, %v2944
    %v2988 = vmul.f32 %v2945, %v2945
    %3005 = vrot.lane.b32.xlu0 %v2973, 48
    %v3006 = vpop.permute.xlu0 %3005
    %3007 = vrot.lane.b32.xlu0 %v2974, 48
    %v3008 = vpop.permute.xlu0 %3007
    %3009 = vrot.lane.b32.xlu0 %v2975, 48
    %v3010 = vpop.permute.xlu0 %3009
    %3011 = vrot.lane.b32.xlu0 %v2976, 48
    %v3012 = vpop.permute.xlu0 %3011
    %3013 = vrot.lane.b32.xlu0 %v2977, 48
    %v3014 = vpop.permute.xlu0 %3013
    %3015 = vrot.lane.b32.xlu0 %v2978, 48
    %v3016 = vpop.permute.xlu0 %3015
    %3017 = vrot.lane.b32.xlu0 %v2979, 48
    %v3018 = vpop.permute.xlu0 %3017
    %3019 = vrot.lane.b32.xlu0 %v2980, 48
    %v3020 = vpop.permute.xlu0 %3019
    %3021 = vrot.lane.b32.xlu0 %v2981, 48
    %v3022 = vpop.permute.xlu0 %3021
    %3023 = vrot.lane.b32.xlu0 %v2982, 48
    %v3024 = vpop.permute.xlu0 %3023
    %3025 = vrot.lane.b32.xlu0 %v2983, 48
    %v3026 = vpop.permute.xlu0 %3025
    %3027 = vrot.lane.b32.xlu0 %v2984, 48
    %v3028 = vpop.permute.xlu0 %3027
    %3029 = vrot.lane.b32.xlu0 %v2985, 48
    %v3030 = vpop.permute.xlu0 %3029
    %3031 = vrot.lane.b32.xlu0 %v2986, 48
    %v3032 = vpop.permute.xlu0 %3031
    %3033 = vrot.lane.b32.xlu0 %v2987, 48
    %v3034 = vpop.permute.xlu0 %3033
    %3035 = vrot.lane.b32.xlu0 %v2988, 48
    %v3036 = vpop.permute.xlu0 %3035
    %vm3037 = vcmask 392192
    %v3038 = vsel %vm3037, %v3006, %v3008
    %v3039 = vsel %vm3037, %v3008, %v3010
    %v3040 = vsel %vm3037, %v3010, %v3012
    %v3041 = vsel %vm3037, %v3014, %v3016
    %v3042 = vsel %vm3037, %v3016, %v3018
    %v3043 = vsel %vm3037, %v3018, %v3020
    %v3044 = vsel %vm3037, %v3022, %v3024
    %v3045 = vsel %vm3037, %v3024, %v3026
    %v3046 = vsel %vm3037, %v3026, %v3028
    %v3047 = vsel %vm3037, %v3030, %v3032
    %v3048 = vsel %vm3037, %v3032, %v3034
    %v3049 = vsel %vm3037, %v3034, %v3036
    %v3062 = vadd.f32 %v2961, %v3038
    %v3063 = vadd.f32 %v2962, %v3039
    %v3064 = vadd.f32 %v2963, %v3040
    %v3065 = vadd.f32 %v2964, %v3041
    %v3066 = vadd.f32 %v2965, %v3042
    %v3067 = vadd.f32 %v2966, %v3043
    %v3068 = vadd.f32 %v2967, %v3044
    %v3069 = vadd.f32 %v2968, %v3045
    %v3070 = vadd.f32 %v2969, %v3046
    %v3071 = vadd.f32 %v2970, %v3047
    %v3072 = vadd.f32 %v2971, %v3048
    %v3073 = vadd.f32 %v2972, %v3049
    %v3074 = vmul.f32 %v2892, %v2892
    %v3075 = vmul.f32 %v2893, %v2893
    %v3076 = vmul.f32 %v2904, %v2904
    %v3077 = vmul.f32 %v2905, %v2905
    %v3078 = vmul.f32 %v2928, %v2928
    %v3079 = vmul.f32 %v2929, %v2929
    %v3080 = vmul.f32 %v2940, %v2940
    %v3081 = vmul.f32 %v2941, %v2941
    %v3082 = vmul.f32 %v2898, %v2898
    %v3083 = vmul.f32 %v2899, %v2899
    %v3084 = vmul.f32 %v2900, %v2900
    %v3085 = vmul.f32 %v2910, %v2910
    %v3086 = vmul.f32 %v2911, %v2911
    %v3087 = vmul.f32 %v2912, %v2912
    %v3088 = vmul.f32 %v2934, %v2934
    %v3089 = vmul.f32 %v2935, %v2935
    %v3090 = vmul.f32 %v2936, %v2936
    %v3091 = vmul.f32 %v2946, %v2946
    %v3092 = vmul.f32 %v2947, %v2947
    %v3093 = vmul.f32 %v2948, %v2948
    %3106 = vrot.lane.b32.xlu0 %v3082, 48
    %v3107 = vpop.permute.xlu0 %3106
    %3108 = vrot.lane.b32.xlu0 %v3083, 48
    %v3109 = vpop.permute.xlu0 %3108
    %3110 = vrot.lane.b32.xlu0 %v3084, 48
    %v3111 = vpop.permute.xlu0 %3110
    %3112 = vrot.lane.b32.xlu0 %v3085, 48
    %v3113 = vpop.permute.xlu0 %3112
    %3114 = vrot.lane.b32.xlu0 %v3086, 48
    %v3115 = vpop.permute.xlu0 %3114
    %3116 = vrot.lane.b32.xlu0 %v3087, 48
    %v3117 = vpop.permute.xlu0 %3116
    %3118 = vrot.lane.b32.xlu0 %v3088, 48
    %v3119 = vpop.permute.xlu0 %3118
    %3120 = vrot.lane.b32.xlu0 %v3089, 48
    %v3121 = vpop.permute.xlu0 %3120
    %3122 = vrot.lane.b32.xlu0 %v3090, 48
    %v3123 = vpop.permute.xlu0 %3122
    %3124 = vrot.lane.b32.xlu0 %v3091, 48
    %v3125 = vpop.permute.xlu0 %3124
    %3126 = vrot.lane.b32.xlu0 %v3092, 48
    %v3127 = vpop.permute.xlu0 %3126
    %3128 = vrot.lane.b32.xlu0 %v3093, 48
    %v3129 = vpop.permute.xlu0 %3128
    %v3130 = vsel %vm3037, %v3012, %v3107
    %v3131 = vsel %vm3037, %v3107, %v3109
    %v3132 = vsel %vm3037, %v3109, %v3111
    %v3133 = vsel %vm3037, %v3020, %v3113
    %v3134 = vsel %vm3037, %v3113, %v3115
    %v3135 = vsel %vm3037, %v3115, %v3117
    %v3136 = vsel %vm3037, %v3028, %v3119
    %v3137 = vsel %vm3037, %v3119, %v3121
    %v3138 = vsel %vm3037, %v3121, %v3123
    %v3139 = vsel %vm3037, %v3036, %v3125
    %v3140 = vsel %vm3037, %v3125, %v3127
    %v3141 = vsel %vm3037, %v3127, %v3129
    %v3158 = vadd.f32 %v2963, %v3012
    %v3159 = vadd.f32 %v3074, %v3130
    %v3160 = vadd.f32 %v3075, %v3131
    %v3161 = vadd.f32 %v2973, %v3132
    %v3162 = vadd.f32 %v2966, %v3020
    %v3163 = vadd.f32 %v3076, %v3133
    %v3164 = vadd.f32 %v3077, %v3134
    %v3165 = vadd.f32 %v2977, %v3135
    %v3166 = vadd.f32 %v2969, %v3028
    %v3167 = vadd.f32 %v3078, %v3136
    %v3168 = vadd.f32 %v3079, %v3137
    %v3169 = vadd.f32 %v2981, %v3138
    %v3170 = vadd.f32 %v2972, %v3036
    %v3171 = vadd.f32 %v3080, %v3139
    %v3172 = vadd.f32 %v3081, %v3140
    %v3173 = vadd.f32 %v2985, %v3141
    %3186 = vrot.lane.b32.xlu0 %v3062, 104
    %v3187 = vpop.permute.xlu0 %3186
    %3188 = vrot.lane.b32.xlu0 %v3063, 104
    %v3189 = vpop.permute.xlu0 %3188
    %3190 = vrot.lane.b32.xlu0 %v3064, 104
    %v3191 = vpop.permute.xlu0 %3190
    %3192 = vrot.lane.b32.xlu0 %v3065, 104
    %v3193 = vpop.permute.xlu0 %3192
    %3194 = vrot.lane.b32.xlu0 %v3066, 104
    %v3195 = vpop.permute.xlu0 %3194
    %3196 = vrot.lane.b32.xlu0 %v3067, 104
    %v3197 = vpop.permute.xlu0 %3196
    %3198 = vrot.lane.b32.xlu0 %v3068, 104
    %v3199 = vpop.permute.xlu0 %3198
    %3200 = vrot.lane.b32.xlu0 %v3069, 104
    %v3201 = vpop.permute.xlu0 %3200
    %3202 = vrot.lane.b32.xlu0 %v3070, 104
    %v3203 = vpop.permute.xlu0 %3202
    %3204 = vrot.lane.b32.xlu0 %v3071, 104
    %v3205 = vpop.permute.xlu0 %3204
    %3206 = vrot.lane.b32.xlu0 %v3072, 104
    %v3207 = vpop.permute.xlu0 %3206
    %3208 = vrot.lane.b32.xlu0 %v3073, 104
    %v3209 = vpop.permute.xlu0 %3208
    %vm3210 = vcmask 850944
    %v3211 = vsel %vm3210, %v3187, %v3189
    %v3212 = vsel %vm3210, %v3189, %v3191
    %v3213 = vsel %vm3210, %v3193, %v3195
    %v3214 = vsel %vm3210, %v3195, %v3197
    %v3215 = vsel %vm3210, %v3199, %v3201
    %v3216 = vsel %vm3210, %v3201, %v3203
    %v3217 = vsel %vm3210, %v3205, %v3207
    %v3218 = vsel %vm3210, %v3207, %v3209
    %vm3235 = vcmp.gt.f32.partialorder %v3158, %v3187
    %vm3236 = vcmp.gt.f32.partialorder %v3159, %v3211
    %vm3237 = vcmp.gt.f32.partialorder %v3160, %v3212
    %vm3238 = vcmp.gt.f32.partialorder %v3161, %v3191
    %vm3239 = vcmp.gt.f32.partialorder %v3162, %v3193
    %vm3240 = vcmp.gt.f32.partialorder %v3163, %v3213
    %vm3241 = vcmp.gt.f32.partialorder %v3164, %v3214
    %vm3242 = vcmp.gt.f32.partialorder %v3165, %v3197
    %vm3243 = vcmp.gt.f32.partialorder %v3166, %v3199
    %vm3244 = vcmp.gt.f32.partialorder %v3167, %v3215
    %vm3245 = vcmp.gt.f32.partialorder %v3168, %v3216
    %vm3246 = vcmp.gt.f32.partialorder %v3169, %v3203
    %vm3247 = vcmp.gt.f32.partialorder %v3170, %v3205
    %vm3248 = vcmp.gt.f32.partialorder %v3171, %v3217
    %vm3249 = vcmp.gt.f32.partialorder %v3172, %v3218
    %vm3250 = vcmp.gt.f32.partialorder %v3173, %v3209
    %3263 = vrot.lane.b32.xlu0 %v2889, 104
    %v3264 = vpop.permute.xlu0 %3263
    %3265 = vrot.lane.b32.xlu0 %v2890, 104
    %v3266 = vpop.permute.xlu0 %3265
    %3267 = vrot.lane.b32.xlu0 %v2891, 104
    %v3268 = vpop.permute.xlu0 %3267
    %3269 = vrot.lane.b32.xlu0 %v2901, 104
    %v3270 = vpop.permute.xlu0 %3269
    %3271 = vrot.lane.b32.xlu0 %v2902, 104
    %v3272 = vpop.permute.xlu0 %3271
    %3273 = vrot.lane.b32.xlu0 %v2903, 104
    %v3274 = vpop.permute.xlu0 %3273
    %3275 = vrot.lane.b32.xlu0 %v2925, 104
    %v3276 = vpop.permute.xlu0 %3275
    %3277 = vrot.lane.b32.xlu0 %v2926, 104
    %v3278 = vpop.permute.xlu0 %3277
    %3279 = vrot.lane.b32.xlu0 %v2927, 104
    %v3280 = vpop.permute.xlu0 %3279
    %3281 = vrot.lane.b32.xlu0 %v2937, 104
    %v3282 = vpop.permute.xlu0 %3281
    %3283 = vrot.lane.b32.xlu0 %v2938, 104
    %v3284 = vpop.permute.xlu0 %3283
    %3285 = vrot.lane.b32.xlu0 %v2939, 104
    %v3286 = vpop.permute.xlu0 %3285
    %v3287 = vsel %vm3210, %v3264, %v3266
    %v3288 = vsel %vm3210, %v3266, %v3268
    %v3289 = vsel %vm3210, %v3270, %v3272
    %v3290 = vsel %vm3210, %v3272, %v3274
    %v3291 = vsel %vm3210, %v3276, %v3278
    %v3292 = vsel %vm3210, %v3278, %v3280
    %v3293 = vsel %vm3210, %v3282, %v3284
    %v3294 = vsel %vm3210, %v3284, %v3286
    %v3311 = vsel %vm3235, %v2891, %v3264
    %v3312 = vsel %vm3236, %v2892, %v3287
    %v3313 = vsel %vm3237, %v2893, %v3288
    %v3314 = vsel %vm3238, %v2894, %v3268
    %v3315 = vsel %vm3239, %v2903, %v3270
    %v3316 = vsel %vm3240, %v2904, %v3289
    %v3317 = vsel %vm3241, %v2905, %v3290
    %v3318 = vsel %vm3242, %v2906, %v3274
    %v3319 = vsel %vm3243, %v2927, %v3276
    %v3320 = vsel %vm3244, %v2928, %v3291
    %v3321 = vsel %vm3245, %v2929, %v3292
    %v3322 = vsel %vm3246, %v2930, %v3280
    %v3323 = vsel %vm3247, %v2939, %v3282
    %v3324 = vsel %vm3248, %v2940, %v3293
    %v3325 = vsel %vm3249, %v2941, %v3294
    %v3326 = vsel %vm3250, %v2942, %v3286
    %3343 = vrot.lane.b32.xlu0 %v2897, 48
    %v3344 = vpop.permute.xlu0 %3343
    %3345 = vrot.lane.b32.xlu0 %v2898, 48
    %v3346 = vpop.permute.xlu0 %3345
    %3347 = vrot.lane.b32.xlu0 %v2899, 48
    %v3348 = vpop.permute.xlu0 %3347
    %3349 = vrot.lane.b32.xlu0 %v2900, 48
    %v3350 = vpop.permute.xlu0 %3349
    %3351 = vrot.lane.b32.xlu0 %v2909, 48
    %v3352 = vpop.permute.xlu0 %3351
    %3353 = vrot.lane.b32.xlu0 %v2910, 48
    %v3354 = vpop.permute.xlu0 %3353
    %3355 = vrot.lane.b32.xlu0 %v2911, 48
    %v3356 = vpop.permute.xlu0 %3355
    %3357 = vrot.lane.b32.xlu0 %v2912, 48
    %v3358 = vpop.permute.xlu0 %3357
    %3359 = vrot.lane.b32.xlu0 %v2933, 48
    %v3360 = vpop.permute.xlu0 %3359
    %3361 = vrot.lane.b32.xlu0 %v2934, 48
    %v3362 = vpop.permute.xlu0 %3361
    %3363 = vrot.lane.b32.xlu0 %v2935, 48
    %v3364 = vpop.permute.xlu0 %3363
    %3365 = vrot.lane.b32.xlu0 %v2936, 48
    %v3366 = vpop.permute.xlu0 %3365
    %3367 = vrot.lane.b32.xlu0 %v2945, 48
    %v3368 = vpop.permute.xlu0 %3367
    %3369 = vrot.lane.b32.xlu0 %v2946, 48
    %v3370 = vpop.permute.xlu0 %3369
    %3371 = vrot.lane.b32.xlu0 %v2947, 48
    %v3372 = vpop.permute.xlu0 %3371
    %3373 = vrot.lane.b32.xlu0 %v2948, 48
    %v3374 = vpop.permute.xlu0 %3373
    %v3375 = vsel %vm3037, %v3344, %v3346
    %v3376 = vsel %vm3037, %v3346, %v3348
    %v3377 = vsel %vm3037, %v3348, %v3350
    %v3378 = vsel %vm3037, %v3352, %v3354
    %v3379 = vsel %vm3037, %v3354, %v3356
    %v3380 = vsel %vm3037, %v3356, %v3358
    %v3381 = vsel %vm3037, %v3360, %v3362
    %v3382 = vsel %vm3037, %v3362, %v3364
    %v3383 = vsel %vm3037, %v3364, %v3366
    %v3384 = vsel %vm3037, %v3368, %v3370
    %v3385 = vsel %vm3037, %v3370, %v3372
    %v3386 = vsel %vm3037, %v3372, %v3374
    %3415 = vrot.lane.b32.xlu0 %v2894, 24
    %v3416 = vpop.permute.xlu0 %3415
    %3417 = vrot.lane.b32.xlu0 %v2895, 24
    %v3418 = vpop.permute.xlu0 %3417
    %3419 = vrot.lane.b32.xlu0 %v2896, 24
    %v3420 = vpop.permute.xlu0 %3419
    %3421 = vrot.lane.b32.xlu0 %v2897, 24
    %v3422 = vpop.permute.xlu0 %3421
    %3423 = vrot.lane.b32.xlu0 %v2906, 24
    %v3424 = vpop.permute.xlu0 %3423
    %3425 = vrot.lane.b32.xlu0 %v2907, 24
    %v3426 = vpop.permute.xlu0 %3425
    %3427 = vrot.lane.b32.xlu0 %v2908, 24
    %v3428 = vpop.permute.xlu0 %3427
    %3429 = vrot.lane.b32.xlu0 %v2909, 24
    %v3430 = vpop.permute.xlu0 %3429
    %3431 = vrot.lane.b32.xlu0 %v2930, 24
    %v3432 = vpop.permute.xlu0 %3431
    %3433 = vrot.lane.b32.xlu0 %v2931, 24
    %v3434 = vpop.permute.xlu0 %3433
    %3435 = vrot.lane.b32.xlu0 %v2932, 24
    %v3436 = vpop.permute.xlu0 %3435
    %3437 = vrot.lane.b32.xlu0 %v2933, 24
    %v3438 = vpop.permute.xlu0 %3437
    %3439 = vrot.lane.b32.xlu0 %v2942, 24
    %v3440 = vpop.permute.xlu0 %3439
    %3441 = vrot.lane.b32.xlu0 %v2943, 24
    %v3442 = vpop.permute.xlu0 %3441
    %3443 = vrot.lane.b32.xlu0 %v2944, 24
    %v3444 = vpop.permute.xlu0 %3443
    %3445 = vrot.lane.b32.xlu0 %v2945, 24
    %v3446 = vpop.permute.xlu0 %3445
    %vm3447 = vcmask 195584
    %v3448 = vsel %vm3447, %v3416, %v3418
    %v3449 = vsel %vm3447, %v3418, %v3420
    %v3450 = vsel %vm3447, %v3420, %v3422
    %v3451 = vsel %vm3447, %v3424, %v3426
    %v3452 = vsel %vm3447, %v3426, %v3428
    %v3453 = vsel %vm3447, %v3428, %v3430
    %v3454 = vsel %vm3447, %v3432, %v3434
    %v3455 = vsel %vm3447, %v3434, %v3436
    %v3456 = vsel %vm3447, %v3436, %v3438
    %v3457 = vsel %vm3447, %v3440, %v3442
    %v3458 = vsel %vm3447, %v3442, %v3444
    %v3459 = vsel %vm3447, %v3444, %v3446
    %v3476 = vsel %vm3235, %v3344, %v3416
    %v3477 = vsel %vm3236, %v3375, %v3448
    %v3478 = vsel %vm3237, %v3376, %v3449
    %v3479 = vsel %vm3238, %v3377, %v3450
    %v3480 = vsel %vm3239, %v3352, %v3424
    %v3481 = vsel %vm3240, %v3378, %v3451
    %v3482 = vsel %vm3241, %v3379, %v3452
    %v3483 = vsel %vm3242, %v3380, %v3453
    %v3484 = vsel %vm3243, %v3360, %v3432
    %v3485 = vsel %vm3244, %v3381, %v3454
    %v3486 = vsel %vm3245, %v3382, %v3455
    %v3487 = vsel %vm3246, %v3383, %v3456
    %v3488 = vsel %vm3247, %v3368, %v3440
    %v3489 = vsel %vm3248, %v3384, %v3457
    %v3490 = vsel %vm3249, %v3385, %v3458
    %v3491 = vsel %vm3250, %v3386, %v3459
    %v3492 = vsel %vm3235, %v3158, %v3187
    %v3493 = vsel %vm3236, %v3159, %v3211
    %v3494 = vsel %vm3237, %v3160, %v3212
    %v3495 = vsel %vm3238, %v3161, %v3191
    %v3496 = vsel %vm3239, %v3162, %v3193
    %v3497 = vsel %vm3240, %v3163, %v3213
    %v3498 = vsel %vm3241, %v3164, %v3214
    %v3499 = vsel %vm3242, %v3165, %v3197
    %v3500 = vsel %vm3243, %v3166, %v3199
    %v3501 = vsel %vm3244, %v3167, %v3215
    %v3502 = vsel %vm3245, %v3168, %v3216
    %v3503 = vsel %vm3246, %v3169, %v3203
    %v3504 = vsel %vm3247, %v3170, %v3205
    %v3505 = vsel %vm3248, %v3171, %v3217
    %v3506 = vsel %vm3249, %v3172, %v3218
    %v3507 = vsel %vm3250, %v3173, %v3209
    %v3508 = vmul.f32 %v2913, %v2913
    %v3509 = vmul.f32 %v2914, %v2914
    %v3510 = vmul.f32 %v2915, %v2915
    %v3511 = vmul.f32 %v2949, %v2949
    %v3512 = vmul.f32 %v2950, %v2950
    %v3513 = vmul.f32 %v2951, %v2951
    %v3514 = vmul.f32 %v2918, %v2918
    %v3515 = vmul.f32 %v2919, %v2919
    %v3516 = vmul.f32 %v2920, %v2920
    %v3517 = vmul.f32 %v2921, %v2921
    %v3518 = vmul.f32 %v2954, %v2954
    %v3519 = vmul.f32 %v2955, %v2955
    %v3520 = vmul.f32 %v2956, %v2956
    %v3521 = vmul.f32 %v2957, %v2957
    %3530 = vrot.lane.b32.xlu0 %v3514, 48
    %v3531 = vpop.permute.xlu0 %3530
    %3532 = vrot.lane.b32.xlu0 %v3515, 48
    %v3533 = vpop.permute.xlu0 %3532
    %3534 = vrot.lane.b32.xlu0 %v3516, 48
    %v3535 = vpop.permute.xlu0 %3534
    %3536 = vrot.lane.b32.xlu0 %v3517, 48
    %v3537 = vpop.permute.xlu0 %3536
    %3538 = vrot.lane.b32.xlu0 %v3518, 48
    %v3539 = vpop.permute.xlu0 %3538
    %3540 = vrot.lane.b32.xlu0 %v3519, 48
    %v3541 = vpop.permute.xlu0 %3540
    %3542 = vrot.lane.b32.xlu0 %v3520, 48
    %v3543 = vpop.permute.xlu0 %3542
    %3544 = vrot.lane.b32.xlu0 %v3521, 48
    %v3545 = vpop.permute.xlu0 %3544
    %v3546 = vsel %vm3037, %v3531, %v3533
    %v3547 = vsel %vm3037, %v3533, %v3535
    %v3548 = vsel %vm3037, %v3535, %v3537
    %v3549 = vsel %vm3037, %v3539, %v3541
    %v3550 = vsel %vm3037, %v3541, %v3543
    %v3551 = vsel %vm3037, %v3543, %v3545
    %v3558 = vadd.f32 %v3508, %v3546
    %v3559 = vadd.f32 %v3509, %v3547
    %v3560 = vadd.f32 %v3510, %v3548
    %v3561 = vadd.f32 %v3511, %v3549
    %v3562 = vadd.f32 %v3512, %v3550
    %v3563 = vadd.f32 %v3513, %v3551
    %vm3580 = vcmask 1043456
    %v3581 = vrot.slane %v3492, 4
    %v3582 = vrot.slane %v3493, 4
    %v3583 = vrot.slane %v3494, 4
    %v3584 = vrot.slane %v3495, 4
    %v3585 = vrot.slane %v3496, 4
    %v3586 = vsel %vm3580, %v3581, %v3585
    %v3587 = vrot.slane %v3497, 4
    %v3588 = vsel %vm3580, %v3582, %v3587
    %v3589 = vrot.slane %v3498, 4
    %v3590 = vsel %vm3580, %v3583, %v3589
    %v3591 = vrot.slane %v3499, 4
    %v3592 = vsel %vm3580, %v3584, %v3591
    %v3593 = vrot.slane %v3500, 4
    %v3594 = vrot.slane %v3501, 4
    %v3595 = vrot.slane %v3502, 4
    %v3596 = vrot.slane %v3503, 4
    %v3597 = vrot.slane %v3504, 4
    %v3598 = vsel %vm3580, %v3593, %v3597
    %v3599 = vrot.slane %v3505, 4
    %v3600 = vsel %vm3580, %v3594, %v3599
    %v3601 = vrot.slane %v3506, 4
    %v3602 = vsel %vm3580, %v3595, %v3601
    %v3603 = vrot.slane %v3507, 4
    %v3604 = vsel %vm3580, %v3596, %v3603
    %3605 = vrot.lane.b32.xlu0 %v3581, 24
    %v3606 = vpop.permute.xlu0 %3605
    %3607 = vrot.lane.b32.xlu0 %v3582, 24
    %v3608 = vpop.permute.xlu0 %3607
    %3609 = vrot.lane.b32.xlu0 %v3583, 24
    %v3610 = vpop.permute.xlu0 %3609
    %3611 = vrot.lane.b32.xlu0 %v3584, 24
    %v3612 = vpop.permute.xlu0 %3611
    %3613 = vrot.lane.b32.xlu0 %v3586, 24
    %v3614 = vpop.permute.xlu0 %3613
    %3615 = vrot.lane.b32.xlu0 %v3588, 24
    %v3616 = vpop.permute.xlu0 %3615
    %3617 = vrot.lane.b32.xlu0 %v3590, 24
    %v3618 = vpop.permute.xlu0 %3617
    %3619 = vrot.lane.b32.xlu0 %v3592, 24
    %v3620 = vpop.permute.xlu0 %3619
    %3621 = vrot.lane.b32.xlu0 %v3593, 24
    %v3622 = vpop.permute.xlu0 %3621
    %3623 = vrot.lane.b32.xlu0 %v3594, 24
    %v3624 = vpop.permute.xlu0 %3623
    %3625 = vrot.lane.b32.xlu0 %v3595, 24
    %v3626 = vpop.permute.xlu0 %3625
    %3627 = vrot.lane.b32.xlu0 %v3596, 24
    %v3628 = vpop.permute.xlu0 %3627
    %3629 = vrot.lane.b32.xlu0 %v3598, 24
    %v3630 = vpop.permute.xlu0 %3629
    %3631 = vrot.lane.b32.xlu0 %v3600, 24
    %v3632 = vpop.permute.xlu0 %3631
    %3633 = vrot.lane.b32.xlu0 %v3602, 24
    %v3634 = vpop.permute.xlu0 %3633
    %3635 = vrot.lane.b32.xlu0 %v3604, 24
    %v3636 = vpop.permute.xlu0 %3635
    %v3637 = vsel %vm3447, %v3606, %v3608
    %v3638 = vsel %vm3447, %v3608, %v3610
    %v3639 = vsel %vm3447, %v3610, %v3612
    %v3640 = vsel %vm3447, %v3614, %v3616
    %v3641 = vsel %vm3447, %v3616, %v3618
    %v3642 = vsel %vm3447, %v3618, %v3620
    %v3643 = vsel %vm3447, %v3622, %v3624
    %v3644 = vsel %vm3447, %v3624, %v3626
    %v3645 = vsel %vm3447, %v3626, %v3628
    %v3646 = vsel %vm3447, %v3630, %v3632
    %v3647 = vsel %vm3447, %v3632, %v3634
    %v3648 = vsel %vm3447, %v3634, %v3636
    %vm3661 = vcmp.gt.f32.partialorder %v3065, %v3637
    %vm3662 = vcmp.gt.f32.partialorder %v3066, %v3638
    %vm3663 = vcmp.gt.f32.partialorder %v3067, %v3639
    %vm3664 = vcmp.gt.f32.partialorder %v3558, %v3640
    %vm3665 = vcmp.gt.f32.partialorder %v3559, %v3641
    %vm3666 = vcmp.gt.f32.partialorder %v3560, %v3642
    %vm3667 = vcmp.gt.f32.partialorder %v3071, %v3643
    %vm3668 = vcmp.gt.f32.partialorder %v3072, %v3644
    %vm3669 = vcmp.gt.f32.partialorder %v3073, %v3645
    %vm3670 = vcmp.gt.f32.partialorder %v3561, %v3646
    %vm3671 = vcmp.gt.f32.partialorder %v3562, %v3647
    %vm3672 = vcmp.gt.f32.partialorder %v3563, %v3648
    %v3689 = vrot.slane %v3311, 4
    %v3690 = vrot.slane %v3312, 4
    %v3691 = vrot.slane %v3313, 4
    %v3692 = vrot.slane %v3314, 4
    %v3693 = vrot.slane %v3315, 4
    %v3694 = vsel %vm3580, %v3689, %v3693
    %v3695 = vrot.slane %v3316, 4
    %v3696 = vsel %vm3580, %v3690, %v3695
    %v3697 = vrot.slane %v3317, 4
    %v3698 = vsel %vm3580, %v3691, %v3697
    %v3699 = vrot.slane %v3318, 4
    %v3700 = vsel %vm3580, %v3692, %v3699
    %v3701 = vrot.slane %v3319, 4
    %v3702 = vrot.slane %v3320, 4
    %v3703 = vrot.slane %v3321, 4
    %v3704 = vrot.slane %v3322, 4
    %v3705 = vrot.slane %v3323, 4
    %v3706 = vsel %vm3580, %v3701, %v3705
    %v3707 = vrot.slane %v3324, 4
    %v3708 = vsel %vm3580, %v3702, %v3707
    %v3709 = vrot.slane %v3325, 4
    %v3710 = vsel %vm3580, %v3703, %v3709
    %v3711 = vrot.slane %v3326, 4
    %v3712 = vsel %vm3580, %v3704, %v3711
    %3713 = vrot.lane.b32.xlu0 %v3689, 24
    %v3714 = vpop.permute.xlu0 %3713
    %3715 = vrot.lane.b32.xlu0 %v3690, 24
    %v3716 = vpop.permute.xlu0 %3715
    %3717 = vrot.lane.b32.xlu0 %v3691, 24
    %v3718 = vpop.permute.xlu0 %3717
    %3719 = vrot.lane.b32.xlu0 %v3692, 24
    %v3720 = vpop.permute.xlu0 %3719
    %3721 = vrot.lane.b32.xlu0 %v3694, 24
    %v3722 = vpop.permute.xlu0 %3721
    %3723 = vrot.lane.b32.xlu0 %v3696, 24
    %v3724 = vpop.permute.xlu0 %3723
    %3725 = vrot.lane.b32.xlu0 %v3698, 24
    %v3726 = vpop.permute.xlu0 %3725
    %3727 = vrot.lane.b32.xlu0 %v3700, 24
    %v3728 = vpop.permute.xlu0 %3727
    %3729 = vrot.lane.b32.xlu0 %v3701, 24
    %v3730 = vpop.permute.xlu0 %3729
    %3731 = vrot.lane.b32.xlu0 %v3702, 24
    %v3732 = vpop.permute.xlu0 %3731
    %3733 = vrot.lane.b32.xlu0 %v3703, 24
    %v3734 = vpop.permute.xlu0 %3733
    %3735 = vrot.lane.b32.xlu0 %v3704, 24
    %v3736 = vpop.permute.xlu0 %3735
    %3737 = vrot.lane.b32.xlu0 %v3706, 24
    %v3738 = vpop.permute.xlu0 %3737
    %3739 = vrot.lane.b32.xlu0 %v3708, 24
    %v3740 = vpop.permute.xlu0 %3739
    %3741 = vrot.lane.b32.xlu0 %v3710, 24
    %v3742 = vpop.permute.xlu0 %3741
    %3743 = vrot.lane.b32.xlu0 %v3712, 24
    %v3744 = vpop.permute.xlu0 %3743
    %v3745 = vsel %vm3447, %v3714, %v3716
    %v3746 = vsel %vm3447, %v3716, %v3718
    %v3747 = vsel %vm3447, %v3718, %v3720
    %v3748 = vsel %vm3447, %v3722, %v3724
    %v3749 = vsel %vm3447, %v3724, %v3726
    %v3750 = vsel %vm3447, %v3726, %v3728
    %v3751 = vsel %vm3447, %v3730, %v3732
    %v3752 = vsel %vm3447, %v3732, %v3734
    %v3753 = vsel %vm3447, %v3734, %v3736
    %v3754 = vsel %vm3447, %v3738, %v3740
    %v3755 = vsel %vm3447, %v3740, %v3742
    %v3756 = vsel %vm3447, %v3742, %v3744
    %v3769 = vsel %vm3661, %v2901, %v3745
    %v3770 = vsel %vm3662, %v2902, %v3746
    %v3771 = vsel %vm3663, %v2903, %v3747
    %v3772 = vsel %vm3664, %v2913, %v3748
    %v3773 = vsel %vm3665, %v2914, %v3749
    %v3774 = vsel %vm3666, %v2915, %v3750
    %v3775 = vsel %vm3667, %v2937, %v3751
    %v3776 = vsel %vm3668, %v2938, %v3752
    %v3777 = vsel %vm3669, %v2939, %v3753
    %v3778 = vsel %vm3670, %v2949, %v3754
    %v3779 = vsel %vm3671, %v2950, %v3755
    %v3780 = vsel %vm3672, %v2951, %v3756
    %3789 = vrot.lane.b32.xlu0 %v2906, 48
    %v3790 = vpop.permute.xlu0 %3789
    %3791 = vrot.lane.b32.xlu0 %v2907, 48
    %v3792 = vpop.permute.xlu0 %3791
    %3793 = vrot.lane.b32.xlu0 %v2908, 48
    %v3794 = vpop.permute.xlu0 %3793
    %3795 = vrot.lane.b32.xlu0 %v2918, 48
    %v3796 = vpop.permute.xlu0 %3795
    %3797 = vrot.lane.b32.xlu0 %v2919, 48
    %v3798 = vpop.permute.xlu0 %3797
    %3799 = vrot.lane.b32.xlu0 %v2920, 48
    %v3800 = vpop.permute.xlu0 %3799
    %3801 = vrot.lane.b32.xlu0 %v2921, 48
    %v3802 = vpop.permute.xlu0 %3801
    %3803 = vrot.lane.b32.xlu0 %v2942, 48
    %v3804 = vpop.permute.xlu0 %3803
    %3805 = vrot.lane.b32.xlu0 %v2943, 48
    %v3806 = vpop.permute.xlu0 %3805
    %3807 = vrot.lane.b32.xlu0 %v2944, 48
    %v3808 = vpop.permute.xlu0 %3807
    %3809 = vrot.lane.b32.xlu0 %v2954, 48
    %v3810 = vpop.permute.xlu0 %3809
    %3811 = vrot.lane.b32.xlu0 %v2955, 48
    %v3812 = vpop.permute.xlu0 %3811
    %3813 = vrot.lane.b32.xlu0 %v2956, 48
    %v3814 = vpop.permute.xlu0 %3813
    %3815 = vrot.lane.b32.xlu0 %v2957, 48
    %v3816 = vpop.permute.xlu0 %3815
    %v3817 = vsel %vm3037, %v3790, %v3792
    %v3818 = vsel %vm3037, %v3792, %v3794
    %v3819 = vsel %vm3037, %v3794, %v3352
    %v3820 = vsel %vm3037, %v3796, %v3798
    %v3821 = vsel %vm3037, %v3798, %v3800
    %v3822 = vsel %vm3037, %v3800, %v3802
    %v3823 = vsel %vm3037, %v3804, %v3806
    %v3824 = vsel %vm3037, %v3806, %v3808
    %v3825 = vsel %vm3037, %v3808, %v3368
    %v3826 = vsel %vm3037, %v3810, %v3812
    %v3827 = vsel %vm3037, %v3812, %v3814
    %v3828 = vsel %vm3037, %v3814, %v3816
    %v3857 = vrot.slane %v3476, 4
    %v3858 = vrot.slane %v3477, 4
    %v3859 = vrot.slane %v3478, 4
    %v3860 = vrot.slane %v3479, 4
    %v3861 = vrot.slane %v3480, 4
    %v3862 = vsel %vm3580, %v3857, %v3861
    %v3863 = vrot.slane %v3481, 4
    %v3864 = vsel %vm3580, %v3858, %v3863
    %v3865 = vrot.slane %v3482, 4
    %v3866 = vsel %vm3580, %v3859, %v3865
    %v3867 = vrot.slane %v3483, 4
    %v3868 = vsel %vm3580, %v3860, %v3867
    %v3869 = vrot.slane %v3484, 4
    %v3870 = vrot.slane %v3485, 4
    %v3871 = vrot.slane %v3486, 4
    %v3872 = vrot.slane %v3487, 4
    %v3873 = vrot.slane %v3488, 4
    %v3874 = vsel %vm3580, %v3869, %v3873
    %v3875 = vrot.slane %v3489, 4
    %v3876 = vsel %vm3580, %v3870, %v3875
    %v3877 = vrot.slane %v3490, 4
    %v3878 = vsel %vm3580, %v3871, %v3877
    %v3879 = vrot.slane %v3491, 4
    %v3880 = vsel %vm3580, %v3872, %v3879
    %3881 = vrot.lane.b32.xlu0 %v3857, 24
    %v3882 = vpop.permute.xlu0 %3881
    %3883 = vrot.lane.b32.xlu0 %v3858, 24
    %v3884 = vpop.permute.xlu0 %3883
    %3885 = vrot.lane.b32.xlu0 %v3859, 24
    %v3886 = vpop.permute.xlu0 %3885
    %3887 = vrot.lane.b32.xlu0 %v3860, 24
    %v3888 = vpop.permute.xlu0 %3887
    %3889 = vrot.lane.b32.xlu0 %v3862, 24
    %v3890 = vpop.permute.xlu0 %3889
    %3891 = vrot.lane.b32.xlu0 %v3864, 24
    %v3892 = vpop.permute.xlu0 %3891
    %3893 = vrot.lane.b32.xlu0 %v3866, 24
    %v3894 = vpop.permute.xlu0 %3893
    %3895 = vrot.lane.b32.xlu0 %v3868, 24
    %v3896 = vpop.permute.xlu0 %3895
    %3897 = vrot.lane.b32.xlu0 %v3869, 24
    %v3898 = vpop.permute.xlu0 %3897
    %3899 = vrot.lane.b32.xlu0 %v3870, 24
    %v3900 = vpop.permute.xlu0 %3899
    %3901 = vrot.lane.b32.xlu0 %v3871, 24
    %v3902 = vpop.permute.xlu0 %3901
    %3903 = vrot.lane.b32.xlu0 %v3872, 24
    %v3904 = vpop.permute.xlu0 %3903
    %3905 = vrot.lane.b32.xlu0 %v3874, 24
    %v3906 = vpop.permute.xlu0 %3905
    %3907 = vrot.lane.b32.xlu0 %v3876, 24
    %v3908 = vpop.permute.xlu0 %3907
    %3909 = vrot.lane.b32.xlu0 %v3878, 24
    %v3910 = vpop.permute.xlu0 %3909
    %3911 = vrot.lane.b32.xlu0 %v3880, 24
    %v3912 = vpop.permute.xlu0 %3911
    %v3913 = vsel %vm3447, %v3882, %v3884
    %v3914 = vsel %vm3447, %v3884, %v3886
    %v3915 = vsel %vm3447, %v3886, %v3888
    %v3916 = vsel %vm3447, %v3890, %v3892
    %v3917 = vsel %vm3447, %v3892, %v3894
    %v3918 = vsel %vm3447, %v3894, %v3896
    %v3919 = vsel %vm3447, %v3898, %v3900
    %v3920 = vsel %vm3447, %v3900, %v3902
    %v3921 = vsel %vm3447, %v3902, %v3904
    %v3922 = vsel %vm3447, %v3906, %v3908
    %v3923 = vsel %vm3447, %v3908, %v3910
    %v3924 = vsel %vm3447, %v3910, %v3912
    %v3937 = vsel %vm3661, %v3817, %v3913
    %v3938 = vsel %vm3662, %v3818, %v3914
    %v3939 = vsel %vm3663, %v3819, %v3915
    %v3940 = vsel %vm3664, %v3820, %v3916
    %v3941 = vsel %vm3665, %v3821, %v3917
    %v3942 = vsel %vm3666, %v3822, %v3918
    %v3943 = vsel %vm3667, %v3823, %v3919
    %v3944 = vsel %vm3668, %v3824, %v3920
    %v3945 = vsel %vm3669, %v3825, %v3921
    %v3946 = vsel %vm3670, %v3826, %v3922
    %v3947 = vsel %vm3671, %v3827, %v3923
    %v3948 = vsel %vm3672, %v3828, %v3924
    %v3949 = vsel %vm3661, %v3065, %v3637
    %v3950 = vsel %vm3662, %v3066, %v3638
    %v3951 = vsel %vm3663, %v3067, %v3639
    %v3952 = vsel %vm3664, %v3558, %v3640
    %v3953 = vsel %vm3665, %v3559, %v3641
    %v3954 = vsel %vm3666, %v3560, %v3642
    %v3955 = vsel %vm3667, %v3071, %v3643
    %v3956 = vsel %vm3668, %v3072, %v3644
    %v3957 = vsel %vm3669, %v3073, %v3645
    %v3958 = vsel %vm3670, %v3561, %v3646
    %v3959 = vsel %vm3671, %v3562, %v3647
    %v3960 = vsel %vm3672, %v3563, %v3648
    %v3961 = vmul.f32 %v2916, %v2916
    %v3962 = vmul.f32 %v2917, %v2917
    %v3963 = vmul.f32 %v2952, %v2952
    %v3964 = vmul.f32 %v2953, %v2953
    %v3965 = vmul.f32 %v2922, %v2922
    %v3966 = vmul.f32 %v2923, %v2923
    %v3967 = vmul.f32 %v2924, %v2924
    %v3968 = vmul.f32 %v2958, %v2958
    %v3969 = vmul.f32 %v2959, %v2959
    %v3970 = vmul.f32 %v2960, %v2960
    %3977 = vrot.lane.b32.xlu0 %v3965, 48
    %v3978 = vpop.permute.xlu0 %3977
    %3979 = vrot.lane.b32.xlu0 %v3966, 48
    %v3980 = vpop.permute.xlu0 %3979
    %3981 = vrot.lane.b32.xlu0 %v3967, 48
    %v3982 = vpop.permute.xlu0 %3981
    %3983 = vrot.lane.b32.xlu0 %v3968, 48
    %v3984 = vpop.permute.xlu0 %3983
    %3985 = vrot.lane.b32.xlu0 %v3969, 48
    %v3986 = vpop.permute.xlu0 %3985
    %3987 = vrot.lane.b32.xlu0 %v3970, 48
    %v3988 = vpop.permute.xlu0 %3987
    %v3989 = vsel %vm3037, %v3537, %v3978
    %v3990 = vsel %vm3037, %v3978, %v3980
    %v3991 = vsel %vm3037, %v3980, %v3982
    %v3992 = vsel %vm3037, %v3545, %v3984
    %v3993 = vsel %vm3037, %v3984, %v3986
    %v3994 = vsel %vm3037, %v3986, %v3988
    %v4003 = vadd.f32 %v3510, %v3537
    %v4004 = vadd.f32 %v3961, %v3989
    %v4005 = vadd.f32 %v3962, %v3990
    %v4006 = vadd.f32 %v3514, %v3991
    %v4007 = vadd.f32 %v3513, %v3545
    %v4008 = vadd.f32 %v3963, %v3992
    %v4009 = vadd.f32 %v3964, %v3993
    %v4010 = vadd.f32 %v3518, %v3994
    %4023 = vrot.lane.b32.xlu0 %v3949, 104
    %v4024 = vpop.permute.xlu0 %4023
    %4025 = vrot.lane.b32.xlu0 %v3950, 104
    %v4026 = vpop.permute.xlu0 %4025
    %4027 = vrot.lane.b32.xlu0 %v3951, 104
    %v4028 = vpop.permute.xlu0 %4027
    %4029 = vrot.lane.b32.xlu0 %v3952, 104
    %v4030 = vpop.permute.xlu0 %4029
    %4031 = vrot.lane.b32.xlu0 %v3953, 104
    %v4032 = vpop.permute.xlu0 %4031
    %4033 = vrot.lane.b32.xlu0 %v3954, 104
    %v4034 = vpop.permute.xlu0 %4033
    %4035 = vrot.lane.b32.xlu0 %v3955, 104
    %v4036 = vpop.permute.xlu0 %4035
    %4037 = vrot.lane.b32.xlu0 %v3956, 104
    %v4038 = vpop.permute.xlu0 %4037
    %4039 = vrot.lane.b32.xlu0 %v3957, 104
    %v4040 = vpop.permute.xlu0 %4039
    %4041 = vrot.lane.b32.xlu0 %v3958, 104
    %v4042 = vpop.permute.xlu0 %4041
    %4043 = vrot.lane.b32.xlu0 %v3959, 104
    %v4044 = vpop.permute.xlu0 %4043
    %4045 = vrot.lane.b32.xlu0 %v3960, 104
    %v4046 = vpop.permute.xlu0 %4045
    %v4047 = vsel %vm3210, %v4024, %v4026
    %v4048 = vsel %vm3210, %v4026, %v4028
    %v4049 = vsel %vm3210, %v4030, %v4032
    %v4050 = vsel %vm3210, %v4032, %v4034
    %v4051 = vsel %vm3210, %v4036, %v4038
    %v4052 = vsel %vm3210, %v4038, %v4040
    %v4053 = vsel %vm3210, %v4042, %v4044
    %v4054 = vsel %vm3210, %v4044, %v4046
    %vm4071 = vcmp.gt.f32.partialorder %v3162, %v4024
    %vm4072 = vcmp.gt.f32.partialorder %v3163, %v4047
    %vm4073 = vcmp.gt.f32.partialorder %v3164, %v4048
    %vm4074 = vcmp.gt.f32.partialorder %v3165, %v4028
    %vm4075 = vcmp.gt.f32.partialorder %v4003, %v4030
    %vm4076 = vcmp.gt.f32.partialorder %v4004, %v4049
    %vm4077 = vcmp.gt.f32.partialorder %v4005, %v4050
    %vm4078 = vcmp.gt.f32.partialorder %v4006, %v4034
    %vm4079 = vcmp.gt.f32.partialorder %v3170, %v4036
    %vm4080 = vcmp.gt.f32.partialorder %v3171, %v4051
    %vm4081 = vcmp.gt.f32.partialorder %v3172, %v4052
    %vm4082 = vcmp.gt.f32.partialorder %v3173, %v4040
    %vm4083 = vcmp.gt.f32.partialorder %v4007, %v4042
    %vm4084 = vcmp.gt.f32.partialorder %v4008, %v4053
    %vm4085 = vcmp.gt.f32.partialorder %v4009, %v4054
    %vm4086 = vcmp.gt.f32.partialorder %v4010, %v4046
    %4099 = vrot.lane.b32.xlu0 %v3769, 104
    %v4100 = vpop.permute.xlu0 %4099
    %4101 = vrot.lane.b32.xlu0 %v3770, 104
    %v4102 = vpop.permute.xlu0 %4101
    %4103 = vrot.lane.b32.xlu0 %v3771, 104
    %v4104 = vpop.permute.xlu0 %4103
    %4105 = vrot.lane.b32.xlu0 %v3772, 104
    %v4106 = vpop.permute.xlu0 %4105
    %4107 = vrot.lane.b32.xlu0 %v3773, 104
    %v4108 = vpop.permute.xlu0 %4107
    %4109 = vrot.lane.b32.xlu0 %v3774, 104
    %v4110 = vpop.permute.xlu0 %4109
    %4111 = vrot.lane.b32.xlu0 %v3775, 104
    %v4112 = vpop.permute.xlu0 %4111
    %4113 = vrot.lane.b32.xlu0 %v3776, 104
    %v4114 = vpop.permute.xlu0 %4113
    %4115 = vrot.lane.b32.xlu0 %v3777, 104
    %v4116 = vpop.permute.xlu0 %4115
    %4117 = vrot.lane.b32.xlu0 %v3778, 104
    %v4118 = vpop.permute.xlu0 %4117
    %4119 = vrot.lane.b32.xlu0 %v3779, 104
    %v4120 = vpop.permute.xlu0 %4119
    %4121 = vrot.lane.b32.xlu0 %v3780, 104
    %v4122 = vpop.permute.xlu0 %4121
    %v4123 = vsel %vm3210, %v4100, %v4102
    %v4124 = vsel %vm3210, %v4102, %v4104
    %v4125 = vsel %vm3210, %v4106, %v4108
    %v4126 = vsel %vm3210, %v4108, %v4110
    %v4127 = vsel %vm3210, %v4112, %v4114
    %v4128 = vsel %vm3210, %v4114, %v4116
    %v4129 = vsel %vm3210, %v4118, %v4120
    %v4130 = vsel %vm3210, %v4120, %v4122
    %v4147 = vsel %vm4071, %v2903, %v4100
    %v4148 = vsel %vm4072, %v2904, %v4123
    %v4149 = vsel %vm4073, %v2905, %v4124
    %v4150 = vsel %vm4074, %v2906, %v4104
    %v4151 = vsel %vm4075, %v2915, %v4106
    %v4152 = vsel %vm4076, %v2916, %v4125
    %v4153 = vsel %vm4077, %v2917, %v4126
    %v4154 = vsel %vm4078, %v2918, %v4110
    %v4155 = vsel %vm4079, %v2939, %v4112
    %v4156 = vsel %vm4080, %v2940, %v4127
    %v4157 = vsel %vm4081, %v2941, %v4128
    %v4158 = vsel %vm4082, %v2942, %v4116
    %v4159 = vsel %vm4083, %v2951, %v4118
    %v4160 = vsel %vm4084, %v2952, %v4129
    %v4161 = vsel %vm4085, %v2953, %v4130
    %v4162 = vsel %vm4086, %v2954, %v4122
    %4169 = vrot.lane.b32.xlu0 %v2922, 48
    %v4170 = vpop.permute.xlu0 %4169
    %4171 = vrot.lane.b32.xlu0 %v2923, 48
    %v4172 = vpop.permute.xlu0 %4171
    %4173 = vrot.lane.b32.xlu0 %v2924, 48
    %v4174 = vpop.permute.xlu0 %4173
    %4175 = vrot.lane.b32.xlu0 %v2958, 48
    %v4176 = vpop.permute.xlu0 %4175
    %4177 = vrot.lane.b32.xlu0 %v2959, 48
    %v4178 = vpop.permute.xlu0 %4177
    %4179 = vrot.lane.b32.xlu0 %v2960, 48
    %v4180 = vpop.permute.xlu0 %4179
    %v4181 = vsel %vm3037, %v3802, %v4170
    %v4182 = vsel %vm3037, %v4170, %v4172
    %v4183 = vsel %vm3037, %v4172, %v4174
    %v4184 = vsel %vm3037, %v3816, %v4176
    %v4185 = vsel %vm3037, %v4176, %v4178
    %v4186 = vsel %vm3037, %v4178, %v4180
    %4207 = vrot.lane.b32.xlu0 %v3937, 104
    %v4208 = vpop.permute.xlu0 %4207
    %4209 = vrot.lane.b32.xlu0 %v3938, 104
    %v4210 = vpop.permute.xlu0 %4209
    %4211 = vrot.lane.b32.xlu0 %v3939, 104
    %v4212 = vpop.permute.xlu0 %4211
    %4213 = vrot.lane.b32.xlu0 %v3940, 104
    %v4214 = vpop.permute.xlu0 %4213
    %4215 = vrot.lane.b32.xlu0 %v3941, 104
    %v4216 = vpop.permute.xlu0 %4215
    %4217 = vrot.lane.b32.xlu0 %v3942, 104
    %v4218 = vpop.permute.xlu0 %4217
    %4219 = vrot.lane.b32.xlu0 %v3943, 104
    %v4220 = vpop.permute.xlu0 %4219
    %4221 = vrot.lane.b32.xlu0 %v3944, 104
    %v4222 = vpop.permute.xlu0 %4221
    %4223 = vrot.lane.b32.xlu0 %v3945, 104
    %v4224 = vpop.permute.xlu0 %4223
    %4225 = vrot.lane.b32.xlu0 %v3946, 104
    %v4226 = vpop.permute.xlu0 %4225
    %4227 = vrot.lane.b32.xlu0 %v3947, 104
    %v4228 = vpop.permute.xlu0 %4227
    %4229 = vrot.lane.b32.xlu0 %v3948, 104
    %v4230 = vpop.permute.xlu0 %4229
    %v4231 = vsel %vm3210, %v4208, %v4210
    %v4232 = vsel %vm3210, %v4210, %v4212
    %v4233 = vsel %vm3210, %v4214, %v4216
    %v4234 = vsel %vm3210, %v4216, %v4218
    %v4235 = vsel %vm3210, %v4220, %v4222
    %v4236 = vsel %vm3210, %v4222, %v4224
    %v4237 = vsel %vm3210, %v4226, %v4228
    %v4238 = vsel %vm3210, %v4228, %v4230
    %v4255 = vsel %vm4071, %v3352, %v4208
    %v4256 = vsel %vm4072, %v3378, %v4231
    %v4257 = vsel %vm4073, %v3379, %v4232
    %v4258 = vsel %vm4074, %v3380, %v4212
    %v4259 = vsel %vm4075, %v3802, %v4214
    %v4260 = vsel %vm4076, %v4181, %v4233
    %v4261 = vsel %vm4077, %v4182, %v4234
    %v4262 = vsel %vm4078, %v4183, %v4218
    %v4263 = vsel %vm4079, %v3368, %v4220
    %v4264 = vsel %vm4080, %v3384, %v4235
    %v4265 = vsel %vm4081, %v3385, %v4236
    %v4266 = vsel %vm4082, %v3386, %v4224
    %v4267 = vsel %vm4083, %v3816, %v4226
    %v4268 = vsel %vm4084, %v4184, %v4237
    %v4269 = vsel %vm4085, %v4185, %v4238
    %v4270 = vsel %vm4086, %v4186, %v4230
    %v4279 = vrot.slane %v4147, 4
    %v4280 = vrot.slane %v4148, 4
    %v4281 = vrot.slane %v4149, 4
    %v4282 = vrot.slane %v4150, 4
    %v4283 = vrot.slane %v4155, 4
    %v4284 = vrot.slane %v4156, 4
    %v4285 = vrot.slane %v4157, 4
    %v4286 = vrot.slane %v4158, 4
    %4287 = vrot.lane.b32.xlu0 %v4279, 24
    %v4288 = vpop.permute.xlu0 %4287
    %4289 = vrot.lane.b32.xlu0 %v4280, 24
    %v4290 = vpop.permute.xlu0 %4289
    %4291 = vrot.lane.b32.xlu0 %v4281, 24
    %v4292 = vpop.permute.xlu0 %4291
    %4293 = vrot.lane.b32.xlu0 %v4282, 24
    %v4294 = vpop.permute.xlu0 %4293
    %4295 = vrot.lane.b32.xlu0 %v4283, 24
    %v4296 = vpop.permute.xlu0 %4295
    %4297 = vrot.lane.b32.xlu0 %v4284, 24
    %v4298 = vpop.permute.xlu0 %4297
    %4299 = vrot.lane.b32.xlu0 %v4285, 24
    %v4300 = vpop.permute.xlu0 %4299
    %4301 = vrot.lane.b32.xlu0 %v4286, 24
    %v4302 = vpop.permute.xlu0 %4301
    %v4303 = vsel %vm3447, %v4288, %v4290
    %v4304 = vsel %vm3447, %v4290, %v4292
    %v4305 = vsel %vm3447, %v4292, %v4294
    %v4306 = vsel %vm3447, %v4296, %v4298
    %v4307 = vsel %vm3447, %v4298, %v4300
    %v4308 = vsel %vm3447, %v4300, %v4302
    %4315 = vst [vmem:[#allocation4] sm:$0xf] %v4303
    %4316 = vst [vmem:[#allocation4 + $0x8] sm:$0xf] %v4304
    %vm4317 = vcmask 846848
    %4318 = vst.msk [vmem:[#allocation4 + $0x10] sm:$0xf] %vm4317, %v4305
    %4319 = vst [vmem:[#allocation4 + $0x78] sm:$0xf] %v4306
    %4320 = vst [vmem:[#allocation4 + $0x80] sm:$0xf] %v4307
    %4321 = vst.msk [vmem:[#allocation4 + $0x88] sm:$0xf] %vm4317, %v4308
    %v4330 = vrot.slane %v4255, 4
    %v4331 = vrot.slane %v4256, 4
    %v4332 = vrot.slane %v4257, 4
    %v4333 = vrot.slane %v4258, 4
    %v4334 = vrot.slane %v4263, 4
    %v4335 = vrot.slane %v4264, 4
    %v4336 = vrot.slane %v4265, 4
    %v4337 = vrot.slane %v4266, 4
    %4338 = vrot.lane.b32.xlu0 %v4330, 24
    %v4339 = vpop.permute.xlu0 %4338
    %4340 = vrot.lane.b32.xlu0 %v4331, 24
    %v4341 = vpop.permute.xlu0 %4340
    %4342 = vrot.lane.b32.xlu0 %v4332, 24
    %v4343 = vpop.permute.xlu0 %4342
    %4344 = vrot.lane.b32.xlu0 %v4333, 24
    %v4345 = vpop.permute.xlu0 %4344
    %4346 = vrot.lane.b32.xlu0 %v4334, 24
    %v4347 = vpop.permute.xlu0 %4346
    %4348 = vrot.lane.b32.xlu0 %v4335, 24
    %v4349 = vpop.permute.xlu0 %4348
    %4350 = vrot.lane.b32.xlu0 %v4336, 24
    %v4351 = vpop.permute.xlu0 %4350
    %4352 = vrot.lane.b32.xlu0 %v4337, 24
    %v4353 = vpop.permute.xlu0 %4352
    %v4354 = vsel %vm3447, %v4339, %v4341
    %v4355 = vsel %vm3447, %v4341, %v4343
    %v4356 = vsel %vm3447, %v4343, %v4345
    %v4357 = vsel %vm3447, %v4347, %v4349
    %v4358 = vsel %vm3447, %v4349, %v4351
    %v4359 = vsel %vm3447, %v4351, %v4353
    %4366 = vst [vmem:[#allocation5] sm:$0xf] %v4354
    %4367 = vst [vmem:[#allocation5 + $0x8] sm:$0xf] %v4355
    %4368 = vst.msk [vmem:[#allocation5 + $0x10] sm:$0xf] %vm4317, %v4356
    %4369 = vst [vmem:[#allocation5 + $0x78] sm:$0xf] %v4357
    %4370 = vst [vmem:[#allocation5 + $0x80] sm:$0xf] %v4358
    %4371 = vst.msk [vmem:[#allocation5 + $0x88] sm:$0xf] %vm4317, %v4359
    %v4380 = vrot.slane %v4151, 2
    %v4381 = vrot.slane %v4152, 2
    %v4382 = vrot.slane %v4153, 2
    %v4383 = vrot.slane %v4154, 2
    %v4384 = vrot.slane %v4159, 2
    %v4385 = vrot.slane %v4160, 2
    %v4386 = vrot.slane %v4161, 2
    %v4387 = vrot.slane %v4162, 2
    %vm4396 = vcmask 1044288
    %4397 = vst.msk [vmem:[#allocation4 + $0x10] sm:$0xf] %vm4396, %v4380
    %4398 = vst [vmem:[#allocation4 + $0x18] sm:$0xf] %v4381
    %4399 = vst [vmem:[#allocation4 + $0x20] sm:$0xf] %v4382
    %vm4400 = vcmask 650240
    %4401 = vst.msk [vmem:[#allocation4 + $0x28] sm:$0xf] %vm4400, %v4383
    %4402 = vst.msk [vmem:[#allocation4 + $0x88] sm:$0xf] %vm4396, %v4384
    %4403 = vst [vmem:[#allocation4 + $0x90] sm:$0xf] %v4385
    %4404 = vst [vmem:[#allocation4 + $0x98] sm:$0xf] %v4386
    %4405 = vst.msk [vmem:[#allocation4 + $0xa0] sm:$0xf] %vm4400, %v4387
    %v4414 = vrot.slane %v4259, 2
    %v4415 = vrot.slane %v4260, 2
    %v4416 = vrot.slane %v4261, 2
    %v4417 = vrot.slane %v4262, 2
    %v4418 = vrot.slane %v4267, 2
    %v4419 = vrot.slane %v4268, 2
    %v4420 = vrot.slane %v4269, 2
    %v4421 = vrot.slane %v4270, 2
    %4430 = vst.msk [vmem:[#allocation5 + $0x10] sm:$0xf] %vm4396, %v4414
    %4431 = vst [vmem:[#allocation5 + $0x18] sm:$0xf] %v4415
    %4432 = vst [vmem:[#allocation5 + $0x20] sm:$0xf] %v4416
    %4433 = vst.msk [vmem:[#allocation5 + $0x28] sm:$0xf] %vm4400, %v4417
    %4434 = vst.msk [vmem:[#allocation5 + $0x88] sm:$0xf] %vm4396, %v4418
    %4435 = vst [vmem:[#allocation5 + $0x90] sm:$0xf] %v4419
    %4436 = vst [vmem:[#allocation5 + $0x98] sm:$0xf] %v4420
    %4437 = vst.msk [vmem:[#allocation5 + $0xa0] sm:$0xf] %vm4400, %v4421
    %vm4438 = vcmask 1042432
    %v4439 = vrot.slane %v4147, 5
    %v4440 = vrot.slane %v4151, 5
    %v4441 = vsel %vm4438, %v4439, %v4440
    %v4442 = vrot.slane %v4148, 5
    %v4443 = vrot.slane %v4152, 5
    %v4444 = vsel %vm4438, %v4442, %v4443
    %v4445 = vrot.slane %v4149, 5
    %v4446 = vrot.slane %v4153, 5
    %v4447 = vsel %vm4438, %v4445, %v4446
    %v4448 = vrot.slane %v4150, 5
    %v4449 = vrot.slane %v4154, 5
    %v4450 = vsel %vm4438, %v4448, %v4449
    %v4451 = vrot.slane %v4155, 5
    %v4452 = vrot.slane %v4159, 5
    %v4453 = vsel %vm4438, %v4451, %v4452
    %v4454 = vrot.slane %v4156, 5
    %v4455 = vrot.slane %v4160, 5
    %v4456 = vsel %vm4438, %v4454, %v4455
    %v4457 = vrot.slane %v4157, 5
    %v4458 = vrot.slane %v4161, 5
    %v4459 = vsel %vm4438, %v4457, %v4458
    %v4460 = vrot.slane %v4158, 5
    %v4461 = vrot.slane %v4162, 5
    %v4462 = vsel %vm4438, %v4460, %v4461
    %4463 = vrot.lane.b32.xlu0 %v4441, 104
    %v4464 = vpop.permute.xlu0 %4463
    %4465 = vrot.lane.b32.xlu0 %v4444, 104
    %v4466 = vpop.permute.xlu0 %4465
    %4467 = vrot.lane.b32.xlu0 %v4447, 104
    %v4468 = vpop.permute.xlu0 %4467
    %4469 = vrot.lane.b32.xlu0 %v4450, 104
    %v4470 = vpop.permute.xlu0 %4469
    %4471 = vrot.lane.b32.xlu0 %v4453, 104
    %v4472 = vpop.permute.xlu0 %4471
    %4473 = vrot.lane.b32.xlu0 %v4456, 104
    %v4474 = vpop.permute.xlu0 %4473
    %4475 = vrot.lane.b32.xlu0 %v4459, 104
    %v4476 = vpop.permute.xlu0 %4475
    %4477 = vrot.lane.b32.xlu0 %v4462, 104
    %v4478 = vpop.permute.xlu0 %4477
    %v4479 = vsel %vm3210, %v4464, %v4466
    %v4480 = vsel %vm3210, %v4466, %v4468
    %v4481 = vsel %vm3210, %v4468, %v4470
    %v4482 = vsel %vm3210, %v4472, %v4474
    %v4483 = vsel %vm3210, %v4474, %v4476
    %v4484 = vsel %vm3210, %v4476, %v4478
    %vm4493 = vcmask 1044096
    %4494 = vst.msk [vmem:[#allocation4 + $0x28] sm:$0xf] %vm4493, %v4479
    %4495 = vst [vmem:[#allocation4 + $0x30] sm:$0xf] %v4480
    %4496 = vst [vmem:[#allocation4 + $0x38] sm:$0xf] %v4481
    %vm4497 = vcmask 453632
    %4498 = vst.msk [vmem:[#allocation4 + $0x40] sm:$0xf] %vm4497, %v4470
    %4499 = vst.msk [vmem:[#allocation4 + $0xa0] sm:$0xf] %vm4493, %v4482
    %4500 = vst [vmem:[#allocation4 + $0xa8] sm:$0xf] %v4483
    %4501 = vst [vmem:[#allocation4 + $0xb0] sm:$0xf] %v4484
    %4502 = vst.msk [vmem:[#allocation4 + $0xb8] sm:$0xf] %vm4497, %v4478
    %v4503 = vrot.slane %v4255, 5
    %v4504 = vrot.slane %v4259, 5
    %v4505 = vsel %vm4438, %v4503, %v4504
    %v4506 = vrot.slane %v4256, 5
    %v4507 = vrot.slane %v4260, 5
    %v4508 = vsel %vm4438, %v4506, %v4507
    %v4509 = vrot.slane %v4257, 5
    %v4510 = vrot.slane %v4261, 5
    %v4511 = vsel %vm4438, %v4509, %v4510
    %v4512 = vrot.slane %v4258, 5
    %v4513 = vrot.slane %v4262, 5
    %v4514 = vsel %vm4438, %v4512, %v4513
    %v4515 = vrot.slane %v4263, 5
    %v4516 = vrot.slane %v4267, 5
    %v4517 = vsel %vm4438, %v4515, %v4516
    %v4518 = vrot.slane %v4264, 5
    %v4519 = vrot.slane %v4268, 5
    %v4520 = vsel %vm4438, %v4518, %v4519
    %v4521 = vrot.slane %v4265, 5
    %v4522 = vrot.slane %v4269, 5
    %v4523 = vsel %vm4438, %v4521, %v4522
    %v4524 = vrot.slane %v4266, 5
    %v4525 = vrot.slane %v4270, 5
    %v4526 = vsel %vm4438, %v4524, %v4525
    %4527 = vrot.lane.b32.xlu0 %v4505, 104
    %v4528 = vpop.permute.xlu0 %4527
    %4529 = vrot.lane.b32.xlu0 %v4508, 104
    %v4530 = vpop.permute.xlu0 %4529
    %4531 = vrot.lane.b32.xlu0 %v4511, 104
    %v4532 = vpop.permute.xlu0 %4531
    %4533 = vrot.lane.b32.xlu0 %v4514, 104
    %v4534 = vpop.permute.xlu0 %4533
    %4535 = vrot.lane.b32.xlu0 %v4517, 104
    %v4536 = vpop.permute.xlu0 %4535
    %4537 = vrot.lane.b32.xlu0 %v4520, 104
    %v4538 = vpop.permute.xlu0 %4537
    %4539 = vrot.lane.b32.xlu0 %v4523, 104
    %v4540 = vpop.permute.xlu0 %4539
    %4541 = vrot.lane.b32.xlu0 %v4526, 104
    %v4542 = vpop.permute.xlu0 %4541
    %v4543 = vsel %vm3210, %v4528, %v4530
    %v4544 = vsel %vm3210, %v4530, %v4532
    %v4545 = vsel %vm3210, %v4532, %v4534
    %v4546 = vsel %vm3210, %v4536, %v4538
    %v4547 = vsel %vm3210, %v4538, %v4540
    %v4548 = vsel %vm3210, %v4540, %v4542
    %4557 = vst.msk [vmem:[#allocation5 + $0x28] sm:$0xf] %vm4493, %v4543
    %4558 = vst [vmem:[#allocation5 + $0x30] sm:$0xf] %v4544
    %4559 = vst [vmem:[#allocation5 + $0x38] sm:$0xf] %v4545
    %4560 = vst.msk [vmem:[#allocation5 + $0x40] sm:$0xf] %vm4497, %v4534
    %4561 = vst.msk [vmem:[#allocation5 + $0xa0] sm:$0xf] %vm4493, %v4546
    %4562 = vst [vmem:[#allocation5 + $0xa8] sm:$0xf] %v4547
    %4563 = vst [vmem:[#allocation5 + $0xb0] sm:$0xf] %v4548
    %4564 = vst.msk [vmem:[#allocation5 + $0xb8] sm:$0xf] %vm4497, %v4542
    %v4565 = vrot.slane %v4151, 3
    %v4566 = vrot.slane %v4152, 3
    %v4567 = vrot.slane %v4153, 3
    %v4568 = vrot.slane %v4154, 3
    %v4569 = vrot.slane %v4159, 3
    %v4570 = vrot.slane %v4160, 3
    %v4571 = vrot.slane %v4161, 3
    %v4572 = vrot.slane %v4162, 3
    %4573 = vrot.lane.b32.xlu0 %v4565, 80
    %v4574 = vpop.permute.xlu0 %4573
    %4575 = vrot.lane.b32.xlu0 %v4566, 80
    %v4576 = vpop.permute.xlu0 %4575
    %4577 = vrot.lane.b32.xlu0 %v4567, 80
    %v4578 = vpop.permute.xlu0 %4577
    %4579 = vrot.lane.b32.xlu0 %v4568, 80
    %v4580 = vpop.permute.xlu0 %4579
    %4581 = vrot.lane.b32.xlu0 %v4569, 80
    %v4582 = vpop.permute.xlu0 %4581
    %4583 = vrot.lane.b32.xlu0 %v4570, 80
    %v4584 = vpop.permute.xlu0 %4583
    %4585 = vrot.lane.b32.xlu0 %v4571, 80
    %v4586 = vpop.permute.xlu0 %4585
    %4587 = vrot.lane.b32.xlu0 %v4572, 80
    %v4588 = vpop.permute.xlu0 %4587
    %vm4589 = vcmask 654336
    %v4590 = vsel %vm4589, %v4574, %v4576
    %v4591 = vsel %vm4589, %v4576, %v4578
    %v4592 = vsel %vm4589, %v4578, %v4580
    %v4593 = vsel %vm4589, %v4582, %v4584
    %v4594 = vsel %vm4589, %v4584, %v4586
    %v4595 = vsel %vm4589, %v4586, %v4588
    %vm4604 = vcmask 1043904
    %4605 = vst.msk [vmem:[#allocation4 + $0x40] sm:$0xf] %vm4604, %v4590
    %4606 = vst [vmem:[#allocation4 + $0x48] sm:$0xf] %v4591
    %4607 = vst [vmem:[#allocation4 + $0x50] sm:$0xf] %v4592
    %vm4608 = vcmask 257024
    %4609 = vst.msk [vmem:[#allocation4 + $0x58] sm:$0xf] %vm4608, %v4580
    %4610 = vst.msk [vmem:[#allocation4 + $0xb8] sm:$0xf] %vm4604, %v4593
    %4611 = vst [vmem:[#allocation4 + $0xc0] sm:$0xf] %v4594
    %4612 = vst [vmem:[#allocation4 + $0xc8] sm:$0xf] %v4595
    %4613 = vst.msk [vmem:[#allocation4 + $0xd0] sm:$0xf] %vm4608, %v4588
    %v4614 = vrot.slane %v4259, 3
    %v4615 = vrot.slane %v4260, 3
    %v4616 = vrot.slane %v4261, 3
    %v4617 = vrot.slane %v4262, 3
    %v4618 = vrot.slane %v4267, 3
    %v4619 = vrot.slane %v4268, 3
    %v4620 = vrot.slane %v4269, 3
    %v4621 = vrot.slane %v4270, 3
    %4622 = vrot.lane.b32.xlu0 %v4614, 80
    %v4623 = vpop.permute.xlu0 %4622
    %4624 = vrot.lane.b32.xlu0 %v4615, 80
    %v4625 = vpop.permute.xlu0 %4624
    %4626 = vrot.lane.b32.xlu0 %v4616, 80
    %v4627 = vpop.permute.xlu0 %4626
    %4628 = vrot.lane.b32.xlu0 %v4617, 80
    %v4629 = vpop.permute.xlu0 %4628
    %4630 = vrot.lane.b32.xlu0 %v4618, 80
    %v4631 = vpop.permute.xlu0 %4630
    %4632 = vrot.lane.b32.xlu0 %v4619, 80
    %v4633 = vpop.permute.xlu0 %4632
    %4634 = vrot.lane.b32.xlu0 %v4620, 80
    %v4635 = vpop.permute.xlu0 %4634
    %4636 = vrot.lane.b32.xlu0 %v4621, 80
    %v4637 = vpop.permute.xlu0 %4636
    %v4638 = vsel %vm4589, %v4623, %v4625
    %v4639 = vsel %vm4589, %v4625, %v4627
    %v4640 = vsel %vm4589, %v4627, %v4629
    %v4641 = vsel %vm4589, %v4631, %v4633
    %v4642 = vsel %vm4589, %v4633, %v4635
    %v4643 = vsel %vm4589, %v4635, %v4637
    %4652 = vst.msk [vmem:[#allocation5 + $0x40] sm:$0xf] %vm4604, %v4638
    %4653 = vst [vmem:[#allocation5 + $0x48] sm:$0xf] %v4639
    %4654 = vst [vmem:[#allocation5 + $0x50] sm:$0xf] %v4640
    %4655 = vst.msk [vmem:[#allocation5 + $0x58] sm:$0xf] %vm4608, %v4629
    %4656 = vst.msk [vmem:[#allocation5 + $0xb8] sm:$0xf] %vm4604, %v4641
    %4657 = vst [vmem:[#allocation5 + $0xc0] sm:$0xf] %v4642
    %4658 = vst [vmem:[#allocation5 + $0xc8] sm:$0xf] %v4643
    %4659 = vst.msk [vmem:[#allocation5 + $0xd0] sm:$0xf] %vm4608, %v4637
    %vm4660 = vcmask 1041408
    %v4661 = vrot.slane %v4147, 6
    %v4662 = vrot.slane %v4151, 6
    %v4663 = vsel %vm4660, %v4661, %v4662
    %v4664 = vrot.slane %v4148, 6
    %v4665 = vrot.slane %v4152, 6
    %v4666 = vsel %vm4660, %v4664, %v4665
    %v4667 = vrot.slane %v4149, 6
    %v4668 = vrot.slane %v4153, 6
    %v4669 = vsel %vm4660, %v4667, %v4668
    %v4670 = vrot.slane %v4150, 6
    %v4671 = vrot.slane %v4154, 6
    %v4672 = vsel %vm4660, %v4670, %v4671
    %v4673 = vrot.slane %v4155, 6
    %v4674 = vrot.slane %v4159, 6
    %v4675 = vsel %vm4660, %v4673, %v4674
    %v4676 = vrot.slane %v4156, 6
    %v4677 = vrot.slane %v4160, 6
    %v4678 = vsel %vm4660, %v4676, %v4677
    %v4679 = vrot.slane %v4157, 6
    %v4680 = vrot.slane %v4161, 6
    %v4681 = vsel %vm4660, %v4679, %v4680
    %v4682 = vrot.slane %v4158, 6
    %v4683 = vrot.slane %v4162, 6
    %v4684 = vsel %vm4660, %v4682, %v4683
    %4685 = vrot.lane.b32.xlu0 %v4663, 56
    %v4686 = vpop.permute.xlu0 %4685
    %4687 = vrot.lane.b32.xlu0 %v4666, 56
    %v4688 = vpop.permute.xlu0 %4687
    %4689 = vrot.lane.b32.xlu0 %v4669, 56
    %v4690 = vpop.permute.xlu0 %4689
    %4691 = vrot.lane.b32.xlu0 %v4672, 56
    %v4692 = vpop.permute.xlu0 %4691
    %4693 = vrot.lane.b32.xlu0 %v4675, 56
    %v4694 = vpop.permute.xlu0 %4693
    %4695 = vrot.lane.b32.xlu0 %v4678, 56
    %v4696 = vpop.permute.xlu0 %4695
    %4697 = vrot.lane.b32.xlu0 %v4681, 56
    %v4698 = vpop.permute.xlu0 %4697
    %4699 = vrot.lane.b32.xlu0 %v4684, 56
    %v4700 = vpop.permute.xlu0 %4699
    %vm4701 = vcmask 457728
    %v4702 = vsel %vm4701, %v4686, %v4688
    %v4703 = vsel %vm4701, %v4688, %v4690
    %v4704 = vsel %vm4701, %v4690, %v4692
    %v4705 = vsel %vm4701, %v4694, %v4696
    %v4706 = vsel %vm4701, %v4696, %v4698
    %v4707 = vsel %vm4701, %v4698, %v4700
    %vm4716 = vcmask 1043712
    %4717 = vst.msk [vmem:[#allocation4 + $0x58] sm:$0xf] %vm4716, %v4702
    %4718 = vst [vmem:[#allocation4 + $0x60] sm:$0xf] %v4703
    %4719 = vst [vmem:[#allocation4 + $0x68] sm:$0xf] %v4704
    %vm4720 = vcmask 60416
    %4721 = vst.msk [vmem:[#allocation4 + $0x70] sm:$0xf] %vm4720, %v4692
    %4722 = vst.msk [vmem:[#allocation4 + $0xd0] sm:$0xf] %vm4716, %v4705
    %4723 = vst [vmem:[#allocation4 + $0xd8] sm:$0xf] %v4706
    %4724 = vst [vmem:[#allocation4 + $0xe0] sm:$0xf] %v4707
    %4725 = vst.msk [vmem:[#allocation4 + $0xe8] sm:$0xf] %vm4720, %v4700
    %v4726 = vrot.slane %v4255, 6
    %v4727 = vrot.slane %v4259, 6
    %v4728 = vsel %vm4660, %v4726, %v4727
    %v4729 = vrot.slane %v4256, 6
    %v4730 = vrot.slane %v4260, 6
    %v4731 = vsel %vm4660, %v4729, %v4730
    %v4732 = vrot.slane %v4257, 6
    %v4733 = vrot.slane %v4261, 6
    %v4734 = vsel %vm4660, %v4732, %v4733
    %v4735 = vrot.slane %v4258, 6
    %v4736 = vrot.slane %v4262, 6
    %v4737 = vsel %vm4660, %v4735, %v4736
    %v4738 = vrot.slane %v4263, 6
    %v4739 = vrot.slane %v4267, 6
    %v4740 = vsel %vm4660, %v4738, %v4739
    %v4741 = vrot.slane %v4264, 6
    %v4742 = vrot.slane %v4268, 6
    %v4743 = vsel %vm4660, %v4741, %v4742
    %v4744 = vrot.slane %v4265, 6
    %v4745 = vrot.slane %v4269, 6
    %v4746 = vsel %vm4660, %v4744, %v4745
    %v4747 = vrot.slane %v4266, 6
    %v4748 = vrot.slane %v4270, 6
    %v4749 = vsel %vm4660, %v4747, %v4748
    %4750 = vrot.lane.b32.xlu0 %v4728, 56
    %v4751 = vpop.permute.xlu0 %4750
    %4752 = vrot.lane.b32.xlu0 %v4731, 56
    %v4753 = vpop.permute.xlu0 %4752
    %4754 = vrot.lane.b32.xlu0 %v4734, 56
    %v4755 = vpop.permute.xlu0 %4754
    %4756 = vrot.lane.b32.xlu0 %v4737, 56
    %v4757 = vpop.permute.xlu0 %4756
    %4758 = vrot.lane.b32.xlu0 %v4740, 56
    %v4759 = vpop.permute.xlu0 %4758
    %4760 = vrot.lane.b32.xlu0 %v4743, 56
    %v4761 = vpop.permute.xlu0 %4760
    %4762 = vrot.lane.b32.xlu0 %v4746, 56
    %v4763 = vpop.permute.xlu0 %4762
    %4764 = vrot.lane.b32.xlu0 %v4749, 56
    %v4765 = vpop.permute.xlu0 %4764
    %v4766 = vsel %vm4701, %v4751, %v4753
    %v4767 = vsel %vm4701, %v4753, %v4755
    %v4768 = vsel %vm4701, %v4755, %v4757
    %v4769 = vsel %vm4701, %v4759, %v4761
    %v4770 = vsel %vm4701, %v4761, %v4763
    %v4771 = vsel %vm4701, %v4763, %v4765
    %4780 = vst.msk [vmem:[#allocation5 + $0x58] sm:$0xf] %vm4716, %v4766
    %4781 = vst [vmem:[#allocation5 + $0x60] sm:$0xf] %v4767
    %4782 = vst [vmem:[#allocation5 + $0x68] sm:$0xf] %v4768
    %4783 = vst.msk [vmem:[#allocation5 + $0x70] sm:$0xf] %vm4720, %v4757
    %4784 = vst.msk [vmem:[#allocation5 + $0xd0] sm:$0xf] %vm4716, %v4769
    %4785 = vst [vmem:[#allocation5 + $0xd8] sm:$0xf] %v4770
    %4786 = vst [vmem:[#allocation5 + $0xe0] sm:$0xf] %v4771
    %4787 = vst.msk [vmem:[#allocation5 + $0xe8] sm:$0xf] %vm4720, %v4765
    %4788 = vrot.lane.b32.xlu0 %v4662, 24
    %v4789 = vpop.permute.xlu0 %4788
    %4790 = vrot.lane.b32.xlu0 %v4665, 24
    %v4791 = vpop.permute.xlu0 %4790
    %4792 = vrot.lane.b32.xlu0 %v4668, 24
    %v4793 = vpop.permute.xlu0 %4792
    %4794 = vrot.lane.b32.xlu0 %v4671, 24
    %v4795 = vpop.permute.xlu0 %4794
    %4796 = vrot.lane.b32.xlu0 %v4674, 24
    %v4797 = vpop.permute.xlu0 %4796
    %4798 = vrot.lane.b32.xlu0 %v4677, 24
    %v4799 = vpop.permute.xlu0 %4798
    %4800 = vrot.lane.b32.xlu0 %v4680, 24
    %v4801 = vpop.permute.xlu0 %4800
    %4802 = vrot.lane.b32.xlu0 %v4683, 24
    %v4803 = vpop.permute.xlu0 %4802
    %v4804 = vsel %vm3447, %v4789, %v4791
    %v4805 = vsel %vm3447, %v4791, %v4793
    %v4806 = vsel %vm3447, %v4793, %v4795
    %v4807 = vsel %vm3447, %v4797, %v4799
    %v4808 = vsel %vm3447, %v4799, %v4801
    %v4809 = vsel %vm3447, %v4801, %v4803
    %4816 = vst [vmem:[#allocation4] sm:$0xf0] %v4804
    %4817 = vst [vmem:[#allocation4 + $0x8] sm:$0xf0] %v4805
    %vm4818 = vcmask 850948
    %4819 = vst.msk [vmem:[#allocation4 + $0x10] sm:$0xf0] %vm4818, %v4806
    %4820 = vst [vmem:[#allocation4 + $0x78] sm:$0xf0] %v4807
    %4821 = vst [vmem:[#allocation4 + $0x80] sm:$0xf0] %v4808
    %4822 = vst.msk [vmem:[#allocation4 + $0x88] sm:$0xf0] %vm4818, %v4809
    %4823 = vrot.lane.b32.xlu0 %v4727, 24
    %v4824 = vpop.permute.xlu0 %4823
    %4825 = vrot.lane.b32.xlu0 %v4730, 24
    %v4826 = vpop.permute.xlu0 %4825
    %4827 = vrot.lane.b32.xlu0 %v4733, 24
    %v4828 = vpop.permute.xlu0 %4827
    %4829 = vrot.lane.b32.xlu0 %v4736, 24
    %v4830 = vpop.permute.xlu0 %4829
    %4831 = vrot.lane.b32.xlu0 %v4739, 24
    %v4832 = vpop.permute.xlu0 %4831
    %4833 = vrot.lane.b32.xlu0 %v4742, 24
    %v4834 = vpop.permute.xlu0 %4833
    %4835 = vrot.lane.b32.xlu0 %v4745, 24
    %v4836 = vpop.permute.xlu0 %4835
    %4837 = vrot.lane.b32.xlu0 %v4748, 24
    %v4838 = vpop.permute.xlu0 %4837
    %v4839 = vsel %vm3447, %v4824, %v4826
    %v4840 = vsel %vm3447, %v4826, %v4828
    %v4841 = vsel %vm3447, %v4828, %v4830
    %v4842 = vsel %vm3447, %v4832, %v4834
    %v4843 = vsel %vm3447, %v4834, %v4836
    %v4844 = vsel %vm3447, %v4836, %v4838
    %4851 = vst [vmem:[#allocation5] sm:$0xf0] %v4839
    %4852 = vst [vmem:[#allocation5 + $0x8] sm:$0xf0] %v4840
    %4853 = vst.msk [vmem:[#allocation5 + $0x10] sm:$0xf0] %vm4818, %v4841
    %4854 = vst [vmem:[#allocation5 + $0x78] sm:$0xf0] %v4842
    %4855 = vst [vmem:[#allocation5 + $0x80] sm:$0xf0] %v4843
    %4856 = vst.msk [vmem:[#allocation5 + $0x88] sm:$0xf0] %vm4818, %v4844
    %vm4857 = vcmask 1046528
    %v4858 = vrot.slane %v4147, 1
    %v4859 = vrot.slane %v4151, 1
    %v4860 = vsel %vm4857, %v4858, %v4859
    %v4861 = vrot.slane %v4148, 1
    %v4862 = vrot.slane %v4152, 1
    %v4863 = vsel %vm4857, %v4861, %v4862
    %v4864 = vrot.slane %v4149, 1
    %v4865 = vrot.slane %v4153, 1
    %v4866 = vsel %vm4857, %v4864, %v4865
    %v4867 = vrot.slane %v4150, 1
    %v4868 = vrot.slane %v4154, 1
    %v4869 = vsel %vm4857, %v4867, %v4868
    %v4870 = vrot.slane %v4155, 1
    %v4871 = vrot.slane %v4159, 1
    %v4872 = vsel %vm4857, %v4870, %v4871
    %v4873 = vrot.slane %v4156, 1
    %v4874 = vrot.slane %v4160, 1
    %v4875 = vsel %vm4857, %v4873, %v4874
    %v4876 = vrot.slane %v4157, 1
    %v4877 = vrot.slane %v4161, 1
    %v4878 = vsel %vm4857, %v4876, %v4877
    %v4879 = vrot.slane %v4158, 1
    %v4880 = vrot.slane %v4162, 1
    %v4881 = vsel %vm4857, %v4879, %v4880
    %vm4890 = vcmask 1048388
    %4891 = vst.msk [vmem:[#allocation4 + $0x10] sm:$0xf0] %vm4890, %v4860
    %4892 = vst [vmem:[#allocation4 + $0x18] sm:$0xf0] %v4863
    %4893 = vst [vmem:[#allocation4 + $0x20] sm:$0xf0] %v4866
    %vm4894 = vcmask 654340
    %4895 = vst.msk [vmem:[#allocation4 + $0x28] sm:$0xf0] %vm4894, %v4869
    %4896 = vst.msk [vmem:[#allocation4 + $0x88] sm:$0xf0] %vm4890, %v4872
    %4897 = vst [vmem:[#allocation4 + $0x90] sm:$0xf0] %v4875
    %4898 = vst [vmem:[#allocation4 + $0x98] sm:$0xf0] %v4878
    %4899 = vst.msk [vmem:[#allocation4 + $0xa0] sm:$0xf0] %vm4894, %v4881
    %v4900 = vrot.slane %v4255, 1
    %v4901 = vrot.slane %v4259, 1
    %v4902 = vsel %vm4857, %v4900, %v4901
    %v4903 = vrot.slane %v4256, 1
    %v4904 = vrot.slane %v4260, 1
    %v4905 = vsel %vm4857, %v4903, %v4904
    %v4906 = vrot.slane %v4257, 1
    %v4907 = vrot.slane %v4261, 1
    %v4908 = vsel %vm4857, %v4906, %v4907
    %v4909 = vrot.slane %v4258, 1
    %v4910 = vrot.slane %v4262, 1
    %v4911 = vsel %vm4857, %v4909, %v4910
    %v4912 = vrot.slane %v4263, 1
    %v4913 = vrot.slane %v4267, 1
    %v4914 = vsel %vm4857, %v4912, %v4913
    %v4915 = vrot.slane %v4264, 1
    %v4916 = vrot.slane %v4268, 1
    %v4917 = vsel %vm4857, %v4915, %v4916
    %v4918 = vrot.slane %v4265, 1
    %v4919 = vrot.slane %v4269, 1
    %v4920 = vsel %vm4857, %v4918, %v4919
    %v4921 = vrot.slane %v4266, 1
    %v4922 = vrot.slane %v4270, 1
    %v4923 = vsel %vm4857, %v4921, %v4922
    %4932 = vst.msk [vmem:[#allocation5 + $0x10] sm:$0xf0] %vm4890, %v4902
    %4933 = vst [vmem:[#allocation5 + $0x18] sm:$0xf0] %v4905
    %4934 = vst [vmem:[#allocation5 + $0x20] sm:$0xf0] %v4908
    %4935 = vst.msk [vmem:[#allocation5 + $0x28] sm:$0xf0] %vm4894, %v4911
    %4936 = vst.msk [vmem:[#allocation5 + $0x88] sm:$0xf0] %vm4890, %v4914
    %4937 = vst [vmem:[#allocation5 + $0x90] sm:$0xf0] %v4917
    %4938 = vst [vmem:[#allocation5 + $0x98] sm:$0xf0] %v4920
    %4939 = vst.msk [vmem:[#allocation5 + $0xa0] sm:$0xf0] %vm4894, %v4923
    %v4940 = vrot.slane %v4151, 7
    %v4941 = vrot.slane %v4152, 7
    %v4942 = vrot.slane %v4153, 7
    %v4943 = vrot.slane %v4154, 7
    %v4944 = vrot.slane %v4159, 7
    %v4945 = vrot.slane %v4160, 7
    %v4946 = vrot.slane %v4161, 7
    %v4947 = vrot.slane %v4162, 7
    %4948 = vrot.lane.b32.xlu0 %v4940, 104
    %v4949 = vpop.permute.xlu0 %4948
    %4950 = vrot.lane.b32.xlu0 %v4941, 104
    %v4951 = vpop.permute.xlu0 %4950
    %4952 = vrot.lane.b32.xlu0 %v4942, 104
    %v4953 = vpop.permute.xlu0 %4952
    %4954 = vrot.lane.b32.xlu0 %v4943, 104
    %v4955 = vpop.permute.xlu0 %4954
    %4956 = vrot.lane.b32.xlu0 %v4944, 104
    %v4957 = vpop.permute.xlu0 %4956
    %4958 = vrot.lane.b32.xlu0 %v4945, 104
    %v4959 = vpop.permute.xlu0 %4958
    %4960 = vrot.lane.b32.xlu0 %v4946, 104
    %v4961 = vpop.permute.xlu0 %4960
    %4962 = vrot.lane.b32.xlu0 %v4947, 104
    %v4963 = vpop.permute.xlu0 %4962
    %v4964 = vsel %vm3210, %v4949, %v4951
    %v4965 = vsel %vm3210, %v4951, %v4953
    %v4966 = vsel %vm3210, %v4953, %v4955
    %v4967 = vsel %vm3210, %v4957, %v4959
    %v4968 = vsel %vm3210, %v4959, %v4961
    %v4969 = vsel %vm3210, %v4961, %v4963
    %vm4978 = vcmask 1048196
    %4979 = vst.msk [vmem:[#allocation4 + $0x28] sm:$0xf0] %vm4978, %v4964
    %4980 = vst [vmem:[#allocation4 + $0x30] sm:$0xf0] %v4965
    %4981 = vst [vmem:[#allocation4 + $0x38] sm:$0xf0] %v4966
    %vm4982 = vcmask 457732
    %4983 = vst.msk [vmem:[#allocation4 + $0x40] sm:$0xf0] %vm4982, %v4955
    %4984 = vst.msk [vmem:[#allocation4 + $0xa0] sm:$0xf0] %vm4978, %v4967
    %4985 = vst [vmem:[#allocation4 + $0xa8] sm:$0xf0] %v4968
    %4986 = vst [vmem:[#allocation4 + $0xb0] sm:$0xf0] %v4969
    %4987 = vst.msk [vmem:[#allocation4 + $0xb8] sm:$0xf0] %vm4982, %v4963
    %v4988 = vrot.slane %v4259, 7
    %v4989 = vrot.slane %v4260, 7
    %v4990 = vrot.slane %v4261, 7
    %v4991 = vrot.slane %v4262, 7
    %v4992 = vrot.slane %v4267, 7
    %v4993 = vrot.slane %v4268, 7
    %v4994 = vrot.slane %v4269, 7
    %v4995 = vrot.slane %v4270, 7
    %4996 = vrot.lane.b32.xlu0 %v4988, 104
    %v4997 = vpop.permute.xlu0 %4996
    %4998 = vrot.lane.b32.xlu0 %v4989, 104
    %v4999 = vpop.permute.xlu0 %4998
    %5000 = vrot.lane.b32.xlu0 %v4990, 104
    %v5001 = vpop.permute.xlu0 %5000
    %5002 = vrot.lane.b32.xlu0 %v4991, 104
    %v5003 = vpop.permute.xlu0 %5002
    %5004 = vrot.lane.b32.xlu0 %v4992, 104
    %v5005 = vpop.permute.xlu0 %5004
    %5006 = vrot.lane.b32.xlu0 %v4993, 104
    %v5007 = vpop.permute.xlu0 %5006
    %5008 = vrot.lane.b32.xlu0 %v4994, 104
    %v5009 = vpop.permute.xlu0 %5008
    %5010 = vrot.lane.b32.xlu0 %v4995, 104
    %v5011 = vpop.permute.xlu0 %5010
    %v5012 = vsel %vm3210, %v4997, %v4999
    %v5013 = vsel %vm3210, %v4999, %v5001
    %v5014 = vsel %vm3210, %v5001, %v5003
    %v5015 = vsel %vm3210, %v5005, %v5007
    %v5016 = vsel %vm3210, %v5007, %v5009
    %v5017 = vsel %vm3210, %v5009, %v5011
    %5026 = vst.msk [vmem:[#allocation5 + $0x28] sm:$0xf0] %vm4978, %v5012
    %5027 = vst [vmem:[#allocation5 + $0x30] sm:$0xf0] %v5013
    %5028 = vst [vmem:[#allocation5 + $0x38] sm:$0xf0] %v5014
    %5029 = vst.msk [vmem:[#allocation5 + $0x40] sm:$0xf0] %vm4982, %v5003
    %5030 = vst.msk [vmem:[#allocation5 + $0xa0] sm:$0xf0] %vm4978, %v5015
    %5031 = vst [vmem:[#allocation5 + $0xa8] sm:$0xf0] %v5016
    %5032 = vst [vmem:[#allocation5 + $0xb0] sm:$0xf0] %v5017
    %5033 = vst.msk [vmem:[#allocation5 + $0xb8] sm:$0xf0] %vm4982, %v5011
    %v5034 = vrot.slane %v4147, 2
    %v5035 = vsel %vm1387, %v5034, %v4380
    %v5036 = vrot.slane %v4148, 2
    %v5037 = vsel %vm1387, %v5036, %v4381
    %v5038 = vrot.slane %v4149, 2
    %v5039 = vsel %vm1387, %v5038, %v4382
    %v5040 = vrot.slane %v4150, 2
    %v5041 = vsel %vm1387, %v5040, %v4383
    %v5042 = vrot.slane %v4155, 2
    %v5043 = vsel %vm1387, %v5042, %v4384
    %v5044 = vrot.slane %v4156, 2
    %v5045 = vsel %vm1387, %v5044, %v4385
    %v5046 = vrot.slane %v4157, 2
    %v5047 = vsel %vm1387, %v5046, %v4386
    %v5048 = vrot.slane %v4158, 2
    %v5049 = vsel %vm1387, %v5048, %v4387
    %5050 = vrot.lane.b32.xlu0 %v5035, 80
    %v5051 = vpop.permute.xlu0 %5050
    %5052 = vrot.lane.b32.xlu0 %v5037, 80
    %v5053 = vpop.permute.xlu0 %5052
    %5054 = vrot.lane.b32.xlu0 %v5039, 80
    %v5055 = vpop.permute.xlu0 %5054
    %5056 = vrot.lane.b32.xlu0 %v5041, 80
    %v5057 = vpop.permute.xlu0 %5056
    %5058 = vrot.lane.b32.xlu0 %v5043, 80
    %v5059 = vpop.permute.xlu0 %5058
    %5060 = vrot.lane.b32.xlu0 %v5045, 80
    %v5061 = vpop.permute.xlu0 %5060
    %5062 = vrot.lane.b32.xlu0 %v5047, 80
    %v5063 = vpop.permute.xlu0 %5062
    %5064 = vrot.lane.b32.xlu0 %v5049, 80
    %v5065 = vpop.permute.xlu0 %5064
    %v5066 = vsel %vm4589, %v5051, %v5053
    %v5067 = vsel %vm4589, %v5053, %v5055
    %v5068 = vsel %vm4589, %v5055, %v5057
    %v5069 = vsel %vm4589, %v5059, %v5061
    %v5070 = vsel %vm4589, %v5061, %v5063
    %v5071 = vsel %vm4589, %v5063, %v5065
    %vm5080 = vcmask 1048004
    %5081 = vst.msk [vmem:[#allocation4 + $0x40] sm:$0xf0] %vm5080, %v5066
    %5082 = vst [vmem:[#allocation4 + $0x48] sm:$0xf0] %v5067
    %5083 = vst [vmem:[#allocation4 + $0x50] sm:$0xf0] %v5068
    %vm5084 = vcmask 261124
    %5085 = vst.msk [vmem:[#allocation4 + $0x58] sm:$0xf0] %vm5084, %v5057
    %5086 = vst.msk [vmem:[#allocation4 + $0xb8] sm:$0xf0] %vm5080, %v5069
    %5087 = vst [vmem:[#allocation4 + $0xc0] sm:$0xf0] %v5070
    %5088 = vst [vmem:[#allocation4 + $0xc8] sm:$0xf0] %v5071
    %5089 = vst.msk [vmem:[#allocation4 + $0xd0] sm:$0xf0] %vm5084, %v5065
    %v5090 = vrot.slane %v4255, 2
    %v5091 = vsel %vm1387, %v5090, %v4414
    %v5092 = vrot.slane %v4256, 2
    %v5093 = vsel %vm1387, %v5092, %v4415
    %v5094 = vrot.slane %v4257, 2
    %v5095 = vsel %vm1387, %v5094, %v4416
    %v5096 = vrot.slane %v4258, 2
    %v5097 = vsel %vm1387, %v5096, %v4417
    %v5098 = vrot.slane %v4263, 2
    %v5099 = vsel %vm1387, %v5098, %v4418
    %v5100 = vrot.slane %v4264, 2
    %v5101 = vsel %vm1387, %v5100, %v4419
    %v5102 = vrot.slane %v4265, 2
    %v5103 = vsel %vm1387, %v5102, %v4420
    %v5104 = vrot.slane %v4266, 2
    %v5105 = vsel %vm1387, %v5104, %v4421
    %5106 = vrot.lane.b32.xlu0 %v5091, 80
    %v5107 = vpop.permute.xlu0 %5106
    %5108 = vrot.lane.b32.xlu0 %v5093, 80
    %v5109 = vpop.permute.xlu0 %5108
    %5110 = vrot.lane.b32.xlu0 %v5095, 80
    %v5111 = vpop.permute.xlu0 %5110
    %5112 = vrot.lane.b32.xlu0 %v5097, 80
    %v5113 = vpop.permute.xlu0 %5112
    %5114 = vrot.lane.b32.xlu0 %v5099, 80
    %v5115 = vpop.permute.xlu0 %5114
    %5116 = vrot.lane.b32.xlu0 %v5101, 80
    %v5117 = vpop.permute.xlu0 %5116
    %5118 = vrot.lane.b32.xlu0 %v5103, 80
    %v5119 = vpop.permute.xlu0 %5118
    %5120 = vrot.lane.b32.xlu0 %v5105, 80
    %v5121 = vpop.permute.xlu0 %5120
    %v5122 = vsel %vm4589, %v5107, %v5109
    %v5123 = vsel %vm4589, %v5109, %v5111
    %v5124 = vsel %vm4589, %v5111, %v5113
    %v5125 = vsel %vm4589, %v5115, %v5117
    %v5126 = vsel %vm4589, %v5117, %v5119
    %v5127 = vsel %vm4589, %v5119, %v5121
    %5136 = vst.msk [vmem:[#allocation5 + $0x40] sm:$0xf0] %vm5080, %v5122
    %5137 = vst [vmem:[#allocation5 + $0x48] sm:$0xf0] %v5123
    %5138 = vst [vmem:[#allocation5 + $0x50] sm:$0xf0] %v5124
    %5139 = vst.msk [vmem:[#allocation5 + $0x58] sm:$0xf0] %vm5084, %v5113
    %5140 = vst.msk [vmem:[#allocation5 + $0xb8] sm:$0xf0] %vm5080, %v5125
    %5141 = vst [vmem:[#allocation5 + $0xc0] sm:$0xf0] %v5126
    %5142 = vst [vmem:[#allocation5 + $0xc8] sm:$0xf0] %v5127
    %5143 = vst.msk [vmem:[#allocation5 + $0xd0] sm:$0xf0] %vm5084, %v5121
    %5144 = vrot.lane.b32.xlu0 %v4151, 56
    %v5145 = vpop.permute.xlu0 %5144
    %5146 = vrot.lane.b32.xlu0 %v4152, 56
    %v5147 = vpop.permute.xlu0 %5146
    %5148 = vrot.lane.b32.xlu0 %v4153, 56
    %v5149 = vpop.permute.xlu0 %5148
    %5150 = vrot.lane.b32.xlu0 %v4154, 56
    %v5151 = vpop.permute.xlu0 %5150
    %5152 = vrot.lane.b32.xlu0 %v4159, 56
    %v5153 = vpop.permute.xlu0 %5152
    %5154 = vrot.lane.b32.xlu0 %v4160, 56
    %v5155 = vpop.permute.xlu0 %5154
    %5156 = vrot.lane.b32.xlu0 %v4161, 56
    %v5157 = vpop.permute.xlu0 %5156
    %5158 = vrot.lane.b32.xlu0 %v4162, 56
    %v5159 = vpop.permute.xlu0 %5158
    %v5160 = vsel %vm4701, %v5145, %v5147
    %v5161 = vsel %vm4701, %v5147, %v5149
    %v5162 = vsel %vm4701, %v5149, %v5151
    %v5163 = vsel %vm4701, %v5153, %v5155
    %v5164 = vsel %vm4701, %v5155, %v5157
    %v5165 = vsel %vm4701, %v5157, %v5159
    %vm5174 = vcmask 1047812
    %5175 = vst.msk [vmem:[#allocation4 + $0x58] sm:$0xf0] %vm5174, %v5160
    %5176 = vst [vmem:[#allocation4 + $0x60] sm:$0xf0] %v5161
    %5177 = vst [vmem:[#allocation4 + $0x68] sm:$0xf0] %v5162
    %vm5178 = vcmask 64516
    %5179 = vst.msk [vmem:[#allocation4 + $0x70] sm:$0xf0] %vm5178, %v5151
    %5180 = vst.msk [vmem:[#allocation4 + $0xd0] sm:$0xf0] %vm5174, %v5163
    %5181 = vst [vmem:[#allocation4 + $0xd8] sm:$0xf0] %v5164
    %5182 = vst [vmem:[#allocation4 + $0xe0] sm:$0xf0] %v5165
    %5183 = vst.msk [vmem:[#allocation4 + $0xe8] sm:$0xf0] %vm5178, %v5159
    %5184 = vrot.lane.b32.xlu0 %v4259, 56
    %v5185 = vpop.permute.xlu0 %5184
    %5186 = vrot.lane.b32.xlu0 %v4260, 56
    %v5187 = vpop.permute.xlu0 %5186
    %5188 = vrot.lane.b32.xlu0 %v4261, 56
    %v5189 = vpop.permute.xlu0 %5188
    %5190 = vrot.lane.b32.xlu0 %v4262, 56
    %v5191 = vpop.permute.xlu0 %5190
    %5192 = vrot.lane.b32.xlu0 %v4267, 56
    %v5193 = vpop.permute.xlu0 %5192
    %5194 = vrot.lane.b32.xlu0 %v4268, 56
    %v5195 = vpop.permute.xlu0 %5194
    %5196 = vrot.lane.b32.xlu0 %v4269, 56
    %v5197 = vpop.permute.xlu0 %5196
    %5198 = vrot.lane.b32.xlu0 %v4270, 56
    %v5199 = vpop.permute.xlu0 %5198
    %v5200 = vsel %vm4701, %v5185, %v5187
    %v5201 = vsel %vm4701, %v5187, %v5189
    %v5202 = vsel %vm4701, %v5189, %v5191
    %v5203 = vsel %vm4701, %v5193, %v5195
    %v5204 = vsel %vm4701, %v5195, %v5197
    %v5205 = vsel %vm4701, %v5197, %v5199
    %5214 = vst.msk [vmem:[#allocation5 + $0x58] sm:$0xf0] %vm5174, %v5200
    %5215 = vst [vmem:[#allocation5 + $0x60] sm:$0xf0] %v5201
    %5216 = vst [vmem:[#allocation5 + $0x68] sm:$0xf0] %v5202
    %5217 = vst.msk [vmem:[#allocation5 + $0x70] sm:$0xf0] %vm5178, %v5191
    %5218 = vst.msk [vmem:[#allocation5 + $0xd0] sm:$0xf0] %vm5174, %v5203
    %5219 = vst [vmem:[#allocation5 + $0xd8] sm:$0xf0] %v5204
    %5220 = vst [vmem:[#allocation5 + $0xe0] sm:$0xf0] %v5205
    %5221 = vst.msk [vmem:[#allocation5 + $0xe8] sm:$0xf0] %vm5178, %v5199
    %v5222 = vld [vmem:[#allocation4] sm:$0xff]
    %v5223 = vld [vmem:[#allocation4 + $0x8] sm:$0xff]
    %v5224 = vld [vmem:[#allocation4 + $0x10] sm:$0xff]
    %v5225 = vld [vmem:[#allocation4 + $0x18] sm:$0xff]
    %v5226 = vld [vmem:[#allocation4 + $0x20] sm:$0xff]
    %v5227 = vld [vmem:[#allocation4 + $0x28] sm:$0xff]
    %v5228 = vld [vmem:[#allocation4 + $0x30] sm:$0xff]
    %v5229 = vld [vmem:[#allocation4 + $0x38] sm:$0xff]
    %v5230 = vld [vmem:[#allocation4 + $0x40] sm:$0xff]
    %v5231 = vld [vmem:[#allocation4 + $0x48] sm:$0xff]
    %v5232 = vld [vmem:[#allocation4 + $0x50] sm:$0xff]
    %v5233 = vld [vmem:[#allocation4 + $0x58] sm:$0xff]
    %v5234 = vld [vmem:[#allocation4 + $0x60] sm:$0xff]
    %v5235 = vld [vmem:[#allocation4 + $0x68] sm:$0xff]
    %v5236 = vld [vmem:[#allocation4 + $0x70] sm:$0xff]
    %v5237 = vld [vmem:[#allocation4 + $0x78] sm:$0xff]
    %v5238 = vld [vmem:[#allocation4 + $0x80] sm:$0xff]
    %v5239 = vld [vmem:[#allocation4 + $0x88] sm:$0xff]
    %v5240 = vld [vmem:[#allocation4 + $0x90] sm:$0xff]
    %v5241 = vld [vmem:[#allocation4 + $0x98] sm:$0xff]
    %v5242 = vld [vmem:[#allocation4 + $0xa0] sm:$0xff]
    %v5243 = vld [vmem:[#allocation4 + $0xa8] sm:$0xff]
    %v5244 = vld [vmem:[#allocation4 + $0xb0] sm:$0xff]
    %v5245 = vld [vmem:[#allocation4 + $0xb8] sm:$0xff]
    %v5246 = vld [vmem:[#allocation4 + $0xc0] sm:$0xff]
    %v5247 = vld [vmem:[#allocation4 + $0xc8] sm:$0xff]
    %v5248 = vld [vmem:[#allocation4 + $0xd0] sm:$0xff]
    %v5249 = vld [vmem:[#allocation4 + $0xd8] sm:$0xff]
    %v5250 = vld [vmem:[#allocation4 + $0xe0] sm:$0xff]
    %v5251 = vld [vmem:[#allocation4 + $0xe8] sm:$0xff]
    %v5252 = vpack.c.bf16 %v5237, %v5222
    %v5253 = vpack.c.bf16 %v5238, %v5223
    %v5254 = vpack.c.bf16 %v5239, %v5224
    %v5255 = vpack.c.bf16 %v5240, %v5225
    %v5256 = vpack.c.bf16 %v5241, %v5226
    %v5257 = vpack.c.bf16 %v5242, %v5227
    %v5258 = vpack.c.bf16 %v5243, %v5228
    %v5259 = vpack.c.bf16 %v5244, %v5229
    %v5260 = vpack.c.bf16 %v5245, %v5230
    %v5261 = vpack.c.bf16 %v5246, %v5231
    %v5262 = vpack.c.bf16 %v5247, %v5232
    %v5263 = vpack.c.bf16 %v5248, %v5233
    %v5264 = vpack.c.bf16 %v5249, %v5234
    %v5265 = vpack.c.bf16 %v5250, %v5235
    %v5266 = vpack.c.bf16 %v5251, %v5236
    %v5267 = vld [vmem:[#allocation5] sm:$0xff]
    %v5268 = vld [vmem:[#allocation5 + $0x8] sm:$0xff]
    %v5269 = vld [vmem:[#allocation5 + $0x10] sm:$0xff]
    %v5270 = vld [vmem:[#allocation5 + $0x18] sm:$0xff]
    %v5271 = vld [vmem:[#allocation5 + $0x20] sm:$0xff]
    %v5272 = vld [vmem:[#allocation5 + $0x28] sm:$0xff]
    %v5273 = vld [vmem:[#allocation5 + $0x30] sm:$0xff]
    %v5274 = vld [vmem:[#allocation5 + $0x38] sm:$0xff]
    %v5275 = vld [vmem:[#allocation5 + $0x40] sm:$0xff]
    %v5276 = vld [vmem:[#allocation5 + $0x48] sm:$0xff]
    %v5277 = vld [vmem:[#allocation5 + $0x50] sm:$0xff]
    %v5278 = vld [vmem:[#allocation5 + $0x58] sm:$0xff]
    %v5279 = vld [vmem:[#allocation5 + $0x60] sm:$0xff]
    %v5280 = vld [vmem:[#allocation5 + $0x68] sm:$0xff]
    %v5281 = vld [vmem:[#allocation5 + $0x70] sm:$0xff]
    %v5282 = vld [vmem:[#allocation5 + $0x78] sm:$0xff]
    %v5283 = vld [vmem:[#allocation5 + $0x80] sm:$0xff]
    %v5284 = vld [vmem:[#allocation5 + $0x88] sm:$0xff]
    %v5285 = vld [vmem:[#allocation5 + $0x90] sm:$0xff]
    %v5286 = vld [vmem:[#allocation5 + $0x98] sm:$0xff]
    %v5287 = vld [vmem:[#allocation5 + $0xa0] sm:$0xff]
    %v5288 = vld [vmem:[#allocation5 + $0xa8] sm:$0xff]
    %v5289 = vld [vmem:[#allocation5 + $0xb0] sm:$0xff]
    %v5290 = vld [vmem:[#allocation5 + $0xb8] sm:$0xff]
    %v5291 = vld [vmem:[#allocation5 + $0xc0] sm:$0xff]
    %v5292 = vld [vmem:[#allocation5 + $0xc8] sm:$0xff]
    %v5293 = vld [vmem:[#allocation5 + $0xd0] sm:$0xff]
    %v5294 = vld [vmem:[#allocation5 + $0xd8] sm:$0xff]
    %v5295 = vld [vmem:[#allocation5 + $0xe0] sm:$0xff]
    %v5296 = vld [vmem:[#allocation5 + $0xe8] sm:$0xff]
    %v5297 = vpack.c.bf16 %v5282, %v5267
    %v5298 = vpack.c.bf16 %v5283, %v5268
    %v5299 = vpack.c.bf16 %v5284, %v5269
    %v5300 = vpack.c.bf16 %v5285, %v5270
    %v5301 = vpack.c.bf16 %v5286, %v5271
    %v5302 = vpack.c.bf16 %v5287, %v5272
    %v5303 = vpack.c.bf16 %v5288, %v5273
    %v5304 = vpack.c.bf16 %v5289, %v5274
    %v5305 = vpack.c.bf16 %v5290, %v5275
    %v5306 = vpack.c.bf16 %v5291, %v5276
    %v5307 = vpack.c.bf16 %v5292, %v5277
    %v5308 = vpack.c.bf16 %v5293, %v5278
    %v5309 = vpack.c.bf16 %v5294, %v5279
    %v5310 = vpack.c.bf16 %v5295, %v5280
    %v5311 = vpack.c.bf16 %v5296, %v5281
    %v5312 = vld [vmem:[#allocation13] sm:$0xff]
    %v5313 = vld [vmem:[#allocation13 + $0x8] sm:$0xff]
    %v5314 = vld [vmem:[#allocation13 + $0x10] sm:$0xff]
    %v5315 = vld [vmem:[#allocation13 + $0x18] sm:$0xff]
    %v5316 = vld [vmem:[#allocation13 + $0x20] sm:$0xff]
    %v5317 = vld [vmem:[#allocation13 + $0x28] sm:$0xff]
    %v5318 = vld [vmem:[#allocation13 + $0x30] sm:$0xff]
    %v5319 = vld [vmem:[#allocation13 + $0x38] sm:$0xff]
    %v5320 = vld [vmem:[#allocation13 + $0x40] sm:$0xff]
    %v5321 = vld [vmem:[#allocation13 + $0x48] sm:$0xff]
    %v5322 = vld [vmem:[#allocation13 + $0x50] sm:$0xff]
    %v5323 = vld [vmem:[#allocation13 + $0x58] sm:$0xff]
    %v5324 = vld [vmem:[#allocation13 + $0x60] sm:$0xff]
    %v5325 = vld [vmem:[#allocation13 + $0x68] sm:$0xff]
    %v5326 = vld [vmem:[#allocation13 + $0x70] sm:$0xff]
    %v5327 = vld [vmem:[#allocation13 + $0x78] sm:$0xff]
    %v5328 = vld [vmem:[#allocation13 + $0x80] sm:$0xff]
    %v5329 = vld [vmem:[#allocation13 + $0x88] sm:$0xff]
    %v5330 = vld [vmem:[#allocation13 + $0x90] sm:$0xff]
    %v5331 = vld [vmem:[#allocation13 + $0x98] sm:$0xff]
    %v5332 = vld [vmem:[#allocation13 + $0xa0] sm:$0xff]
    %v5333 = vld [vmem:[#allocation13 + $0xa8] sm:$0xff]
    %v5334 = vld [vmem:[#allocation13 + $0xb0] sm:$0xff]
    %v5335 = vld [vmem:[#allocation13 + $0xb8] sm:$0xff]
    %v5336 = vld [vmem:[#allocation13 + $0xc0] sm:$0xff]
    %v5337 = vld [vmem:[#allocation13 + $0xc8] sm:$0xff]
    %v5338 = vld [vmem:[#allocation13 + $0xd0] sm:$0xff]
    %v5339 = vld [vmem:[#allocation13 + $0xd8] sm:$0xff]
    %v5340 = vld [vmem:[#allocation13 + $0xe0] sm:$0xff]
    %v5341 = vld [vmem:[#allocation13 + $0xe8] sm:$0xff]
    %v5342 = vld [vmem:[#allocation13 + $0xf0] sm:$0xff]
    %v5343 = vld [vmem:[#allocation13 + $0xf8] sm:$0xff]
    %v5344 = vld [vmem:[#allocation13 + $0x100] sm:$0xff]
    %v5345 = vld [vmem:[#allocation13 + $0x108] sm:$0xff]
    %v5346 = vld [vmem:[#allocation13 + $0x110] sm:$0xff]
    %v5347 = vld [vmem:[#allocation13 + $0x118] sm:$0xff]
    %v5348 = vld [vmem:[#allocation13 + $0x120] sm:$0xff]
    %v5349 = vld [vmem:[#allocation13 + $0x128] sm:$0xff]
    %v5350 = vld [vmem:[#allocation13 + $0x130] sm:$0xff]
    %v5351 = vld [vmem:[#allocation13 + $0x138] sm:$0xff]
    %v5352 = vld [vmem:[#allocation13 + $0x140] sm:$0xff]
    %v5353 = vld [vmem:[#allocation13 + $0x148] sm:$0xff]
    %v5354 = vld [vmem:[#allocation13 + $0x150] sm:$0xff]
    %v5355 = vld [vmem:[#allocation13 + $0x158] sm:$0xff]
    %v5356 = vld [vmem:[#allocation13 + $0x160] sm:$0xff]
    %v5357 = vld [vmem:[#allocation13 + $0x168] sm:$0xff]
    %v5358 = vld [vmem:[#allocation13 + $0x170] sm:$0xff]
    %v5359 = vld [vmem:[#allocation13 + $0x178] sm:$0xff]
    %v5360 = vld [vmem:[#allocation13 + $0x180] sm:$0xff]
    %v5361 = vld [vmem:[#allocation13 + $0x188] sm:$0xff]
    %v5362 = vld [vmem:[#allocation13 + $0x190] sm:$0xff]
    %v5363 = vld [vmem:[#allocation13 + $0x198] sm:$0xff]
    %v5364 = vld [vmem:[#allocation13 + $0x1a0] sm:$0xff]
    %v5365 = vld [vmem:[#allocation13 + $0x1a8] sm:$0xff]
    %v5366 = vld [vmem:[#allocation13 + $0x1b0] sm:$0xff]
    %v5367 = vld [vmem:[#allocation13 + $0x1b8] sm:$0xff]
    %v5368 = vld [vmem:[#allocation13 + $0x1c0] sm:$0xff]
    %v5369 = vld [vmem:[#allocation13 + $0x1c8] sm:$0xff]
    %v5370 = vld [vmem:[#allocation13 + $0x1d0] sm:$0xff]
    %v5371 = vld [vmem:[#allocation13 + $0x1d8] sm:$0xff]
    %v5372 = vld [vmem:[#allocation13 + $0x1e0] sm:$0xff]
    %v5373 = vld [vmem:[#allocation13 + $0x1e8] sm:$0xff]
    %v5374 = vld [vmem:[#allocation13 + $0x1f0] sm:$0xff]
    %v5375 = vld [vmem:[#allocation13 + $0x1f8] sm:$0xff]
    %v5376 = vld [vmem:[#allocation13 + $0x200] sm:$0xff]
    %v5377 = vld [vmem:[#allocation13 + $0x208] sm:$0xff]
    %v5378 = vld [vmem:[#allocation13 + $0x210] sm:$0xff]
    %v5379 = vld [vmem:[#allocation13 + $0x218] sm:$0xff]
    %v5380 = vld [vmem:[#allocation13 + $0x220] sm:$0xff]
    %v5381 = vld [vmem:[#allocation13 + $0x228] sm:$0xff]
    %v5382 = vld [vmem:[#allocation13 + $0x230] sm:$0xff]
    %v5383 = vld [vmem:[#allocation13 + $0x238] sm:$0xff]
    %v5384 = vld [vmem:[#allocation13 + $0x240] sm:$0xff]
    %v5385 = vld [vmem:[#allocation13 + $0x248] sm:$0xff]
    %v5386 = vld [vmem:[#allocation13 + $0x250] sm:$0xff]
    %v5387 = vld [vmem:[#allocation13 + $0x258] sm:$0xff]
    %v5388 = vld [vmem:[#allocation13 + $0x260] sm:$0xff]
    %v5389 = vld [vmem:[#allocation13 + $0x268] sm:$0xff]
    %v5390 = vld [vmem:[#allocation13 + $0x270] sm:$0xff]
    %v5391 = vld [vmem:[#allocation13 + $0x278] sm:$0xff]
    %v5392 = vld [vmem:[#allocation13 + $0x280] sm:$0xff]
    %v5393 = vld [vmem:[#allocation13 + $0x288] sm:$0xff]
    %v5394 = vld [vmem:[#allocation13 + $0x290] sm:$0xff]
    %v5395 = vld [vmem:[#allocation13 + $0x298] sm:$0xff]
    %v5396 = vld [vmem:[#allocation13 + $0x2a0] sm:$0xff]
    %v5397 = vld [vmem:[#allocation13 + $0x2a8] sm:$0xff]
    %v5398 = vld [vmem:[#allocation13 + $0x2b0] sm:$0xff]
    %v5399 = vld [vmem:[#allocation13 + $0x2b8] sm:$0xff]
    %v5400 = vld [vmem:[#allocation13 + $0x2c0] sm:$0xff]
    %v5401 = vld [vmem:[#allocation13 + $0x2c8] sm:$0xff]
    %v5402 = vld [vmem:[#allocation13 + $0x2d0] sm:$0xff]
    %v5403 = vld [vmem:[#allocation13 + $0x2d8] sm:$0xff]
    %v5404 = vld [vmem:[#allocation13 + $0x2e0] sm:$0xff]
    %v5405 = vld [vmem:[#allocation13 + $0x2e8] sm:$0xff]
    %v5406 = vld [vmem:[#allocation13 + $0x2f0] sm:$0xff]
    %v5407 = vld [vmem:[#allocation13 + $0x2f8] sm:$0xff]
    %v5408 = vld [vmem:[#allocation13 + $0x300] sm:$0xff]
    %v5409 = vld [vmem:[#allocation13 + $0x308] sm:$0xff]
    %v5410 = vld [vmem:[#allocation13 + $0x310] sm:$0xff]
    %v5411 = vld [vmem:[#allocation13 + $0x318] sm:$0xff]
    %v5412 = vld [vmem:[#allocation13 + $0x320] sm:$0xff]
    %v5413 = vld [vmem:[#allocation13 + $0x328] sm:$0xff]
    %v5414 = vld [vmem:[#allocation13 + $0x330] sm:$0xff]
    %v5415 = vld [vmem:[#allocation13 + $0x338] sm:$0xff]
    %v5416 = vld [vmem:[#allocation13 + $0x340] sm:$0xff]
    %v5417 = vld [vmem:[#allocation13 + $0x348] sm:$0xff]
    %v5418 = vld [vmem:[#allocation13 + $0x350] sm:$0xff]
    %v5419 = vld [vmem:[#allocation13 + $0x358] sm:$0xff]
    %v5420 = vld [vmem:[#allocation13 + $0x360] sm:$0xff]
    %v5421 = vld [vmem:[#allocation13 + $0x368] sm:$0xff]
    %v5422 = vld [vmem:[#allocation13 + $0x370] sm:$0xff]
    %v5423 = vld [vmem:[#allocation13 + $0x378] sm:$0xff]
    %v5424 = vld [vmem:[#allocation13 + $0x380] sm:$0xff]
    %v5425 = vld [vmem:[#allocation13 + $0x388] sm:$0xff]
    %v5426 = vld [vmem:[#allocation13 + $0x390] sm:$0xff]
    %v5427 = vld [vmem:[#allocation13 + $0x398] sm:$0xff]
    %v5428 = vld [vmem:[#allocation13 + $0x3a0] sm:$0xff]
    %v5429 = vld [vmem:[#allocation13 + $0x3a8] sm:$0xff]
    %v5430 = vld [vmem:[#allocation13 + $0x3b0] sm:$0xff]
    %v5431 = vld [vmem:[#allocation13 + $0x3b8] sm:$0xff]
    %v5432 = vld [vmem:[#allocation13 + $0x3c0] sm:$0xff]
    %v5433 = vld [vmem:[#allocation13 + $0x3c8] sm:$0xff]
    %v5434 = vld [vmem:[#allocation13 + $0x3d0] sm:$0xff]
    %v5435 = vld [vmem:[#allocation13 + $0x3d8] sm:$0xff]
    %v5436 = vld [vmem:[#allocation13 + $0x3e0] sm:$0xff]
    %v5437 = vld [vmem:[#allocation13 + $0x3e8] sm:$0xff]
    %v5438 = vld [vmem:[#allocation13 + $0x3f0] sm:$0xff]
    %v5439 = vld [vmem:[#allocation13 + $0x3f8] sm:$0xff]
    %v5440 = vld [vmem:[#allocation13 + $0x400] sm:$0xff]
    %v5441 = vld [vmem:[#allocation13 + $0x408] sm:$0xff]
    %v5442 = vld [vmem:[#allocation13 + $0x410] sm:$0xff]
    %v5443 = vld [vmem:[#allocation13 + $0x418] sm:$0xff]
    %v5444 = vld [vmem:[#allocation13 + $0x420] sm:$0xff]
    %v5445 = vld [vmem:[#allocation13 + $0x428] sm:$0xff]
    %v5446 = vld [vmem:[#allocation13 + $0x430] sm:$0xff]
    %v5447 = vld [vmem:[#allocation13 + $0x438] sm:$0xff]
    %v5448 = vld [vmem:[#allocation13 + $0x440] sm:$0xff]
    %v5449 = vld [vmem:[#allocation13 + $0x448] sm:$0xff]
    %v5450 = vld [vmem:[#allocation13 + $0x450] sm:$0xff]
    %v5451 = vld [vmem:[#allocation13 + $0x458] sm:$0xff]
    %v5452 = vld [vmem:[#allocation13 + $0x460] sm:$0xff]
    %v5453 = vld [vmem:[#allocation13 + $0x468] sm:$0xff]
    %v5454 = vld [vmem:[#allocation13 + $0x470] sm:$0xff]
    %v5455 = vld [vmem:[#allocation13 + $0x478] sm:$0xff]
    %v5456 = vld [vmem:[#allocation13 + $0x480] sm:$0xff]
    %v5457 = vld [vmem:[#allocation13 + $0x488] sm:$0xff]
    %v5458 = vld [vmem:[#allocation13 + $0x490] sm:$0xff]
    %v5459 = vld [vmem:[#allocation13 + $0x498] sm:$0xff]
    %v5460 = vld [vmem:[#allocation13 + $0x4a0] sm:$0xff]
    %v5461 = vld [vmem:[#allocation13 + $0x4a8] sm:$0xff]
    %v5462 = vld [vmem:[#allocation13 + $0x4b0] sm:$0xff]
    %v5463 = vld [vmem:[#allocation13 + $0x4b8] sm:$0xff]
    %v5464 = vld [vmem:[#allocation13 + $0x4c0] sm:$0xff]
    %v5465 = vld [vmem:[#allocation13 + $0x4c8] sm:$0xff]
    %v5466 = vld [vmem:[#allocation13 + $0x4d0] sm:$0xff]
    %v5467 = vld [vmem:[#allocation13 + $0x4d8] sm:$0xff]
    %v5468 = vld [vmem:[#allocation13 + $0x4e0] sm:$0xff]
    %v5469 = vld [vmem:[#allocation13 + $0x4e8] sm:$0xff]
    %v5470 = vld [vmem:[#allocation13 + $0x4f0] sm:$0xff]
    %v5471 = vld [vmem:[#allocation13 + $0x4f8] sm:$0xff]
    %v5472 = vld [vmem:[#allocation13 + $0x500] sm:$0xff]
    %v5473 = vld [vmem:[#allocation13 + $0x508] sm:$0xff]
    %v5474 = vld [vmem:[#allocation13 + $0x510] sm:$0xff]
    %v5475 = vld [vmem:[#allocation13 + $0x518] sm:$0xff]
    %v5476 = vld [vmem:[#allocation13 + $0x520] sm:$0xff]
    %v5477 = vld [vmem:[#allocation13 + $0x528] sm:$0xff]
    %v5478 = vld [vmem:[#allocation13 + $0x530] sm:$0xff]
    %v5479 = vld [vmem:[#allocation13 + $0x538] sm:$0xff]
    %v5480 = vld [vmem:[#allocation13 + $0x540] sm:$0xff]
    %v5481 = vld [vmem:[#allocation13 + $0x548] sm:$0xff]
    %v5482 = vld [vmem:[#allocation13 + $0x550] sm:$0xff]
    %v5483 = vld [vmem:[#allocation13 + $0x558] sm:$0xff]
    %v5484 = vld [vmem:[#allocation13 + $0x560] sm:$0xff]
    %v5485 = vld [vmem:[#allocation13 + $0x568] sm:$0xff]
    %v5486 = vld [vmem:[#allocation13 + $0x570] sm:$0xff]
    %v5487 = vld [vmem:[#allocation13 + $0x578] sm:$0xff]
    %v5488 = vld [vmem:[#allocation13 + $0x580] sm:$0xff]
    %v5489 = vld [vmem:[#allocation13 + $0x588] sm:$0xff]
    %v5490 = vld [vmem:[#allocation13 + $0x590] sm:$0xff]
    %v5491 = vld [vmem:[#allocation13 + $0x598] sm:$0xff]
    %v5492 = vld [vmem:[#allocation13 + $0x5a0] sm:$0xff]
    %v5493 = vld [vmem:[#allocation13 + $0x5a8] sm:$0xff]
    %v5494 = vld [vmem:[#allocation13 + $0x5b0] sm:$0xff]
    %v5495 = vld [vmem:[#allocation13 + $0x5b8] sm:$0xff]
    %v5496 = vld [vmem:[#allocation13 + $0x5c0] sm:$0xff]
    %v5497 = vld [vmem:[#allocation13 + $0x5c8] sm:$0xff]
    %v5498 = vld [vmem:[#allocation13 + $0x5d0] sm:$0xff]
    %v5499 = vld [vmem:[#allocation13 + $0x5d8] sm:$0xff]
    %v5500 = vld [vmem:[#allocation13 + $0x5e0] sm:$0xff]
    %v5501 = vld [vmem:[#allocation13 + $0x5e8] sm:$0xff]
    %v5502 = vld [vmem:[#allocation13 + $0x5f0] sm:$0xff]
    %v5503 = vld [vmem:[#allocation13 + $0x5f8] sm:$0xff]
    %v5504 = vld [vmem:[#allocation13 + $0x600] sm:$0xff]
    %v5505 = vld [vmem:[#allocation13 + $0x608] sm:$0xff]
    %v5506 = vld [vmem:[#allocation13 + $0x610] sm:$0xff]
    %v5507 = vld [vmem:[#allocation13 + $0x618] sm:$0xff]
    %v5508 = vld [vmem:[#allocation13 + $0x620] sm:$0xff]
    %v5509 = vld [vmem:[#allocation13 + $0x628] sm:$0xff]
    %v5510 = vld [vmem:[#allocation13 + $0x630] sm:$0xff]
    %v5511 = vld [vmem:[#allocation13 + $0x638] sm:$0xff]
    %v5512 = vld [vmem:[#allocation13 + $0x640] sm:$0xff]
    %v5513 = vld [vmem:[#allocation13 + $0x648] sm:$0xff]
    %v5514 = vld [vmem:[#allocation13 + $0x650] sm:$0xff]
    %v5515 = vld [vmem:[#allocation13 + $0x658] sm:$0xff]
    %v5516 = vld [vmem:[#allocation13 + $0x660] sm:$0xff]
    %v5517 = vld [vmem:[#allocation13 + $0x668] sm:$0xff]
    %v5518 = vld [vmem:[#allocation13 + $0x670] sm:$0xff]
    %v5519 = vld [vmem:[#allocation13 + $0x678] sm:$0xff]
    %v5520 = vld [vmem:[#allocation13 + $0x680] sm:$0xff]
    %v5521 = vld [vmem:[#allocation13 + $0x688] sm:$0xff]
    %v5522 = vld [vmem:[#allocation13 + $0x690] sm:$0xff]
    %v5523 = vld [vmem:[#allocation13 + $0x698] sm:$0xff]
    %v5524 = vld [vmem:[#allocation13 + $0x6a0] sm:$0xff]
    %v5525 = vld [vmem:[#allocation13 + $0x6a8] sm:$0xff]
    %v5526 = vld [vmem:[#allocation13 + $0x6b0] sm:$0xff]
    %v5527 = vld [vmem:[#allocation13 + $0x6b8] sm:$0xff]
    %v5528 = vld [vmem:[#allocation13 + $0x6c0] sm:$0xff]
    %v5529 = vld [vmem:[#allocation13 + $0x6c8] sm:$0xff]
    %v5530 = vld [vmem:[#allocation13 + $0x6d0] sm:$0xff]
    %v5531 = vld [vmem:[#allocation13 + $0x6d8] sm:$0xff]
    %v5532 = vld [vmem:[#allocation13 + $0x6e0] sm:$0xff]
    %v5533 = vld [vmem:[#allocation13 + $0x6e8] sm:$0xff]
    %v5534 = vld [vmem:[#allocation13 + $0x6f0] sm:$0xff]
    %v5535 = vld [vmem:[#allocation13 + $0x6f8] sm:$0xff]
    %v5536 = vld [vmem:[#allocation13 + $0x700] sm:$0xff]
    %v5537 = vld [vmem:[#allocation14] sm:$0xff]
    %v5538 = vld [vmem:[#allocation14 + $0x8] sm:$0xff]
    %v5539 = vld [vmem:[#allocation14 + $0x10] sm:$0xff]
    %v5540 = vld [vmem:[#allocation14 + $0x18] sm:$0xff]
    %v5541 = vld [vmem:[#allocation14 + $0x20] sm:$0xff]
    %v5542 = vld [vmem:[#allocation14 + $0x28] sm:$0xff]
    %v5543 = vld [vmem:[#allocation14 + $0x30] sm:$0xff]
    %v5544 = vld [vmem:[#allocation14 + $0x38] sm:$0xff]
    %v5545 = vld [vmem:[#allocation14 + $0x40] sm:$0xff]
    %v5546 = vld [vmem:[#allocation14 + $0x48] sm:$0xff]
    %v5547 = vld [vmem:[#allocation14 + $0x50] sm:$0xff]
    %v5548 = vld [vmem:[#allocation14 + $0x58] sm:$0xff]
    %v5549 = vld [vmem:[#allocation14 + $0x60] sm:$0xff]
    %v5550 = vld [vmem:[#allocation14 + $0x68] sm:$0xff]
    %v5551 = vld [vmem:[#allocation14 + $0x70] sm:$0xff]
    %v5552 = vld [vmem:[#allocation14 + $0x78] sm:$0xff]
    %v5553 = vld [vmem:[#allocation14 + $0x80] sm:$0xff]
    %v5554 = vld [vmem:[#allocation14 + $0x88] sm:$0xff]
    %v5555 = vld [vmem:[#allocation14 + $0x90] sm:$0xff]
    %v5556 = vld [vmem:[#allocation14 + $0x98] sm:$0xff]
    %v5557 = vld [vmem:[#allocation14 + $0xa0] sm:$0xff]
    %v5558 = vld [vmem:[#allocation14 + $0xa8] sm:$0xff]
    %v5559 = vld [vmem:[#allocation14 + $0xb0] sm:$0xff]
    %v5560 = vld [vmem:[#allocation14 + $0xb8] sm:$0xff]
    %v5561 = vld [vmem:[#allocation14 + $0xc0] sm:$0xff]
    %v5562 = vld [vmem:[#allocation14 + $0xc8] sm:$0xff]
    %v5563 = vld [vmem:[#allocation14 + $0xd0] sm:$0xff]
    %v5564 = vld [vmem:[#allocation14 + $0xd8] sm:$0xff]
    %v5565 = vld [vmem:[#allocation14 + $0xe0] sm:$0xff]
    %v5566 = vld [vmem:[#allocation14 + $0xe8] sm:$0xff]
    %v5567 = vld [vmem:[#allocation14 + $0xf0] sm:$0xff]
    %v5568 = vld [vmem:[#allocation14 + $0xf8] sm:$0xff]
    %v5569 = vld [vmem:[#allocation14 + $0x100] sm:$0xff]
    %v5570 = vld [vmem:[#allocation14 + $0x108] sm:$0xff]
    %v5571 = vld [vmem:[#allocation14 + $0x110] sm:$0xff]
    %v5572 = vld [vmem:[#allocation14 + $0x118] sm:$0xff]
    %v5573 = vld [vmem:[#allocation14 + $0x120] sm:$0xff]
    %v5574 = vld [vmem:[#allocation14 + $0x128] sm:$0xff]
    %v5575 = vld [vmem:[#allocation14 + $0x130] sm:$0xff]
    %v5576 = vld [vmem:[#allocation14 + $0x138] sm:$0xff]
    %v5577 = vld [vmem:[#allocation14 + $0x140] sm:$0xff]
    %v5578 = vld [vmem:[#allocation14 + $0x148] sm:$0xff]
    %v5579 = vld [vmem:[#allocation14 + $0x150] sm:$0xff]
    %v5580 = vld [vmem:[#allocation14 + $0x158] sm:$0xff]
    %v5581 = vld [vmem:[#allocation14 + $0x160] sm:$0xff]
    %v5582 = vld [vmem:[#allocation14 + $0x168] sm:$0xff]
    %v5583 = vld [vmem:[#allocation14 + $0x170] sm:$0xff]
    %v5584 = vld [vmem:[#allocation14 + $0x178] sm:$0xff]
    %v5585 = vld [vmem:[#allocation14 + $0x180] sm:$0xff]
    %v5586 = vld [vmem:[#allocation14 + $0x188] sm:$0xff]
    %v5587 = vld [vmem:[#allocation14 + $0x190] sm:$0xff]
    %v5588 = vld [vmem:[#allocation14 + $0x198] sm:$0xff]
    %v5589 = vld [vmem:[#allocation14 + $0x1a0] sm:$0xff]
    %v5590 = vld [vmem:[#allocation14 + $0x1a8] sm:$0xff]
    %v5591 = vld [vmem:[#allocation14 + $0x1b0] sm:$0xff]
    %v5592 = vld [vmem:[#allocation14 + $0x1b8] sm:$0xff]
    %v5593 = vld [vmem:[#allocation14 + $0x1c0] sm:$0xff]
    %v5594 = vld [vmem:[#allocation14 + $0x1c8] sm:$0xff]
    %v5595 = vld [vmem:[#allocation14 + $0x1d0] sm:$0xff]
    %v5596 = vld [vmem:[#allocation14 + $0x1d8] sm:$0xff]
    %v5597 = vld [vmem:[#allocation14 + $0x1e0] sm:$0xff]
    %v5598 = vld [vmem:[#allocation14 + $0x1e8] sm:$0xff]
    %v5599 = vld [vmem:[#allocation14 + $0x1f0] sm:$0xff]
    %v5600 = vld [vmem:[#allocation14 + $0x1f8] sm:$0xff]
    %v5601 = vld [vmem:[#allocation14 + $0x200] sm:$0xff]
    %v5602 = vld [vmem:[#allocation14 + $0x208] sm:$0xff]
    %v5603 = vld [vmem:[#allocation14 + $0x210] sm:$0xff]
    %v5604 = vld [vmem:[#allocation14 + $0x218] sm:$0xff]
    %v5605 = vld [vmem:[#allocation14 + $0x220] sm:$0xff]
    %v5606 = vld [vmem:[#allocation14 + $0x228] sm:$0xff]
    %v5607 = vld [vmem:[#allocation14 + $0x230] sm:$0xff]
    %v5608 = vld [vmem:[#allocation14 + $0x238] sm:$0xff]
    %v5609 = vld [vmem:[#allocation14 + $0x240] sm:$0xff]
    %v5610 = vld [vmem:[#allocation14 + $0x248] sm:$0xff]
    %v5611 = vld [vmem:[#allocation14 + $0x250] sm:$0xff]
    %v5612 = vld [vmem:[#allocation14 + $0x258] sm:$0xff]
    %v5613 = vld [vmem:[#allocation14 + $0x260] sm:$0xff]
    %v5614 = vld [vmem:[#allocation14 + $0x268] sm:$0xff]
    %v5615 = vld [vmem:[#allocation14 + $0x270] sm:$0xff]
    %v5616 = vld [vmem:[#allocation14 + $0x278] sm:$0xff]
    %v5617 = vld [vmem:[#allocation14 + $0x280] sm:$0xff]
    %v5618 = vld [vmem:[#allocation14 + $0x288] sm:$0xff]
    %v5619 = vld [vmem:[#allocation14 + $0x290] sm:$0xff]
    %v5620 = vld [vmem:[#allocation14 + $0x298] sm:$0xff]
    %v5621 = vld [vmem:[#allocation14 + $0x2a0] sm:$0xff]
    %v5622 = vld [vmem:[#allocation14 + $0x2a8] sm:$0xff]
    %v5623 = vld [vmem:[#allocation14 + $0x2b0] sm:$0xff]
    %v5624 = vld [vmem:[#allocation14 + $0x2b8] sm:$0xff]
    %v5625 = vld [vmem:[#allocation14 + $0x2c0] sm:$0xff]
    %v5626 = vld [vmem:[#allocation14 + $0x2c8] sm:$0xff]
    %v5627 = vld [vmem:[#allocation14 + $0x2d0] sm:$0xff]
    %v5628 = vld [vmem:[#allocation14 + $0x2d8] sm:$0xff]
    %v5629 = vld [vmem:[#allocation14 + $0x2e0] sm:$0xff]
    %v5630 = vld [vmem:[#allocation14 + $0x2e8] sm:$0xff]
    %v5631 = vld [vmem:[#allocation14 + $0x2f0] sm:$0xff]
    %v5632 = vld [vmem:[#allocation14 + $0x2f8] sm:$0xff]
    %v5633 = vld [vmem:[#allocation14 + $0x300] sm:$0xff]
    %v5634 = vld [vmem:[#allocation14 + $0x308] sm:$0xff]
    %v5635 = vld [vmem:[#allocation14 + $0x310] sm:$0xff]
    %v5636 = vld [vmem:[#allocation14 + $0x318] sm:$0xff]
    %v5637 = vld [vmem:[#allocation14 + $0x320] sm:$0xff]
    %v5638 = vld [vmem:[#allocation14 + $0x328] sm:$0xff]
    %v5639 = vld [vmem:[#allocation14 + $0x330] sm:$0xff]
    %v5640 = vld [vmem:[#allocation14 + $0x338] sm:$0xff]
    %v5641 = vld [vmem:[#allocation14 + $0x340] sm:$0xff]
    %v5642 = vld [vmem:[#allocation14 + $0x348] sm:$0xff]
    %v5643 = vld [vmem:[#allocation14 + $0x350] sm:$0xff]
    %v5644 = vld [vmem:[#allocation14 + $0x358] sm:$0xff]
    %v5645 = vld [vmem:[#allocation14 + $0x360] sm:$0xff]
    %v5646 = vld [vmem:[#allocation14 + $0x368] sm:$0xff]
    %v5647 = vld [vmem:[#allocation14 + $0x370] sm:$0xff]
    %v5648 = vld [vmem:[#allocation14 + $0x378] sm:$0xff]
    %v5649 = vld [vmem:[#allocation14 + $0x380] sm:$0xff]
    %v5650 = vld [vmem:[#allocation14 + $0x388] sm:$0xff]
    %v5651 = vld [vmem:[#allocation14 + $0x390] sm:$0xff]
    %v5652 = vld [vmem:[#allocation14 + $0x398] sm:$0xff]
    %v5653 = vld [vmem:[#allocation14 + $0x3a0] sm:$0xff]
    %v5654 = vld [vmem:[#allocation14 + $0x3a8] sm:$0xff]
    %v5655 = vld [vmem:[#allocation14 + $0x3b0] sm:$0xff]
    %v5656 = vld [vmem:[#allocation14 + $0x3b8] sm:$0xff]
    %v5657 = vld [vmem:[#allocation14 + $0x3c0] sm:$0xff]
    %v5658 = vld [vmem:[#allocation14 + $0x3c8] sm:$0xff]
    %v5659 = vld [vmem:[#allocation14 + $0x3d0] sm:$0xff]
    %v5660 = vld [vmem:[#allocation14 + $0x3d8] sm:$0xff]
    %v5661 = vld [vmem:[#allocation14 + $0x3e0] sm:$0xff]
    %v5662 = vld [vmem:[#allocation14 + $0x3e8] sm:$0xff]
    %v5663 = vld [vmem:[#allocation14 + $0x3f0] sm:$0xff]
    %v5664 = vld [vmem:[#allocation14 + $0x3f8] sm:$0xff]
    %v5665 = vld [vmem:[#allocation14 + $0x400] sm:$0xff]
    %v5666 = vld [vmem:[#allocation14 + $0x408] sm:$0xff]
    %v5667 = vld [vmem:[#allocation14 + $0x410] sm:$0xff]
    %v5668 = vld [vmem:[#allocation14 + $0x418] sm:$0xff]
    %v5669 = vld [vmem:[#allocation14 + $0x420] sm:$0xff]
    %v5670 = vld [vmem:[#allocation14 + $0x428] sm:$0xff]
    %v5671 = vld [vmem:[#allocation14 + $0x430] sm:$0xff]
    %v5672 = vld [vmem:[#allocation14 + $0x438] sm:$0xff]
    %v5673 = vld [vmem:[#allocation14 + $0x440] sm:$0xff]
    %v5674 = vld [vmem:[#allocation14 + $0x448] sm:$0xff]
    %v5675 = vld [vmem:[#allocation14 + $0x450] sm:$0xff]
    %v5676 = vld [vmem:[#allocation14 + $0x458] sm:$0xff]
    %v5677 = vld [vmem:[#allocation14 + $0x460] sm:$0xff]
    %v5678 = vld [vmem:[#allocation14 + $0x468] sm:$0xff]
    %v5679 = vld [vmem:[#allocation14 + $0x470] sm:$0xff]
    %v5680 = vld [vmem:[#allocation14 + $0x478] sm:$0xff]
    %v5681 = vld [vmem:[#allocation14 + $0x480] sm:$0xff]
    %v5682 = vld [vmem:[#allocation14 + $0x488] sm:$0xff]
    %v5683 = vld [vmem:[#allocation14 + $0x490] sm:$0xff]
    %v5684 = vld [vmem:[#allocation14 + $0x498] sm:$0xff]
    %v5685 = vld [vmem:[#allocation14 + $0x4a0] sm:$0xff]
    %v5686 = vld [vmem:[#allocation14 + $0x4a8] sm:$0xff]
    %v5687 = vld [vmem:[#allocation14 + $0x4b0] sm:$0xff]
    %v5688 = vld [vmem:[#allocation14 + $0x4b8] sm:$0xff]
    %v5689 = vld [vmem:[#allocation14 + $0x4c0] sm:$0xff]
    %v5690 = vld [vmem:[#allocation14 + $0x4c8] sm:$0xff]
    %v5691 = vld [vmem:[#allocation14 + $0x4d0] sm:$0xff]
    %v5692 = vld [vmem:[#allocation14 + $0x4d8] sm:$0xff]
    %v5693 = vld [vmem:[#allocation14 + $0x4e0] sm:$0xff]
    %v5694 = vld [vmem:[#allocation14 + $0x4e8] sm:$0xff]
    %v5695 = vld [vmem:[#allocation14 + $0x4f0] sm:$0xff]
    %v5696 = vld [vmem:[#allocation14 + $0x4f8] sm:$0xff]
    %v5697 = vld [vmem:[#allocation14 + $0x500] sm:$0xff]
    %v5698 = vld [vmem:[#allocation14 + $0x508] sm:$0xff]
    %v5699 = vld [vmem:[#allocation14 + $0x510] sm:$0xff]
    %v5700 = vld [vmem:[#allocation14 + $0x518] sm:$0xff]
    %v5701 = vld [vmem:[#allocation14 + $0x520] sm:$0xff]
    %v5702 = vld [vmem:[#allocation14 + $0x528] sm:$0xff]
    %v5703 = vld [vmem:[#allocation14 + $0x530] sm:$0xff]
    %v5704 = vld [vmem:[#allocation14 + $0x538] sm:$0xff]
    %v5705 = vld [vmem:[#allocation14 + $0x540] sm:$0xff]
    %v5706 = vld [vmem:[#allocation14 + $0x548] sm:$0xff]
    %v5707 = vld [vmem:[#allocation14 + $0x550] sm:$0xff]
    %v5708 = vld [vmem:[#allocation14 + $0x558] sm:$0xff]
    %v5709 = vld [vmem:[#allocation14 + $0x560] sm:$0xff]
    %v5710 = vld [vmem:[#allocation14 + $0x568] sm:$0xff]
    %v5711 = vld [vmem:[#allocation14 + $0x570] sm:$0xff]
    %v5712 = vld [vmem:[#allocation14 + $0x578] sm:$0xff]
    %v5713 = vld [vmem:[#allocation14 + $0x580] sm:$0xff]
    %v5714 = vld [vmem:[#allocation14 + $0x588] sm:$0xff]
    %v5715 = vld [vmem:[#allocation14 + $0x590] sm:$0xff]
    %v5716 = vld [vmem:[#allocation14 + $0x598] sm:$0xff]
    %v5717 = vld [vmem:[#allocation14 + $0x5a0] sm:$0xff]
    %v5718 = vld [vmem:[#allocation14 + $0x5a8] sm:$0xff]
    %v5719 = vld [vmem:[#allocation14 + $0x5b0] sm:$0xff]
    %v5720 = vld [vmem:[#allocation14 + $0x5b8] sm:$0xff]
    %v5721 = vld [vmem:[#allocation14 + $0x5c0] sm:$0xff]
    %v5722 = vld [vmem:[#allocation14 + $0x5c8] sm:$0xff]
    %v5723 = vld [vmem:[#allocation14 + $0x5d0] sm:$0xff]
    %v5724 = vld [vmem:[#allocation14 + $0x5d8] sm:$0xff]
    %v5725 = vld [vmem:[#allocation14 + $0x5e0] sm:$0xff]
    %v5726 = vld [vmem:[#allocation14 + $0x5e8] sm:$0xff]
    %v5727 = vld [vmem:[#allocation14 + $0x5f0] sm:$0xff]
    %v5728 = vld [vmem:[#allocation14 + $0x5f8] sm:$0xff]
    %v5729 = vld [vmem:[#allocation14 + $0x600] sm:$0xff]
    %v5730 = vld [vmem:[#allocation14 + $0x608] sm:$0xff]
    %v5731 = vld [vmem:[#allocation14 + $0x610] sm:$0xff]
    %v5732 = vld [vmem:[#allocation14 + $0x618] sm:$0xff]
    %v5733 = vld [vmem:[#allocation14 + $0x620] sm:$0xff]
    %v5734 = vld [vmem:[#allocation14 + $0x628] sm:$0xff]
    %v5735 = vld [vmem:[#allocation14 + $0x630] sm:$0xff]
    %v5736 = vld [vmem:[#allocation14 + $0x638] sm:$0xff]
    %v5737 = vld [vmem:[#allocation14 + $0x640] sm:$0xff]
    %v5738 = vld [vmem:[#allocation14 + $0x648] sm:$0xff]
    %v5739 = vld [vmem:[#allocation14 + $0x650] sm:$0xff]
    %v5740 = vld [vmem:[#allocation14 + $0x658] sm:$0xff]
    %v5741 = vld [vmem:[#allocation14 + $0x660] sm:$0xff]
    %v5742 = vld [vmem:[#allocation14 + $0x668] sm:$0xff]
    %v5743 = vld [vmem:[#allocation14 + $0x670] sm:$0xff]
    %v5744 = vld [vmem:[#allocation14 + $0x678] sm:$0xff]
    %v5745 = vld [vmem:[#allocation14 + $0x680] sm:$0xff]
    %v5746 = vld [vmem:[#allocation14 + $0x688] sm:$0xff]
    %v5747 = vld [vmem:[#allocation14 + $0x690] sm:$0xff]
    %v5748 = vld [vmem:[#allocation14 + $0x698] sm:$0xff]
    %v5749 = vld [vmem:[#allocation14 + $0x6a0] sm:$0xff]
    %v5750 = vld [vmem:[#allocation14 + $0x6a8] sm:$0xff]
    %v5751 = vld [vmem:[#allocation14 + $0x6b0] sm:$0xff]
    %v5752 = vld [vmem:[#allocation14 + $0x6b8] sm:$0xff]
    %v5753 = vld [vmem:[#allocation14 + $0x6c0] sm:$0xff]
    %v5754 = vld [vmem:[#allocation14 + $0x6c8] sm:$0xff]
    %v5755 = vld [vmem:[#allocation14 + $0x6d0] sm:$0xff]
    %v5756 = vld [vmem:[#allocation14 + $0x6d8] sm:$0xff]
    %v5757 = vld [vmem:[#allocation14 + $0x6e0] sm:$0xff]
    %v5758 = vld [vmem:[#allocation14 + $0x6e8] sm:$0xff]
    %v5759 = vld [vmem:[#allocation14 + $0x6f0] sm:$0xff]
    %v5760 = vld [vmem:[#allocation14 + $0x6f8] sm:$0xff]
    %v5761 = vld [vmem:[#allocation14 + $0x700] sm:$0xff]
    %v5987 = vunpack.c.l.b16 %v5537
    %v5988 = vunpack.c.h.b16 %v5537
    %v5989 = vunpack.c.l.b16 %v5538
    %v5990 = vunpack.c.h.b16 %v5538
    %v5991 = vunpack.c.l.b16 %v5539
    %v5992 = vunpack.c.h.b16 %v5539
    %v5993 = vunpack.c.l.b16 %v5540
    %v5994 = vunpack.c.h.b16 %v5540
    %v5995 = vunpack.c.l.b16 %v5541
    %v5996 = vunpack.c.h.b16 %v5541
    %v5997 = vunpack.c.l.b16 %v5542
    %v5998 = vunpack.c.h.b16 %v5542
    %v5999 = vunpack.c.l.b16 %v5543
    %v6000 = vunpack.c.h.b16 %v5543
    %v6001 = vunpack.c.l.b16 %v5544
    %v6002 = vunpack.c.h.b16 %v5544
    %v6003 = vunpack.c.l.b16 %v5545
    %v6004 = vunpack.c.h.b16 %v5545
    %v6005 = vunpack.c.l.b16 %v5546
    %v6006 = vunpack.c.h.b16 %v5546
    %v6007 = vunpack.c.l.b16 %v5547
    %v6008 = vunpack.c.h.b16 %v5547
    %v6009 = vunpack.c.l.b16 %v5548
    %v6010 = vunpack.c.h.b16 %v5548
    %v6011 = vunpack.c.l.b16 %v5549
    %v6012 = vunpack.c.h.b16 %v5549
    %v6013 = vunpack.c.l.b16 %v5550
    %v6014 = vunpack.c.h.b16 %v5550
    %v6015 = vunpack.c.l.b16 %v5551
    %v6016 = vunpack.c.h.b16 %v5551
    %v6017 = vunpack.c.l.b16 %v5552
    %v6018 = vunpack.c.h.b16 %v5552
    %v6019 = vunpack.c.l.b16 %v5553
    %v6020 = vunpack.c.h.b16 %v5553
    %v6021 = vunpack.c.l.b16 %v5554
    %v6022 = vunpack.c.h.b16 %v5554
    %v6023 = vunpack.c.l.b16 %v5555
    %v6024 = vunpack.c.h.b16 %v5555
    %v6025 = vunpack.c.l.b16 %v5556
    %v6026 = vunpack.c.h.b16 %v5556
    %v6027 = vunpack.c.l.b16 %v5557
    %v6028 = vunpack.c.h.b16 %v5557
    %v6029 = vunpack.c.l.b16 %v5558
    %v6030 = vunpack.c.h.b16 %v5558
    %v6031 = vunpack.c.l.b16 %v5559
    %v6032 = vunpack.c.h.b16 %v5559
    %v6033 = vunpack.c.l.b16 %v5560
    %v6034 = vunpack.c.h.b16 %v5560
    %v6035 = vunpack.c.l.b16 %v5561
    %v6036 = vunpack.c.h.b16 %v5561
    %v6037 = vunpack.c.l.b16 %v5562
    %v6038 = vunpack.c.h.b16 %v5562
    %v6039 = vunpack.c.l.b16 %v5563
    %v6040 = vunpack.c.h.b16 %v5563
    %v6041 = vunpack.c.l.b16 %v5564
    %v6042 = vunpack.c.h.b16 %v5564
    %v6043 = vunpack.c.l.b16 %v5565
    %v6044 = vunpack.c.h.b16 %v5565
    %v6045 = vunpack.c.l.b16 %v5566
    %v6046 = vunpack.c.h.b16 %v5566
    %v6047 = vunpack.c.l.b16 %v5567
    %v6048 = vunpack.c.h.b16 %v5567
    %v6049 = vunpack.c.l.b16 %v5568
    %v6050 = vunpack.c.h.b16 %v5568
    %v6051 = vunpack.c.l.b16 %v5569
    %v6052 = vunpack.c.h.b16 %v5569
    %v6053 = vunpack.c.l.b16 %v5570
    %v6054 = vunpack.c.h.b16 %v5570
    %v6055 = vunpack.c.l.b16 %v5571
    %v6056 = vunpack.c.h.b16 %v5571
    %v6057 = vunpack.c.l.b16 %v5572
    %v6058 = vunpack.c.h.b16 %v5572
    %v6059 = vunpack.c.l.b16 %v5573
    %v6060 = vunpack.c.h.b16 %v5573
    %v6061 = vunpack.c.l.b16 %v5574
    %v6062 = vunpack.c.h.b16 %v5574
    %v6063 = vunpack.c.l.b16 %v5575
    %v6064 = vunpack.c.h.b16 %v5575
    %v6065 = vunpack.c.l.b16 %v5576
    %v6066 = vunpack.c.h.b16 %v5576
    %v6067 = vunpack.c.l.b16 %v5577
    %v6068 = vunpack.c.h.b16 %v5577
    %v6069 = vunpack.c.l.b16 %v5578
    %v6070 = vunpack.c.h.b16 %v5578
    %v6071 = vunpack.c.l.b16 %v5579
    %v6072 = vunpack.c.h.b16 %v5579
    %v6073 = vunpack.c.l.b16 %v5580
    %v6074 = vunpack.c.h.b16 %v5580
    %v6075 = vunpack.c.l.b16 %v5581
    %v6076 = vunpack.c.h.b16 %v5581
    %v6077 = vunpack.c.l.b16 %v5582
    %v6078 = vunpack.c.h.b16 %v5582
    %v6079 = vunpack.c.l.b16 %v5583
    %v6080 = vunpack.c.h.b16 %v5583
    %v6081 = vunpack.c.l.b16 %v5584
    %v6082 = vunpack.c.h.b16 %v5584
    %v6083 = vunpack.c.l.b16 %v5585
    %v6084 = vunpack.c.h.b16 %v5585
    %v6085 = vunpack.c.l.b16 %v5586
    %v6086 = vunpack.c.h.b16 %v5586
    %v6087 = vunpack.c.l.b16 %v5587
    %v6088 = vunpack.c.h.b16 %v5587
    %v6089 = vunpack.c.l.b16 %v5588
    %v6090 = vunpack.c.h.b16 %v5588
    %v6091 = vunpack.c.l.b16 %v5589
    %v6092 = vunpack.c.h.b16 %v5589
    %v6093 = vunpack.c.l.b16 %v5590
    %v6094 = vunpack.c.h.b16 %v5590
    %v6095 = vunpack.c.l.b16 %v5591
    %v6096 = vunpack.c.h.b16 %v5591
    %v6097 = vunpack.c.l.b16 %v5592
    %v6098 = vunpack.c.h.b16 %v5592
    %v6099 = vunpack.c.l.b16 %v5593
    %v6100 = vunpack.c.h.b16 %v5593
    %v6101 = vunpack.c.l.b16 %v5594
    %v6102 = vunpack.c.h.b16 %v5594
    %v6103 = vunpack.c.l.b16 %v5595
    %v6104 = vunpack.c.h.b16 %v5595
    %v6105 = vunpack.c.l.b16 %v5596
    %v6106 = vunpack.c.h.b16 %v5596
    %v6107 = vunpack.c.l.b16 %v5597
    %v6108 = vunpack.c.h.b16 %v5597
    %v6109 = vunpack.c.l.b16 %v5598
    %v6110 = vunpack.c.h.b16 %v5598
    %v6111 = vunpack.c.l.b16 %v5599
    %v6112 = vunpack.c.h.b16 %v5599
    %v6113 = vunpack.c.l.b16 %v5600
    %v6114 = vunpack.c.h.b16 %v5600
    %v6115 = vunpack.c.l.b16 %v5601
    %v6116 = vunpack.c.h.b16 %v5601
    %v6117 = vunpack.c.l.b16 %v5602
    %v6118 = vunpack.c.h.b16 %v5602
    %v6119 = vunpack.c.l.b16 %v5603
    %v6120 = vunpack.c.h.b16 %v5603
    %v6121 = vunpack.c.l.b16 %v5604
    %v6122 = vunpack.c.h.b16 %v5604
    %v6123 = vunpack.c.l.b16 %v5605
    %v6124 = vunpack.c.h.b16 %v5605
    %v6125 = vunpack.c.l.b16 %v5606
    %v6126 = vunpack.c.h.b16 %v5606
    %v6127 = vunpack.c.l.b16 %v5607
    %v6128 = vunpack.c.h.b16 %v5607
    %v6129 = vunpack.c.l.b16 %v5608
    %v6130 = vunpack.c.h.b16 %v5608
    %v6131 = vunpack.c.l.b16 %v5609
    %v6132 = vunpack.c.h.b16 %v5609
    %v6133 = vunpack.c.l.b16 %v5610
    %v6134 = vunpack.c.h.b16 %v5610
    %v6135 = vunpack.c.l.b16 %v5611
    %v6136 = vunpack.c.h.b16 %v5611
    %v6137 = vunpack.c.l.b16 %v5612
    %v6138 = vunpack.c.h.b16 %v5612
    %v6139 = vunpack.c.l.b16 %v5613
    %v6140 = vunpack.c.h.b16 %v5613
    %v6141 = vunpack.c.l.b16 %v5614
    %v6142 = vunpack.c.h.b16 %v5614
    %v6143 = vunpack.c.l.b16 %v5615
    %v6144 = vunpack.c.h.b16 %v5615
    %v6145 = vunpack.c.l.b16 %v5616
    %v6146 = vunpack.c.h.b16 %v5616
    %v6147 = vunpack.c.l.b16 %v5617
    %v6148 = vunpack.c.h.b16 %v5617
    %v6149 = vunpack.c.l.b16 %v5618
    %v6150 = vunpack.c.h.b16 %v5618
    %v6151 = vunpack.c.l.b16 %v5619
    %v6152 = vunpack.c.h.b16 %v5619
    %v6153 = vunpack.c.l.b16 %v5620
    %v6154 = vunpack.c.h.b16 %v5620
    %v6155 = vunpack.c.l.b16 %v5621
    %v6156 = vunpack.c.h.b16 %v5621
    %v6157 = vunpack.c.l.b16 %v5622
    %v6158 = vunpack.c.h.b16 %v5622
    %v6159 = vunpack.c.l.b16 %v5623
    %v6160 = vunpack.c.h.b16 %v5623
    %v6161 = vunpack.c.l.b16 %v5624
    %v6162 = vunpack.c.h.b16 %v5624
    %v6163 = vunpack.c.l.b16 %v5625
    %v6164 = vunpack.c.h.b16 %v5625
    %v6165 = vunpack.c.l.b16 %v5626
    %v6166 = vunpack.c.h.b16 %v5626
    %v6167 = vunpack.c.l.b16 %v5627
    %v6168 = vunpack.c.h.b16 %v5627
    %v6169 = vunpack.c.l.b16 %v5628
    %v6170 = vunpack.c.h.b16 %v5628
    %v6171 = vunpack.c.l.b16 %v5629
    %v6172 = vunpack.c.h.b16 %v5629
    %v6173 = vunpack.c.l.b16 %v5630
    %v6174 = vunpack.c.h.b16 %v5630
    %v6175 = vunpack.c.l.b16 %v5631
    %v6176 = vunpack.c.h.b16 %v5631
    %v6177 = vunpack.c.l.b16 %v5632
    %v6178 = vunpack.c.h.b16 %v5632
    %v6179 = vunpack.c.l.b16 %v5633
    %v6180 = vunpack.c.h.b16 %v5633
    %v6181 = vunpack.c.l.b16 %v5634
    %v6182 = vunpack.c.h.b16 %v5634
    %v6183 = vunpack.c.l.b16 %v5635
    %v6184 = vunpack.c.h.b16 %v5635
    %v6185 = vunpack.c.l.b16 %v5636
    %v6186 = vunpack.c.h.b16 %v5636
    %v6187 = vunpack.c.l.b16 %v5637
    %v6188 = vunpack.c.h.b16 %v5637
    %v6189 = vunpack.c.l.b16 %v5638
    %v6190 = vunpack.c.h.b16 %v5638
    %v6191 = vunpack.c.l.b16 %v5639
    %v6192 = vunpack.c.h.b16 %v5639
    %v6193 = vunpack.c.l.b16 %v5640
    %v6194 = vunpack.c.h.b16 %v5640
    %v6195 = vunpack.c.l.b16 %v5641
    %v6196 = vunpack.c.h.b16 %v5641
    %v6197 = vunpack.c.l.b16 %v5642
    %v6198 = vunpack.c.h.b16 %v5642
    %v6199 = vunpack.c.l.b16 %v5643
    %v6200 = vunpack.c.h.b16 %v5643
    %v6201 = vunpack.c.l.b16 %v5644
    %v6202 = vunpack.c.h.b16 %v5644
    %v6203 = vunpack.c.l.b16 %v5645
    %v6204 = vunpack.c.h.b16 %v5645
    %v6205 = vunpack.c.l.b16 %v5646
    %v6206 = vunpack.c.h.b16 %v5646
    %v6207 = vunpack.c.l.b16 %v5647
    %v6208 = vunpack.c.h.b16 %v5647
    %v6209 = vunpack.c.l.b16 %v5648
    %v6210 = vunpack.c.h.b16 %v5648
    %v6211 = vunpack.c.l.b16 %v5649
    %v6212 = vunpack.c.h.b16 %v5649
    %v6213 = vunpack.c.l.b16 %v5650
    %v6214 = vunpack.c.h.b16 %v5650
    %v6215 = vunpack.c.l.b16 %v5651
    %v6216 = vunpack.c.h.b16 %v5651
    %v6217 = vunpack.c.l.b16 %v5652
    %v6218 = vunpack.c.h.b16 %v5652
    %v6219 = vunpack.c.l.b16 %v5653
    %v6220 = vunpack.c.h.b16 %v5653
    %v6221 = vunpack.c.l.b16 %v5654
    %v6222 = vunpack.c.h.b16 %v5654
    %v6223 = vunpack.c.l.b16 %v5655
    %v6224 = vunpack.c.h.b16 %v5655
    %v6225 = vunpack.c.l.b16 %v5656
    %v6226 = vunpack.c.h.b16 %v5656
    %v6227 = vunpack.c.l.b16 %v5657
    %v6228 = vunpack.c.h.b16 %v5657
    %v6229 = vunpack.c.l.b16 %v5658
    %v6230 = vunpack.c.h.b16 %v5658
    %v6231 = vunpack.c.l.b16 %v5659
    %v6232 = vunpack.c.h.b16 %v5659
    %v6233 = vunpack.c.l.b16 %v5660
    %v6234 = vunpack.c.h.b16 %v5660
    %v6235 = vunpack.c.l.b16 %v5661
    %v6236 = vunpack.c.h.b16 %v5661
    %v6237 = vunpack.c.l.b16 %v5662
    %v6238 = vunpack.c.h.b16 %v5662
    %v6239 = vunpack.c.l.b16 %v5663
    %v6240 = vunpack.c.h.b16 %v5663
    %v6241 = vunpack.c.l.b16 %v5664
    %v6242 = vunpack.c.h.b16 %v5664
    %v6243 = vunpack.c.l.b16 %v5665
    %v6244 = vunpack.c.h.b16 %v5665
    %v6245 = vunpack.c.l.b16 %v5666
    %v6246 = vunpack.c.h.b16 %v5666
    %v6247 = vunpack.c.l.b16 %v5667
    %v6248 = vunpack.c.h.b16 %v5667
    %v6249 = vunpack.c.l.b16 %v5668
    %v6250 = vunpack.c.h.b16 %v5668
    %v6251 = vunpack.c.l.b16 %v5669
    %v6252 = vunpack.c.h.b16 %v5669
    %v6253 = vunpack.c.l.b16 %v5670
    %v6254 = vunpack.c.h.b16 %v5670
    %v6255 = vunpack.c.l.b16 %v5671
    %v6256 = vunpack.c.h.b16 %v5671
    %v6257 = vunpack.c.l.b16 %v5672
    %v6258 = vunpack.c.h.b16 %v5672
    %v6259 = vunpack.c.l.b16 %v5673
    %v6260 = vunpack.c.h.b16 %v5673
    %v6261 = vunpack.c.l.b16 %v5674
    %v6262 = vunpack.c.h.b16 %v5674
    %v6263 = vunpack.c.l.b16 %v5675
    %v6264 = vunpack.c.h.b16 %v5675
    %v6265 = vunpack.c.l.b16 %v5676
    %v6266 = vunpack.c.h.b16 %v5676
    %v6267 = vunpack.c.l.b16 %v5677
    %v6268 = vunpack.c.h.b16 %v5677
    %v6269 = vunpack.c.l.b16 %v5678
    %v6270 = vunpack.c.h.b16 %v5678
    %v6271 = vunpack.c.l.b16 %v5679
    %v6272 = vunpack.c.h.b16 %v5679
    %v6273 = vunpack.c.l.b16 %v5680
    %v6274 = vunpack.c.h.b16 %v5680
    %v6275 = vunpack.c.l.b16 %v5681
    %v6276 = vunpack.c.h.b16 %v5681
    %v6277 = vunpack.c.l.b16 %v5682
    %v6278 = vunpack.c.h.b16 %v5682
    %v6279 = vunpack.c.l.b16 %v5683
    %v6280 = vunpack.c.h.b16 %v5683
    %v6281 = vunpack.c.l.b16 %v5684
    %v6282 = vunpack.c.h.b16 %v5684
    %v6283 = vunpack.c.l.b16 %v5685
    %v6284 = vunpack.c.h.b16 %v5685
    %v6285 = vunpack.c.l.b16 %v5686
    %v6286 = vunpack.c.h.b16 %v5686
    %v6287 = vunpack.c.l.b16 %v5687
    %v6288 = vunpack.c.h.b16 %v5687
    %v6289 = vunpack.c.l.b16 %v5688
    %v6290 = vunpack.c.h.b16 %v5688
    %v6291 = vunpack.c.l.b16 %v5689
    %v6292 = vunpack.c.h.b16 %v5689
    %v6293 = vunpack.c.l.b16 %v5690
    %v6294 = vunpack.c.h.b16 %v5690
    %v6295 = vunpack.c.l.b16 %v5691
    %v6296 = vunpack.c.h.b16 %v5691
    %v6297 = vunpack.c.l.b16 %v5692
    %v6298 = vunpack.c.h.b16 %v5692
    %v6299 = vunpack.c.l.b16 %v5693
    %v6300 = vunpack.c.h.b16 %v5693
    %v6301 = vunpack.c.l.b16 %v5694
    %v6302 = vunpack.c.h.b16 %v5694
    %v6303 = vunpack.c.l.b16 %v5695
    %v6304 = vunpack.c.h.b16 %v5695
    %v6305 = vunpack.c.l.b16 %v5696
    %v6306 = vunpack.c.h.b16 %v5696
    %v6307 = vunpack.c.l.b16 %v5697
    %v6308 = vunpack.c.h.b16 %v5697
    %v6309 = vunpack.c.l.b16 %v5698
    %v6310 = vunpack.c.h.b16 %v5698
    %v6311 = vunpack.c.l.b16 %v5699
    %v6312 = vunpack.c.h.b16 %v5699
    %v6313 = vunpack.c.l.b16 %v5700
    %v6314 = vunpack.c.h.b16 %v5700
    %v6315 = vunpack.c.l.b16 %v5701
    %v6316 = vunpack.c.h.b16 %v5701
    %v6317 = vunpack.c.l.b16 %v5702
    %v6318 = vunpack.c.h.b16 %v5702
    %v6319 = vunpack.c.l.b16 %v5703
    %v6320 = vunpack.c.h.b16 %v5703
    %v6321 = vunpack.c.l.b16 %v5704
    %v6322 = vunpack.c.h.b16 %v5704
    %v6323 = vunpack.c.l.b16 %v5705
    %v6324 = vunpack.c.h.b16 %v5705
    %v6325 = vunpack.c.l.b16 %v5706
    %v6326 = vunpack.c.h.b16 %v5706
    %v6327 = vunpack.c.l.b16 %v5707
    %v6328 = vunpack.c.h.b16 %v5707
    %v6329 = vunpack.c.l.b16 %v5708
    %v6330 = vunpack.c.h.b16 %v5708
    %v6331 = vunpack.c.l.b16 %v5709
    %v6332 = vunpack.c.h.b16 %v5709
    %v6333 = vunpack.c.l.b16 %v5710
    %v6334 = vunpack.c.h.b16 %v5710
    %v6335 = vunpack.c.l.b16 %v5711
    %v6336 = vunpack.c.h.b16 %v5711
    %v6337 = vunpack.c.l.b16 %v5712
    %v6338 = vunpack.c.h.b16 %v5712
    %v6339 = vunpack.c.l.b16 %v5713
    %v6340 = vunpack.c.h.b16 %v5713
    %v6341 = vunpack.c.l.b16 %v5714
    %v6342 = vunpack.c.h.b16 %v5714
    %v6343 = vunpack.c.l.b16 %v5715
    %v6344 = vunpack.c.h.b16 %v5715
    %v6345 = vunpack.c.l.b16 %v5716
    %v6346 = vunpack.c.h.b16 %v5716
    %v6347 = vunpack.c.l.b16 %v5717
    %v6348 = vunpack.c.h.b16 %v5717
    %v6349 = vunpack.c.l.b16 %v5718
    %v6350 = vunpack.c.h.b16 %v5718
    %v6351 = vunpack.c.l.b16 %v5719
    %v6352 = vunpack.c.h.b16 %v5719
    %v6353 = vunpack.c.l.b16 %v5720
    %v6354 = vunpack.c.h.b16 %v5720
    %v6355 = vunpack.c.l.b16 %v5721
    %v6356 = vunpack.c.h.b16 %v5721
    %v6357 = vunpack.c.l.b16 %v5722
    %v6358 = vunpack.c.h.b16 %v5722
    %v6359 = vunpack.c.l.b16 %v5723
    %v6360 = vunpack.c.h.b16 %v5723
    %v6361 = vunpack.c.l.b16 %v5724
    %v6362 = vunpack.c.h.b16 %v5724
    %v6363 = vunpack.c.l.b16 %v5725
    %v6364 = vunpack.c.h.b16 %v5725
    %v6365 = vunpack.c.l.b16 %v5726
    %v6366 = vunpack.c.h.b16 %v5726
    %v6367 = vunpack.c.l.b16 %v5727
    %v6368 = vunpack.c.h.b16 %v5727
    %v6369 = vunpack.c.l.b16 %v5728
    %v6370 = vunpack.c.h.b16 %v5728
    %v6371 = vunpack.c.l.b16 %v5729
    %v6372 = vunpack.c.h.b16 %v5729
    %v6373 = vunpack.c.l.b16 %v5730
    %v6374 = vunpack.c.h.b16 %v5730
    %v6375 = vunpack.c.l.b16 %v5731
    %v6376 = vunpack.c.h.b16 %v5731
    %v6377 = vunpack.c.l.b16 %v5732
    %v6378 = vunpack.c.h.b16 %v5732
    %v6379 = vunpack.c.l.b16 %v5733
    %v6380 = vunpack.c.h.b16 %v5733
    %v6381 = vunpack.c.l.b16 %v5734
    %v6382 = vunpack.c.h.b16 %v5734
    %v6383 = vunpack.c.l.b16 %v5735
    %v6384 = vunpack.c.h.b16 %v5735
    %v6385 = vunpack.c.l.b16 %v5736
    %v6386 = vunpack.c.h.b16 %v5736
    %v6387 = vunpack.c.l.b16 %v5737
    %v6388 = vunpack.c.h.b16 %v5737
    %v6389 = vunpack.c.l.b16 %v5738
    %v6390 = vunpack.c.h.b16 %v5738
    %v6391 = vunpack.c.l.b16 %v5739
    %v6392 = vunpack.c.h.b16 %v5739
    %v6393 = vunpack.c.l.b16 %v5740
    %v6394 = vunpack.c.h.b16 %v5740
    %v6395 = vunpack.c.l.b16 %v5741
    %v6396 = vunpack.c.h.b16 %v5741
    %v6397 = vunpack.c.l.b16 %v5742
    %v6398 = vunpack.c.h.b16 %v5742
    %v6399 = vunpack.c.l.b16 %v5743
    %v6400 = vunpack.c.h.b16 %v5743
    %v6401 = vunpack.c.l.b16 %v5744
    %v6402 = vunpack.c.h.b16 %v5744
    %v6403 = vunpack.c.l.b16 %v5745
    %v6404 = vunpack.c.h.b16 %v5745
    %v6405 = vunpack.c.l.b16 %v5746
    %v6406 = vunpack.c.h.b16 %v5746
    %v6407 = vunpack.c.l.b16 %v5747
    %v6408 = vunpack.c.h.b16 %v5747
    %v6409 = vunpack.c.l.b16 %v5748
    %v6410 = vunpack.c.h.b16 %v5748
    %v6411 = vunpack.c.l.b16 %v5749
    %v6412 = vunpack.c.h.b16 %v5749
    %v6413 = vunpack.c.l.b16 %v5750
    %v6414 = vunpack.c.h.b16 %v5750
    %v6415 = vunpack.c.l.b16 %v5751
    %v6416 = vunpack.c.h.b16 %v5751
    %v6417 = vunpack.c.l.b16 %v5752
    %v6418 = vunpack.c.h.b16 %v5752
    %v6419 = vunpack.c.l.b16 %v5753
    %v6420 = vunpack.c.h.b16 %v5753
    %v6421 = vunpack.c.l.b16 %v5754
    %v6422 = vunpack.c.h.b16 %v5754
    %v6423 = vunpack.c.l.b16 %v5755
    %v6424 = vunpack.c.h.b16 %v5755
    %v6425 = vunpack.c.l.b16 %v5756
    %v6426 = vunpack.c.h.b16 %v5756
    %v6427 = vunpack.c.l.b16 %v5757
    %v6428 = vunpack.c.h.b16 %v5757
    %v6429 = vunpack.c.l.b16 %v5758
    %v6430 = vunpack.c.h.b16 %v5758
    %v6431 = vunpack.c.l.b16 %v5759
    %v6432 = vunpack.c.h.b16 %v5759
    %v6433 = vunpack.c.l.b16 %v5760
    %v6434 = vunpack.c.h.b16 %v5760
    %v6435 = vunpack.c.l.b16 %v5761
    %v6436 = vunpack.c.h.b16 %v5761
    %v6437 = vpack.c.b16 %v5989, %v5987
    %v6438 = vpack.c.b16 %v5990, %v5988
    %v6439 = vpack.c.b16 %v5993, %v5991
    %v6440 = vpack.c.b16 %v5994, %v5992
    %v6441 = vpack.c.b16 %v5997, %v5995
    %v6442 = vpack.c.b16 %v5998, %v5996
    %v6443 = vpack.c.b16 %v6001, %v5999
    %v6444 = vpack.c.b16 %v6002, %v6000
    %v6445 = vpack.c.b16 %v6005, %v6003
    %v6446 = vpack.c.b16 %v6006, %v6004
    %v6447 = vpack.c.b16 %v6009, %v6007
    %v6448 = vpack.c.b16 %v6010, %v6008
    %v6449 = vpack.c.b16 %v6013, %v6011
    %v6450 = vpack.c.b16 %v6014, %v6012
    %v6451 = vpack.c.b16 %v6017, %v6015
    %v6452 = vpack.c.b16 %v6018, %v6016
    %v6453 = vpack.c.b16 %v6021, %v6019
    %v6454 = vpack.c.b16 %v6022, %v6020
    %v6455 = vpack.c.b16 %v6025, %v6023
    %v6456 = vpack.c.b16 %v6026, %v6024
    %v6457 = vpack.c.b16 %v6029, %v6027
    %v6458 = vpack.c.b16 %v6030, %v6028
    %v6459 = vpack.c.b16 %v6033, %v6031
    %v6460 = vpack.c.b16 %v6034, %v6032
    %v6461 = vpack.c.b16 %v6037, %v6035
    %v6462 = vpack.c.b16 %v6038, %v6036
    %v6463 = vpack.c.b16 %v6041, %v6039
    %v6464 = vpack.c.b16 %v6042, %v6040
    %v6465 = vpack.c.b16 %v6045, %v6043
    %v6466 = vpack.c.b16 %v6046, %v6044
    %v6467 = vpack.c.b16 %v6049, %v6047
    %v6468 = vpack.c.b16 %v6050, %v6048
    %v6469 = vpack.c.b16 %v6053, %v6051
    %v6470 = vpack.c.b16 %v6054, %v6052
    %v6471 = vpack.c.b16 %v6057, %v6055
    %v6472 = vpack.c.b16 %v6058, %v6056
    %v6473 = vpack.c.b16 %v6061, %v6059
    %v6474 = vpack.c.b16 %v6062, %v6060
    %v6475 = vpack.c.b16 %v6065, %v6063
    %v6476 = vpack.c.b16 %v6066, %v6064
    %v6477 = vpack.c.b16 %v6069, %v6067
    %v6478 = vpack.c.b16 %v6070, %v6068
    %v6479 = vpack.c.b16 %v6073, %v6071
    %v6480 = vpack.c.b16 %v6074, %v6072
    %v6481 = vpack.c.b16 %v6077, %v6075
    %v6482 = vpack.c.b16 %v6078, %v6076
    %v6483 = vpack.c.b16 %v6081, %v6079
    %v6484 = vpack.c.b16 %v6082, %v6080
    %v6485 = vpack.c.b16 %v6085, %v6083
    %v6486 = vpack.c.b16 %v6086, %v6084
    %v6487 = vpack.c.b16 %v6089, %v6087
    %v6488 = vpack.c.b16 %v6090, %v6088
    %v6489 = vpack.c.b16 %v6093, %v6091
    %v6490 = vpack.c.b16 %v6094, %v6092
    %v6491 = vpack.c.b16 %v6097, %v6095
    %v6492 = vpack.c.b16 %v6098, %v6096
    %v6493 = vpack.c.b16 %v6101, %v6099
    %v6494 = vpack.c.b16 %v6102, %v6100
    %v6495 = vpack.c.b16 %v6105, %v6103
    %v6496 = vpack.c.b16 %v6106, %v6104
    %v6497 = vpack.c.b16 %v6109, %v6107
    %v6498 = vpack.c.b16 %v6110, %v6108
    %v6499 = vpack.c.b16 %v6113, %v6111
    %v6500 = vpack.c.b16 %v6114, %v6112
    %v6501 = vpack.c.b16 %v6117, %v6115
    %v6502 = vpack.c.b16 %v6118, %v6116
    %v6503 = vpack.c.b16 %v6121, %v6119
    %v6504 = vpack.c.b16 %v6122, %v6120
    %v6505 = vpack.c.b16 %v6125, %v6123
    %v6506 = vpack.c.b16 %v6126, %v6124
    %v6507 = vpack.c.b16 %v6129, %v6127
    %v6508 = vpack.c.b16 %v6130, %v6128
    %v6509 = vpack.c.b16 %v6133, %v6131
    %v6510 = vpack.c.b16 %v6134, %v6132
    %v6511 = vpack.c.b16 %v6137, %v6135
    %v6512 = vpack.c.b16 %v6138, %v6136
    %v6513 = vpack.c.b16 %v6141, %v6139
    %v6514 = vpack.c.b16 %v6142, %v6140
    %v6515 = vpack.c.b16 %v6145, %v6143
    %v6516 = vpack.c.b16 %v6146, %v6144
    %v6517 = vpack.c.b16 %v6149, %v6147
    %v6518 = vpack.c.b16 %v6150, %v6148
    %v6519 = vpack.c.b16 %v6153, %v6151
    %v6520 = vpack.c.b16 %v6154, %v6152
    %v6521 = vpack.c.b16 %v6157, %v6155
    %v6522 = vpack.c.b16 %v6158, %v6156
    %v6523 = vpack.c.b16 %v6161, %v6159
    %v6524 = vpack.c.b16 %v6162, %v6160
    %v6525 = vpack.c.b16 %v6165, %v6163
    %v6526 = vpack.c.b16 %v6166, %v6164
    %v6527 = vpack.c.b16 %v6169, %v6167
    %v6528 = vpack.c.b16 %v6170, %v6168
    %v6529 = vpack.c.b16 %v6173, %v6171
    %v6530 = vpack.c.b16 %v6174, %v6172
    %v6531 = vpack.c.b16 %v6177, %v6175
    %v6532 = vpack.c.b16 %v6178, %v6176
    %v6533 = vpack.c.b16 %v6181, %v6179
    %v6534 = vpack.c.b16 %v6182, %v6180
    %v6535 = vpack.c.b16 %v6185, %v6183
    %v6536 = vpack.c.b16 %v6186, %v6184
    %v6537 = vpack.c.b16 %v6189, %v6187
    %v6538 = vpack.c.b16 %v6190, %v6188
    %v6539 = vpack.c.b16 %v6193, %v6191
    %v6540 = vpack.c.b16 %v6194, %v6192
    %v6541 = vpack.c.b16 %v6197, %v6195
    %v6542 = vpack.c.b16 %v6198, %v6196
    %v6543 = vpack.c.b16 %v6201, %v6199
    %v6544 = vpack.c.b16 %v6202, %v6200
    %v6545 = vpack.c.b16 %v6205, %v6203
    %v6546 = vpack.c.b16 %v6206, %v6204
    %v6547 = vpack.c.b16 %v6209, %v6207
    %v6548 = vpack.c.b16 %v6210, %v6208
    %v6549 = vpack.c.b16 %v6213, %v6211
    %v6550 = vpack.c.b16 %v6214, %v6212
    %v6551 = vpack.c.b16 %v6217, %v6215
    %v6552 = vpack.c.b16 %v6218, %v6216
    %v6553 = vpack.c.b16 %v6221, %v6219
    %v6554 = vpack.c.b16 %v6222, %v6220
    %v6555 = vpack.c.b16 %v6225, %v6223
    %v6556 = vpack.c.b16 %v6226, %v6224
    %v6557 = vpack.c.b16 %v6229, %v6227
    %v6558 = vpack.c.b16 %v6230, %v6228
    %v6559 = vpack.c.b16 %v6233, %v6231
    %v6560 = vpack.c.b16 %v6234, %v6232
    %v6561 = vpack.c.b16 %v6237, %v6235
    %v6562 = vpack.c.b16 %v6238, %v6236
    %v6563 = vpack.c.b16 %v6241, %v6239
    %v6564 = vpack.c.b16 %v6242, %v6240
    %v6565 = vpack.c.b16 %v6245, %v6243
    %v6566 = vpack.c.b16 %v6246, %v6244
    %v6567 = vpack.c.b16 %v6249, %v6247
    %v6568 = vpack.c.b16 %v6250, %v6248
    %v6569 = vpack.c.b16 %v6253, %v6251
    %v6570 = vpack.c.b16 %v6254, %v6252
    %v6571 = vpack.c.b16 %v6257, %v6255
    %v6572 = vpack.c.b16 %v6258, %v6256
    %v6573 = vpack.c.b16 %v6261, %v6259
    %v6574 = vpack.c.b16 %v6262, %v6260
    %v6575 = vpack.c.b16 %v6265, %v6263
    %v6576 = vpack.c.b16 %v6266, %v6264
    %v6577 = vpack.c.b16 %v6269, %v6267
    %v6578 = vpack.c.b16 %v6270, %v6268
    %v6579 = vpack.c.b16 %v6273, %v6271
    %v6580 = vpack.c.b16 %v6274, %v6272
    %v6581 = vpack.c.b16 %v6277, %v6275
    %v6582 = vpack.c.b16 %v6278, %v6276
    %v6583 = vpack.c.b16 %v6281, %v6279
    %v6584 = vpack.c.b16 %v6282, %v6280
    %v6585 = vpack.c.b16 %v6285, %v6283
    %v6586 = vpack.c.b16 %v6286, %v6284
    %v6587 = vpack.c.b16 %v6289, %v6287
    %v6588 = vpack.c.b16 %v6290, %v6288
    %v6589 = vpack.c.b16 %v6293, %v6291
    %v6590 = vpack.c.b16 %v6294, %v6292
    %v6591 = vpack.c.b16 %v6297, %v6295
    %v6592 = vpack.c.b16 %v6298, %v6296
    %v6593 = vpack.c.b16 %v6301, %v6299
    %v6594 = vpack.c.b16 %v6302, %v6300
    %v6595 = vpack.c.b16 %v6305, %v6303
    %v6596 = vpack.c.b16 %v6306, %v6304
    %v6597 = vpack.c.b16 %v6309, %v6307
    %v6598 = vpack.c.b16 %v6310, %v6308
    %v6599 = vpack.c.b16 %v6313, %v6311
    %v6600 = vpack.c.b16 %v6314, %v6312
    %v6601 = vpack.c.b16 %v6317, %v6315
    %v6602 = vpack.c.b16 %v6318, %v6316
    %v6603 = vpack.c.b16 %v6321, %v6319
    %v6604 = vpack.c.b16 %v6322, %v6320
    %v6605 = vpack.c.b16 %v6325, %v6323
    %v6606 = vpack.c.b16 %v6326, %v6324
    %v6607 = vpack.c.b16 %v6329, %v6327
    %v6608 = vpack.c.b16 %v6330, %v6328
    %v6609 = vpack.c.b16 %v6333, %v6331
    %v6610 = vpack.c.b16 %v6334, %v6332
    %v6611 = vpack.c.b16 %v6337, %v6335
    %v6612 = vpack.c.b16 %v6338, %v6336
    %v6613 = vpack.c.b16 %v6341, %v6339
    %v6614 = vpack.c.b16 %v6342, %v6340
    %v6615 = vpack.c.b16 %v6345, %v6343
    %v6616 = vpack.c.b16 %v6346, %v6344
    %v6617 = vpack.c.b16 %v6349, %v6347
    %v6618 = vpack.c.b16 %v6350, %v6348
    %v6619 = vpack.c.b16 %v6353, %v6351
    %v6620 = vpack.c.b16 %v6354, %v6352
    %v6621 = vpack.c.b16 %v6357, %v6355
    %v6622 = vpack.c.b16 %v6358, %v6356
    %v6623 = vpack.c.b16 %v6361, %v6359
    %v6624 = vpack.c.b16 %v6362, %v6360
    %v6625 = vpack.c.b16 %v6365, %v6363
    %v6626 = vpack.c.b16 %v6366, %v6364
    %v6627 = vpack.c.b16 %v6369, %v6367
    %v6628 = vpack.c.b16 %v6370, %v6368
    %v6629 = vpack.c.b16 %v6373, %v6371
    %v6630 = vpack.c.b16 %v6374, %v6372
    %v6631 = vpack.c.b16 %v6377, %v6375
    %v6632 = vpack.c.b16 %v6378, %v6376
    %v6633 = vpack.c.b16 %v6381, %v6379
    %v6634 = vpack.c.b16 %v6382, %v6380
    %v6635 = vpack.c.b16 %v6385, %v6383
    %v6636 = vpack.c.b16 %v6386, %v6384
    %v6637 = vpack.c.b16 %v6389, %v6387
    %v6638 = vpack.c.b16 %v6390, %v6388
    %v6639 = vpack.c.b16 %v6393, %v6391
    %v6640 = vpack.c.b16 %v6394, %v6392
    %v6641 = vpack.c.b16 %v6397, %v6395
    %v6642 = vpack.c.b16 %v6398, %v6396
    %v6643 = vpack.c.b16 %v6401, %v6399
    %v6644 = vpack.c.b16 %v6402, %v6400
    %v6645 = vpack.c.b16 %v6405, %v6403
    %v6646 = vpack.c.b16 %v6406, %v6404
    %v6647 = vpack.c.b16 %v6409, %v6407
    %v6648 = vpack.c.b16 %v6410, %v6408
    %v6649 = vpack.c.b16 %v6413, %v6411
    %v6650 = vpack.c.b16 %v6414, %v6412
    %v6651 = vpack.c.b16 %v6417, %v6415
    %v6652 = vpack.c.b16 %v6418, %v6416
    %v6653 = vpack.c.b16 %v6421, %v6419
    %v6654 = vpack.c.b16 %v6422, %v6420
    %v6655 = vpack.c.b16 %v6425, %v6423
    %v6656 = vpack.c.b16 %v6426, %v6424
    %v6657 = vpack.c.b16 %v6429, %v6427
    %v6658 = vpack.c.b16 %v6430, %v6428
    %v6659 = vpack.c.b16 %v6433, %v6431
    %v6660 = vpack.c.b16 %v6434, %v6432
    %v6661 = vpack.c.b16 %v6435, %v6435
    %v6662 = vpack.c.b16 %v6436, %v6436
    %vm6887 = vcmask 64512
    %v6889 = vsel %vm6887, %v5311, 0
    %v6892 = vsel %vm3580, %v6661, 0
    %v6895 = vsel %vm3580, %v6662, 0
    %6897 = vmatprep.subr.bf16.mxu0 %v6452
    %6898 = vmatpush1.bf16.msra.mxu0 %v6451
    %6899 = vmatprep.subr.bf16.mxu0 %v6450
    %6900 = vmatpush1.bf16.msra.mxu0 %v6449
    %6901 = vmatprep.subr.bf16.mxu0 %v6448
    %6902 = vmatpush1.bf16.msra.mxu0 %v6447
    %6903 = vmatprep.subr.bf16.mxu0 %v6446
    %6904 = vmatpush1.bf16.msra.mxu0 %v6445
    %6905 = vmatprep.subr.bf16.mxu0 %v6444
    %6906 = vmatpush1.bf16.msra.mxu0 %v6443
    %6907 = vmatprep.subr.bf16.mxu0 %v6442
    %6908 = vmatpush1.bf16.msra.mxu0 %v6441
    %6909 = vmatprep.subr.bf16.mxu0 %v6440
    %6910 = vmatpush1.bf16.msra.mxu0 %v6439
    %6911 = vmatprep.subr.bf16.mxu0 %v6438
    %6912 = vmatpush1.bf16.msra.mxu0 %v6437
    %6913 = vmatprep.subr.bf16.mxu0 %v6468
    %6914 = vmatpush2.bf16.msra.mxu0 %v6467
    %6915 = vmatprep.subr.bf16.mxu0 %v6466
    %6916 = vmatpush2.bf16.msra.mxu0 %v6465
    %6917 = vmatprep.subr.bf16.mxu0 %v6464
    %6918 = vmatpush2.bf16.msra.mxu0 %v6463
    %6919 = vmatprep.subr.bf16.mxu0 %v6462
    %6920 = vmatpush2.bf16.msra.mxu0 %v6461
    %6921 = vmatprep.subr.bf16.mxu0 %v6460
    %6922 = vmatpush2.bf16.msra.mxu0 %v6459
    %6923 = vmatprep.subr.bf16.mxu0 %v6458
    %6924 = vmatpush2.bf16.msra.mxu0 %v6457
    %6925 = vmatprep.subr.bf16.mxu0 %v6456
    %6926 = vmatpush2.bf16.msra.mxu0 %v6455
    %6927 = vmatprep.subr.bf16.mxu0 %v6454
    %6928 = vmatpush2.bf16.msra.mxu0 %v6453
    %6929 = vmatprep.mubr.bf16.mxu0 %v5298
    %6930 = vmatmul.mubr.bf16.gmra.mxu0 %v5297
    %v6931 = vpop.f32.mrf.mxu0
    %v6932 = vadd.f32 0.0, %v6931
    %v6933 = vpop.f32.mrf.mxu0
    %v6934 = vadd.f32 0.0, %v6933
    %v6935 = vpop.f32.mrf.mxu0
    %v6936 = vadd.f32 0.0, %v6935
    %v6937 = vpop.f32.mrf.mxu0
    %v6938 = vadd.f32 0.0, %v6937
    %6939 = vdwg.mxu0
    %6940 = vmatprep.subr.bf16.mxu0 %v6484
    %6941 = vmatpush1.bf16.msra.mxu0 %v6483
    %6942 = vmatprep.subr.bf16.mxu0 %v6482
    %6943 = vmatpush1.bf16.msra.mxu0 %v6481
    %6944 = vmatprep.subr.bf16.mxu0 %v6480
    %6945 = vmatpush1.bf16.msra.mxu0 %v6479
    %6946 = vmatprep.subr.bf16.mxu0 %v6478
    %6947 = vmatpush1.bf16.msra.mxu0 %v6477
    %6948 = vmatprep.subr.bf16.mxu0 %v6476
    %6949 = vmatpush1.bf16.msra.mxu0 %v6475
    %6950 = vmatprep.subr.bf16.mxu0 %v6474
    %6951 = vmatpush1.bf16.msra.mxu0 %v6473
    %6952 = vmatprep.subr.bf16.mxu0 %v6472
    %6953 = vmatpush1.bf16.msra.mxu0 %v6471
    %6954 = vmatprep.subr.bf16.mxu0 %v6470
    %6955 = vmatpush1.bf16.msra.mxu0 %v6469
    %6956 = vmatprep.subr.bf16.mxu0 %v6500
    %6957 = vmatpush2.bf16.msra.mxu0 %v6499
    %6958 = vmatprep.subr.bf16.mxu0 %v6498
    %6959 = vmatpush2.bf16.msra.mxu0 %v6497
    %6960 = vmatprep.subr.bf16.mxu0 %v6496
    %6961 = vmatpush2.bf16.msra.mxu0 %v6495
    %6962 = vmatprep.subr.bf16.mxu0 %v6494
    %6963 = vmatpush2.bf16.msra.mxu0 %v6493
    %6964 = vmatprep.subr.bf16.mxu0 %v6492
    %6965 = vmatpush2.bf16.msra.mxu0 %v6491
    %6966 = vmatprep.subr.bf16.mxu0 %v6490
    %6967 = vmatpush2.bf16.msra.mxu0 %v6489
    %6968 = vmatprep.subr.bf16.mxu0 %v6488
    %6969 = vmatpush2.bf16.msra.mxu0 %v6487
    %6970 = vmatprep.subr.bf16.mxu0 %v6486
    %6971 = vmatpush2.bf16.msra.mxu0 %v6485
    %6972 = vmatprep.mubr.bf16.mxu0 %v5300
    %6973 = vmatmul.mubr.bf16.gmra.mxu0 %v5299
    %v6974 = vpop.f32.mrf.mxu0
    %v6975 = vadd.f32 %v6932, %v6974
    %v6976 = vpop.f32.mrf.mxu0
    %v6977 = vadd.f32 %v6934, %v6976
    %v6978 = vpop.f32.mrf.mxu0
    %v6979 = vadd.f32 %v6936, %v6978
    %v6980 = vpop.f32.mrf.mxu0
    %v6981 = vadd.f32 %v6938, %v6980
    %6982 = vdwg.mxu0
    %6983 = vmatprep.subr.bf16.mxu0 %v6516
    %6984 = vmatpush1.bf16.msra.mxu0 %v6515
    %6985 = vmatprep.subr.bf16.mxu0 %v6514
    %6986 = vmatpush1.bf16.msra.mxu0 %v6513
    %6987 = vmatprep.subr.bf16.mxu0 %v6512
    %6988 = vmatpush1.bf16.msra.mxu0 %v6511
    %6989 = vmatprep.subr.bf16.mxu0 %v6510
    %6990 = vmatpush1.bf16.msra.mxu0 %v6509
    %6991 = vmatprep.subr.bf16.mxu0 %v6508
    %6992 = vmatpush1.bf16.msra.mxu0 %v6507
    %6993 = vmatprep.subr.bf16.mxu0 %v6506
    %6994 = vmatpush1.bf16.msra.mxu0 %v6505
    %6995 = vmatprep.subr.bf16.mxu0 %v6504
    %6996 = vmatpush1.bf16.msra.mxu0 %v6503
    %6997 = vmatprep.subr.bf16.mxu0 %v6502
    %6998 = vmatpush1.bf16.msra.mxu0 %v6501
    %6999 = vmatprep.subr.bf16.mxu0 %v6532
    %7000 = vmatpush2.bf16.msra.mxu0 %v6531
    %7001 = vmatprep.subr.bf16.mxu0 %v6530
    %7002 = vmatpush2.bf16.msra.mxu0 %v6529
    %7003 = vmatprep.subr.bf16.mxu0 %v6528
    %7004 = vmatpush2.bf16.msra.mxu0 %v6527
    %7005 = vmatprep.subr.bf16.mxu0 %v6526
    %7006 = vmatpush2.bf16.msra.mxu0 %v6525
    %7007 = vmatprep.subr.bf16.mxu0 %v6524
    %7008 = vmatpush2.bf16.msra.mxu0 %v6523
    %7009 = vmatprep.subr.bf16.mxu0 %v6522
    %7010 = vmatpush2.bf16.msra.mxu0 %v6521
    %7011 = vmatprep.subr.bf16.mxu0 %v6520
    %7012 = vmatpush2.bf16.msra.mxu0 %v6519
    %7013 = vmatprep.subr.bf16.mxu0 %v6518
    %7014 = vmatpush2.bf16.msra.mxu0 %v6517
    %7015 = vmatprep.mubr.bf16.mxu0 %v5302
    %7016 = vmatmul.mubr.bf16.gmra.mxu0 %v5301
    %v7017 = vpop.f32.mrf.mxu0
    %v7018 = vadd.f32 %v6975, %v7017
    %v7019 = vpop.f32.mrf.mxu0
    %v7020 = vadd.f32 %v6977, %v7019
    %v7021 = vpop.f32.mrf.mxu0
    %v7022 = vadd.f32 %v6979, %v7021
    %v7023 = vpop.f32.mrf.mxu0
    %v7024 = vadd.f32 %v6981, %v7023
    %7025 = vdwg.mxu0
    %7026 = vmatprep.subr.bf16.mxu0 %v6548
    %7027 = vmatpush1.bf16.msra.mxu0 %v6547
    %7028 = vmatprep.subr.bf16.mxu0 %v6546
    %7029 = vmatpush1.bf16.msra.mxu0 %v6545
    %7030 = vmatprep.subr.bf16.mxu0 %v6544
    %7031 = vmatpush1.bf16.msra.mxu0 %v6543
    %7032 = vmatprep.subr.bf16.mxu0 %v6542
    %7033 = vmatpush1.bf16.msra.mxu0 %v6541
    %7034 = vmatprep.subr.bf16.mxu0 %v6540
    %7035 = vmatpush1.bf16.msra.mxu0 %v6539
    %7036 = vmatprep.subr.bf16.mxu0 %v6538
    %7037 = vmatpush1.bf16.msra.mxu0 %v6537
    %7038 = vmatprep.subr.bf16.mxu0 %v6536
    %7039 = vmatpush1.bf16.msra.mxu0 %v6535
    %7040 = vmatprep.subr.bf16.mxu0 %v6534
    %7041 = vmatpush1.bf16.msra.mxu0 %v6533
    %7042 = vmatprep.subr.bf16.mxu0 %v6564
    %7043 = vmatpush2.bf16.msra.mxu0 %v6563
    %7044 = vmatprep.subr.bf16.mxu0 %v6562
    %7045 = vmatpush2.bf16.msra.mxu0 %v6561
    %7046 = vmatprep.subr.bf16.mxu0 %v6560
    %7047 = vmatpush2.bf16.msra.mxu0 %v6559
    %7048 = vmatprep.subr.bf16.mxu0 %v6558
    %7049 = vmatpush2.bf16.msra.mxu0 %v6557
    %7050 = vmatprep.subr.bf16.mxu0 %v6556
    %7051 = vmatpush2.bf16.msra.mxu0 %v6555
    %7052 = vmatprep.subr.bf16.mxu0 %v6554
    %7053 = vmatpush2.bf16.msra.mxu0 %v6553
    %7054 = vmatprep.subr.bf16.mxu0 %v6552
    %7055 = vmatpush2.bf16.msra.mxu0 %v6551
    %7056 = vmatprep.subr.bf16.mxu0 %v6550
    %7057 = vmatpush2.bf16.msra.mxu0 %v6549
    %7058 = vmatprep.mubr.bf16.mxu0 %v5304
    %7059 = vmatmul.mubr.bf16.gmra.mxu0 %v5303
    %v7060 = vpop.f32.mrf.mxu0
    %v7061 = vadd.f32 %v7018, %v7060
    %v7062 = vpop.f32.mrf.mxu0
    %v7063 = vadd.f32 %v7020, %v7062
    %v7064 = vpop.f32.mrf.mxu0
    %v7065 = vadd.f32 %v7022, %v7064
    %v7066 = vpop.f32.mrf.mxu0
    %v7067 = vadd.f32 %v7024, %v7066
    %7068 = vdwg.mxu0
    %7069 = vmatprep.subr.bf16.mxu0 %v6580
    %7070 = vmatpush1.bf16.msra.mxu0 %v6579
    %7071 = vmatprep.subr.bf16.mxu0 %v6578
    %7072 = vmatpush1.bf16.msra.mxu0 %v6577
    %7073 = vmatprep.subr.bf16.mxu0 %v6576
    %7074 = vmatpush1.bf16.msra.mxu0 %v6575
    %7075 = vmatprep.subr.bf16.mxu0 %v6574
    %7076 = vmatpush1.bf16.msra.mxu0 %v6573
    %7077 = vmatprep.subr.bf16.mxu0 %v6572
    %7078 = vmatpush1.bf16.msra.mxu0 %v6571
    %7079 = vmatprep.subr.bf16.mxu0 %v6570
    %7080 = vmatpush1.bf16.msra.mxu0 %v6569
    %7081 = vmatprep.subr.bf16.mxu0 %v6568
    %7082 = vmatpush1.bf16.msra.mxu0 %v6567
    %7083 = vmatprep.subr.bf16.mxu0 %v6566
    %7084 = vmatpush1.bf16.msra.mxu0 %v6565
    %7085 = vmatprep.subr.bf16.mxu0 %v6596
    %7086 = vmatpush2.bf16.msra.mxu0 %v6595
    %7087 = vmatprep.subr.bf16.mxu0 %v6594
    %7088 = vmatpush2.bf16.msra.mxu0 %v6593
    %7089 = vmatprep.subr.bf16.mxu0 %v6592
    %7090 = vmatpush2.bf16.msra.mxu0 %v6591
    %7091 = vmatprep.subr.bf16.mxu0 %v6590
    %7092 = vmatpush2.bf16.msra.mxu0 %v6589
    %7093 = vmatprep.subr.bf16.mxu0 %v6588
    %7094 = vmatpush2.bf16.msra.mxu0 %v6587
    %7095 = vmatprep.subr.bf16.mxu0 %v6586
    %7096 = vmatpush2.bf16.msra.mxu0 %v6585
    %7097 = vmatprep.subr.bf16.mxu0 %v6584
    %7098 = vmatpush2.bf16.msra.mxu0 %v6583
    %7099 = vmatprep.subr.bf16.mxu0 %v6582
    %7100 = vmatpush2.bf16.msra.mxu0 %v6581
    %7101 = vmatprep.mubr.bf16.mxu0 %v5306
    %7102 = vmatmul.mubr.bf16.gmra.mxu0 %v5305
    %v7103 = vpop.f32.mrf.mxu0
    %v7104 = vadd.f32 %v7061, %v7103
    %v7105 = vpop.f32.mrf.mxu0
    %v7106 = vadd.f32 %v7063, %v7105
    %v7107 = vpop.f32.mrf.mxu0
    %v7108 = vadd.f32 %v7065, %v7107
    %v7109 = vpop.f32.mrf.mxu0
    %v7110 = vadd.f32 %v7067, %v7109
    %7111 = vdwg.mxu0
    %7112 = vmatprep.subr.bf16.mxu0 %v6612
    %7113 = vmatpush1.bf16.msra.mxu0 %v6611
    %7114 = vmatprep.subr.bf16.mxu0 %v6610
    %7115 = vmatpush1.bf16.msra.mxu0 %v6609
    %7116 = vmatprep.subr.bf16.mxu0 %v6608
    %7117 = vmatpush1.bf16.msra.mxu0 %v6607
    %7118 = vmatprep.subr.bf16.mxu0 %v6606
    %7119 = vmatpush1.bf16.msra.mxu0 %v6605
    %7120 = vmatprep.subr.bf16.mxu0 %v6604
    %7121 = vmatpush1.bf16.msra.mxu0 %v6603
    %7122 = vmatprep.subr.bf16.mxu0 %v6602
    %7123 = vmatpush1.bf16.msra.mxu0 %v6601
    %7124 = vmatprep.subr.bf16.mxu0 %v6600
    %7125 = vmatpush1.bf16.msra.mxu0 %v6599
    %7126 = vmatprep.subr.bf16.mxu0 %v6598
    %7127 = vmatpush1.bf16.msra.mxu0 %v6597
    %7128 = vmatprep.subr.bf16.mxu0 %v6628
    %7129 = vmatpush2.bf16.msra.mxu0 %v6627
    %7130 = vmatprep.subr.bf16.mxu0 %v6626
    %7131 = vmatpush2.bf16.msra.mxu0 %v6625
    %7132 = vmatprep.subr.bf16.mxu0 %v6624
    %7133 = vmatpush2.bf16.msra.mxu0 %v6623
    %7134 = vmatprep.subr.bf16.mxu0 %v6622
    %7135 = vmatpush2.bf16.msra.mxu0 %v6621
    %7136 = vmatprep.subr.bf16.mxu0 %v6620
    %7137 = vmatpush2.bf16.msra.mxu0 %v6619
    %7138 = vmatprep.subr.bf16.mxu0 %v6618
    %7139 = vmatpush2.bf16.msra.mxu0 %v6617
    %7140 = vmatprep.subr.bf16.mxu0 %v6616
    %7141 = vmatpush2.bf16.msra.mxu0 %v6615
    %7142 = vmatprep.subr.bf16.mxu0 %v6614
    %7143 = vmatpush2.bf16.msra.mxu0 %v6613
    %7144 = vmatprep.mubr.bf16.mxu0 %v5308
    %7145 = vmatmul.mubr.bf16.gmra.mxu0 %v5307
    %v7146 = vpop.f32.mrf.mxu0
    %v7147 = vadd.f32 %v7104, %v7146
    %v7148 = vpop.f32.mrf.mxu0
    %v7149 = vadd.f32 %v7106, %v7148
    %v7150 = vpop.f32.mrf.mxu0
    %v7151 = vadd.f32 %v7108, %v7150
    %v7152 = vpop.f32.mrf.mxu0
    %v7153 = vadd.f32 %v7110, %v7152
    %7154 = vdwg.mxu0
    %7155 = vmatprep.subr.bf16.mxu0 %v6644
    %7156 = vmatpush1.bf16.msra.mxu0 %v6643
    %7157 = vmatprep.subr.bf16.mxu0 %v6642
    %7158 = vmatpush1.bf16.msra.mxu0 %v6641
    %7159 = vmatprep.subr.bf16.mxu0 %v6640
    %7160 = vmatpush1.bf16.msra.mxu0 %v6639
    %7161 = vmatprep.subr.bf16.mxu0 %v6638
    %7162 = vmatpush1.bf16.msra.mxu0 %v6637
    %7163 = vmatprep.subr.bf16.mxu0 %v6636
    %7164 = vmatpush1.bf16.msra.mxu0 %v6635
    %7165 = vmatprep.subr.bf16.mxu0 %v6634
    %7166 = vmatpush1.bf16.msra.mxu0 %v6633
    %7167 = vmatprep.subr.bf16.mxu0 %v6632
    %7168 = vmatpush1.bf16.msra.mxu0 %v6631
    %7169 = vmatprep.subr.bf16.mxu0 %v6630
    %7170 = vmatpush1.bf16.msra.mxu0 %v6629
    %7171 = vmatprep.subr.bf16.mxu0 %v6660
    %7172 = vmatpush2.bf16.msra.mxu0 %v6659
    %7173 = vmatprep.subr.bf16.mxu0 %v6658
    %7174 = vmatpush2.bf16.msra.mxu0 %v6657
    %7175 = vmatprep.subr.bf16.mxu0 %v6656
    %7176 = vmatpush2.bf16.msra.mxu0 %v6655
    %7177 = vmatprep.subr.bf16.mxu0 %v6654
    %7178 = vmatpush2.bf16.msra.mxu0 %v6653
    %7179 = vmatprep.subr.bf16.mxu0 %v6652
    %7180 = vmatpush2.bf16.msra.mxu0 %v6651
    %7181 = vmatprep.subr.bf16.mxu0 %v6650
    %7182 = vmatpush2.bf16.msra.mxu0 %v6649
    %7183 = vmatprep.subr.bf16.mxu0 %v6648
    %7184 = vmatpush2.bf16.msra.mxu0 %v6647
    %7185 = vmatprep.subr.bf16.mxu0 %v6646
    %7186 = vmatpush2.bf16.msra.mxu0 %v6645
    %7187 = vmatprep.mubr.bf16.mxu0 %v5310
    %7188 = vmatmul.mubr.bf16.gmra.mxu0 %v5309
    %v7189 = vpop.f32.mrf.mxu0
    %v7190 = vadd.f32 %v7147, %v7189
    %v7191 = vpop.f32.mrf.mxu0
    %v7192 = vadd.f32 %v7149, %v7191
    %v7193 = vpop.f32.mrf.mxu0
    %v7194 = vadd.f32 %v7151, %v7193
    %v7195 = vpop.f32.mrf.mxu0
    %v7196 = vadd.f32 %v7153, %v7195
    %7197 = vdwg.mxu0
    %7198 = vmatprep.subr.bf16.mxu0 0
    %7199 = vmatpush1.bf16.msra.mxu0 0
    %7200 = vmatprep.subr.bf16.mxu0 0
    %7201 = vmatpush1.bf16.msra.mxu0 0
    %7202 = vmatprep.subr.bf16.mxu0 0
    %7203 = vmatpush1.bf16.msra.mxu0 0
    %7204 = vmatprep.subr.bf16.mxu0 0
    %7205 = vmatpush1.bf16.msra.mxu0 0
    %7206 = vmatprep.subr.bf16.mxu0 0
    %7207 = vmatpush1.bf16.msra.mxu0 0
    %7208 = vmatprep.subr.bf16.mxu0 0
    %7209 = vmatpush1.bf16.msra.mxu0 0
    %7210 = vmatprep.subr.bf16.mxu0 0
    %7211 = vmatpush1.bf16.msra.mxu0 0
    %7212 = vmatprep.subr.bf16.mxu0 %v6895
    %7213 = vmatpush1.bf16.msra.mxu0 %v6892
    %7214 = vmatprep.subr.bf16.mxu0 0
    %7215 = vmatpush2.bf16.msra.mxu0 0
    %7216 = vmatprep.subr.bf16.mxu0 0
    %7217 = vmatpush2.bf16.msra.mxu0 0
    %7218 = vmatprep.subr.bf16.mxu0 0
    %7219 = vmatpush2.bf16.msra.mxu0 0
    %7220 = vmatprep.subr.bf16.mxu0 0
    %7221 = vmatpush2.bf16.msra.mxu0 0
    %7222 = vmatprep.subr.bf16.mxu0 0
    %7223 = vmatpush2.bf16.msra.mxu0 0
    %7224 = vmatprep.subr.bf16.mxu0 0
    %7225 = vmatpush2.bf16.msra.mxu0 0
    %7226 = vmatprep.subr.bf16.mxu0 0
    %7227 = vmatpush2.bf16.msra.mxu0 0
    %7228 = vmatprep.subr.bf16.mxu0 0
    %7229 = vmatpush2.bf16.msra.mxu0 0
    %7230 = vmatprep.mubr.bf16.mxu0 0
    %7231 = vmatmul.mubr.bf16.gmra.mxu0 %v6889
    %v7232 = vpop.f32.mrf.mxu0
    %v7233 = vadd.f32 %v7190, %v7232
    %v7234 = vpop.f32.mrf.mxu0
    %v7235 = vadd.f32 %v7192, %v7234
    %v7236 = vpop.f32.mrf.mxu0
    %v7237 = vadd.f32 %v7194, %v7236
    %v7238 = vpop.f32.mrf.mxu0
    %v7239 = vadd.f32 %v7196, %v7238
    %7240 = vdwg.mxu0
    %v7466 = vunpack.c.l.b16 %v5312
    %v7467 = vunpack.c.h.b16 %v5312
    %v7468 = vunpack.c.l.b16 %v5313
    %v7469 = vunpack.c.h.b16 %v5313
    %v7470 = vunpack.c.l.b16 %v5314
    %v7471 = vunpack.c.h.b16 %v5314
    %v7472 = vunpack.c.l.b16 %v5315
    %v7473 = vunpack.c.h.b16 %v5315
    %v7474 = vunpack.c.l.b16 %v5316
    %v7475 = vunpack.c.h.b16 %v5316
    %v7476 = vunpack.c.l.b16 %v5317
    %v7477 = vunpack.c.h.b16 %v5317
    %v7478 = vunpack.c.l.b16 %v5318
    %v7479 = vunpack.c.h.b16 %v5318
    %v7480 = vunpack.c.l.b16 %v5319
    %v7481 = vunpack.c.h.b16 %v5319
    %v7482 = vunpack.c.l.b16 %v5320
    %v7483 = vunpack.c.h.b16 %v5320
    %v7484 = vunpack.c.l.b16 %v5321
    %v7485 = vunpack.c.h.b16 %v5321
    %v7486 = vunpack.c.l.b16 %v5322
    %v7487 = vunpack.c.h.b16 %v5322
    %v7488 = vunpack.c.l.b16 %v5323
    %v7489 = vunpack.c.h.b16 %v5323
    %v7490 = vunpack.c.l.b16 %v5324
    %v7491 = vunpack.c.h.b16 %v5324
    %v7492 = vunpack.c.l.b16 %v5325
    %v7493 = vunpack.c.h.b16 %v5325
    %v7494 = vunpack.c.l.b16 %v5326
    %v7495 = vunpack.c.h.b16 %v5326
    %v7496 = vunpack.c.l.b16 %v5327
    %v7497 = vunpack.c.h.b16 %v5327
    %v7498 = vunpack.c.l.b16 %v5328
    %v7499 = vunpack.c.h.b16 %v5328
    %v7500 = vunpack.c.l.b16 %v5329
    %v7501 = vunpack.c.h.b16 %v5329
    %v7502 = vunpack.c.l.b16 %v5330
    %v7503 = vunpack.c.h.b16 %v5330
    %v7504 = vunpack.c.l.b16 %v5331
    %v7505 = vunpack.c.h.b16 %v5331
    %v7506 = vunpack.c.l.b16 %v5332
    %v7507 = vunpack.c.h.b16 %v5332
    %v7508 = vunpack.c.l.b16 %v5333
    %v7509 = vunpack.c.h.b16 %v5333
    %v7510 = vunpack.c.l.b16 %v5334
    %v7511 = vunpack.c.h.b16 %v5334
    %v7512 = vunpack.c.l.b16 %v5335
    %v7513 = vunpack.c.h.b16 %v5335
    %v7514 = vunpack.c.l.b16 %v5336
    %v7515 = vunpack.c.h.b16 %v5336
    %v7516 = vunpack.c.l.b16 %v5337
    %v7517 = vunpack.c.h.b16 %v5337
    %v7518 = vunpack.c.l.b16 %v5338
    %v7519 = vunpack.c.h.b16 %v5338
    %v7520 = vunpack.c.l.b16 %v5339
    %v7521 = vunpack.c.h.b16 %v5339
    %v7522 = vunpack.c.l.b16 %v5340
    %v7523 = vunpack.c.h.b16 %v5340
    %v7524 = vunpack.c.l.b16 %v5341
    %v7525 = vunpack.c.h.b16 %v5341
    %v7526 = vunpack.c.l.b16 %v5342
    %v7527 = vunpack.c.h.b16 %v5342
    %v7528 = vunpack.c.l.b16 %v5343
    %v7529 = vunpack.c.h.b16 %v5343
    %v7530 = vunpack.c.l.b16 %v5344
    %v7531 = vunpack.c.h.b16 %v5344
    %v7532 = vunpack.c.l.b16 %v5345
    %v7533 = vunpack.c.h.b16 %v5345
    %v7534 = vunpack.c.l.b16 %v5346
    %v7535 = vunpack.c.h.b16 %v5346
    %v7536 = vunpack.c.l.b16 %v5347
    %v7537 = vunpack.c.h.b16 %v5347
    %v7538 = vunpack.c.l.b16 %v5348
    %v7539 = vunpack.c.h.b16 %v5348
    %v7540 = vunpack.c.l.b16 %v5349
    %v7541 = vunpack.c.h.b16 %v5349
    %v7542 = vunpack.c.l.b16 %v5350
    %v7543 = vunpack.c.h.b16 %v5350
    %v7544 = vunpack.c.l.b16 %v5351
    %v7545 = vunpack.c.h.b16 %v5351
    %v7546 = vunpack.c.l.b16 %v5352
    %v7547 = vunpack.c.h.b16 %v5352
    %v7548 = vunpack.c.l.b16 %v5353
    %v7549 = vunpack.c.h.b16 %v5353
    %v7550 = vunpack.c.l.b16 %v5354
    %v7551 = vunpack.c.h.b16 %v5354
    %v7552 = vunpack.c.l.b16 %v5355
    %v7553 = vunpack.c.h.b16 %v5355
    %v7554 = vunpack.c.l.b16 %v5356
    %v7555 = vunpack.c.h.b16 %v5356
    %v7556 = vunpack.c.l.b16 %v5357
    %v7557 = vunpack.c.h.b16 %v5357
    %v7558 = vunpack.c.l.b16 %v5358
    %v7559 = vunpack.c.h.b16 %v5358
    %v7560 = vunpack.c.l.b16 %v5359
    %v7561 = vunpack.c.h.b16 %v5359
    %v7562 = vunpack.c.l.b16 %v5360
    %v7563 = vunpack.c.h.b16 %v5360
    %v7564 = vunpack.c.l.b16 %v5361
    %v7565 = vunpack.c.h.b16 %v5361
    %v7566 = vunpack.c.l.b16 %v5362
    %v7567 = vunpack.c.h.b16 %v5362
    %v7568 = vunpack.c.l.b16 %v5363
    %v7569 = vunpack.c.h.b16 %v5363
    %v7570 = vunpack.c.l.b16 %v5364
    %v7571 = vunpack.c.h.b16 %v5364
    %v7572 = vunpack.c.l.b16 %v5365
    %v7573 = vunpack.c.h.b16 %v5365
    %v7574 = vunpack.c.l.b16 %v5366
    %v7575 = vunpack.c.h.b16 %v5366
    %v7576 = vunpack.c.l.b16 %v5367
    %v7577 = vunpack.c.h.b16 %v5367
    %v7578 = vunpack.c.l.b16 %v5368
    %v7579 = vunpack.c.h.b16 %v5368
    %v7580 = vunpack.c.l.b16 %v5369
    %v7581 = vunpack.c.h.b16 %v5369
    %v7582 = vunpack.c.l.b16 %v5370
    %v7583 = vunpack.c.h.b16 %v5370
    %v7584 = vunpack.c.l.b16 %v5371
    %v7585 = vunpack.c.h.b16 %v5371
    %v7586 = vunpack.c.l.b16 %v5372
    %v7587 = vunpack.c.h.b16 %v5372
    %v7588 = vunpack.c.l.b16 %v5373
    %v7589 = vunpack.c.h.b16 %v5373
    %v7590 = vunpack.c.l.b16 %v5374
    %v7591 = vunpack.c.h.b16 %v5374
    %v7592 = vunpack.c.l.b16 %v5375
    %v7593 = vunpack.c.h.b16 %v5375
    %v7594 = vunpack.c.l.b16 %v5376
    %v7595 = vunpack.c.h.b16 %v5376
    %v7596 = vunpack.c.l.b16 %v5377
    %v7597 = vunpack.c.h.b16 %v5377
    %v7598 = vunpack.c.l.b16 %v5378
    %v7599 = vunpack.c.h.b16 %v5378
    %v7600 = vunpack.c.l.b16 %v5379
    %v7601 = vunpack.c.h.b16 %v5379
    %v7602 = vunpack.c.l.b16 %v5380
    %v7603 = vunpack.c.h.b16 %v5380
    %v7604 = vunpack.c.l.b16 %v5381
    %v7605 = vunpack.c.h.b16 %v5381
    %v7606 = vunpack.c.l.b16 %v5382
    %v7607 = vunpack.c.h.b16 %v5382
    %v7608 = vunpack.c.l.b16 %v5383
    %v7609 = vunpack.c.h.b16 %v5383
    %v7610 = vunpack.c.l.b16 %v5384
    %v7611 = vunpack.c.h.b16 %v5384
    %v7612 = vunpack.c.l.b16 %v5385
    %v7613 = vunpack.c.h.b16 %v5385
    %v7614 = vunpack.c.l.b16 %v5386
    %v7615 = vunpack.c.h.b16 %v5386
    %v7616 = vunpack.c.l.b16 %v5387
    %v7617 = vunpack.c.h.b16 %v5387
    %v7618 = vunpack.c.l.b16 %v5388
    %v7619 = vunpack.c.h.b16 %v5388
    %v7620 = vunpack.c.l.b16 %v5389
    %v7621 = vunpack.c.h.b16 %v5389
    %v7622 = vunpack.c.l.b16 %v5390
    %v7623 = vunpack.c.h.b16 %v5390
    %v7624 = vunpack.c.l.b16 %v5391
    %v7625 = vunpack.c.h.b16 %v5391
    %v7626 = vunpack.c.l.b16 %v5392
    %v7627 = vunpack.c.h.b16 %v5392
    %v7628 = vunpack.c.l.b16 %v5393
    %v7629 = vunpack.c.h.b16 %v5393
    %v7630 = vunpack.c.l.b16 %v5394
    %v7631 = vunpack.c.h.b16 %v5394
    %v7632 = vunpack.c.l.b16 %v5395
    %v7633 = vunpack.c.h.b16 %v5395
    %v7634 = vunpack.c.l.b16 %v5396
    %v7635 = vunpack.c.h.b16 %v5396
    %v7636 = vunpack.c.l.b16 %v5397
    %v7637 = vunpack.c.h.b16 %v5397
    %v7638 = vunpack.c.l.b16 %v5398
    %v7639 = vunpack.c.h.b16 %v5398
    %v7640 = vunpack.c.l.b16 %v5399
    %v7641 = vunpack.c.h.b16 %v5399
    %v7642 = vunpack.c.l.b16 %v5400
    %v7643 = vunpack.c.h.b16 %v5400
    %v7644 = vunpack.c.l.b16 %v5401
    %v7645 = vunpack.c.h.b16 %v5401
    %v7646 = vunpack.c.l.b16 %v5402
    %v7647 = vunpack.c.h.b16 %v5402
    %v7648 = vunpack.c.l.b16 %v5403
    %v7649 = vunpack.c.h.b16 %v5403
    %v7650 = vunpack.c.l.b16 %v5404
    %v7651 = vunpack.c.h.b16 %v5404
    %v7652 = vunpack.c.l.b16 %v5405
    %v7653 = vunpack.c.h.b16 %v5405
    %v7654 = vunpack.c.l.b16 %v5406
    %v7655 = vunpack.c.h.b16 %v5406
    %v7656 = vunpack.c.l.b16 %v5407
    %v7657 = vunpack.c.h.b16 %v5407
    %v7658 = vunpack.c.l.b16 %v5408
    %v7659 = vunpack.c.h.b16 %v5408
    %v7660 = vunpack.c.l.b16 %v5409
    %v7661 = vunpack.c.h.b16 %v5409
    %v7662 = vunpack.c.l.b16 %v5410
    %v7663 = vunpack.c.h.b16 %v5410
    %v7664 = vunpack.c.l.b16 %v5411
    %v7665 = vunpack.c.h.b16 %v5411
    %v7666 = vunpack.c.l.b16 %v5412
    %v7667 = vunpack.c.h.b16 %v5412
    %v7668 = vunpack.c.l.b16 %v5413
    %v7669 = vunpack.c.h.b16 %v5413
    %v7670 = vunpack.c.l.b16 %v5414
    %v7671 = vunpack.c.h.b16 %v5414
    %v7672 = vunpack.c.l.b16 %v5415
    %v7673 = vunpack.c.h.b16 %v5415
    %v7674 = vunpack.c.l.b16 %v5416
    %v7675 = vunpack.c.h.b16 %v5416
    %v7676 = vunpack.c.l.b16 %v5417
    %v7677 = vunpack.c.h.b16 %v5417
    %v7678 = vunpack.c.l.b16 %v5418
    %v7679 = vunpack.c.h.b16 %v5418
    %v7680 = vunpack.c.l.b16 %v5419
    %v7681 = vunpack.c.h.b16 %v5419
    %v7682 = vunpack.c.l.b16 %v5420
    %v7683 = vunpack.c.h.b16 %v5420
    %v7684 = vunpack.c.l.b16 %v5421
    %v7685 = vunpack.c.h.b16 %v5421
    %v7686 = vunpack.c.l.b16 %v5422
    %v7687 = vunpack.c.h.b16 %v5422
    %v7688 = vunpack.c.l.b16 %v5423
    %v7689 = vunpack.c.h.b16 %v5423
    %v7690 = vunpack.c.l.b16 %v5424
    %v7691 = vunpack.c.h.b16 %v5424
    %v7692 = vunpack.c.l.b16 %v5425
    %v7693 = vunpack.c.h.b16 %v5425
    %v7694 = vunpack.c.l.b16 %v5426
    %v7695 = vunpack.c.h.b16 %v5426
    %v7696 = vunpack.c.l.b16 %v5427
    %v7697 = vunpack.c.h.b16 %v5427
    %v7698 = vunpack.c.l.b16 %v5428
    %v7699 = vunpack.c.h.b16 %v5428
    %v7700 = vunpack.c.l.b16 %v5429
    %v7701 = vunpack.c.h.b16 %v5429
    %v7702 = vunpack.c.l.b16 %v5430
    %v7703 = vunpack.c.h.b16 %v5430
    %v7704 = vunpack.c.l.b16 %v5431
    %v7705 = vunpack.c.h.b16 %v5431
    %v7706 = vunpack.c.l.b16 %v5432
    %v7707 = vunpack.c.h.b16 %v5432
    %v7708 = vunpack.c.l.b16 %v5433
    %v7709 = vunpack.c.h.b16 %v5433
    %v7710 = vunpack.c.l.b16 %v5434
    %v7711 = vunpack.c.h.b16 %v5434
    %v7712 = vunpack.c.l.b16 %v5435
    %v7713 = vunpack.c.h.b16 %v5435
    %v7714 = vunpack.c.l.b16 %v5436
    %v7715 = vunpack.c.h.b16 %v5436
    %v7716 = vunpack.c.l.b16 %v5437
    %v7717 = vunpack.c.h.b16 %v5437
    %v7718 = vunpack.c.l.b16 %v5438
    %v7719 = vunpack.c.h.b16 %v5438
    %v7720 = vunpack.c.l.b16 %v5439
    %v7721 = vunpack.c.h.b16 %v5439
    %v7722 = vunpack.c.l.b16 %v5440
    %v7723 = vunpack.c.h.b16 %v5440
    %v7724 = vunpack.c.l.b16 %v5441
    %v7725 = vunpack.c.h.b16 %v5441
    %v7726 = vunpack.c.l.b16 %v5442
    %v7727 = vunpack.c.h.b16 %v5442
    %v7728 = vunpack.c.l.b16 %v5443
    %v7729 = vunpack.c.h.b16 %v5443
    %v7730 = vunpack.c.l.b16 %v5444
    %v7731 = vunpack.c.h.b16 %v5444
    %v7732 = vunpack.c.l.b16 %v5445
    %v7733 = vunpack.c.h.b16 %v5445
    %v7734 = vunpack.c.l.b16 %v5446
    %v7735 = vunpack.c.h.b16 %v5446
    %v7736 = vunpack.c.l.b16 %v5447
    %v7737 = vunpack.c.h.b16 %v5447
    %v7738 = vunpack.c.l.b16 %v5448
    %v7739 = vunpack.c.h.b16 %v5448
    %v7740 = vunpack.c.l.b16 %v5449
    %v7741 = vunpack.c.h.b16 %v5449
    %v7742 = vunpack.c.l.b16 %v5450
    %v7743 = vunpack.c.h.b16 %v5450
    %v7744 = vunpack.c.l.b16 %v5451
    %v7745 = vunpack.c.h.b16 %v5451
    %v7746 = vunpack.c.l.b16 %v5452
    %v7747 = vunpack.c.h.b16 %v5452
    %v7748 = vunpack.c.l.b16 %v5453
    %v7749 = vunpack.c.h.b16 %v5453
    %v7750 = vunpack.c.l.b16 %v5454
    %v7751 = vunpack.c.h.b16 %v5454
    %v7752 = vunpack.c.l.b16 %v5455
    %v7753 = vunpack.c.h.b16 %v5455
    %v7754 = vunpack.c.l.b16 %v5456
    %v7755 = vunpack.c.h.b16 %v5456
    %v7756 = vunpack.c.l.b16 %v5457
    %v7757 = vunpack.c.h.b16 %v5457
    %v7758 = vunpack.c.l.b16 %v5458
    %v7759 = vunpack.c.h.b16 %v5458
    %v7760 = vunpack.c.l.b16 %v5459
    %v7761 = vunpack.c.h.b16 %v5459
    %v7762 = vunpack.c.l.b16 %v5460
    %v7763 = vunpack.c.h.b16 %v5460
    %v7764 = vunpack.c.l.b16 %v5461
    %v7765 = vunpack.c.h.b16 %v5461
    %v7766 = vunpack.c.l.b16 %v5462
    %v7767 = vunpack.c.h.b16 %v5462
    %v7768 = vunpack.c.l.b16 %v5463
    %v7769 = vunpack.c.h.b16 %v5463
    %v7770 = vunpack.c.l.b16 %v5464
    %v7771 = vunpack.c.h.b16 %v5464
    %v7772 = vunpack.c.l.b16 %v5465
    %v7773 = vunpack.c.h.b16 %v5465
    %v7774 = vunpack.c.l.b16 %v5466
    %v7775 = vunpack.c.h.b16 %v5466
    %v7776 = vunpack.c.l.b16 %v5467
    %v7777 = vunpack.c.h.b16 %v5467
    %v7778 = vunpack.c.l.b16 %v5468
    %v7779 = vunpack.c.h.b16 %v5468
    %v7780 = vunpack.c.l.b16 %v5469
    %v7781 = vunpack.c.h.b16 %v5469
    %v7782 = vunpack.c.l.b16 %v5470
    %v7783 = vunpack.c.h.b16 %v5470
    %v7784 = vunpack.c.l.b16 %v5471
    %v7785 = vunpack.c.h.b16 %v5471
    %v7786 = vunpack.c.l.b16 %v5472
    %v7787 = vunpack.c.h.b16 %v5472
    %v7788 = vunpack.c.l.b16 %v5473
    %v7789 = vunpack.c.h.b16 %v5473
    %v7790 = vunpack.c.l.b16 %v5474
    %v7791 = vunpack.c.h.b16 %v5474
    %v7792 = vunpack.c.l.b16 %v5475
    %v7793 = vunpack.c.h.b16 %v5475
    %v7794 = vunpack.c.l.b16 %v5476
    %v7795 = vunpack.c.h.b16 %v5476
    %v7796 = vunpack.c.l.b16 %v5477
    %v7797 = vunpack.c.h.b16 %v5477
    %v7798 = vunpack.c.l.b16 %v5478
    %v7799 = vunpack.c.h.b16 %v5478
    %v7800 = vunpack.c.l.b16 %v5479
    %v7801 = vunpack.c.h.b16 %v5479
    %v7802 = vunpack.c.l.b16 %v5480
    %v7803 = vunpack.c.h.b16 %v5480
    %v7804 = vunpack.c.l.b16 %v5481
    %v7805 = vunpack.c.h.b16 %v5481
    %v7806 = vunpack.c.l.b16 %v5482
    %v7807 = vunpack.c.h.b16 %v5482
    %v7808 = vunpack.c.l.b16 %v5483
    %v7809 = vunpack.c.h.b16 %v5483
    %v7810 = vunpack.c.l.b16 %v5484
    %v7811 = vunpack.c.h.b16 %v5484
    %v7812 = vunpack.c.l.b16 %v5485
    %v7813 = vunpack.c.h.b16 %v5485
    %v7814 = vunpack.c.l.b16 %v5486
    %v7815 = vunpack.c.h.b16 %v5486
    %v7816 = vunpack.c.l.b16 %v5487
    %v7817 = vunpack.c.h.b16 %v5487
    %v7818 = vunpack.c.l.b16 %v5488
    %v7819 = vunpack.c.h.b16 %v5488
    %v7820 = vunpack.c.l.b16 %v5489
    %v7821 = vunpack.c.h.b16 %v5489
    %v7822 = vunpack.c.l.b16 %v5490
    %v7823 = vunpack.c.h.b16 %v5490
    %v7824 = vunpack.c.l.b16 %v5491
    %v7825 = vunpack.c.h.b16 %v5491
    %v7826 = vunpack.c.l.b16 %v5492
    %v7827 = vunpack.c.h.b16 %v5492
    %v7828 = vunpack.c.l.b16 %v5493
    %v7829 = vunpack.c.h.b16 %v5493
    %v7830 = vunpack.c.l.b16 %v5494
    %v7831 = vunpack.c.h.b16 %v5494
    %v7832 = vunpack.c.l.b16 %v5495
    %v7833 = vunpack.c.h.b16 %v5495
    %v7834 = vunpack.c.l.b16 %v5496
    %v7835 = vunpack.c.h.b16 %v5496
    %v7836 = vunpack.c.l.b16 %v5497
    %v7837 = vunpack.c.h.b16 %v5497
    %v7838 = vunpack.c.l.b16 %v5498
    %v7839 = vunpack.c.h.b16 %v5498
    %v7840 = vunpack.c.l.b16 %v5499
    %v7841 = vunpack.c.h.b16 %v5499
    %v7842 = vunpack.c.l.b16 %v5500
    %v7843 = vunpack.c.h.b16 %v5500
    %v7844 = vunpack.c.l.b16 %v5501
    %v7845 = vunpack.c.h.b16 %v5501
    %v7846 = vunpack.c.l.b16 %v5502
    %v7847 = vunpack.c.h.b16 %v5502
    %v7848 = vunpack.c.l.b16 %v5503
    %v7849 = vunpack.c.h.b16 %v5503
    %v7850 = vunpack.c.l.b16 %v5504
    %v7851 = vunpack.c.h.b16 %v5504
    %v7852 = vunpack.c.l.b16 %v5505
    %v7853 = vunpack.c.h.b16 %v5505
    %v7854 = vunpack.c.l.b16 %v5506
    %v7855 = vunpack.c.h.b16 %v5506
    %v7856 = vunpack.c.l.b16 %v5507
    %v7857 = vunpack.c.h.b16 %v5507
    %v7858 = vunpack.c.l.b16 %v5508
    %v7859 = vunpack.c.h.b16 %v5508
    %v7860 = vunpack.c.l.b16 %v5509
    %v7861 = vunpack.c.h.b16 %v5509
    %v7862 = vunpack.c.l.b16 %v5510
    %v7863 = vunpack.c.h.b16 %v5510
    %v7864 = vunpack.c.l.b16 %v5511
    %v7865 = vunpack.c.h.b16 %v5511
    %v7866 = vunpack.c.l.b16 %v5512
    %v7867 = vunpack.c.h.b16 %v5512
    %v7868 = vunpack.c.l.b16 %v5513
    %v7869 = vunpack.c.h.b16 %v5513
    %v7870 = vunpack.c.l.b16 %v5514
    %v7871 = vunpack.c.h.b16 %v5514
    %v7872 = vunpack.c.l.b16 %v5515
    %v7873 = vunpack.c.h.b16 %v5515
    %v7874 = vunpack.c.l.b16 %v5516
    %v7875 = vunpack.c.h.b16 %v5516
    %v7876 = vunpack.c.l.b16 %v5517
    %v7877 = vunpack.c.h.b16 %v5517
    %v7878 = vunpack.c.l.b16 %v5518
    %v7879 = vunpack.c.h.b16 %v5518
    %v7880 = vunpack.c.l.b16 %v5519
    %v7881 = vunpack.c.h.b16 %v5519
    %v7882 = vunpack.c.l.b16 %v5520
    %v7883 = vunpack.c.h.b16 %v5520
    %v7884 = vunpack.c.l.b16 %v5521
    %v7885 = vunpack.c.h.b16 %v5521
    %v7886 = vunpack.c.l.b16 %v5522
    %v7887 = vunpack.c.h.b16 %v5522
    %v7888 = vunpack.c.l.b16 %v5523
    %v7889 = vunpack.c.h.b16 %v5523
    %v7890 = vunpack.c.l.b16 %v5524
    %v7891 = vunpack.c.h.b16 %v5524
    %v7892 = vunpack.c.l.b16 %v5525
    %v7893 = vunpack.c.h.b16 %v5525
    %v7894 = vunpack.c.l.b16 %v5526
    %v7895 = vunpack.c.h.b16 %v5526
    %v7896 = vunpack.c.l.b16 %v5527
    %v7897 = vunpack.c.h.b16 %v5527
    %v7898 = vunpack.c.l.b16 %v5528
    %v7899 = vunpack.c.h.b16 %v5528
    %v7900 = vunpack.c.l.b16 %v5529
    %v7901 = vunpack.c.h.b16 %v5529
    %v7902 = vunpack.c.l.b16 %v5530
    %v7903 = vunpack.c.h.b16 %v5530
    %v7904 = vunpack.c.l.b16 %v5531
    %v7905 = vunpack.c.h.b16 %v5531
    %v7906 = vunpack.c.l.b16 %v5532
    %v7907 = vunpack.c.h.b16 %v5532
    %v7908 = vunpack.c.l.b16 %v5533
    %v7909 = vunpack.c.h.b16 %v5533
    %v7910 = vunpack.c.l.b16 %v5534
    %v7911 = vunpack.c.h.b16 %v5534
    %v7912 = vunpack.c.l.b16 %v5535
    %v7913 = vunpack.c.h.b16 %v5535
    %v7914 = vunpack.c.l.b16 %v5536
    %v7915 = vunpack.c.h.b16 %v5536
    %v7916 = vpack.c.b16 %v7468, %v7466
    %v7917 = vpack.c.b16 %v7469, %v7467
    %v7918 = vpack.c.b16 %v7472, %v7470
    %v7919 = vpack.c.b16 %v7473, %v7471
    %v7920 = vpack.c.b16 %v7476, %v7474
    %v7921 = vpack.c.b16 %v7477, %v7475
    %v7922 = vpack.c.b16 %v7480, %v7478
    %v7923 = vpack.c.b16 %v7481, %v7479
    %v7924 = vpack.c.b16 %v7484, %v7482
    %v7925 = vpack.c.b16 %v7485, %v7483
    %v7926 = vpack.c.b16 %v7488, %v7486
    %v7927 = vpack.c.b16 %v7489, %v7487
    %v7928 = vpack.c.b16 %v7492, %v7490
    %v7929 = vpack.c.b16 %v7493, %v7491
    %v7930 = vpack.c.b16 %v7496, %v7494
    %v7931 = vpack.c.b16 %v7497, %v7495
    %v7932 = vpack.c.b16 %v7500, %v7498
    %v7933 = vpack.c.b16 %v7501, %v7499
    %v7934 = vpack.c.b16 %v7504, %v7502
    %v7935 = vpack.c.b16 %v7505, %v7503
    %v7936 = vpack.c.b16 %v7508, %v7506
    %v7937 = vpack.c.b16 %v7509, %v7507
    %v7938 = vpack.c.b16 %v7512, %v7510
    %v7939 = vpack.c.b16 %v7513, %v7511
    %v7940 = vpack.c.b16 %v7516, %v7514
    %v7941 = vpack.c.b16 %v7517, %v7515
    %v7942 = vpack.c.b16 %v7520, %v7518
    %v7943 = vpack.c.b16 %v7521, %v7519
    %v7944 = vpack.c.b16 %v7524, %v7522
    %v7945 = vpack.c.b16 %v7525, %v7523
    %v7946 = vpack.c.b16 %v7528, %v7526
    %v7947 = vpack.c.b16 %v7529, %v7527
    %v7948 = vpack.c.b16 %v7532, %v7530
    %v7949 = vpack.c.b16 %v7533, %v7531
    %v7950 = vpack.c.b16 %v7536, %v7534
    %v7951 = vpack.c.b16 %v7537, %v7535
    %v7952 = vpack.c.b16 %v7540, %v7538
    %v7953 = vpack.c.b16 %v7541, %v7539
    %v7954 = vpack.c.b16 %v7544, %v7542
    %v7955 = vpack.c.b16 %v7545, %v7543
    %v7956 = vpack.c.b16 %v7548, %v7546
    %v7957 = vpack.c.b16 %v7549, %v7547
    %v7958 = vpack.c.b16 %v7552, %v7550
    %v7959 = vpack.c.b16 %v7553, %v7551
    %v7960 = vpack.c.b16 %v7556, %v7554
    %v7961 = vpack.c.b16 %v7557, %v7555
    %v7962 = vpack.c.b16 %v7560, %v7558
    %v7963 = vpack.c.b16 %v7561, %v7559
    %v7964 = vpack.c.b16 %v7564, %v7562
    %v7965 = vpack.c.b16 %v7565, %v7563
    %v7966 = vpack.c.b16 %v7568, %v7566
    %v7967 = vpack.c.b16 %v7569, %v7567
    %v7968 = vpack.c.b16 %v7572, %v7570
    %v7969 = vpack.c.b16 %v7573, %v7571
    %v7970 = vpack.c.b16 %v7576, %v7574
    %v7971 = vpack.c.b16 %v7577, %v7575
    %v7972 = vpack.c.b16 %v7580, %v7578
    %v7973 = vpack.c.b16 %v7581, %v7579
    %v7974 = vpack.c.b16 %v7584, %v7582
    %v7975 = vpack.c.b16 %v7585, %v7583
    %v7976 = vpack.c.b16 %v7588, %v7586
    %v7977 = vpack.c.b16 %v7589, %v7587
    %v7978 = vpack.c.b16 %v7592, %v7590
    %v7979 = vpack.c.b16 %v7593, %v7591
    %v7980 = vpack.c.b16 %v7596, %v7594
    %v7981 = vpack.c.b16 %v7597, %v7595
    %v7982 = vpack.c.b16 %v7600, %v7598
    %v7983 = vpack.c.b16 %v7601, %v7599
    %v7984 = vpack.c.b16 %v7604, %v7602
    %v7985 = vpack.c.b16 %v7605, %v7603
    %v7986 = vpack.c.b16 %v7608, %v7606
    %v7987 = vpack.c.b16 %v7609, %v7607
    %v7988 = vpack.c.b16 %v7612, %v7610
    %v7989 = vpack.c.b16 %v7613, %v7611
    %v7990 = vpack.c.b16 %v7616, %v7614
    %v7991 = vpack.c.b16 %v7617, %v7615
    %v7992 = vpack.c.b16 %v7620, %v7618
    %v7993 = vpack.c.b16 %v7621, %v7619
    %v7994 = vpack.c.b16 %v7624, %v7622
    %v7995 = vpack.c.b16 %v7625, %v7623
    %v7996 = vpack.c.b16 %v7628, %v7626
    %v7997 = vpack.c.b16 %v7629, %v7627
    %v7998 = vpack.c.b16 %v7632, %v7630
    %v7999 = vpack.c.b16 %v7633, %v7631
    %v8000 = vpack.c.b16 %v7636, %v7634
    %v8001 = vpack.c.b16 %v7637, %v7635
    %v8002 = vpack.c.b16 %v7640, %v7638
    %v8003 = vpack.c.b16 %v7641, %v7639
    %v8004 = vpack.c.b16 %v7644, %v7642
    %v8005 = vpack.c.b16 %v7645, %v7643
    %v8006 = vpack.c.b16 %v7648, %v7646
    %v8007 = vpack.c.b16 %v7649, %v7647
    %v8008 = vpack.c.b16 %v7652, %v7650
    %v8009 = vpack.c.b16 %v7653, %v7651
    %v8010 = vpack.c.b16 %v7656, %v7654
    %v8011 = vpack.c.b16 %v7657, %v7655
    %v8012 = vpack.c.b16 %v7660, %v7658
    %v8013 = vpack.c.b16 %v7661, %v7659
    %v8014 = vpack.c.b16 %v7664, %v7662
    %v8015 = vpack.c.b16 %v7665, %v7663
    %v8016 = vpack.c.b16 %v7668, %v7666
    %v8017 = vpack.c.b16 %v7669, %v7667
    %v8018 = vpack.c.b16 %v7672, %v7670
    %v8019 = vpack.c.b16 %v7673, %v7671
    %v8020 = vpack.c.b16 %v7676, %v7674
    %v8021 = vpack.c.b16 %v7677, %v7675
    %v8022 = vpack.c.b16 %v7680, %v7678
    %v8023 = vpack.c.b16 %v7681, %v7679
    %v8024 = vpack.c.b16 %v7684, %v7682
    %v8025 = vpack.c.b16 %v7685, %v7683
    %v8026 = vpack.c.b16 %v7688, %v7686
    %v8027 = vpack.c.b16 %v7689, %v7687
    %v8028 = vpack.c.b16 %v7692, %v7690
    %v8029 = vpack.c.b16 %v7693, %v7691
    %v8030 = vpack.c.b16 %v7696, %v7694
    %v8031 = vpack.c.b16 %v7697, %v7695
    %v8032 = vpack.c.b16 %v7700, %v7698
    %v8033 = vpack.c.b16 %v7701, %v7699
    %v8034 = vpack.c.b16 %v7704, %v7702
    %v8035 = vpack.c.b16 %v7705, %v7703
    %v8036 = vpack.c.b16 %v7708, %v7706
    %v8037 = vpack.c.b16 %v7709, %v7707
    %v8038 = vpack.c.b16 %v7712, %v7710
    %v8039 = vpack.c.b16 %v7713, %v7711
    %v8040 = vpack.c.b16 %v7716, %v7714
    %v8041 = vpack.c.b16 %v7717, %v7715
    %v8042 = vpack.c.b16 %v7720, %v7718
    %v8043 = vpack.c.b16 %v7721, %v7719
    %v8044 = vpack.c.b16 %v7724, %v7722
    %v8045 = vpack.c.b16 %v7725, %v7723
    %v8046 = vpack.c.b16 %v7728, %v7726
    %v8047 = vpack.c.b16 %v7729, %v7727
    %v8048 = vpack.c.b16 %v7732, %v7730
    %v8049 = vpack.c.b16 %v7733, %v7731
    %v8050 = vpack.c.b16 %v7736, %v7734
    %v8051 = vpack.c.b16 %v7737, %v7735
    %v8052 = vpack.c.b16 %v7740, %v7738
    %v8053 = vpack.c.b16 %v7741, %v7739
    %v8054 = vpack.c.b16 %v7744, %v7742
    %v8055 = vpack.c.b16 %v7745, %v7743
    %v8056 = vpack.c.b16 %v7748, %v7746
    %v8057 = vpack.c.b16 %v7749, %v7747
    %v8058 = vpack.c.b16 %v7752, %v7750
    %v8059 = vpack.c.b16 %v7753, %v7751
    %v8060 = vpack.c.b16 %v7756, %v7754
    %v8061 = vpack.c.b16 %v7757, %v7755
    %v8062 = vpack.c.b16 %v7760, %v7758
    %v8063 = vpack.c.b16 %v7761, %v7759
    %v8064 = vpack.c.b16 %v7764, %v7762
    %v8065 = vpack.c.b16 %v7765, %v7763
    %v8066 = vpack.c.b16 %v7768, %v7766
    %v8067 = vpack.c.b16 %v7769, %v7767
    %v8068 = vpack.c.b16 %v7772, %v7770
    %v8069 = vpack.c.b16 %v7773, %v7771
    %v8070 = vpack.c.b16 %v7776, %v7774
    %v8071 = vpack.c.b16 %v7777, %v7775
    %v8072 = vpack.c.b16 %v7780, %v7778
    %v8073 = vpack.c.b16 %v7781, %v7779
    %v8074 = vpack.c.b16 %v7784, %v7782
    %v8075 = vpack.c.b16 %v7785, %v7783
    %v8076 = vpack.c.b16 %v7788, %v7786
    %v8077 = vpack.c.b16 %v7789, %v7787
    %v8078 = vpack.c.b16 %v7792, %v7790
    %v8079 = vpack.c.b16 %v7793, %v7791
    %v8080 = vpack.c.b16 %v7796, %v7794
    %v8081 = vpack.c.b16 %v7797, %v7795
    %v8082 = vpack.c.b16 %v7800, %v7798
    %v8083 = vpack.c.b16 %v7801, %v7799
    %v8084 = vpack.c.b16 %v7804, %v7802
    %v8085 = vpack.c.b16 %v7805, %v7803
    %v8086 = vpack.c.b16 %v7808, %v7806
    %v8087 = vpack.c.b16 %v7809, %v7807
    %v8088 = vpack.c.b16 %v7812, %v7810
    %v8089 = vpack.c.b16 %v7813, %v7811
    %v8090 = vpack.c.b16 %v7816, %v7814
    %v8091 = vpack.c.b16 %v7817, %v7815
    %v8092 = vpack.c.b16 %v7820, %v7818
    %v8093 = vpack.c.b16 %v7821, %v7819
    %v8094 = vpack.c.b16 %v7824, %v7822
    %v8095 = vpack.c.b16 %v7825, %v7823
    %v8096 = vpack.c.b16 %v7828, %v7826
    %v8097 = vpack.c.b16 %v7829, %v7827
    %v8098 = vpack.c.b16 %v7832, %v7830
    %v8099 = vpack.c.b16 %v7833, %v7831
    %v8100 = vpack.c.b16 %v7836, %v7834
    %v8101 = vpack.c.b16 %v7837, %v7835
    %v8102 = vpack.c.b16 %v7840, %v7838
    %v8103 = vpack.c.b16 %v7841, %v7839
    %v8104 = vpack.c.b16 %v7844, %v7842
    %v8105 = vpack.c.b16 %v7845, %v7843
    %v8106 = vpack.c.b16 %v7848, %v7846
    %v8107 = vpack.c.b16 %v7849, %v7847
    %v8108 = vpack.c.b16 %v7852, %v7850
    %v8109 = vpack.c.b16 %v7853, %v7851
    %v8110 = vpack.c.b16 %v7856, %v7854
    %v8111 = vpack.c.b16 %v7857, %v7855
    %v8112 = vpack.c.b16 %v7860, %v7858
    %v8113 = vpack.c.b16 %v7861, %v7859
    %v8114 = vpack.c.b16 %v7864, %v7862
    %v8115 = vpack.c.b16 %v7865, %v7863
    %v8116 = vpack.c.b16 %v7868, %v7866
    %v8117 = vpack.c.b16 %v7869, %v7867
    %v8118 = vpack.c.b16 %v7872, %v7870
    %v8119 = vpack.c.b16 %v7873, %v7871
    %v8120 = vpack.c.b16 %v7876, %v7874
    %v8121 = vpack.c.b16 %v7877, %v7875
    %v8122 = vpack.c.b16 %v7880, %v7878
    %v8123 = vpack.c.b16 %v7881, %v7879
    %v8124 = vpack.c.b16 %v7884, %v7882
    %v8125 = vpack.c.b16 %v7885, %v7883
    %v8126 = vpack.c.b16 %v7888, %v7886
    %v8127 = vpack.c.b16 %v7889, %v7887
    %v8128 = vpack.c.b16 %v7892, %v7890
    %v8129 = vpack.c.b16 %v7893, %v7891
    %v8130 = vpack.c.b16 %v7896, %v7894
    %v8131 = vpack.c.b16 %v7897, %v7895
    %v8132 = vpack.c.b16 %v7900, %v7898
    %v8133 = vpack.c.b16 %v7901, %v7899
    %v8134 = vpack.c.b16 %v7904, %v7902
    %v8135 = vpack.c.b16 %v7905, %v7903
    %v8136 = vpack.c.b16 %v7908, %v7906
    %v8137 = vpack.c.b16 %v7909, %v7907
    %v8138 = vpack.c.b16 %v7912, %v7910
    %v8139 = vpack.c.b16 %v7913, %v7911
    %v8140 = vpack.c.b16 %v7914, %v7914
    %v8141 = vpack.c.b16 %v7915, %v7915
    %v8367 = vsel %vm6887, %v5266, 0
    %v8370 = vsel %vm3580, %v8140, 0
    %v8373 = vsel %vm3580, %v8141, 0
    %8375 = vmatprep.subr.bf16.mxu0 %v7931
    %8376 = vmatpush1.bf16.msra.mxu0 %v7930
    %8377 = vmatprep.subr.bf16.mxu0 %v7929
    %8378 = vmatpush1.bf16.msra.mxu0 %v7928
    %8379 = vmatprep.subr.bf16.mxu0 %v7927
    %8380 = vmatpush1.bf16.msra.mxu0 %v7926
    %8381 = vmatprep.subr.bf16.mxu0 %v7925
    %8382 = vmatpush1.bf16.msra.mxu0 %v7924
    %8383 = vmatprep.subr.bf16.mxu0 %v7923
    %8384 = vmatpush1.bf16.msra.mxu0 %v7922
    %8385 = vmatprep.subr.bf16.mxu0 %v7921
    %8386 = vmatpush1.bf16.msra.mxu0 %v7920
    %8387 = vmatprep.subr.bf16.mxu0 %v7919
    %8388 = vmatpush1.bf16.msra.mxu0 %v7918
    %8389 = vmatprep.subr.bf16.mxu0 %v7917
    %8390 = vmatpush1.bf16.msra.mxu0 %v7916
    %8391 = vmatprep.subr.bf16.mxu0 %v7947
    %8392 = vmatpush2.bf16.msra.mxu0 %v7946
    %8393 = vmatprep.subr.bf16.mxu0 %v7945
    %8394 = vmatpush2.bf16.msra.mxu0 %v7944
    %8395 = vmatprep.subr.bf16.mxu0 %v7943
    %8396 = vmatpush2.bf16.msra.mxu0 %v7942
    %8397 = vmatprep.subr.bf16.mxu0 %v7941
    %8398 = vmatpush2.bf16.msra.mxu0 %v7940
    %8399 = vmatprep.subr.bf16.mxu0 %v7939
    %8400 = vmatpush2.bf16.msra.mxu0 %v7938
    %8401 = vmatprep.subr.bf16.mxu0 %v7937
    %8402 = vmatpush2.bf16.msra.mxu0 %v7936
    %8403 = vmatprep.subr.bf16.mxu0 %v7935
    %8404 = vmatpush2.bf16.msra.mxu0 %v7934
    %8405 = vmatprep.subr.bf16.mxu0 %v7933
    %8406 = vmatpush2.bf16.msra.mxu0 %v7932
    %8407 = vmatprep.mubr.bf16.mxu0 %v5253
    %8408 = vmatmul.mubr.bf16.gmra.mxu0 %v5252
    %v8409 = vpop.f32.mrf.mxu0
    %v8410 = vadd.f32 %v7233, %v8409
    %v8411 = vpop.f32.mrf.mxu0
    %v8412 = vadd.f32 %v7235, %v8411
    %v8413 = vpop.f32.mrf.mxu0
    %v8414 = vadd.f32 %v7237, %v8413
    %v8415 = vpop.f32.mrf.mxu0
    %v8416 = vadd.f32 %v7239, %v8415
    %8417 = vdwg.mxu0
    %8418 = vmatprep.subr.bf16.mxu0 %v7963
    %8419 = vmatpush1.bf16.msra.mxu0 %v7962
    %8420 = vmatprep.subr.bf16.mxu0 %v7961
    %8421 = vmatpush1.bf16.msra.mxu0 %v7960
    %8422 = vmatprep.subr.bf16.mxu0 %v7959
    %8423 = vmatpush1.bf16.msra.mxu0 %v7958
    %8424 = vmatprep.subr.bf16.mxu0 %v7957
    %8425 = vmatpush1.bf16.msra.mxu0 %v7956
    %8426 = vmatprep.subr.bf16.mxu0 %v7955
    %8427 = vmatpush1.bf16.msra.mxu0 %v7954
    %8428 = vmatprep.subr.bf16.mxu0 %v7953
    %8429 = vmatpush1.bf16.msra.mxu0 %v7952
    %8430 = vmatprep.subr.bf16.mxu0 %v7951
    %8431 = vmatpush1.bf16.msra.mxu0 %v7950
    %8432 = vmatprep.subr.bf16.mxu0 %v7949
    %8433 = vmatpush1.bf16.msra.mxu0 %v7948
    %8434 = vmatprep.subr.bf16.mxu0 %v7979
    %8435 = vmatpush2.bf16.msra.mxu0 %v7978
    %8436 = vmatprep.subr.bf16.mxu0 %v7977
    %8437 = vmatpush2.bf16.msra.mxu0 %v7976
    %8438 = vmatprep.subr.bf16.mxu0 %v7975
    %8439 = vmatpush2.bf16.msra.mxu0 %v7974
    %8440 = vmatprep.subr.bf16.mxu0 %v7973
    %8441 = vmatpush2.bf16.msra.mxu0 %v7972
    %8442 = vmatprep.subr.bf16.mxu0 %v7971
    %8443 = vmatpush2.bf16.msra.mxu0 %v7970
    %8444 = vmatprep.subr.bf16.mxu0 %v7969
    %8445 = vmatpush2.bf16.msra.mxu0 %v7968
    %8446 = vmatprep.subr.bf16.mxu0 %v7967
    %8447 = vmatpush2.bf16.msra.mxu0 %v7966
    %8448 = vmatprep.subr.bf16.mxu0 %v7965
    %8449 = vmatpush2.bf16.msra.mxu0 %v7964
    %8450 = vmatprep.mubr.bf16.mxu0 %v5255
    %8451 = vmatmul.mubr.bf16.gmra.mxu0 %v5254
    %v8452 = vpop.f32.mrf.mxu0
    %v8453 = vadd.f32 %v8410, %v8452
    %v8454 = vpop.f32.mrf.mxu0
    %v8455 = vadd.f32 %v8412, %v8454
    %v8456 = vpop.f32.mrf.mxu0
    %v8457 = vadd.f32 %v8414, %v8456
    %v8458 = vpop.f32.mrf.mxu0
    %v8459 = vadd.f32 %v8416, %v8458
    %8460 = vdwg.mxu0
    %8461 = vmatprep.subr.bf16.mxu0 %v7995
    %8462 = vmatpush1.bf16.msra.mxu0 %v7994
    %8463 = vmatprep.subr.bf16.mxu0 %v7993
    %8464 = vmatpush1.bf16.msra.mxu0 %v7992
    %8465 = vmatprep.subr.bf16.mxu0 %v7991
    %8466 = vmatpush1.bf16.msra.mxu0 %v7990
    %8467 = vmatprep.subr.bf16.mxu0 %v7989
    %8468 = vmatpush1.bf16.msra.mxu0 %v7988
    %8469 = vmatprep.subr.bf16.mxu0 %v7987
    %8470 = vmatpush1.bf16.msra.mxu0 %v7986
    %8471 = vmatprep.subr.bf16.mxu0 %v7985
    %8472 = vmatpush1.bf16.msra.mxu0 %v7984
    %8473 = vmatprep.subr.bf16.mxu0 %v7983
    %8474 = vmatpush1.bf16.msra.mxu0 %v7982
    %8475 = vmatprep.subr.bf16.mxu0 %v7981
    %8476 = vmatpush1.bf16.msra.mxu0 %v7980
    %8477 = vmatprep.subr.bf16.mxu0 %v8011
    %8478 = vmatpush2.bf16.msra.mxu0 %v8010
    %8479 = vmatprep.subr.bf16.mxu0 %v8009
    %8480 = vmatpush2.bf16.msra.mxu0 %v8008
    %8481 = vmatprep.subr.bf16.mxu0 %v8007
    %8482 = vmatpush2.bf16.msra.mxu0 %v8006
    %8483 = vmatprep.subr.bf16.mxu0 %v8005
    %8484 = vmatpush2.bf16.msra.mxu0 %v8004
    %8485 = vmatprep.subr.bf16.mxu0 %v8003
    %8486 = vmatpush2.bf16.msra.mxu0 %v8002
    %8487 = vmatprep.subr.bf16.mxu0 %v8001
    %8488 = vmatpush2.bf16.msra.mxu0 %v8000
    %8489 = vmatprep.subr.bf16.mxu0 %v7999
    %8490 = vmatpush2.bf16.msra.mxu0 %v7998
    %8491 = vmatprep.subr.bf16.mxu0 %v7997
    %8492 = vmatpush2.bf16.msra.mxu0 %v7996
    %8493 = vmatprep.mubr.bf16.mxu0 %v5257
    %8494 = vmatmul.mubr.bf16.gmra.mxu0 %v5256
    %v8495 = vpop.f32.mrf.mxu0
    %v8496 = vadd.f32 %v8453, %v8495
    %v8497 = vpop.f32.mrf.mxu0
    %v8498 = vadd.f32 %v8455, %v8497
    %v8499 = vpop.f32.mrf.mxu0
    %v8500 = vadd.f32 %v8457, %v8499
    %v8501 = vpop.f32.mrf.mxu0
    %v8502 = vadd.f32 %v8459, %v8501
    %8503 = vdwg.mxu0
    %8504 = vmatprep.subr.bf16.mxu0 %v8027
    %8505 = vmatpush1.bf16.msra.mxu0 %v8026
    %8506 = vmatprep.subr.bf16.mxu0 %v8025
    %8507 = vmatpush1.bf16.msra.mxu0 %v8024
    %8508 = vmatprep.subr.bf16.mxu0 %v8023
    %8509 = vmatpush1.bf16.msra.mxu0 %v8022
    %8510 = vmatprep.subr.bf16.mxu0 %v8021
    %8511 = vmatpush1.bf16.msra.mxu0 %v8020
    %8512 = vmatprep.subr.bf16.mxu0 %v8019
    %8513 = vmatpush1.bf16.msra.mxu0 %v8018
    %8514 = vmatprep.subr.bf16.mxu0 %v8017
    %8515 = vmatpush1.bf16.msra.mxu0 %v8016
    %8516 = vmatprep.subr.bf16.mxu0 %v8015
    %8517 = vmatpush1.bf16.msra.mxu0 %v8014
    %8518 = vmatprep.subr.bf16.mxu0 %v8013
    %8519 = vmatpush1.bf16.msra.mxu0 %v8012
    %8520 = vmatprep.subr.bf16.mxu0 %v8043
    %8521 = vmatpush2.bf16.msra.mxu0 %v8042
    %8522 = vmatprep.subr.bf16.mxu0 %v8041
    %8523 = vmatpush2.bf16.msra.mxu0 %v8040
    %8524 = vmatprep.subr.bf16.mxu0 %v8039
    %8525 = vmatpush2.bf16.msra.mxu0 %v8038
    %8526 = vmatprep.subr.bf16.mxu0 %v8037
    %8527 = vmatpush2.bf16.msra.mxu0 %v8036
    %8528 = vmatprep.subr.bf16.mxu0 %v8035
    %8529 = vmatpush2.bf16.msra.mxu0 %v8034
    %8530 = vmatprep.subr.bf16.mxu0 %v8033
    %8531 = vmatpush2.bf16.msra.mxu0 %v8032
    %8532 = vmatprep.subr.bf16.mxu0 %v8031
    %8533 = vmatpush2.bf16.msra.mxu0 %v8030
    %8534 = vmatprep.subr.bf16.mxu0 %v8029
    %8535 = vmatpush2.bf16.msra.mxu0 %v8028
    %8536 = vmatprep.mubr.bf16.mxu0 %v5259
    %8537 = vmatmul.mubr.bf16.gmra.mxu0 %v5258
    %v8538 = vpop.f32.mrf.mxu0
    %v8539 = vadd.f32 %v8496, %v8538
    %v8540 = vpop.f32.mrf.mxu0
    %v8541 = vadd.f32 %v8498, %v8540
    %v8542 = vpop.f32.mrf.mxu0
    %v8543 = vadd.f32 %v8500, %v8542
    %v8544 = vpop.f32.mrf.mxu0
    %v8545 = vadd.f32 %v8502, %v8544
    %8546 = vdwg.mxu0
    %8547 = vmatprep.subr.bf16.mxu0 %v8059
    %8548 = vmatpush1.bf16.msra.mxu0 %v8058
    %8549 = vmatprep.subr.bf16.mxu0 %v8057
    %8550 = vmatpush1.bf16.msra.mxu0 %v8056
    %8551 = vmatprep.subr.bf16.mxu0 %v8055
    %8552 = vmatpush1.bf16.msra.mxu0 %v8054
    %8553 = vmatprep.subr.bf16.mxu0 %v8053
    %8554 = vmatpush1.bf16.msra.mxu0 %v8052
    %8555 = vmatprep.subr.bf16.mxu0 %v8051
    %8556 = vmatpush1.bf16.msra.mxu0 %v8050
    %8557 = vmatprep.subr.bf16.mxu0 %v8049
    %8558 = vmatpush1.bf16.msra.mxu0 %v8048
    %8559 = vmatprep.subr.bf16.mxu0 %v8047
    %8560 = vmatpush1.bf16.msra.mxu0 %v8046
    %8561 = vmatprep.subr.bf16.mxu0 %v8045
    %8562 = vmatpush1.bf16.msra.mxu0 %v8044
    %8563 = vmatprep.subr.bf16.mxu0 %v8075
    %8564 = vmatpush2.bf16.msra.mxu0 %v8074
    %8565 = vmatprep.subr.bf16.mxu0 %v8073
    %8566 = vmatpush2.bf16.msra.mxu0 %v8072
    %8567 = vmatprep.subr.bf16.mxu0 %v8071
    %8568 = vmatpush2.bf16.msra.mxu0 %v8070
    %8569 = vmatprep.subr.bf16.mxu0 %v8069
    %8570 = vmatpush2.bf16.msra.mxu0 %v8068
    %8571 = vmatprep.subr.bf16.mxu0 %v8067
    %8572 = vmatpush2.bf16.msra.mxu0 %v8066
    %8573 = vmatprep.subr.bf16.mxu0 %v8065
    %8574 = vmatpush2.bf16.msra.mxu0 %v8064
    %8575 = vmatprep.subr.bf16.mxu0 %v8063
    %8576 = vmatpush2.bf16.msra.mxu0 %v8062
    %8577 = vmatprep.subr.bf16.mxu0 %v8061
    %8578 = vmatpush2.bf16.msra.mxu0 %v8060
    %8579 = vmatprep.mubr.bf16.mxu0 %v5261
    %8580 = vmatmul.mubr.bf16.gmra.mxu0 %v5260
    %v8581 = vpop.f32.mrf.mxu0
    %v8582 = vadd.f32 %v8539, %v8581
    %v8583 = vpop.f32.mrf.mxu0
    %v8584 = vadd.f32 %v8541, %v8583
    %v8585 = vpop.f32.mrf.mxu0
    %v8586 = vadd.f32 %v8543, %v8585
    %v8587 = vpop.f32.mrf.mxu0
    %v8588 = vadd.f32 %v8545, %v8587
    %8589 = vdwg.mxu0
    %8590 = vmatprep.subr.bf16.mxu0 %v8091
    %8591 = vmatpush1.bf16.msra.mxu0 %v8090
    %8592 = vmatprep.subr.bf16.mxu0 %v8089
    %8593 = vmatpush1.bf16.msra.mxu0 %v8088
    %8594 = vmatprep.subr.bf16.mxu0 %v8087
    %8595 = vmatpush1.bf16.msra.mxu0 %v8086
    %8596 = vmatprep.subr.bf16.mxu0 %v8085
    %8597 = vmatpush1.bf16.msra.mxu0 %v8084
    %8598 = vmatprep.subr.bf16.mxu0 %v8083
    %8599 = vmatpush1.bf16.msra.mxu0 %v8082
    %8600 = vmatprep.subr.bf16.mxu0 %v8081
    %8601 = vmatpush1.bf16.msra.mxu0 %v8080
    %8602 = vmatprep.subr.bf16.mxu0 %v8079
    %8603 = vmatpush1.bf16.msra.mxu0 %v8078
    %8604 = vmatprep.subr.bf16.mxu0 %v8077
    %8605 = vmatpush1.bf16.msra.mxu0 %v8076
    %8606 = vmatprep.subr.bf16.mxu0 %v8107
    %8607 = vmatpush2.bf16.msra.mxu0 %v8106
    %8608 = vmatprep.subr.bf16.mxu0 %v8105
    %8609 = vmatpush2.bf16.msra.mxu0 %v8104
    %8610 = vmatprep.subr.bf16.mxu0 %v8103
    %8611 = vmatpush2.bf16.msra.mxu0 %v8102
    %8612 = vmatprep.subr.bf16.mxu0 %v8101
    %8613 = vmatpush2.bf16.msra.mxu0 %v8100
    %8614 = vmatprep.subr.bf16.mxu0 %v8099
    %8615 = vmatpush2.bf16.msra.mxu0 %v8098
    %8616 = vmatprep.subr.bf16.mxu0 %v8097
    %8617 = vmatpush2.bf16.msra.mxu0 %v8096
    %8618 = vmatprep.subr.bf16.mxu0 %v8095
    %8619 = vmatpush2.bf16.msra.mxu0 %v8094
    %8620 = vmatprep.subr.bf16.mxu0 %v8093
    %8621 = vmatpush2.bf16.msra.mxu0 %v8092
    %8622 = vmatprep.mubr.bf16.mxu0 %v5263
    %8623 = vmatmul.mubr.bf16.gmra.mxu0 %v5262
    %v8624 = vpop.f32.mrf.mxu0
    %v8625 = vadd.f32 %v8582, %v8624
    %v8626 = vpop.f32.mrf.mxu0
    %v8627 = vadd.f32 %v8584, %v8626
    %v8628 = vpop.f32.mrf.mxu0
    %v8629 = vadd.f32 %v8586, %v8628
    %v8630 = vpop.f32.mrf.mxu0
    %v8631 = vadd.f32 %v8588, %v8630
    %8632 = vdwg.mxu0
    %8633 = vmatprep.subr.bf16.mxu0 %v8123
    %8634 = vmatpush1.bf16.msra.mxu0 %v8122
    %8635 = vmatprep.subr.bf16.mxu0 %v8121
    %8636 = vmatpush1.bf16.msra.mxu0 %v8120
    %8637 = vmatprep.subr.bf16.mxu0 %v8119
    %8638 = vmatpush1.bf16.msra.mxu0 %v8118
    %8639 = vmatprep.subr.bf16.mxu0 %v8117
    %8640 = vmatpush1.bf16.msra.mxu0 %v8116
    %8641 = vmatprep.subr.bf16.mxu0 %v8115
    %8642 = vmatpush1.bf16.msra.mxu0 %v8114
    %8643 = vmatprep.subr.bf16.mxu0 %v8113
    %8644 = vmatpush1.bf16.msra.mxu0 %v8112
    %8645 = vmatprep.subr.bf16.mxu0 %v8111
    %8646 = vmatpush1.bf16.msra.mxu0 %v8110
    %8647 = vmatprep.subr.bf16.mxu0 %v8109
    %8648 = vmatpush1.bf16.msra.mxu0 %v8108
    %8649 = vmatprep.subr.bf16.mxu0 %v8139
    %8650 = vmatpush2.bf16.msra.mxu0 %v8138
    %8651 = vmatprep.subr.bf16.mxu0 %v8137
    %8652 = vmatpush2.bf16.msra.mxu0 %v8136
    %8653 = vmatprep.subr.bf16.mxu0 %v8135
    %8654 = vmatpush2.bf16.msra.mxu0 %v8134
    %8655 = vmatprep.subr.bf16.mxu0 %v8133
    %8656 = vmatpush2.bf16.msra.mxu0 %v8132
    %8657 = vmatprep.subr.bf16.mxu0 %v8131
    %8658 = vmatpush2.bf16.msra.mxu0 %v8130
    %8659 = vmatprep.subr.bf16.mxu0 %v8129
    %8660 = vmatpush2.bf16.msra.mxu0 %v8128
    %8661 = vmatprep.subr.bf16.mxu0 %v8127
    %8662 = vmatpush2.bf16.msra.mxu0 %v8126
    %8663 = vmatprep.subr.bf16.mxu0 %v8125
    %8664 = vmatpush2.bf16.msra.mxu0 %v8124
    %8665 = vmatprep.mubr.bf16.mxu0 %v5265
    %8666 = vmatmul.mubr.bf16.gmra.mxu0 %v5264
    %v8667 = vpop.f32.mrf.mxu0
    %v8668 = vadd.f32 %v8625, %v8667
    %v8669 = vpop.f32.mrf.mxu0
    %v8670 = vadd.f32 %v8627, %v8669
    %v8671 = vpop.f32.mrf.mxu0
    %v8672 = vadd.f32 %v8629, %v8671
    %v8673 = vpop.f32.mrf.mxu0
    %v8674 = vadd.f32 %v8631, %v8673
    %8675 = vdwg.mxu0
    %8676 = vmatprep.subr.bf16.mxu0 0
    %8677 = vmatpush1.bf16.msra.mxu0 0
    %8678 = vmatprep.subr.bf16.mxu0 0
    %8679 = vmatpush1.bf16.msra.mxu0 0
    %8680 = vmatprep.subr.bf16.mxu0 0
    %8681 = vmatpush1.bf16.msra.mxu0 0
    %8682 = vmatprep.subr.bf16.mxu0 0
    %8683 = vmatpush1.bf16.msra.mxu0 0
    %8684 = vmatprep.subr.bf16.mxu0 0
    %8685 = vmatpush1.bf16.msra.mxu0 0
    %8686 = vmatprep.subr.bf16.mxu0 0
    %8687 = vmatpush1.bf16.msra.mxu0 0
    %8688 = vmatprep.subr.bf16.mxu0 0
    %8689 = vmatpush1.bf16.msra.mxu0 0
    %8690 = vmatprep.subr.bf16.mxu0 %v8373
    %8691 = vmatpush1.bf16.msra.mxu0 %v8370
    %8692 = vmatprep.subr.bf16.mxu0 0
    %8693 = vmatpush2.bf16.msra.mxu0 0
    %8694 = vmatprep.subr.bf16.mxu0 0
    %8695 = vmatpush2.bf16.msra.mxu0 0
    %8696 = vmatprep.subr.bf16.mxu0 0
    %8697 = vmatpush2.bf16.msra.mxu0 0
    %8698 = vmatprep.subr.bf16.mxu0 0
    %8699 = vmatpush2.bf16.msra.mxu0 0
    %8700 = vmatprep.subr.bf16.mxu0 0
    %8701 = vmatpush2.bf16.msra.mxu0 0
    %8702 = vmatprep.subr.bf16.mxu0 0
    %8703 = vmatpush2.bf16.msra.mxu0 0
    %8704 = vmatprep.subr.bf16.mxu0 0
    %8705 = vmatpush2.bf16.msra.mxu0 0
    %8706 = vmatprep.subr.bf16.mxu0 0
    %8707 = vmatpush2.bf16.msra.mxu0 0
    %8708 = vmatprep.mubr.bf16.mxu0 0
    %8709 = vmatmul.mubr.bf16.gmra.mxu0 %v8367
    %v8710 = vpop.f32.mrf.mxu0
    %v8711 = vadd.f32 %v8668, %v8710
    %v8712 = vpop.f32.mrf.mxu0
    %v8713 = vadd.f32 %v8670, %v8712
    %v8714 = vpop.f32.mrf.mxu0
    %v8715 = vadd.f32 %v8672, %v8714
    %v8716 = vpop.f32.mrf.mxu0
    %v8717 = vadd.f32 %v8674, %v8716
    %8718 = vdwg.mxu0
    %v8719 = vld [vmem:[%s7] sm:$0x3]
    %v8721 = vlaneseq
    %v8722 = vshrl.u32 %v8721, 7
    %v8723 = vsub.s32 0, %v8722
    %v8724 = vrot.slane %v8719, %v8723
    %v8725 = vlaneseq
    %v8726 = vshrl.u32 %v8725, 7
    %v8727 = vsub.s32 1, %v8726
    %v8728 = vrot.slane %v8719, %v8727
    %v8731 = vadd.f32 %v8711, %v8724
    %v8732 = vadd.f32 %v8713, %v8728
    %v8733 = vadd.f32 %v8715, %v8724
    %v8734 = vadd.f32 %v8717, %v8728
    %v8735 = vmax.f32 %v8731, 0.0
    %v8736 = vmax.f32 %v8732, 0.0
    %v8737 = vmax.f32 %v8733, 0.0
    %v8738 = vmax.f32 %v8734, 0.0
    %v8739 = vmul.f32 %v8735, %v8735
    %v8740 = vmul.f32 %v8737, %v8737
    %v8741 = vmul.f32 %v8736, %v8736
    %v8742 = vmul.f32 %v8738, %v8738
    %8747 = vrot.lane.b32.xlu0 %v8739, 8
    %v8748 = vpop.permute.xlu0 %8747
    %8749 = vrot.lane.b32.xlu0 %v8741, 8
    %v8750 = vpop.permute.xlu0 %8749
    %8751 = vrot.lane.b32.xlu0 %v8740, 8
    %v8752 = vpop.permute.xlu0 %8751
    %8753 = vrot.lane.b32.xlu0 %v8742, 8
    %v8754 = vpop.permute.xlu0 %8753
    %v8755 = vsel %vm6887, %v8748, %v8750
    %v8756 = vsel %vm6887, %v8752, %v8754
    %v8759 = vadd.f32 %v8739, %v8755
    %v8760 = vadd.f32 %v8740, %v8756
    %v8763 = vadd.f32 %v8739, %v8750
    %v8764 = vadd.f32 %v8740, %v8754
    %8767 = vrot.lane.b32.xlu0 %v8759, 60
    %v8768 = vpop.permute.xlu0 %8767
    %8769 = vrot.lane.b32.xlu0 %v8760, 60
    %v8770 = vpop.permute.xlu0 %8769
    %vm8773 = vcmp.gt.f32.partialorder %v8763, %v8768
    %vm8774 = vcmp.gt.f32.partialorder %v8764, %v8770
    %8777 = vrot.lane.b32.xlu0 %v8735, 60
    %v8778 = vpop.permute.xlu0 %8777
    %8779 = vrot.lane.b32.xlu0 %v8737, 60
    %v8780 = vpop.permute.xlu0 %8779
    %v8783 = vsel %vm8773, %v8735, %v8778
    %v8784 = vsel %vm8774, %v8737, %v8780
    %8787 = vrot.lane.b32.xlu0 %v8736, 8
    %v8788 = vpop.permute.xlu0 %8787
    %8789 = vrot.lane.b32.xlu0 %v8738, 8
    %v8790 = vpop.permute.xlu0 %8789
    %8793 = vrot.lane.b32.xlu0 %v8735, 68
    %v8794 = vpop.permute.xlu0 %8793
    %8795 = vrot.lane.b32.xlu0 %v8736, 68
    %v8796 = vpop.permute.xlu0 %8795
    %8797 = vrot.lane.b32.xlu0 %v8737, 68
    %v8798 = vpop.permute.xlu0 %8797
    %8799 = vrot.lane.b32.xlu0 %v8738, 68
    %v8800 = vpop.permute.xlu0 %8799
    %vm8801 = vcmask 556032
    %v8802 = vsel %vm8801, %v8794, %v8796
    %v8803 = vsel %vm8801, %v8798, %v8800
    %v8806 = vsel %vm8773, %v8788, %v8802
    %v8807 = vsel %vm8774, %v8790, %v8803
    %v8808 = vsel %vm8773, %v8763, %v8768
    %v8809 = vsel %vm8774, %v8764, %v8770
    %v8812 = vrot.slane %v8808, 4
    %v8813 = vrot.slane %v8809, 4
    %8814 = vrot.lane.b32.xlu0 %v8812, 68
    %v8815 = vpop.permute.xlu0 %8814
    %8816 = vrot.lane.b32.xlu0 %v8813, 68
    %v8817 = vpop.permute.xlu0 %8816
    %vm8820 = vcmp.gt.f32.partialorder %v8759, %v8815
    %vm8821 = vcmp.gt.f32.partialorder %v8760, %v8817
    %v8824 = vrot.slane %v8783, 4
    %v8825 = vrot.slane %v8784, 4
    %8826 = vrot.lane.b32.xlu0 %v8824, 68
    %v8827 = vpop.permute.xlu0 %8826
    %8828 = vrot.lane.b32.xlu0 %v8825, 68
    %v8829 = vpop.permute.xlu0 %8828
    %v8832 = vsel %vm8820, %v8735, %v8827
    %v8833 = vsel %vm8821, %v8737, %v8829
    %8834 = vrot.lane.b32.xlu0 %v8735, 8
    %v8835 = vpop.permute.xlu0 %8834
    %8836 = vrot.lane.b32.xlu0 %v8737, 8
    %v8837 = vpop.permute.xlu0 %8836
    %v8838 = vsel %vm6887, %v8835, %v8788
    %v8839 = vsel %vm6887, %v8837, %v8790
    %v8844 = vrot.slane %v8806, 4
    %v8845 = vrot.slane %v8807, 4
    %8846 = vrot.lane.b32.xlu0 %v8844, 68
    %v8847 = vpop.permute.xlu0 %8846
    %8848 = vrot.lane.b32.xlu0 %v8845, 68
    %v8849 = vpop.permute.xlu0 %8848
    %v8852 = vsel %vm8820, %v8838, %v8847
    %v8853 = vsel %vm8821, %v8839, %v8849
    %v8854 = vsel %vm8820, %v8759, %v8815
    %v8855 = vsel %vm8821, %v8760, %v8817
    %8858 = vrot.lane.b32.xlu0 %v8854, 60
    %v8859 = vpop.permute.xlu0 %8858
    %8860 = vrot.lane.b32.xlu0 %v8855, 60
    %v8861 = vpop.permute.xlu0 %8860
    %vm8864 = vcmp.gt.f32.partialorder %v8763, %v8859
    %vm8865 = vcmp.gt.f32.partialorder %v8764, %v8861
    %8868 = vrot.lane.b32.xlu0 %v8832, 60
    %v8869 = vpop.permute.xlu0 %8868
    %8870 = vrot.lane.b32.xlu0 %v8833, 60
    %v8871 = vpop.permute.xlu0 %8870
    %v8874 = vsel %vm8864, %v8735, %v8869
    %v8875 = vsel %vm8865, %v8737, %v8871
    %8878 = vrot.lane.b32.xlu0 %v8852, 60
    %v8879 = vpop.permute.xlu0 %8878
    %8880 = vrot.lane.b32.xlu0 %v8853, 60
    %v8881 = vpop.permute.xlu0 %8880
    %v8884 = vsel %vm8864, %v8788, %v8879
    %v8885 = vsel %vm8865, %v8790, %v8881
    %8888 = vrot.lane.b32.xlu0 %v8874, 68
    %v8889 = vpop.permute.xlu0 %8888
    %8890 = vrot.lane.b32.xlu0 %v8875, 68
    %v8891 = vpop.permute.xlu0 %8890
    %vm8894 = vcmask 490500
    %8895 = vst.msk [vmem:[#allocation6 - $0x4] sm:$0xf0] %vm8894, %v8889
    %8896 = vst.msk [vmem:[#allocation6] sm:$0xf0] %vm8894, %v8891
    %8899 = vrot.lane.b32.xlu0 %v8884, 68
    %v8900 = vpop.permute.xlu0 %8899
    %8901 = vrot.lane.b32.xlu0 %v8885, 68
    %v8902 = vpop.permute.xlu0 %8901
    %8905 = vst.msk [vmem:[#allocation7 - $0x4] sm:$0xf0] %vm8894, %v8900
    %8906 = vst.msk [vmem:[#allocation7] sm:$0xf0] %vm8894, %v8902
    %v8907 = vld [vmem:[#allocation6] sm:$0x1]
    %v8908 = vld [vmem:[#allocation6 + $0x4] sm:$0x1]
    %v8909 = vpack.c.bf16 %v8907, %v8907
    %v8910 = vpack.c.bf16 %v8908, %v8908
    %v8911 = vld [vmem:[#allocation7] sm:$0x1]
    %v8912 = vld [vmem:[#allocation7 + $0x4] sm:$0x1]
    %v8913 = vpack.c.bf16 %v8911, %v8911
    %v8914 = vpack.c.bf16 %v8912, %v8912
    %v8915 = vld [vmem:[%s8] sm:$0xff]
    %v8916 = vld [vmem:[%s8 + $0x8] sm:$0xff]
    %v8917 = vld [vmem:[%s8 + $0x10] sm:$0xff]
    %v8918 = vld [vmem:[%s8 + $0x18] sm:$0xff]
    %v8919 = vld [vmem:[%s8 + $0x20] sm:$0xff]
    %v8920 = vld [vmem:[%s8 + $0x28] sm:$0xff]
    %v8921 = vld [vmem:[%s8 + $0x30] sm:$0xff]
    %v8922 = vld [vmem:[%s8 + $0x38] sm:$0x33]
    %v8923 = vld [vmem:[#allocation16] sm:$0xff]
    %v8924 = vld [vmem:[#allocation16 + $0x8] sm:$0xff]
    %v8925 = vld [vmem:[#allocation16 + $0x10] sm:$0xff]
    %v8926 = vld [vmem:[#allocation16 + $0x18] sm:$0xff]
    %v8927 = vld [vmem:[#allocation16 + $0x20] sm:$0xff]
    %v8928 = vld [vmem:[#allocation16 + $0x28] sm:$0xff]
    %v8929 = vld [vmem:[#allocation16 + $0x30] sm:$0xff]
    %v8930 = vld [vmem:[#allocation16 + $0x38] sm:$0x33]
    %v8933 = vunpack.c.l.b16 %v8913
    %v8934 = vunpack.c.l.b16 %v8914
    %v8935 = vrot.slane %v8934, 7
    %vm8936 = vcmask 1041409
    %v8937 = vsel %vm8936, %v8935, %v8933
    %v8938 = vpack.c.b16 %v8937, %v8937
    %v8947 = vunpack.c.l.b16 %v8923
    %v8948 = vunpack.c.h.b16 %v8923
    %v8949 = vunpack.c.l.b16 %v8924
    %v8950 = vunpack.c.h.b16 %v8924
    %v8951 = vunpack.c.l.b16 %v8925
    %v8952 = vunpack.c.h.b16 %v8925
    %v8953 = vunpack.c.l.b16 %v8926
    %v8954 = vunpack.c.h.b16 %v8926
    %v8955 = vunpack.c.l.b16 %v8927
    %v8956 = vunpack.c.h.b16 %v8927
    %v8957 = vunpack.c.l.b16 %v8928
    %v8958 = vunpack.c.h.b16 %v8928
    %v8959 = vunpack.c.l.b16 %v8929
    %v8960 = vunpack.c.h.b16 %v8929
    %v8961 = vunpack.c.l.b16 %v8930
    %v8962 = vunpack.c.h.b16 %v8930
    %v8963 = vpack.c.b16 %v8949, %v8947
    %v8964 = vpack.c.b16 %v8950, %v8948
    %v8965 = vpack.c.b16 %v8953, %v8951
    %v8966 = vpack.c.b16 %v8954, %v8952
    %v8967 = vpack.c.b16 %v8957, %v8955
    %v8968 = vpack.c.b16 %v8958, %v8956
    %v8969 = vpack.c.b16 %v8961, %v8959
    %v8970 = vpack.c.b16 %v8962, %v8960
    %vm8977 = vcmask 490496
    %v8979 = vsel %vm8977, %v8938, 0
    %v8982 = vsel %vm1387, %v8969, 0
    %v8985 = vsel %vm1387, %v8970, 0
    %8987 = vmatprep.subr.bf16.mxu0 0
    %8988 = vmatpush1.bf16.msra.mxu0 0
    %8989 = vmatprep.subr.bf16.mxu0 0
    %8990 = vmatpush1.bf16.msra.mxu0 0
    %8991 = vmatprep.subr.bf16.mxu0 0
    %8992 = vmatpush1.bf16.msra.mxu0 0
    %8993 = vmatprep.subr.bf16.mxu0 0
    %8994 = vmatpush1.bf16.msra.mxu0 0
    %8995 = vmatprep.subr.bf16.mxu0 %v8985
    %8996 = vmatpush1.bf16.msra.mxu0 %v8982
    %8997 = vmatprep.subr.bf16.mxu0 %v8968
    %8998 = vmatpush1.bf16.msra.mxu0 %v8967
    %8999 = vmatprep.subr.bf16.mxu0 %v8966
    %9000 = vmatpush1.bf16.msra.mxu0 %v8965
    %9001 = vmatprep.subr.bf16.mxu0 %v8964
    %9002 = vmatpush1.bf16.msra.mxu0 %v8963
    %9003 = vmatprep.subr.bf16.mxu0 0
    %9004 = vmatpush2.bf16.msra.mxu0 0
    %9005 = vmatprep.subr.bf16.mxu0 0
    %9006 = vmatpush2.bf16.msra.mxu0 0
    %9007 = vmatprep.subr.bf16.mxu0 0
    %9008 = vmatpush2.bf16.msra.mxu0 0
    %9009 = vmatprep.subr.bf16.mxu0 0
    %9010 = vmatpush2.bf16.msra.mxu0 0
    %9011 = vmatprep.subr.bf16.mxu0 0
    %9012 = vmatpush2.bf16.msra.mxu0 0
    %9013 = vmatprep.subr.bf16.mxu0 0
    %9014 = vmatpush2.bf16.msra.mxu0 0
    %9015 = vmatprep.subr.bf16.mxu0 0
    %9016 = vmatpush2.bf16.msra.mxu0 0
    %9017 = vmatprep.subr.bf16.mxu0 0
    %9018 = vmatpush2.bf16.msra.mxu0 0
    %9019 = vmatprep.mubr.bf16.mxu0 0
    %9020 = vmatmul.mubr.bf16.gmra.mxu0 %v8979
    %v9021 = vpop.f32.mrf.mxu0
    %v9022 = vadd.f32 0.0, %v9021
    %v9023 = vpop.f32.mrf.mxu0
    %v9024 = vadd.f32 0.0, %v9023
    %v9025 = vpop.f32.mrf.mxu0
    %v9026 = vpop.f32.mrf.mxu0
    %9027 = vdwg.mxu0
    %v9030 = vunpack.c.l.b16 %v8909
    %v9031 = vunpack.c.l.b16 %v8910
    %v9032 = vrot.slane %v9031, 7
    %v9033 = vsel %vm8936, %v9032, %v9030
    %v9034 = vpack.c.b16 %v9033, %v9033
    %v9043 = vunpack.c.l.b16 %v8915
    %v9044 = vunpack.c.h.b16 %v8915
    %v9045 = vunpack.c.l.b16 %v8916
    %v9046 = vunpack.c.h.b16 %v8916
    %v9047 = vunpack.c.l.b16 %v8917
    %v9048 = vunpack.c.h.b16 %v8917
    %v9049 = vunpack.c.l.b16 %v8918
    %v9050 = vunpack.c.h.b16 %v8918
    %v9051 = vunpack.c.l.b16 %v8919
    %v9052 = vunpack.c.h.b16 %v8919
    %v9053 = vunpack.c.l.b16 %v8920
    %v9054 = vunpack.c.h.b16 %v8920
    %v9055 = vunpack.c.l.b16 %v8921
    %v9056 = vunpack.c.h.b16 %v8921
    %v9057 = vunpack.c.l.b16 %v8922
    %v9058 = vunpack.c.h.b16 %v8922
    %v9059 = vpack.c.b16 %v9045, %v9043
    %v9060 = vpack.c.b16 %v9046, %v9044
    %v9061 = vpack.c.b16 %v9049, %v9047
    %v9062 = vpack.c.b16 %v9050, %v9048
    %v9063 = vpack.c.b16 %v9053, %v9051
    %v9064 = vpack.c.b16 %v9054, %v9052
    %v9065 = vpack.c.b16 %v9057, %v9055
    %v9066 = vpack.c.b16 %v9058, %v9056
    %v9074 = vsel %vm8977, %v9034, 0
    %v9077 = vsel %vm1387, %v9065, 0
    %v9080 = vsel %vm1387, %v9066, 0
    %9082 = vmatprep.subr.bf16.mxu0 0
    %9083 = vmatpush1.bf16.msra.mxu0 0
    %9084 = vmatprep.subr.bf16.mxu0 0
    %9085 = vmatpush1.bf16.msra.mxu0 0
    %9086 = vmatprep.subr.bf16.mxu0 0
    %9087 = vmatpush1.bf16.msra.mxu0 0
    %9088 = vmatprep.subr.bf16.mxu0 0
    %9089 = vmatpush1.bf16.msra.mxu0 0
    %9090 = vmatprep.subr.bf16.mxu0 %v9080
    %9091 = vmatpush1.bf16.msra.mxu0 %v9077
    %9092 = vmatprep.subr.bf16.mxu0 %v9064
    %9093 = vmatpush1.bf16.msra.mxu0 %v9063
    %9094 = vmatprep.subr.bf16.mxu0 %v9062
    %9095 = vmatpush1.bf16.msra.mxu0 %v9061
    %9096 = vmatprep.subr.bf16.mxu0 %v9060
    %9097 = vmatpush1.bf16.msra.mxu0 %v9059
    %9098 = vmatprep.subr.bf16.mxu0 0
    %9099 = vmatpush2.bf16.msra.mxu0 0
    %9100 = vmatprep.subr.bf16.mxu0 0
    %9101 = vmatpush2.bf16.msra.mxu0 0
    %9102 = vmatprep.subr.bf16.mxu0 0
    %9103 = vmatpush2.bf16.msra.mxu0 0
    %9104 = vmatprep.subr.bf16.mxu0 0
    %9105 = vmatpush2.bf16.msra.mxu0 0
    %9106 = vmatprep.subr.bf16.mxu0 0
    %9107 = vmatpush2.bf16.msra.mxu0 0
    %9108 = vmatprep.subr.bf16.mxu0 0
    %9109 = vmatpush2.bf16.msra.mxu0 0
    %9110 = vmatprep.subr.bf16.mxu0 0
    %9111 = vmatpush2.bf16.msra.mxu0 0
    %9112 = vmatprep.subr.bf16.mxu0 0
    %9113 = vmatpush2.bf16.msra.mxu0 0
    %9114 = vmatprep.mubr.bf16.mxu0 0
    %9115 = vmatmul.mubr.bf16.gmra.mxu0 %v9074
    %v9116 = vpop.f32.mrf.mxu0
    %v9117 = vadd.f32 %v9022, %v9116
    %v9118 = vpop.f32.mrf.mxu0
    %v9119 = vadd.f32 %v9024, %v9118
    %v9120 = vpop.f32.mrf.mxu0
    %v9121 = vpop.f32.mrf.mxu0
    %9122 = vdwg.mxu0
    %v9123 = vld [vmem:[#allocation6 + $0x1] sm:$0x1]
    %v9124 = vld [vmem:[#allocation6 + $0x5] sm:$0x1]
    %v9125 = vpack.c.bf16 %v9123, %v9123
    %v9126 = vpack.c.bf16 %v9124, %v9124
    %v9127 = vld [vmem:[#allocation7 + $0x1] sm:$0x1]
    %v9128 = vld [vmem:[#allocation7 + $0x5] sm:$0x1]
    %v9129 = vpack.c.bf16 %v9127, %v9127
    %v9130 = vpack.c.bf16 %v9128, %v9128
    %v9131 = vld [vmem:[%s8 + $0x38] sm:$0xcc]
    %v9132 = vld [vmem:[%s8 + $0x40] sm:$0xff]
    %v9133 = vld [vmem:[%s8 + $0x48] sm:$0xff]
    %v9134 = vld [vmem:[%s8 + $0x50] sm:$0xff]
    %v9135 = vld [vmem:[%s8 + $0x58] sm:$0xff]
    %v9136 = vld [vmem:[%s8 + $0x60] sm:$0xff]
    %v9137 = vld [vmem:[%s8 + $0x68] sm:$0xff]
    %v9138 = vld [vmem:[%s8 + $0x70] sm:$0xff]
    %v9139 = vld [vmem:[#allocation16 + $0x38] sm:$0xcc]
    %v9140 = vld [vmem:[#allocation16 + $0x40] sm:$0xff]
    %v9141 = vld [vmem:[#allocation16 + $0x48] sm:$0xff]
    %v9142 = vld [vmem:[#allocation16 + $0x50] sm:$0xff]
    %v9143 = vld [vmem:[#allocation16 + $0x58] sm:$0xff]
    %v9144 = vld [vmem:[#allocation16 + $0x60] sm:$0xff]
    %v9145 = vld [vmem:[#allocation16 + $0x68] sm:$0xff]
    %v9146 = vld [vmem:[#allocation16 + $0x70] sm:$0xff]
    %v9149 = vunpack.c.l.b16 %v9129
    %v9150 = vunpack.c.l.b16 %v9130
    %v9151 = vrot.slane %v9150, 7
    %v9152 = vsel %vm8936, %v9151, %v9149
    %v9153 = vpack.c.b16 %v9152, %v9152
    %v9162 = vunpack.c.l.b16 %v9139
    %v9163 = vunpack.c.h.b16 %v9139
    %v9164 = vunpack.c.l.b16 %v9140
    %v9165 = vunpack.c.h.b16 %v9140
    %v9166 = vunpack.c.l.b16 %v9141
    %v9167 = vunpack.c.h.b16 %v9141
    %v9168 = vunpack.c.l.b16 %v9142
    %v9169 = vunpack.c.h.b16 %v9142
    %v9170 = vunpack.c.l.b16 %v9143
    %v9171 = vunpack.c.h.b16 %v9143
    %v9172 = vunpack.c.l.b16 %v9144
    %v9173 = vunpack.c.h.b16 %v9144
    %v9174 = vunpack.c.l.b16 %v9145
    %v9175 = vunpack.c.h.b16 %v9145
    %v9176 = vunpack.c.l.b16 %v9146
    %v9177 = vunpack.c.h.b16 %v9146
    %v9178 = vpack.c.b16 %v9164, %v9162
    %v9179 = vpack.c.b16 %v9165, %v9163
    %v9180 = vpack.c.b16 %v9168, %v9166
    %v9181 = vpack.c.b16 %v9169, %v9167
    %v9182 = vpack.c.b16 %v9172, %v9170
    %v9183 = vpack.c.b16 %v9173, %v9171
    %v9184 = vpack.c.b16 %v9176, %v9174
    %v9185 = vpack.c.b16 %v9177, %v9175
    %vm9186 = vcmask 1045504
    %v9187 = vrot.slane %v9178, 2
    %v9188 = vrot.slane %v9180, 2
    %v9189 = vsel %vm9186, %v9187, %v9188
    %v9190 = vrot.slane %v9179, 2
    %v9191 = vrot.slane %v9181, 2
    %v9192 = vsel %vm9186, %v9190, %v9191
    %v9193 = vrot.slane %v9182, 2
    %v9194 = vsel %vm9186, %v9188, %v9193
    %v9195 = vrot.slane %v9183, 2
    %v9196 = vsel %vm9186, %v9191, %v9195
    %v9197 = vrot.slane %v9184, 2
    %v9198 = vsel %vm9186, %v9193, %v9197
    %v9199 = vrot.slane %v9185, 2
    %v9200 = vsel %vm9186, %v9195, %v9199
    %v9208 = vsel %vm8977, %v9153, 0
    %v9211 = vsel %vm1387, %v9197, 0
    %v9214 = vsel %vm1387, %v9199, 0
    %9216 = vmatprep.subr.bf16.mxu0 0
    %9217 = vmatpush1.bf16.msra.mxu0 0
    %9218 = vmatprep.subr.bf16.mxu0 0
    %9219 = vmatpush1.bf16.msra.mxu0 0
    %9220 = vmatprep.subr.bf16.mxu0 0
    %9221 = vmatpush1.bf16.msra.mxu0 0
    %9222 = vmatprep.subr.bf16.mxu0 0
    %9223 = vmatpush1.bf16.msra.mxu0 0
    %9224 = vmatprep.subr.bf16.mxu0 %v9214
    %9225 = vmatpush1.bf16.msra.mxu0 %v9211
    %9226 = vmatprep.subr.bf16.mxu0 %v9200
    %9227 = vmatpush1.bf16.msra.mxu0 %v9198
    %9228 = vmatprep.subr.bf16.mxu0 %v9196
    %9229 = vmatpush1.bf16.msra.mxu0 %v9194
    %9230 = vmatprep.subr.bf16.mxu0 %v9192
    %9231 = vmatpush1.bf16.msra.mxu0 %v9189
    %9232 = vmatprep.subr.bf16.mxu0 0
    %9233 = vmatpush2.bf16.msra.mxu0 0
    %9234 = vmatprep.subr.bf16.mxu0 0
    %9235 = vmatpush2.bf16.msra.mxu0 0
    %9236 = vmatprep.subr.bf16.mxu0 0
    %9237 = vmatpush2.bf16.msra.mxu0 0
    %9238 = vmatprep.subr.bf16.mxu0 0
    %9239 = vmatpush2.bf16.msra.mxu0 0
    %9240 = vmatprep.subr.bf16.mxu0 0
    %9241 = vmatpush2.bf16.msra.mxu0 0
    %9242 = vmatprep.subr.bf16.mxu0 0
    %9243 = vmatpush2.bf16.msra.mxu0 0
    %9244 = vmatprep.subr.bf16.mxu0 0
    %9245 = vmatpush2.bf16.msra.mxu0 0
    %9246 = vmatprep.subr.bf16.mxu0 0
    %9247 = vmatpush2.bf16.msra.mxu0 0
    %9248 = vmatprep.mubr.bf16.mxu0 0
    %9249 = vmatmul.mubr.bf16.gmra.mxu0 %v9208
    %v9250 = vpop.f32.mrf.mxu0
    %v9251 = vadd.f32 0.0, %v9250
    %v9252 = vpop.f32.mrf.mxu0
    %v9253 = vadd.f32 0.0, %v9252
    %v9254 = vpop.f32.mrf.mxu0
    %v9255 = vpop.f32.mrf.mxu0
    %9256 = vdwg.mxu0
    %v9259 = vunpack.c.l.b16 %v9125
    %v9260 = vunpack.c.l.b16 %v9126
    %v9261 = vrot.slane %v9260, 7
    %v9262 = vsel %vm8936, %v9261, %v9259
    %v9263 = vpack.c.b16 %v9262, %v9262
    %v9272 = vunpack.c.l.b16 %v9131
    %v9273 = vunpack.c.h.b16 %v9131
    %v9274 = vunpack.c.l.b16 %v9132
    %v9275 = vunpack.c.h.b16 %v9132
    %v9276 = vunpack.c.l.b16 %v9133
    %v9277 = vunpack.c.h.b16 %v9133
    %v9278 = vunpack.c.l.b16 %v9134
    %v9279 = vunpack.c.h.b16 %v9134
    %v9280 = vunpack.c.l.b16 %v9135
    %v9281 = vunpack.c.h.b16 %v9135
    %v9282 = vunpack.c.l.b16 %v9136
    %v9283 = vunpack.c.h.b16 %v9136
    %v9284 = vunpack.c.l.b16 %v9137
    %v9285 = vunpack.c.h.b16 %v9137
    %v9286 = vunpack.c.l.b16 %v9138
    %v9287 = vunpack.c.h.b16 %v9138
    %v9288 = vpack.c.b16 %v9274, %v9272
    %v9289 = vpack.c.b16 %v9275, %v9273
    %v9290 = vpack.c.b16 %v9278, %v9276
    %v9291 = vpack.c.b16 %v9279, %v9277
    %v9292 = vpack.c.b16 %v9282, %v9280
    %v9293 = vpack.c.b16 %v9283, %v9281
    %v9294 = vpack.c.b16 %v9286, %v9284
    %v9295 = vpack.c.b16 %v9287, %v9285
    %v9296 = vrot.slane %v9288, 2
    %v9297 = vrot.slane %v9290, 2
    %v9298 = vsel %vm9186, %v9296, %v9297
    %v9299 = vrot.slane %v9289, 2
    %v9300 = vrot.slane %v9291, 2
    %v9301 = vsel %vm9186, %v9299, %v9300
    %v9302 = vrot.slane %v9292, 2
    %v9303 = vsel %vm9186, %v9297, %v9302
    %v9304 = vrot.slane %v9293, 2
    %v9305 = vsel %vm9186, %v9300, %v9304
    %v9306 = vrot.slane %v9294, 2
    %v9307 = vsel %vm9186, %v9302, %v9306
    %v9308 = vrot.slane %v9295, 2
    %v9309 = vsel %vm9186, %v9304, %v9308
    %v9317 = vsel %vm8977, %v9263, 0
    %v9320 = vsel %vm1387, %v9306, 0
    %v9323 = vsel %vm1387, %v9308, 0
    %9325 = vmatprep.subr.bf16.mxu0 0
    %9326 = vmatpush1.bf16.msra.mxu0 0
    %9327 = vmatprep.subr.bf16.mxu0 0
    %9328 = vmatpush1.bf16.msra.mxu0 0
    %9329 = vmatprep.subr.bf16.mxu0 0
    %9330 = vmatpush1.bf16.msra.mxu0 0
    %9331 = vmatprep.subr.bf16.mxu0 0
    %9332 = vmatpush1.bf16.msra.mxu0 0
    %9333 = vmatprep.subr.bf16.mxu0 %v9323
    %9334 = vmatpush1.bf16.msra.mxu0 %v9320
    %9335 = vmatprep.subr.bf16.mxu0 %v9309
    %9336 = vmatpush1.bf16.msra.mxu0 %v9307
    %9337 = vmatprep.subr.bf16.mxu0 %v9305
    %9338 = vmatpush1.bf16.msra.mxu0 %v9303
    %9339 = vmatprep.subr.bf16.mxu0 %v9301
    %9340 = vmatpush1.bf16.msra.mxu0 %v9298
    %9341 = vmatprep.subr.bf16.mxu0 0
    %9342 = vmatpush2.bf16.msra.mxu0 0
    %9343 = vmatprep.subr.bf16.mxu0 0
    %9344 = vmatpush2.bf16.msra.mxu0 0
    %9345 = vmatprep.subr.bf16.mxu0 0
    %9346 = vmatpush2.bf16.msra.mxu0 0
    %9347 = vmatprep.subr.bf16.mxu0 0
    %9348 = vmatpush2.bf16.msra.mxu0 0
    %9349 = vmatprep.subr.bf16.mxu0 0
    %9350 = vmatpush2.bf16.msra.mxu0 0
    %9351 = vmatprep.subr.bf16.mxu0 0
    %9352 = vmatpush2.bf16.msra.mxu0 0
    %9353 = vmatprep.subr.bf16.mxu0 0
    %9354 = vmatpush2.bf16.msra.mxu0 0
    %9355 = vmatprep.subr.bf16.mxu0 0
    %9356 = vmatpush2.bf16.msra.mxu0 0
    %9357 = vmatprep.mubr.bf16.mxu0 0
    %9358 = vmatmul.mubr.bf16.gmra.mxu0 %v9317
    %v9359 = vpop.f32.mrf.mxu0
    %v9360 = vadd.f32 %v9251, %v9359
    %v9361 = vpop.f32.mrf.mxu0
    %v9362 = vadd.f32 %v9253, %v9361
    %v9363 = vpop.f32.mrf.mxu0
    %v9364 = vpop.f32.mrf.mxu0
    %9365 = vdwg.mxu0
    %v9366 = vadd.f32 %v9117, %v9360
    %v9367 = vadd.f32 %v9119, %v9362
    %v9368 = vld [vmem:[#allocation6 + $0x2] sm:$0x1]
    %v9369 = vld [vmem:[#allocation6 + $0x6] sm:$0x1]
    %v9370 = vpack.c.bf16 %v9368, %v9368
    %v9371 = vpack.c.bf16 %v9369, %v9369
    %v9372 = vld [vmem:[#allocation7 + $0x2] sm:$0x1]
    %v9373 = vld [vmem:[#allocation7 + $0x6] sm:$0x1]
    %v9374 = vpack.c.bf16 %v9372, %v9372
    %v9375 = vpack.c.bf16 %v9373, %v9373
    %v9376 = vld [vmem:[%s8 + $0x78] sm:$0xff]
    %v9377 = vld [vmem:[%s8 + $0x80] sm:$0xff]
    %v9378 = vld [vmem:[%s8 + $0x88] sm:$0xff]
    %v9379 = vld [vmem:[%s8 + $0x90] sm:$0xff]
    %v9380 = vld [vmem:[%s8 + $0x98] sm:$0xff]
    %v9381 = vld [vmem:[%s8 + $0xa0] sm:$0xff]
    %v9382 = vld [vmem:[%s8 + $0xa8] sm:$0xff]
    %v9383 = vld [vmem:[%s8 + $0xb0] sm:$0x33]
    %v9384 = vld [vmem:[#allocation16 + $0x78] sm:$0xff]
    %v9385 = vld [vmem:[#allocation16 + $0x80] sm:$0xff]
    %v9386 = vld [vmem:[#allocation16 + $0x88] sm:$0xff]
    %v9387 = vld [vmem:[#allocation16 + $0x90] sm:$0xff]
    %v9388 = vld [vmem:[#allocation16 + $0x98] sm:$0xff]
    %v9389 = vld [vmem:[#allocation16 + $0xa0] sm:$0xff]
    %v9390 = vld [vmem:[#allocation16 + $0xa8] sm:$0xff]
    %v9391 = vld [vmem:[#allocation16 + $0xb0] sm:$0x33]
    %v9394 = vunpack.c.l.b16 %v9374
    %v9395 = vunpack.c.l.b16 %v9375
    %v9396 = vrot.slane %v9395, 7
    %v9397 = vsel %vm8936, %v9396, %v9394
    %v9398 = vpack.c.b16 %v9397, %v9397
    %v9407 = vunpack.c.l.b16 %v9384
    %v9408 = vunpack.c.h.b16 %v9384
    %v9409 = vunpack.c.l.b16 %v9385
    %v9410 = vunpack.c.h.b16 %v9385
    %v9411 = vunpack.c.l.b16 %v9386
    %v9412 = vunpack.c.h.b16 %v9386
    %v9413 = vunpack.c.l.b16 %v9387
    %v9414 = vunpack.c.h.b16 %v9387
    %v9415 = vunpack.c.l.b16 %v9388
    %v9416 = vunpack.c.h.b16 %v9388
    %v9417 = vunpack.c.l.b16 %v9389
    %v9418 = vunpack.c.h.b16 %v9389
    %v9419 = vunpack.c.l.b16 %v9390
    %v9420 = vunpack.c.h.b16 %v9390
    %v9421 = vunpack.c.l.b16 %v9391
    %v9422 = vunpack.c.h.b16 %v9391
    %v9423 = vpack.c.b16 %v9409, %v9407
    %v9424 = vpack.c.b16 %v9410, %v9408
    %v9425 = vpack.c.b16 %v9413, %v9411
    %v9426 = vpack.c.b16 %v9414, %v9412
    %v9427 = vpack.c.b16 %v9417, %v9415
    %v9428 = vpack.c.b16 %v9418, %v9416
    %v9429 = vpack.c.b16 %v9421, %v9419
    %v9430 = vpack.c.b16 %v9422, %v9420
    %v9438 = vsel %vm8977, %v9398, 0
    %v9441 = vsel %vm1387, %v9429, 0
    %v9444 = vsel %vm1387, %v9430, 0
    %9446 = vmatprep.subr.bf16.mxu0 0
    %9447 = vmatpush1.bf16.msra.mxu0 0
    %9448 = vmatprep.subr.bf16.mxu0 0
    %9449 = vmatpush1.bf16.msra.mxu0 0
    %9450 = vmatprep.subr.bf16.mxu0 0
    %9451 = vmatpush1.bf16.msra.mxu0 0
    %9452 = vmatprep.subr.bf16.mxu0 0
    %9453 = vmatpush1.bf16.msra.mxu0 0
    %9454 = vmatprep.subr.bf16.mxu0 %v9444
    %9455 = vmatpush1.bf16.msra.mxu0 %v9441
    %9456 = vmatprep.subr.bf16.mxu0 %v9428
    %9457 = vmatpush1.bf16.msra.mxu0 %v9427
    %9458 = vmatprep.subr.bf16.mxu0 %v9426
    %9459 = vmatpush1.bf16.msra.mxu0 %v9425
    %9460 = vmatprep.subr.bf16.mxu0 %v9424
    %9461 = vmatpush1.bf16.msra.mxu0 %v9423
    %9462 = vmatprep.subr.bf16.mxu0 0
    %9463 = vmatpush2.bf16.msra.mxu0 0
    %9464 = vmatprep.subr.bf16.mxu0 0
    %9465 = vmatpush2.bf16.msra.mxu0 0
    %9466 = vmatprep.subr.bf16.mxu0 0
    %9467 = vmatpush2.bf16.msra.mxu0 0
    %9468 = vmatprep.subr.bf16.mxu0 0
    %9469 = vmatpush2.bf16.msra.mxu0 0
    %9470 = vmatprep.subr.bf16.mxu0 0
    %9471 = vmatpush2.bf16.msra.mxu0 0
    %9472 = vmatprep.subr.bf16.mxu0 0
    %9473 = vmatpush2.bf16.msra.mxu0 0
    %9474 = vmatprep.subr.bf16.mxu0 0
    %9475 = vmatpush2.bf16.msra.mxu0 0
    %9476 = vmatprep.subr.bf16.mxu0 0
    %9477 = vmatpush2.bf16.msra.mxu0 0
    %9478 = vmatprep.mubr.bf16.mxu0 0
    %9479 = vmatmul.mubr.bf16.gmra.mxu0 %v9438
    %v9480 = vpop.f32.mrf.mxu0
    %v9481 = vadd.f32 0.0, %v9480
    %v9482 = vpop.f32.mrf.mxu0
    %v9483 = vadd.f32 0.0, %v9482
    %v9484 = vpop.f32.mrf.mxu0
    %v9485 = vpop.f32.mrf.mxu0
    %9486 = vdwg.mxu0
    %v9489 = vunpack.c.l.b16 %v9370
    %v9490 = vunpack.c.l.b16 %v9371
    %v9491 = vrot.slane %v9490, 7
    %v9492 = vsel %vm8936, %v9491, %v9489
    %v9493 = vpack.c.b16 %v9492, %v9492
    %v9502 = vunpack.c.l.b16 %v9376
    %v9503 = vunpack.c.h.b16 %v9376
    %v9504 = vunpack.c.l.b16 %v9377
    %v9505 = vunpack.c.h.b16 %v9377
    %v9506 = vunpack.c.l.b16 %v9378
    %v9507 = vunpack.c.h.b16 %v9378
    %v9508 = vunpack.c.l.b16 %v9379
    %v9509 = vunpack.c.h.b16 %v9379
    %v9510 = vunpack.c.l.b16 %v9380
    %v9511 = vunpack.c.h.b16 %v9380
    %v9512 = vunpack.c.l.b16 %v9381
    %v9513 = vunpack.c.h.b16 %v9381
    %v9514 = vunpack.c.l.b16 %v9382
    %v9515 = vunpack.c.h.b16 %v9382
    %v9516 = vunpack.c.l.b16 %v9383
    %v9517 = vunpack.c.h.b16 %v9383
    %v9518 = vpack.c.b16 %v9504, %v9502
    %v9519 = vpack.c.b16 %v9505, %v9503
    %v9520 = vpack.c.b16 %v9508, %v9506
    %v9521 = vpack.c.b16 %v9509, %v9507
    %v9522 = vpack.c.b16 %v9512, %v9510
    %v9523 = vpack.c.b16 %v9513, %v9511
    %v9524 = vpack.c.b16 %v9516, %v9514
    %v9525 = vpack.c.b16 %v9517, %v9515
    %v9533 = vsel %vm8977, %v9493, 0
    %v9536 = vsel %vm1387, %v9524, 0
    %v9539 = vsel %vm1387, %v9525, 0
    %9541 = vmatprep.subr.bf16.mxu0 0
    %9542 = vmatpush1.bf16.msra.mxu0 0
    %9543 = vmatprep.subr.bf16.mxu0 0
    %9544 = vmatpush1.bf16.msra.mxu0 0
    %9545 = vmatprep.subr.bf16.mxu0 0
    %9546 = vmatpush1.bf16.msra.mxu0 0
    %9547 = vmatprep.subr.bf16.mxu0 0
    %9548 = vmatpush1.bf16.msra.mxu0 0
    %9549 = vmatprep.subr.bf16.mxu0 %v9539
    %9550 = vmatpush1.bf16.msra.mxu0 %v9536
    %9551 = vmatprep.subr.bf16.mxu0 %v9523
    %9552 = vmatpush1.bf16.msra.mxu0 %v9522
    %9553 = vmatprep.subr.bf16.mxu0 %v9521
    %9554 = vmatpush1.bf16.msra.mxu0 %v9520
    %9555 = vmatprep.subr.bf16.mxu0 %v9519
    %9556 = vmatpush1.bf16.msra.mxu0 %v9518
    %9557 = vmatprep.subr.bf16.mxu0 0
    %9558 = vmatpush2.bf16.msra.mxu0 0
    %9559 = vmatprep.subr.bf16.mxu0 0
    %9560 = vmatpush2.bf16.msra.mxu0 0
    %9561 = vmatprep.subr.bf16.mxu0 0
    %9562 = vmatpush2.bf16.msra.mxu0 0
    %9563 = vmatprep.subr.bf16.mxu0 0
    %9564 = vmatpush2.bf16.msra.mxu0 0
    %9565 = vmatprep.subr.bf16.mxu0 0
    %9566 = vmatpush2.bf16.msra.mxu0 0
    %9567 = vmatprep.subr.bf16.mxu0 0
    %9568 = vmatpush2.bf16.msra.mxu0 0
    %9569 = vmatprep.subr.bf16.mxu0 0
    %9570 = vmatpush2.bf16.msra.mxu0 0
    %9571 = vmatprep.subr.bf16.mxu0 0
    %9572 = vmatpush2.bf16.msra.mxu0 0
    %9573 = vmatprep.mubr.bf16.mxu0 0
    %9574 = vmatmul.mubr.bf16.gmra.mxu0 %v9533
    %v9575 = vpop.f32.mrf.mxu0
    %v9576 = vadd.f32 %v9481, %v9575
    %v9577 = vpop.f32.mrf.mxu0
    %v9578 = vadd.f32 %v9483, %v9577
    %v9579 = vpop.f32.mrf.mxu0
    %v9580 = vpop.f32.mrf.mxu0
    %9581 = vdwg.mxu0
    %v9582 = vadd.f32 %v9366, %v9576
    %v9583 = vadd.f32 %v9367, %v9578
    %v9584 = vld [vmem:[#allocation6 + $0x3] sm:$0x1]
    %v9585 = vld [vmem:[#allocation6 + $0x7] sm:$0x1]
    %v9586 = vpack.c.bf16 %v9584, %v9584
    %v9587 = vpack.c.bf16 %v9585, %v9585
    %v9588 = vld [vmem:[#allocation7 + $0x3] sm:$0x1]
    %v9589 = vld [vmem:[#allocation7 + $0x7] sm:$0x1]
    %v9590 = vpack.c.bf16 %v9588, %v9588
    %v9591 = vpack.c.bf16 %v9589, %v9589
    %v9592 = vld [vmem:[%s8 + $0xb0] sm:$0xcc]
    %v9593 = vld [vmem:[%s8 + $0xb8] sm:$0xff]
    %v9594 = vld [vmem:[%s8 + $0xc0] sm:$0xff]
    %v9595 = vld [vmem:[%s8 + $0xc8] sm:$0xff]
    %v9596 = vld [vmem:[%s8 + $0xd0] sm:$0xff]
    %v9597 = vld [vmem:[%s8 + $0xd8] sm:$0xff]
    %v9598 = vld [vmem:[%s8 + $0xe0] sm:$0xff]
    %v9599 = vld [vmem:[%s8 + $0xe8] sm:$0xff]
    %v9600 = vld [vmem:[#allocation16 + $0xb0] sm:$0xcc]
    %v9601 = vld [vmem:[#allocation16 + $0xb8] sm:$0xff]
    %v9602 = vld [vmem:[#allocation16 + $0xc0] sm:$0xff]
    %v9603 = vld [vmem:[#allocation16 + $0xc8] sm:$0xff]
    %v9604 = vld [vmem:[#allocation16 + $0xd0] sm:$0xff]
    %v9605 = vld [vmem:[#allocation16 + $0xd8] sm:$0xff]
    %v9606 = vld [vmem:[#allocation16 + $0xe0] sm:$0xff]
    %v9607 = vld [vmem:[#allocation16 + $0xe8] sm:$0xff]
    %v9610 = vunpack.c.l.b16 %v9590
    %v9611 = vunpack.c.l.b16 %v9591
    %v9612 = vrot.slane %v9611, 7
    %v9613 = vsel %vm8936, %v9612, %v9610
    %v9614 = vpack.c.b16 %v9613, %v9613
    %v9623 = vunpack.c.l.b16 %v9600
    %v9624 = vunpack.c.h.b16 %v9600
    %v9625 = vunpack.c.l.b16 %v9601
    %v9626 = vunpack.c.h.b16 %v9601
    %v9627 = vunpack.c.l.b16 %v9602
    %v9628 = vunpack.c.h.b16 %v9602
    %v9629 = vunpack.c.l.b16 %v9603
    %v9630 = vunpack.c.h.b16 %v9603
    %v9631 = vunpack.c.l.b16 %v9604
    %v9632 = vunpack.c.h.b16 %v9604
    %v9633 = vunpack.c.l.b16 %v9605
    %v9634 = vunpack.c.h.b16 %v9605
    %v9635 = vunpack.c.l.b16 %v9606
    %v9636 = vunpack.c.h.b16 %v9606
    %v9637 = vunpack.c.l.b16 %v9607
    %v9638 = vunpack.c.h.b16 %v9607
    %v9639 = vpack.c.b16 %v9625, %v9623
    %v9640 = vpack.c.b16 %v9626, %v9624
    %v9641 = vpack.c.b16 %v9629, %v9627
    %v9642 = vpack.c.b16 %v9630, %v9628
    %v9643 = vpack.c.b16 %v9633, %v9631
    %v9644 = vpack.c.b16 %v9634, %v9632
    %v9645 = vpack.c.b16 %v9637, %v9635
    %v9646 = vpack.c.b16 %v9638, %v9636
    %v9647 = vrot.slane %v9639, 2
    %v9648 = vrot.slane %v9641, 2
    %v9649 = vsel %vm9186, %v9647, %v9648
    %v9650 = vrot.slane %v9640, 2
    %v9651 = vrot.slane %v9642, 2
    %v9652 = vsel %vm9186, %v9650, %v9651
    %v9653 = vrot.slane %v9643, 2
    %v9654 = vsel %vm9186, %v9648, %v9653
    %v9655 = vrot.slane %v9644, 2
    %v9656 = vsel %vm9186, %v9651, %v9655
    %v9657 = vrot.slane %v9645, 2
    %v9658 = vsel %vm9186, %v9653, %v9657
    %v9659 = vrot.slane %v9646, 2
    %v9660 = vsel %vm9186, %v9655, %v9659
    %v9668 = vsel %vm8977, %v9614, 0
    %v9671 = vsel %vm1387, %v9657, 0
    %v9674 = vsel %vm1387, %v9659, 0
    %9676 = vmatprep.subr.bf16.mxu0 0
    %9677 = vmatpush1.bf16.msra.mxu0 0
    %9678 = vmatprep.subr.bf16.mxu0 0
    %9679 = vmatpush1.bf16.msra.mxu0 0
    %9680 = vmatprep.subr.bf16.mxu0 0
    %9681 = vmatpush1.bf16.msra.mxu0 0
    %9682 = vmatprep.subr.bf16.mxu0 0
    %9683 = vmatpush1.bf16.msra.mxu0 0
    %9684 = vmatprep.subr.bf16.mxu0 %v9674
    %9685 = vmatpush1.bf16.msra.mxu0 %v9671
    %9686 = vmatprep.subr.bf16.mxu0 %v9660
    %9687 = vmatpush1.bf16.msra.mxu0 %v9658
    %9688 = vmatprep.subr.bf16.mxu0 %v9656
    %9689 = vmatpush1.bf16.msra.mxu0 %v9654
    %9690 = vmatprep.subr.bf16.mxu0 %v9652
    %9691 = vmatpush1.bf16.msra.mxu0 %v9649
    %9692 = vmatprep.subr.bf16.mxu0 0
    %9693 = vmatpush2.bf16.msra.mxu0 0
    %9694 = vmatprep.subr.bf16.mxu0 0
    %9695 = vmatpush2.bf16.msra.mxu0 0
    %9696 = vmatprep.subr.bf16.mxu0 0
    %9697 = vmatpush2.bf16.msra.mxu0 0
    %9698 = vmatprep.subr.bf16.mxu0 0
    %9699 = vmatpush2.bf16.msra.mxu0 0
    %9700 = vmatprep.subr.bf16.mxu0 0
    %9701 = vmatpush2.bf16.msra.mxu0 0
    %9702 = vmatprep.subr.bf16.mxu0 0
    %9703 = vmatpush2.bf16.msra.mxu0 0
    %9704 = vmatprep.subr.bf16.mxu0 0
    %9705 = vmatpush2.bf16.msra.mxu0 0
    %9706 = vmatprep.subr.bf16.mxu0 0
    %9707 = vmatpush2.bf16.msra.mxu0 0
    %9708 = vmatprep.mubr.bf16.mxu0 0
    %9709 = vmatmul.mubr.bf16.gmra.mxu0 %v9668
    %v9710 = vpop.f32.mrf.mxu0
    %v9711 = vadd.f32 0.0, %v9710
    %v9712 = vpop.f32.mrf.mxu0
    %v9713 = vadd.f32 0.0, %v9712
    %v9714 = vpop.f32.mrf.mxu0
    %v9715 = vpop.f32.mrf.mxu0
    %9716 = vdwg.mxu0
    %v9719 = vunpack.c.l.b16 %v9586
    %v9720 = vunpack.c.l.b16 %v9587
    %v9721 = vrot.slane %v9720, 7
    %v9722 = vsel %vm8936, %v9721, %v9719
    %v9723 = vpack.c.b16 %v9722, %v9722
    %v9732 = vunpack.c.l.b16 %v9592
    %v9733 = vunpack.c.h.b16 %v9592
    %v9734 = vunpack.c.l.b16 %v9593
    %v9735 = vunpack.c.h.b16 %v9593
    %v9736 = vunpack.c.l.b16 %v9594
    %v9737 = vunpack.c.h.b16 %v9594
    %v9738 = vunpack.c.l.b16 %v9595
    %v9739 = vunpack.c.h.b16 %v9595
    %v9740 = vunpack.c.l.b16 %v9596
    %v9741 = vunpack.c.h.b16 %v9596
    %v9742 = vunpack.c.l.b16 %v9597
    %v9743 = vunpack.c.h.b16 %v9597
    %v9744 = vunpack.c.l.b16 %v9598
    %v9745 = vunpack.c.h.b16 %v9598
    %v9746 = vunpack.c.l.b16 %v9599
    %v9747 = vunpack.c.h.b16 %v9599
    %v9748 = vpack.c.b16 %v9734, %v9732
    %v9749 = vpack.c.b16 %v9735, %v9733
    %v9750 = vpack.c.b16 %v9738, %v9736
    %v9751 = vpack.c.b16 %v9739, %v9737
    %v9752 = vpack.c.b16 %v9742, %v9740
    %v9753 = vpack.c.b16 %v9743, %v9741
    %v9754 = vpack.c.b16 %v9746, %v9744
    %v9755 = vpack.c.b16 %v9747, %v9745
    %v9756 = vrot.slane %v9748, 2
    %v9757 = vrot.slane %v9750, 2
    %v9758 = vsel %vm9186, %v9756, %v9757
    %v9759 = vrot.slane %v9749, 2
    %v9760 = vrot.slane %v9751, 2
    %v9761 = vsel %vm9186, %v9759, %v9760
    %v9762 = vrot.slane %v9752, 2
    %v9763 = vsel %vm9186, %v9757, %v9762
    %v9764 = vrot.slane %v9753, 2
    %v9765 = vsel %vm9186, %v9760, %v9764
    %v9766 = vrot.slane %v9754, 2
    %v9767 = vsel %vm9186, %v9762, %v9766
    %v9768 = vrot.slane %v9755, 2
    %v9769 = vsel %vm9186, %v9764, %v9768
    %v9777 = vsel %vm8977, %v9723, 0
    %v9780 = vsel %vm1387, %v9766, 0
    %v9783 = vsel %vm1387, %v9768, 0
    %9785 = vmatprep.subr.bf16.mxu0 0
    %9786 = vmatpush1.bf16.msra.mxu0 0
    %9787 = vmatprep.subr.bf16.mxu0 0
    %9788 = vmatpush1.bf16.msra.mxu0 0
    %9789 = vmatprep.subr.bf16.mxu0 0
    %9790 = vmatpush1.bf16.msra.mxu0 0
    %9791 = vmatprep.subr.bf16.mxu0 0
    %9792 = vmatpush1.bf16.msra.mxu0 0
    %9793 = vmatprep.subr.bf16.mxu0 %v9783
    %9794 = vmatpush1.bf16.msra.mxu0 %v9780
    %9795 = vmatprep.subr.bf16.mxu0 %v9769
    %9796 = vmatpush1.bf16.msra.mxu0 %v9767
    %9797 = vmatprep.subr.bf16.mxu0 %v9765
    %9798 = vmatpush1.bf16.msra.mxu0 %v9763
    %9799 = vmatprep.subr.bf16.mxu0 %v9761
    %9800 = vmatpush1.bf16.msra.mxu0 %v9758
    %9801 = vmatprep.subr.bf16.mxu0 0
    %9802 = vmatpush2.bf16.msra.mxu0 0
    %9803 = vmatprep.subr.bf16.mxu0 0
    %9804 = vmatpush2.bf16.msra.mxu0 0
    %9805 = vmatprep.subr.bf16.mxu0 0
    %9806 = vmatpush2.bf16.msra.mxu0 0
    %9807 = vmatprep.subr.bf16.mxu0 0
    %9808 = vmatpush2.bf16.msra.mxu0 0
    %9809 = vmatprep.subr.bf16.mxu0 0
    %9810 = vmatpush2.bf16.msra.mxu0 0
    %9811 = vmatprep.subr.bf16.mxu0 0
    %9812 = vmatpush2.bf16.msra.mxu0 0
    %9813 = vmatprep.subr.bf16.mxu0 0
    %9814 = vmatpush2.bf16.msra.mxu0 0
    %9815 = vmatprep.subr.bf16.mxu0 0
    %9816 = vmatpush2.bf16.msra.mxu0 0
    %9817 = vmatprep.mubr.bf16.mxu0 0
    %9818 = vmatmul.mubr.bf16.gmra.mxu0 %v9777
    %v9819 = vpop.f32.mrf.mxu0
    %v9820 = vadd.f32 %v9711, %v9819
    %v9821 = vpop.f32.mrf.mxu0
    %v9822 = vadd.f32 %v9713, %v9821
    %v9823 = vpop.f32.mrf.mxu0
    %v9824 = vpop.f32.mrf.mxu0
    %9825 = vdwg.mxu0
    %v9826 = vadd.f32 %v9582, %v9820
    %v9827 = vadd.f32 %v9583, %v9822
    %v9828 = vld [vmem:[%s10] sm:$0x3]
    %v9830 = vlaneseq
    %v9831 = vshrl.u32 %v9830, 7
    %v9832 = vsub.s32 0, %v9831
    %v9833 = vrot.slane %v9828, %v9832
    %v9834 = vlaneseq
    %v9835 = vshrl.u32 %v9834, 7
    %v9836 = vsub.s32 1, %v9835
    %v9837 = vrot.slane %v9828, %v9836
    %v9840 = vadd.f32 %v9826, %v9833
    %v9841 = vadd.f32 %v9827, %v9837
    %v9842 = vmax.f32 %v9840, 0.0
    %v9843 = vmax.f32 %v9841, 0.0
    %v9844 = vpack.c.bf16 %v9842, %v9842
    %v9845 = vpack.c.bf16 %v9843, %v9843
    %v9846 = vld [vmem:[%s11] sm:$0xf]
    %v9847 = vld [vmem:[%s11 + $0x4] sm:$0xf]
    %v9848 = vld [vmem:[%s11 + $0x8] sm:$0xf]
    %v9849 = vld [vmem:[%s11 + $0xc] sm:$0xf]
    %v9850 = vld [vmem:[%s11 + $0x10] sm:$0xf]
    %v9851 = vld [vmem:[%s11 + $0x14] sm:$0xf]
    %v9852 = vld [vmem:[%s11 + $0x18] sm:$0xf]
    %v9853 = vld [vmem:[%s11 + $0x1c] sm:$0xf]
    %v9854 = vld [vmem:[%s11 + $0x20] sm:$0xf]
    %v9855 = vld [vmem:[%s11 + $0x24] sm:$0xf]
    %v9856 = vld [vmem:[%s11 + $0x28] sm:$0xf]
    %v9857 = vld [vmem:[%s11 + $0x2c] sm:$0xf]
    %v9858 = vld [vmem:[%s11 + $0x30] sm:$0xf]
    %v9859 = vld [vmem:[%s11 + $0x34] sm:$0xf]
    %v9860 = vld [vmem:[%s11 + $0x38] sm:$0xf]
    %v9861 = vld [vmem:[%s11 + $0x3c] sm:$0xf]
    %v9862 = vld [vmem:[%s12] sm:$0xf]
    %v9863 = vld [vmem:[%s12 + $0x4] sm:$0xf]
    %v9864 = vld [vmem:[%s12 + $0x8] sm:$0xf]
    %v9865 = vld [vmem:[%s12 + $0xc] sm:$0xf]
    %v9866 = vld [vmem:[%s12 + $0x10] sm:$0xf]
    %v9867 = vld [vmem:[%s12 + $0x14] sm:$0xf]
    %v9868 = vld [vmem:[%s12 + $0x18] sm:$0xf]
    %v9869 = vld [vmem:[%s12 + $0x1c] sm:$0xf]
    %v9870 = vld [vmem:[%s12 + $0x20] sm:$0xf]
    %v9871 = vld [vmem:[%s12 + $0x24] sm:$0xf]
    %v9872 = vld [vmem:[%s12 + $0x28] sm:$0xf]
    %v9873 = vld [vmem:[%s12 + $0x2c] sm:$0xf]
    %v9874 = vld [vmem:[%s12 + $0x30] sm:$0xf]
    %v9875 = vld [vmem:[%s12 + $0x34] sm:$0xf]
    %v9876 = vld [vmem:[%s12 + $0x38] sm:$0xf]
    %v9877 = vld [vmem:[%s12 + $0x3c] sm:$0xf]
    %v9894 = vunpack.c.l.b16 %v9862
    %v9895 = vunpack.c.l.b16 %v9863
    %v9896 = vunpack.c.l.b16 %v9864
    %v9897 = vunpack.c.l.b16 %v9865
    %v9898 = vunpack.c.l.b16 %v9866
    %v9899 = vunpack.c.l.b16 %v9867
    %v9900 = vunpack.c.l.b16 %v9868
    %v9901 = vunpack.c.l.b16 %v9869
    %v9902 = vunpack.c.l.b16 %v9870
    %v9903 = vunpack.c.l.b16 %v9871
    %v9904 = vunpack.c.l.b16 %v9872
    %v9905 = vunpack.c.l.b16 %v9873
    %v9906 = vunpack.c.l.b16 %v9874
    %v9907 = vunpack.c.l.b16 %v9875
    %v9908 = vunpack.c.l.b16 %v9876
    %v9909 = vunpack.c.l.b16 %v9877
    %v9910 = vpack.c.b16 %v9895, %v9894
    %v9911 = vpack.c.b16 %v9897, %v9896
    %v9912 = vpack.c.b16 %v9899, %v9898
    %v9913 = vpack.c.b16 %v9901, %v9900
    %v9914 = vpack.c.b16 %v9903, %v9902
    %v9915 = vpack.c.b16 %v9905, %v9904
    %v9916 = vpack.c.b16 %v9907, %v9906
    %v9917 = vpack.c.b16 %v9909, %v9908
    %9926 = vmatprep.subr.bf16.mxu0 0
    %9927 = vmatpush1.bf16.msra.mxu0 %v9917
    %9928 = vmatprep.subr.bf16.mxu0 0
    %9929 = vmatpush1.bf16.msra.mxu0 %v9916
    %9930 = vmatprep.subr.bf16.mxu0 0
    %9931 = vmatpush1.bf16.msra.mxu0 %v9915
    %9932 = vmatprep.subr.bf16.mxu0 0
    %9933 = vmatpush1.bf16.msra.mxu0 %v9914
    %9934 = vmatprep.subr.bf16.mxu0 0
    %9935 = vmatpush1.bf16.msra.mxu0 %v9913
    %9936 = vmatprep.subr.bf16.mxu0 0
    %9937 = vmatpush1.bf16.msra.mxu0 %v9912
    %9938 = vmatprep.subr.bf16.mxu0 0
    %9939 = vmatpush1.bf16.msra.mxu0 %v9911
    %9940 = vmatprep.subr.bf16.mxu0 0
    %9941 = vmatpush1.bf16.msra.mxu0 %v9910
    %9942 = vmatprep.subr.bf16.mxu0 0
    %9943 = vmatpush2.bf16.msra.mxu0 0
    %9944 = vmatprep.subr.bf16.mxu0 0
    %9945 = vmatpush2.bf16.msra.mxu0 0
    %9946 = vmatprep.subr.bf16.mxu0 0
    %9947 = vmatpush2.bf16.msra.mxu0 0
    %9948 = vmatprep.subr.bf16.mxu0 0
    %9949 = vmatpush2.bf16.msra.mxu0 0
    %9950 = vmatprep.subr.bf16.mxu0 0
    %9951 = vmatpush2.bf16.msra.mxu0 0
    %9952 = vmatprep.subr.bf16.mxu0 0
    %9953 = vmatpush2.bf16.msra.mxu0 0
    %9954 = vmatprep.subr.bf16.mxu0 0
    %9955 = vmatpush2.bf16.msra.mxu0 0
    %9956 = vmatprep.subr.bf16.mxu0 0
    %9957 = vmatpush2.bf16.msra.mxu0 0
    %9958 = vmatprep.mubr.bf16.mxu0 0
    %9959 = vmatmul.mubr.bf16.gmra.mxu0 %v9845
    %v9960 = vpop.f32.mrf.mxu0
    %v9961 = vadd.f32 0.0, %v9960
    %v9962 = vpop.f32.mrf.mxu0
    %v9963 = vpop.f32.mrf.mxu0
    %v9964 = vpop.f32.mrf.mxu0
    %9965 = vdwg.mxu0
    %v9982 = vunpack.c.l.b16 %v9846
    %v9983 = vunpack.c.l.b16 %v9847
    %v9984 = vunpack.c.l.b16 %v9848
    %v9985 = vunpack.c.l.b16 %v9849
    %v9986 = vunpack.c.l.b16 %v9850
    %v9987 = vunpack.c.l.b16 %v9851
    %v9988 = vunpack.c.l.b16 %v9852
    %v9989 = vunpack.c.l.b16 %v9853
    %v9990 = vunpack.c.l.b16 %v9854
    %v9991 = vunpack.c.l.b16 %v9855
    %v9992 = vunpack.c.l.b16 %v9856
    %v9993 = vunpack.c.l.b16 %v9857
    %v9994 = vunpack.c.l.b16 %v9858
    %v9995 = vunpack.c.l.b16 %v9859
    %v9996 = vunpack.c.l.b16 %v9860
    %v9997 = vunpack.c.l.b16 %v9861
    %v9998 = vpack.c.b16 %v9983, %v9982
    %v9999 = vpack.c.b16 %v9985, %v9984
    %v10000 = vpack.c.b16 %v9987, %v9986
    %v10001 = vpack.c.b16 %v9989, %v9988
    %v10002 = vpack.c.b16 %v9991, %v9990
    %v10003 = vpack.c.b16 %v9993, %v9992
    %v10004 = vpack.c.b16 %v9995, %v9994
    %v10005 = vpack.c.b16 %v9997, %v9996
    %10014 = vmatprep.subr.bf16.mxu0 0
    %10015 = vmatpush1.bf16.msra.mxu0 %v10005
    %10016 = vmatprep.subr.bf16.mxu0 0
    %10017 = vmatpush1.bf16.msra.mxu0 %v10004
    %10018 = vmatprep.subr.bf16.mxu0 0
    %10019 = vmatpush1.bf16.msra.mxu0 %v10003
    %10020 = vmatprep.subr.bf16.mxu0 0
    %10021 = vmatpush1.bf16.msra.mxu0 %v10002
    %10022 = vmatprep.subr.bf16.mxu0 0
    %10023 = vmatpush1.bf16.msra.mxu0 %v10001
    %10024 = vmatprep.subr.bf16.mxu0 0
    %10025 = vmatpush1.bf16.msra.mxu0 %v10000
    %10026 = vmatprep.subr.bf16.mxu0 0
    %10027 = vmatpush1.bf16.msra.mxu0 %v9999
    %10028 = vmatprep.subr.bf16.mxu0 0
    %10029 = vmatpush1.bf16.msra.mxu0 %v9998
    %10030 = vmatprep.subr.bf16.mxu0 0
    %10031 = vmatpush2.bf16.msra.mxu0 0
    %10032 = vmatprep.subr.bf16.mxu0 0
    %10033 = vmatpush2.bf16.msra.mxu0 0
    %10034 = vmatprep.subr.bf16.mxu0 0
    %10035 = vmatpush2.bf16.msra.mxu0 0
    %10036 = vmatprep.subr.bf16.mxu0 0
    %10037 = vmatpush2.bf16.msra.mxu0 0
    %10038 = vmatprep.subr.bf16.mxu0 0
    %10039 = vmatpush2.bf16.msra.mxu0 0
    %10040 = vmatprep.subr.bf16.mxu0 0
    %10041 = vmatpush2.bf16.msra.mxu0 0
    %10042 = vmatprep.subr.bf16.mxu0 0
    %10043 = vmatpush2.bf16.msra.mxu0 0
    %10044 = vmatprep.subr.bf16.mxu0 0
    %10045 = vmatpush2.bf16.msra.mxu0 0
    %10046 = vmatprep.mubr.bf16.mxu0 0
    %10047 = vmatmul.mubr.bf16.gmra.mxu0 %v9844
    %v10048 = vpop.f32.mrf.mxu0
    %v10049 = vadd.f32 %v9961, %v10048
    %v10050 = vpop.f32.mrf.mxu0
    %v10051 = vpop.f32.mrf.mxu0
    %v10052 = vpop.f32.mrf.mxu0
    %10053 = vdwg.mxu0
    %v10054 = vld [vmem:[%s13] sm:$0x1]
    %v10056 = vlaneseq
    %v10057 = vshrl.u32 %v10056, 7
    %v10058 = vsub.s32 0, %v10057
    %v10059 = vrot.slane %v10054, %v10058
    %v10061 = vadd.f32 %v10049, %v10059
    %v10062 = vmul.f32 %v10061, %v10061
    %10064 = vrot.lane.b32.xlu0 %v10062, 118
    %v10065 = vpop.permute.xlu0 %10064
    %v10067 = vadd.f32 %v10062, %v10065
    %v10068 = vrsqrt.pop %v10067
    %v10069 = vmul.f32 %v10067, %v10068
    %vm10070 = vcmp.eq.f32.partialorder %v10067, inf
    %v10071 = vsel %vm10070, %v10067, %v10069
    %vm10072 = vcmp.eq.f32.partialorder %v10067, 0.0
    %v10073 = vand.u32 %v10067, 2147483648
    %v10074 = vsel %vm10072, %v10073, %v10071
    %vm10075 = vcmask 74752
    %v10076 = vsel %vm10075, %v10074, -inf
    %10077 = vmax.xlane.f32.xlu0 %v10076
    %v10078 = vpop.xlane.xlu0 %10077
    %v10079 = vsub.f32 %v10074, %v10078
    %v10080 = vmul.f32 %v10079, 1.442695
    %v10081 = vpow.pop %v10080
    %v10082 = vsel %vm10075, %v10081, 0.0
    %10083 = vadd.xlane.f32.xlu0 %v10082
    %v10084 = vpop.xlane.xlu0 %10083
    %v10085 = vlog2.pop %v10084
    %v10086 = vmul.f32 %v10085, 0.6931472
    %v10087 = vsub.f32 %v10079, %v10086
    %10088 = vst.msk [vmem:[#allocation17] sm:$0x3] %vm10075, %v10087
    // Predicated region
    $region78: #{cvcnn_forward.1} parent=1 // pred_check
      _
    $region79: #{cvcnn_forward.1} parent=1 // pred_check_branch
      %10090 = sbr.rel (0) target = $region81
    $region80: #{cvcnn_forward.1} parent=1 // pred_region
      %s10092 = ssub.s32 32, 32
      %10093 = vsyncadd [#allocation10], %s10092
      %s10095 = sshll.u32 [#allocation17], 4
      %s10096 = int_to_ptr.vmem [resolvable:$true] %s10095
      %10098 = dma.vmem_to_hbm [thread:$0]  %s10096, 32, %s14, [#allocation10]
    $region81: #{cvcnn_forward.1} parent=1 // pred_fallthru
      _
    // Predicated region
    $region82: #{cvcnn_forward.1} parent=1 // pred_check
      _
    $region83: #{cvcnn_forward.1} parent=1 // pred_check_branch
      %10100 = sbr.rel (0) target = $region85
    $region84: #{cvcnn_forward.1} parent=1 // pred_region
      %10101 = dma.done [#allocation10], 32
    $region85: #{cvcnn_forward.1} parent=1 // pred_fallthru
      _
    %10102 = vsyncpa [#allocation9], 1
    %10103 = vsyncpa [#allocation12], 1
    %10104 = vsyncpa [#allocation15], 1
    %10105 = vsyncpa [#allocation10], 1

</llo_original>
